<compile_context>
chip_gen: v6e
topology: v6e:2x2x1
jax: 0.10.0
libtpu: 0.0.40
codegen_flags: <defaults>
</compile_context>

<pallas_src>
import jax
import jax.numpy as jnp
import numpy as np
from jax import lax
from jax.experimental import pallas as pl
from jax.experimental.pallas import tpu as pltpu

# Small, module-consistent sizes.
N, CIN, H, W = 2, 4, 16, 16
COUT = 8
KH = KW = 3
EMB = 32
HW = H * W                       # 256
HP, WP = H + 2, W + 2            # spatially padded input (pad=1 each side)
NTAPS = CIN * KH * KW            # 36
EMB_PAD = 128                    # pad the narrow embedding dim to a full lane width
BB = 8                           # batch elements per grid step (multiple of 8 sublanes)
LB = BB * WP                     # 144: packed lane axis = (b, x_padded)
LV = LB - 2                      # 142: lanes actually produced per tap slice


def embedding_kernel(xp_ref, wc_ref, bc_ref, wf_ref, bf_ref, o_ref):
    """One grid step = BB batch elements.

    xp_ref: (CIN, HP, LB)     zero-padded inputs, lanes packed as b*WP + x
    wc_ref: (NTAPS, COUT, 1)  conv weight, tap-major (tap = ci*9 + kh*3 + kw)
    bc_ref: (COUT, 1)         conv bias
    wf_ref: (COUT, EMB_PAD)   FC weight (fc_w.T), lane-padded
    bf_ref: (1, EMB_PAD)      FC bias, lane-padded
    o_ref : (BB, EMB_PAD)     embeddings for this batch block (full (8,128) tile)
    """
    xp = xp_ref[...]                                   # (CIN, HP, LB)
    wc = wc_ref[...]                                   # (NTAPS, COUT, 1)

    # Conv2d(3x3, pad=1) as 36 shifted-tap broadcast-FMAs on the VPU.
    # acc[co, y, l] = sum_{ci,kh,kw} w[co,ci,kh,kw] * xp[ci, y+kh, l+kw]
    # Valid outputs live at lanes l = b*WP + x (x < W); the 2 junk lanes per
    # batch segment are simply excluded from the pooling below.
    acc = jnp.zeros((COUT, H, LV), jnp.float32)
    for ci in range(CIN):
        for kh in range(KH):
            rows = xp[ci, kh:kh + H, :]                # (H, LB) static slice
            for kw in range(KW):
                tap = rows[:, kw:kw + LV]              # (H, LV) static lane slice
                w_t = wc[ci * KH * KW + kh * KW + kw]  # (COUT, 1)
                acc = acc + w_t[:, :, None] * tap[None, :, :]

    # Bias + ReLU (VPU).
    h = jnp.maximum(acc + bc_ref[...][:, :, None], 0.0)          # (COUT, H, LV)

    # Global average pool: sublane reduction over y, then a short unrolled loop
    # over the BB batch lane-segments (no pooling matmul, no lane reshape).
    rowsum = jnp.sum(h, axis=1)                                  # (COUT, LV)
    cols = [jnp.sum(rowsum[:, b * WP:b * WP + W], axis=1, keepdims=True)
            for b in range(BB)]                                  # BB x (COUT, 1)
    pooled = jnp.concatenate(cols, axis=1) * (1.0 / HW)          # (COUT, BB)

    # FC on the MXU: contract COUT (dim 0 of both) -> (BB, EMB_PAD), i.e.
    # pooled.T @ wf without an explicit transpose.  Full (8,128) output tile.
    emb = lax.dot_general(pooled, wf_ref[...],
                          dimension_numbers=(((0,), (0,)), ((), ())),
                          preferred_element_type=jnp.float32)
    o_ref[...] = emb + bf_ref[...]


def prepare_params(conv_w, conv_b, fc_w, fc_b):
    """Hoisted, one-time weight preparation (called once, outside the hot path)."""
    # conv_w: (COUT, CIN, KH, KW) -> tap-major (NTAPS, COUT, 1),
    # tap index t = ci*KH*KW + kh*KW + kw  (PyTorch cross-correlation ordering).
    wc = conv_w.transpose(1, 2, 3, 0).reshape(NTAPS, COUT, 1).astype(jnp.float32)
    bc = conv_b.reshape(COUT, 1).astype(jnp.float32)
    # torch Linear weight is (EMB, COUT); lane-pad EMB -> EMB_PAD so stores are unmasked.
    wf = jnp.zeros((COUT, EMB_PAD), jnp.float32).at[:, :EMB].set(fc_w.T)
    bf = jnp.zeros((1, EMB_PAD), jnp.float32).at[:, :EMB].set(fc_b.reshape(1, EMB))
    return (wc, bc, wf, bf)


def _prep_input(x):
    """(n, CIN, H, W) -> (nblk, CIN, HP, BB*WP): zero-pad spatially + batch,
    pack BB batch elements onto the lane axis (lane = b*WP + x_padded)."""
    n = x.shape[0]
    nblk = -(-n // BB)
    n_pad = nblk * BB
    xpad = jnp.pad(x, ((0, n_pad - n), (0, 0), (1, 1), (1, 1)))      # (n_pad,CIN,HP,WP)
    xp = (xpad.reshape(nblk, BB, CIN, HP, WP)
              .transpose(0, 2, 3, 1, 4)
              .reshape(nblk, CIN, HP, LB))
    return xp, n_pad, nblk


@jax.jit
def triplet_net_forward(x, params):
    """x: (n, CIN, H, W) float32 (NCHW, like PyTorch). Returns (n, EMB) embedding."""
    wc, bc, wf, bf = params
    n = x.shape[0]
    xp, n_pad, nblk = _prep_input(x)

    out = pl.pallas_call(
        embedding_kernel,
        out_shape=jax.ShapeDtypeStruct((n_pad, EMB_PAD), jnp.float32),
        grid=(nblk,),
        in_specs=[
            # Per-step input slab: BB batch elements, lane-packed.
            pl.BlockSpec((None, CIN, HP, LB), lambda i: (i, 0, 0, 0)),
            # Weights/biases: constant block index -> DMA'd once, stay resident.
            pl.BlockSpec((NTAPS, COUT, 1), lambda i: (0, 0, 0)),
            pl.BlockSpec((COUT, 1), lambda i: (0, 0)),
            pl.BlockSpec((COUT, EMB_PAD), lambda i: (0, 0)),
            pl.BlockSpec((1, EMB_PAD), lambda i: (0, 0)),
        ],
        out_specs=pl.BlockSpec((BB, EMB_PAD), lambda i: (i, 0)),
        # Annotation only: with 1 (or a few) sub-us steps there is no megacore
        # win; real v7x 2-TC scaling needs many non-trivial batch blocks.
        compiler_params=pltpu.CompilerParams(
            dimension_semantics=("parallel",)),
    )(xp, wc, bc, wf, bf)

    return out[:n, :EMB]                                             # (n, EMB)


def triplet_forward(anchor, positive, negative, params):
    """All three triplet branches in ONE kernel launch (shared weights).
    Callers on a hot path should keep the triplet pre-stacked to skip this concat."""
    stacked = jnp.concatenate([anchor, positive, negative], axis=0)
    emb = triplet_net_forward(stacked, params)
    n = anchor.shape[0]
    return emb[:n], emb[n:2 * n], emb[2 * n:]


def reference_forward(x, conv_w, conv_b, fc_w, fc_b):
    """Pure-JAX reference matching the PyTorch embedding CNN."""
    y = lax.conv_general_dilated(
        x, conv_w, window_strides=(1, 1), padding=((1, 1), (1, 1)),
        dimension_numbers=("NCHW", "OIHW", "NCHW"))
    y = jnp.maximum(y + conv_b.reshape(1, COUT, 1, 1), 0.0)
    pooled = jnp.mean(y, axis=(2, 3))                                # (n, COUT)
    return pooled @ fc_w.T + fc_b


if __name__ == "__main__":
    key = jax.random.PRNGKey(0)
    kx, kw1, kb1, kw2, kb2 = jax.random.split(key, 5)

    x = jax.random.normal(kx, (N, CIN, H, W), dtype=jnp.float32)
    conv_w = jax.random.normal(kw1, (COUT, CIN, KH, KW), dtype=jnp.float32) * 0.1
    conv_b = jax.random.normal(kb1, (COUT,), dtype=jnp.float32) * 0.1
    fc_w = jax.random.normal(kw2, (EMB, COUT), dtype=jnp.float32) * 0.1
    fc_b = jax.random.normal(kb2, (EMB,), dtype=jnp.float32) * 0.1

    params = prepare_params(conv_w, conv_b, fc_w, fc_b)   # one-time weight prep

    out = jax.block_until_ready(triplet_net_forward(x, params))
    ref = reference_forward(x, conv_w, conv_b, fc_w, fc_b)
    assert out.shape == (N, EMB)
    assert np.allclose(np.asarray(out), np.asarray(ref), atol=1e-4, rtol=1e-4)

    # Fused triplet usage: anchor/positive/negative embedded in a single kernel launch.
    a, p_, n_ = x, x + 0.5, x - 0.5
    ea, ep, en = triplet_forward(a, p_, n_, params)
    ea, ep, en = jax.block_until_ready((ea, ep, en))
    assert np.allclose(np.asarray(ea), np.asarray(out), atol=1e-4, rtol=1e-4)
    assert np.allclose(np.asarray(ep),
                       np.asarray(reference_forward(p_, conv_w, conv_b, fc_w, fc_b)),
                       atol=1e-4, rtol=1e-4)
    assert np.allclose(np.asarray(en),
                       np.asarray(reference_forward(n_, conv_w, conv_b, fc_w, fc_b)),
                       atol=1e-4, rtol=1e-4)

    # NOTE: TripletNet defines self.sigmoid but never applies it in forward(),
    # so the kernel output is the raw embedding, matching PyTorch semantics.
    print("KERNEL_OK")
</pallas_src>

<mosaic_0001>
module attributes {stable_mosaic.version = 11 : i64} {
  func.func @embedding_kernel(%arg0: i32, %arg1: memref<1x4x18x144xf32, #tpu.memory_space<vmem>>, %arg2: memref<36x8x1xf32, #tpu.memory_space<vmem>>, %arg3: memref<8x1xf32, #tpu.memory_space<vmem>>, %arg4: memref<8x128xf32, #tpu.memory_space<vmem>>, %arg5: memref<1x128xf32, #tpu.memory_space<vmem>>, %arg6: memref<8x128xf32, #tpu.memory_space<vmem>>) attributes {dimension_semantics = [#tpu.dimension_semantics<parallel>], iteration_bounds = array<i64: 1>, scalar_prefetch = 0 : i64, scratch_operands = 0 : i64, tpu.core_type = #tpu.core_type<tc>, window_params = [{transform_indices = @transform_0, window_bounds = array<i64: 1, 4, 18, 144>}, {pipeline_mode = #tpu.pipeline_mode<synchronous>, transform_indices = @transform_1, window_bounds = array<i64: 36, 8, 1>}, {pipeline_mode = #tpu.pipeline_mode<synchronous>, transform_indices = @transform_2, window_bounds = array<i64: 8, 1>}, {pipeline_mode = #tpu.pipeline_mode<synchronous>, transform_indices = @transform_3, window_bounds = array<i64: 8, 128>}, {pipeline_mode = #tpu.pipeline_mode<synchronous>, transform_indices = @transform_4, window_bounds = array<i64: 1, 128>}, {transform_indices = @transform_5, window_bounds = array<i64: 8, 128>}]} {
    %c0 = arith.constant 0 : index
    %c0_0 = arith.constant 0 : index
    %c0_1 = arith.constant 0 : index
    %c0_2 = arith.constant 0 : index
    %0 = vector.load %arg1[%c0, %c0_0, %c0_1, %c0_2] : memref<1x4x18x144xf32, #tpu.memory_space<vmem>>, vector<1x4x18x144xf32>
    %1 = vector.shape_cast %0 : vector<1x4x18x144xf32> to vector<4x18x144xf32>
    %c0_3 = arith.constant 0 : index
    %c0_4 = arith.constant 0 : index
    %c0_5 = arith.constant 0 : index
    %2 = vector.load %arg2[%c0_3, %c0_4, %c0_5] : memref<36x8x1xf32, #tpu.memory_space<vmem>>, vector<36x8x1xf32>
    %cst = arith.constant 0.000000e+00 : f32
    %3 = vector.broadcast %cst : f32 to vector<8x16x142xf32>
    %4 = vector.extract_strided_slice %1 {offsets = [0, 0, 0], sizes = [1, 16, 144], strides = [1, 1, 1]} : vector<4x18x144xf32> to vector<1x16x144xf32>
    %5 = vector.shape_cast %4 : vector<1x16x144xf32> to vector<16x144xf32>
    %6 = vector.extract_strided_slice %5 {offsets = [0, 0], sizes = [16, 142], strides = [1, 1]} : vector<16x144xf32> to vector<16x142xf32>
    %7 = vector.extract_strided_slice %2 {offsets = [0, 0, 0], sizes = [1, 8, 1], strides = [1, 1, 1]} : vector<36x8x1xf32> to vector<1x8x1xf32>
    %8 = vector.shape_cast %7 : vector<1x8x1xf32> to vector<8x1xf32>
    %9 = vector.shape_cast %8 : vector<8x1xf32> to vector<8x1x1xf32>
    %10 = vector.shape_cast %6 : vector<16x142xf32> to vector<1x16x142xf32>
    %11 = vector.broadcast %9 : vector<8x1x1xf32> to vector<8x16x142xf32>
    %12 = vector.broadcast %10 : vector<1x16x142xf32> to vector<8x16x142xf32>
    %13 = arith.mulf %11, %12 : vector<8x16x142xf32>
    %14 = arith.addf %3, %13 : vector<8x16x142xf32>
    %15 = vector.extract_strided_slice %5 {offsets = [0, 1], sizes = [16, 142], strides = [1, 1]} : vector<16x144xf32> to vector<16x142xf32>
    %16 = vector.extract_strided_slice %2 {offsets = [1, 0, 0], sizes = [1, 8, 1], strides = [1, 1, 1]} : vector<36x8x1xf32> to vector<1x8x1xf32>
    %17 = vector.shape_cast %16 : vector<1x8x1xf32> to vector<8x1xf32>
    %18 = vector.shape_cast %17 : vector<8x1xf32> to vector<8x1x1xf32>
    %19 = vector.shape_cast %15 : vector<16x142xf32> to vector<1x16x142xf32>
    %20 = vector.broadcast %18 : vector<8x1x1xf32> to vector<8x16x142xf32>
    %21 = vector.broadcast %19 : vector<1x16x142xf32> to vector<8x16x142xf32>
    %22 = arith.mulf %20, %21 : vector<8x16x142xf32>
    %23 = arith.addf %14, %22 : vector<8x16x142xf32>
    %24 = vector.extract_strided_slice %5 {offsets = [0, 2], sizes = [16, 142], strides = [1, 1]} : vector<16x144xf32> to vector<16x142xf32>
    %25 = vector.extract_strided_slice %2 {offsets = [2, 0, 0], sizes = [1, 8, 1], strides = [1, 1, 1]} : vector<36x8x1xf32> to vector<1x8x1xf32>
    %26 = vector.shape_cast %25 : vector<1x8x1xf32> to vector<8x1xf32>
    %27 = vector.shape_cast %26 : vector<8x1xf32> to vector<8x1x1xf32>
    %28 = vector.shape_cast %24 : vector<16x142xf32> to vector<1x16x142xf32>
    %29 = vector.broadcast %27 : vector<8x1x1xf32> to vector<8x16x142xf32>
    %30 = vector.broadcast %28 : vector<1x16x142xf32> to vector<8x16x142xf32>
    %31 = arith.mulf %29, %30 : vector<8x16x142xf32>
    %32 = arith.addf %23, %31 : vector<8x16x142xf32>
    %33 = vector.extract_strided_slice %1 {offsets = [0, 1, 0], sizes = [1, 16, 144], strides = [1, 1, 1]} : vector<4x18x144xf32> to vector<1x16x144xf32>
    %34 = vector.shape_cast %33 : vector<1x16x144xf32> to vector<16x144xf32>
    %35 = vector.extract_strided_slice %34 {offsets = [0, 0], sizes = [16, 142], strides = [1, 1]} : vector<16x144xf32> to vector<16x142xf32>
    %36 = vector.extract_strided_slice %2 {offsets = [3, 0, 0], sizes = [1, 8, 1], strides = [1, 1, 1]} : vector<36x8x1xf32> to vector<1x8x1xf32>
    %37 = vector.shape_cast %36 : vector<1x8x1xf32> to vector<8x1xf32>
    %38 = vector.shape_cast %37 : vector<8x1xf32> to vector<8x1x1xf32>
    %39 = vector.shape_cast %35 : vector<16x142xf32> to vector<1x16x142xf32>
    %40 = vector.broadcast %38 : vector<8x1x1xf32> to vector<8x16x142xf32>
    %41 = vector.broadcast %39 : vector<1x16x142xf32> to vector<8x16x142xf32>
    %42 = arith.mulf %40, %41 : vector<8x16x142xf32>
    %43 = arith.addf %32, %42 : vector<8x16x142xf32>
    %44 = vector.extract_strided_slice %34 {offsets = [0, 1], sizes = [16, 142], strides = [1, 1]} : vector<16x144xf32> to vector<16x142xf32>
    %45 = vector.extract_strided_slice %2 {offsets = [4, 0, 0], sizes = [1, 8, 1], strides = [1, 1, 1]} : vector<36x8x1xf32> to vector<1x8x1xf32>
    %46 = vector.shape_cast %45 : vector<1x8x1xf32> to vector<8x1xf32>
    %47 = vector.shape_cast %46 : vector<8x1xf32> to vector<8x1x1xf32>
    %48 = vector.shape_cast %44 : vector<16x142xf32> to vector<1x16x142xf32>
    %49 = vector.broadcast %47 : vector<8x1x1xf32> to vector<8x16x142xf32>
    %50 = vector.broadcast %48 : vector<1x16x142xf32> to vector<8x16x142xf32>
    %51 = arith.mulf %49, %50 : vector<8x16x142xf32>
    %52 = arith.addf %43, %51 : vector<8x16x142xf32>
    %53 = vector.extract_strided_slice %34 {offsets = [0, 2], sizes = [16, 142], strides = [1, 1]} : vector<16x144xf32> to vector<16x142xf32>
    %54 = vector.extract_strided_slice %2 {offsets = [5, 0, 0], sizes = [1, 8, 1], strides = [1, 1, 1]} : vector<36x8x1xf32> to vector<1x8x1xf32>
    %55 = vector.shape_cast %54 : vector<1x8x1xf32> to vector<8x1xf32>
    %56 = vector.shape_cast %55 : vector<8x1xf32> to vector<8x1x1xf32>
    %57 = vector.shape_cast %53 : vector<16x142xf32> to vector<1x16x142xf32>
    %58 = vector.broadcast %56 : vector<8x1x1xf32> to vector<8x16x142xf32>
    %59 = vector.broadcast %57 : vector<1x16x142xf32> to vector<8x16x142xf32>
    %60 = arith.mulf %58, %59 : vector<8x16x142xf32>
    %61 = arith.addf %52, %60 : vector<8x16x142xf32>
    %62 = vector.extract_strided_slice %1 {offsets = [0, 2, 0], sizes = [1, 16, 144], strides = [1, 1, 1]} : vector<4x18x144xf32> to vector<1x16x144xf32>
    %63 = vector.shape_cast %62 : vector<1x16x144xf32> to vector<16x144xf32>
    %64 = vector.extract_strided_slice %63 {offsets = [0, 0], sizes = [16, 142], strides = [1, 1]} : vector<16x144xf32> to vector<16x142xf32>
    %65 = vector.extract_strided_slice %2 {offsets = [6, 0, 0], sizes = [1, 8, 1], strides = [1, 1, 1]} : vector<36x8x1xf32> to vector<1x8x1xf32>
    %66 = vector.shape_cast %65 : vector<1x8x1xf32> to vector<8x1xf32>
    %67 = vector.shape_cast %66 : vector<8x1xf32> to vector<8x1x1xf32>
    %68 = vector.shape_cast %64 : vector<16x142xf32> to vector<1x16x142xf32>
    %69 = vector.broadcast %67 : vector<8x1x1xf32> to vector<8x16x142xf32>
    %70 = vector.broadcast %68 : vector<1x16x142xf32> to vector<8x16x142xf32>
    %71 = arith.mulf %69, %70 : vector<8x16x142xf32>
    %72 = arith.addf %61, %71 : vector<8x16x142xf32>
    %73 = vector.extract_strided_slice %63 {offsets = [0, 1], sizes = [16, 142], strides = [1, 1]} : vector<16x144xf32> to vector<16x142xf32>
    %74 = vector.extract_strided_slice %2 {offsets = [7, 0, 0], sizes = [1, 8, 1], strides = [1, 1, 1]} : vector<36x8x1xf32> to vector<1x8x1xf32>
    %75 = vector.shape_cast %74 : vector<1x8x1xf32> to vector<8x1xf32>
    %76 = vector.shape_cast %75 : vector<8x1xf32> to vector<8x1x1xf32>
    %77 = vector.shape_cast %73 : vector<16x142xf32> to vector<1x16x142xf32>
    %78 = vector.broadcast %76 : vector<8x1x1xf32> to vector<8x16x142xf32>
    %79 = vector.broadcast %77 : vector<1x16x142xf32> to vector<8x16x142xf32>
    %80 = arith.mulf %78, %79 : vector<8x16x142xf32>
    %81 = arith.addf %72, %80 : vector<8x16x142xf32>
    %82 = vector.extract_strided_slice %63 {offsets = [0, 2], sizes = [16, 142], strides = [1, 1]} : vector<16x144xf32> to vector<16x142xf32>
    %83 = vector.extract_strided_slice %2 {offsets = [8, 0, 0], sizes = [1, 8, 1], strides = [1, 1, 1]} : vector<36x8x1xf32> to vector<1x8x1xf32>
    %84 = vector.shape_cast %83 : vector<1x8x1xf32> to vector<8x1xf32>
    %85 = vector.shape_cast %84 : vector<8x1xf32> to vector<8x1x1xf32>
    %86 = vector.shape_cast %82 : vector<16x142xf32> to vector<1x16x142xf32>
    %87 = vector.broadcast %85 : vector<8x1x1xf32> to vector<8x16x142xf32>
    %88 = vector.broadcast %86 : vector<1x16x142xf32> to vector<8x16x142xf32>
    %89 = arith.mulf %87, %88 : vector<8x16x142xf32>
    %90 = arith.addf %81, %89 : vector<8x16x142xf32>
    %91 = vector.extract_strided_slice %1 {offsets = [1, 0, 0], sizes = [1, 16, 144], strides = [1, 1, 1]} : vector<4x18x144xf32> to vector<1x16x144xf32>
    %92 = vector.shape_cast %91 : vector<1x16x144xf32> to vector<16x144xf32>
    %93 = vector.extract_strided_slice %92 {offsets = [0, 0], sizes = [16, 142], strides = [1, 1]} : vector<16x144xf32> to vector<16x142xf32>
    %94 = vector.extract_strided_slice %2 {offsets = [9, 0, 0], sizes = [1, 8, 1], strides = [1, 1, 1]} : vector<36x8x1xf32> to vector<1x8x1xf32>
    %95 = vector.shape_cast %94 : vector<1x8x1xf32> to vector<8x1xf32>
    %96 = vector.shape_cast %95 : vector<8x1xf32> to vector<8x1x1xf32>
    %97 = vector.shape_cast %93 : vector<16x142xf32> to vector<1x16x142xf32>
    %98 = vector.broadcast %96 : vector<8x1x1xf32> to vector<8x16x142xf32>
    %99 = vector.broadcast %97 : vector<1x16x142xf32> to vector<8x16x142xf32>
    %100 = arith.mulf %98, %99 : vector<8x16x142xf32>
    %101 = arith.addf %90, %100 : vector<8x16x142xf32>
    %102 = vector.extract_strided_slice %92 {offsets = [0, 1], sizes = [16, 142], strides = [1, 1]} : vector<16x144xf32> to vector<16x142xf32>
    %103 = vector.extract_strided_slice %2 {offsets = [10, 0, 0], sizes = [1, 8, 1], strides = [1, 1, 1]} : vector<36x8x1xf32> to vector<1x8x1xf32>
    %104 = vector.shape_cast %103 : vector<1x8x1xf32> to vector<8x1xf32>
    %105 = vector.shape_cast %104 : vector<8x1xf32> to vector<8x1x1xf32>
    %106 = vector.shape_cast %102 : vector<16x142xf32> to vector<1x16x142xf32>
    %107 = vector.broadcast %105 : vector<8x1x1xf32> to vector<8x16x142xf32>
    %108 = vector.broadcast %106 : vector<1x16x142xf32> to vector<8x16x142xf32>
    %109 = arith.mulf %107, %108 : vector<8x16x142xf32>
    %110 = arith.addf %101, %109 : vector<8x16x142xf32>
    %111 = vector.extract_strided_slice %92 {offsets = [0, 2], sizes = [16, 142], strides = [1, 1]} : vector<16x144xf32> to vector<16x142xf32>
    %112 = vector.extract_strided_slice %2 {offsets = [11, 0, 0], sizes = [1, 8, 1], strides = [1, 1, 1]} : vector<36x8x1xf32> to vector<1x8x1xf32>
    %113 = vector.shape_cast %112 : vector<1x8x1xf32> to vector<8x1xf32>
    %114 = vector.shape_cast %113 : vector<8x1xf32> to vector<8x1x1xf32>
    %115 = vector.shape_cast %111 : vector<16x142xf32> to vector<1x16x142xf32>
    %116 = vector.broadcast %114 : vector<8x1x1xf32> to vector<8x16x142xf32>
    %117 = vector.broadcast %115 : vector<1x16x142xf32> to vector<8x16x142xf32>
    %118 = arith.mulf %116, %117 : vector<8x16x142xf32>
    %119 = arith.addf %110, %118 : vector<8x16x142xf32>
    %120 = vector.extract_strided_slice %1 {offsets = [1, 1, 0], sizes = [1, 16, 144], strides = [1, 1, 1]} : vector<4x18x144xf32> to vector<1x16x144xf32>
    %121 = vector.shape_cast %120 : vector<1x16x144xf32> to vector<16x144xf32>
    %122 = vector.extract_strided_slice %121 {offsets = [0, 0], sizes = [16, 142], strides = [1, 1]} : vector<16x144xf32> to vector<16x142xf32>
    %123 = vector.extract_strided_slice %2 {offsets = [12, 0, 0], sizes = [1, 8, 1], strides = [1, 1, 1]} : vector<36x8x1xf32> to vector<1x8x1xf32>
    %124 = vector.shape_cast %123 : vector<1x8x1xf32> to vector<8x1xf32>
    %125 = vector.shape_cast %124 : vector<8x1xf32> to vector<8x1x1xf32>
    %126 = vector.shape_cast %122 : vector<16x142xf32> to vector<1x16x142xf32>
    %127 = vector.broadcast %125 : vector<8x1x1xf32> to vector<8x16x142xf32>
    %128 = vector.broadcast %126 : vector<1x16x142xf32> to vector<8x16x142xf32>
    %129 = arith.mulf %127, %128 : vector<8x16x142xf32>
    %130 = arith.addf %119, %129 : vector<8x16x142xf32>
    %131 = vector.extract_strided_slice %121 {offsets = [0, 1], sizes = [16, 142], strides = [1, 1]} : vector<16x144xf32> to vector<16x142xf32>
    %132 = vector.extract_strided_slice %2 {offsets = [13, 0, 0], sizes = [1, 8, 1], strides = [1, 1, 1]} : vector<36x8x1xf32> to vector<1x8x1xf32>
    %133 = vector.shape_cast %132 : vector<1x8x1xf32> to vector<8x1xf32>
    %134 = vector.shape_cast %133 : vector<8x1xf32> to vector<8x1x1xf32>
    %135 = vector.shape_cast %131 : vector<16x142xf32> to vector<1x16x142xf32>
    %136 = vector.broadcast %134 : vector<8x1x1xf32> to vector<8x16x142xf32>
    %137 = vector.broadcast %135 : vector<1x16x142xf32> to vector<8x16x142xf32>
    %138 = arith.mulf %136, %137 : vector<8x16x142xf32>
    %139 = arith.addf %130, %138 : vector<8x16x142xf32>
    %140 = vector.extract_strided_slice %121 {offsets = [0, 2], sizes = [16, 142], strides = [1, 1]} : vector<16x144xf32> to vector<16x142xf32>
    %141 = vector.extract_strided_slice %2 {offsets = [14, 0, 0], sizes = [1, 8, 1], strides = [1, 1, 1]} : vector<36x8x1xf32> to vector<1x8x1xf32>
    %142 = vector.shape_cast %141 : vector<1x8x1xf32> to vector<8x1xf32>
    %143 = vector.shape_cast %142 : vector<8x1xf32> to vector<8x1x1xf32>
    %144 = vector.shape_cast %140 : vector<16x142xf32> to vector<1x16x142xf32>
    %145 = vector.broadcast %143 : vector<8x1x1xf32> to vector<8x16x142xf32>
    %146 = vector.broadcast %144 : vector<1x16x142xf32> to vector<8x16x142xf32>
    %147 = arith.mulf %145, %146 : vector<8x16x142xf32>
    %148 = arith.addf %139, %147 : vector<8x16x142xf32>
    %149 = vector.extract_strided_slice %1 {offsets = [1, 2, 0], sizes = [1, 16, 144], strides = [1, 1, 1]} : vector<4x18x144xf32> to vector<1x16x144xf32>
    %150 = vector.shape_cast %149 : vector<1x16x144xf32> to vector<16x144xf32>
    %151 = vector.extract_strided_slice %150 {offsets = [0, 0], sizes = [16, 142], strides = [1, 1]} : vector<16x144xf32> to vector<16x142xf32>
    %152 = vector.extract_strided_slice %2 {offsets = [15, 0, 0], sizes = [1, 8, 1], strides = [1, 1, 1]} : vector<36x8x1xf32> to vector<1x8x1xf32>
    %153 = vector.shape_cast %152 : vector<1x8x1xf32> to vector<8x1xf32>
    %154 = vector.shape_cast %153 : vector<8x1xf32> to vector<8x1x1xf32>
    %155 = vector.shape_cast %151 : vector<16x142xf32> to vector<1x16x142xf32>
    %156 = vector.broadcast %154 : vector<8x1x1xf32> to vector<8x16x142xf32>
    %157 = vector.broadcast %155 : vector<1x16x142xf32> to vector<8x16x142xf32>
    %158 = arith.mulf %156, %157 : vector<8x16x142xf32>
    %159 = arith.addf %148, %158 : vector<8x16x142xf32>
    %160 = vector.extract_strided_slice %150 {offsets = [0, 1], sizes = [16, 142], strides = [1, 1]} : vector<16x144xf32> to vector<16x142xf32>
    %161 = vector.extract_strided_slice %2 {offsets = [16, 0, 0], sizes = [1, 8, 1], strides = [1, 1, 1]} : vector<36x8x1xf32> to vector<1x8x1xf32>
    %162 = vector.shape_cast %161 : vector<1x8x1xf32> to vector<8x1xf32>
    %163 = vector.shape_cast %162 : vector<8x1xf32> to vector<8x1x1xf32>
    %164 = vector.shape_cast %160 : vector<16x142xf32> to vector<1x16x142xf32>
    %165 = vector.broadcast %163 : vector<8x1x1xf32> to vector<8x16x142xf32>
    %166 = vector.broadcast %164 : vector<1x16x142xf32> to vector<8x16x142xf32>
    %167 = arith.mulf %165, %166 : vector<8x16x142xf32>
    %168 = arith.addf %159, %167 : vector<8x16x142xf32>
    %169 = vector.extract_strided_slice %150 {offsets = [0, 2], sizes = [16, 142], strides = [1, 1]} : vector<16x144xf32> to vector<16x142xf32>
    %170 = vector.extract_strided_slice %2 {offsets = [17, 0, 0], sizes = [1, 8, 1], strides = [1, 1, 1]} : vector<36x8x1xf32> to vector<1x8x1xf32>
    %171 = vector.shape_cast %170 : vector<1x8x1xf32> to vector<8x1xf32>
    %172 = vector.shape_cast %171 : vector<8x1xf32> to vector<8x1x1xf32>
    %173 = vector.shape_cast %169 : vector<16x142xf32> to vector<1x16x142xf32>
    %174 = vector.broadcast %172 : vector<8x1x1xf32> to vector<8x16x142xf32>
    %175 = vector.broadcast %173 : vector<1x16x142xf32> to vector<8x16x142xf32>
    %176 = arith.mulf %174, %175 : vector<8x16x142xf32>
    %177 = arith.addf %168, %176 : vector<8x16x142xf32>
    %178 = vector.extract_strided_slice %1 {offsets = [2, 0, 0], sizes = [1, 16, 144], strides = [1, 1, 1]} : vector<4x18x144xf32> to vector<1x16x144xf32>
    %179 = vector.shape_cast %178 : vector<1x16x144xf32> to vector<16x144xf32>
    %180 = vector.extract_strided_slice %179 {offsets = [0, 0], sizes = [16, 142], strides = [1, 1]} : vector<16x144xf32> to vector<16x142xf32>
    %181 = vector.extract_strided_slice %2 {offsets = [18, 0, 0], sizes = [1, 8, 1], strides = [1, 1, 1]} : vector<36x8x1xf32> to vector<1x8x1xf32>
    %182 = vector.shape_cast %181 : vector<1x8x1xf32> to vector<8x1xf32>
    %183 = vector.shape_cast %182 : vector<8x1xf32> to vector<8x1x1xf32>
    %184 = vector.shape_cast %180 : vector<16x142xf32> to vector<1x16x142xf32>
    %185 = vector.broadcast %183 : vector<8x1x1xf32> to vector<8x16x142xf32>
    %186 = vector.broadcast %184 : vector<1x16x142xf32> to vector<8x16x142xf32>
    %187 = arith.mulf %185, %186 : vector<8x16x142xf32>
    %188 = arith.addf %177, %187 : vector<8x16x142xf32>
    %189 = vector.extract_strided_slice %179 {offsets = [0, 1], sizes = [16, 142], strides = [1, 1]} : vector<16x144xf32> to vector<16x142xf32>
    %190 = vector.extract_strided_slice %2 {offsets = [19, 0, 0], sizes = [1, 8, 1], strides = [1, 1, 1]} : vector<36x8x1xf32> to vector<1x8x1xf32>
    %191 = vector.shape_cast %190 : vector<1x8x1xf32> to vector<8x1xf32>
    %192 = vector.shape_cast %191 : vector<8x1xf32> to vector<8x1x1xf32>
    %193 = vector.shape_cast %189 : vector<16x142xf32> to vector<1x16x142xf32>
    %194 = vector.broadcast %192 : vector<8x1x1xf32> to vector<8x16x142xf32>
    %195 = vector.broadcast %193 : vector<1x16x142xf32> to vector<8x16x142xf32>
    %196 = arith.mulf %194, %195 : vector<8x16x142xf32>
    %197 = arith.addf %188, %196 : vector<8x16x142xf32>
    %198 = vector.extract_strided_slice %179 {offsets = [0, 2], sizes = [16, 142], strides = [1, 1]} : vector<16x144xf32> to vector<16x142xf32>
    %199 = vector.extract_strided_slice %2 {offsets = [20, 0, 0], sizes = [1, 8, 1], strides = [1, 1, 1]} : vector<36x8x1xf32> to vector<1x8x1xf32>
    %200 = vector.shape_cast %199 : vector<1x8x1xf32> to vector<8x1xf32>
    %201 = vector.shape_cast %200 : vector<8x1xf32> to vector<8x1x1xf32>
    %202 = vector.shape_cast %198 : vector<16x142xf32> to vector<1x16x142xf32>
    %203 = vector.broadcast %201 : vector<8x1x1xf32> to vector<8x16x142xf32>
    %204 = vector.broadcast %202 : vector<1x16x142xf32> to vector<8x16x142xf32>
    %205 = arith.mulf %203, %204 : vector<8x16x142xf32>
    %206 = arith.addf %197, %205 : vector<8x16x142xf32>
    %207 = vector.extract_strided_slice %1 {offsets = [2, 1, 0], sizes = [1, 16, 144], strides = [1, 1, 1]} : vector<4x18x144xf32> to vector<1x16x144xf32>
    %208 = vector.shape_cast %207 : vector<1x16x144xf32> to vector<16x144xf32>
    %209 = vector.extract_strided_slice %208 {offsets = [0, 0], sizes = [16, 142], strides = [1, 1]} : vector<16x144xf32> to vector<16x142xf32>
    %210 = vector.extract_strided_slice %2 {offsets = [21, 0, 0], sizes = [1, 8, 1], strides = [1, 1, 1]} : vector<36x8x1xf32> to vector<1x8x1xf32>
    %211 = vector.shape_cast %210 : vector<1x8x1xf32> to vector<8x1xf32>
    %212 = vector.shape_cast %211 : vector<8x1xf32> to vector<8x1x1xf32>
    %213 = vector.shape_cast %209 : vector<16x142xf32> to vector<1x16x142xf32>
    %214 = vector.broadcast %212 : vector<8x1x1xf32> to vector<8x16x142xf32>
    %215 = vector.broadcast %213 : vector<1x16x142xf32> to vector<8x16x142xf32>
    %216 = arith.mulf %214, %215 : vector<8x16x142xf32>
    %217 = arith.addf %206, %216 : vector<8x16x142xf32>
    %218 = vector.extract_strided_slice %208 {offsets = [0, 1], sizes = [16, 142], strides = [1, 1]} : vector<16x144xf32> to vector<16x142xf32>
    %219 = vector.extract_strided_slice %2 {offsets = [22, 0, 0], sizes = [1, 8, 1], strides = [1, 1, 1]} : vector<36x8x1xf32> to vector<1x8x1xf32>
    %220 = vector.shape_cast %219 : vector<1x8x1xf32> to vector<8x1xf32>
    %221 = vector.shape_cast %220 : vector<8x1xf32> to vector<8x1x1xf32>
    %222 = vector.shape_cast %218 : vector<16x142xf32> to vector<1x16x142xf32>
    %223 = vector.broadcast %221 : vector<8x1x1xf32> to vector<8x16x142xf32>
    %224 = vector.broadcast %222 : vector<1x16x142xf32> to vector<8x16x142xf32>
    %225 = arith.mulf %223, %224 : vector<8x16x142xf32>
    %226 = arith.addf %217, %225 : vector<8x16x142xf32>
    %227 = vector.extract_strided_slice %208 {offsets = [0, 2], sizes = [16, 142], strides = [1, 1]} : vector<16x144xf32> to vector<16x142xf32>
    %228 = vector.extract_strided_slice %2 {offsets = [23, 0, 0], sizes = [1, 8, 1], strides = [1, 1, 1]} : vector<36x8x1xf32> to vector<1x8x1xf32>
    %229 = vector.shape_cast %228 : vector<1x8x1xf32> to vector<8x1xf32>
    %230 = vector.shape_cast %229 : vector<8x1xf32> to vector<8x1x1xf32>
    %231 = vector.shape_cast %227 : vector<16x142xf32> to vector<1x16x142xf32>
    %232 = vector.broadcast %230 : vector<8x1x1xf32> to vector<8x16x142xf32>
    %233 = vector.broadcast %231 : vector<1x16x142xf32> to vector<8x16x142xf32>
    %234 = arith.mulf %232, %233 : vector<8x16x142xf32>
    %235 = arith.addf %226, %234 : vector<8x16x142xf32>
    %236 = vector.extract_strided_slice %1 {offsets = [2, 2, 0], sizes = [1, 16, 144], strides = [1, 1, 1]} : vector<4x18x144xf32> to vector<1x16x144xf32>
    %237 = vector.shape_cast %236 : vector<1x16x144xf32> to vector<16x144xf32>
    %238 = vector.extract_strided_slice %237 {offsets = [0, 0], sizes = [16, 142], strides = [1, 1]} : vector<16x144xf32> to vector<16x142xf32>
    %239 = vector.extract_strided_slice %2 {offsets = [24, 0, 0], sizes = [1, 8, 1], strides = [1, 1, 1]} : vector<36x8x1xf32> to vector<1x8x1xf32>
    %240 = vector.shape_cast %239 : vector<1x8x1xf32> to vector<8x1xf32>
    %241 = vector.shape_cast %240 : vector<8x1xf32> to vector<8x1x1xf32>
    %242 = vector.shape_cast %238 : vector<16x142xf32> to vector<1x16x142xf32>
    %243 = vector.broadcast %241 : vector<8x1x1xf32> to vector<8x16x142xf32>
    %244 = vector.broadcast %242 : vector<1x16x142xf32> to vector<8x16x142xf32>
    %245 = arith.mulf %243, %244 : vector<8x16x142xf32>
    %246 = arith.addf %235, %245 : vector<8x16x142xf32>
    %247 = vector.extract_strided_slice %237 {offsets = [0, 1], sizes = [16, 142], strides = [1, 1]} : vector<16x144xf32> to vector<16x142xf32>
    %248 = vector.extract_strided_slice %2 {offsets = [25, 0, 0], sizes = [1, 8, 1], strides = [1, 1, 1]} : vector<36x8x1xf32> to vector<1x8x1xf32>
    %249 = vector.shape_cast %248 : vector<1x8x1xf32> to vector<8x1xf32>
    %250 = vector.shape_cast %249 : vector<8x1xf32> to vector<8x1x1xf32>
    %251 = vector.shape_cast %247 : vector<16x142xf32> to vector<1x16x142xf32>
    %252 = vector.broadcast %250 : vector<8x1x1xf32> to vector<8x16x142xf32>
    %253 = vector.broadcast %251 : vector<1x16x142xf32> to vector<8x16x142xf32>
    %254 = arith.mulf %252, %253 : vector<8x16x142xf32>
    %255 = arith.addf %246, %254 : vector<8x16x142xf32>
    %256 = vector.extract_strided_slice %237 {offsets = [0, 2], sizes = [16, 142], strides = [1, 1]} : vector<16x144xf32> to vector<16x142xf32>
    %257 = vector.extract_strided_slice %2 {offsets = [26, 0, 0], sizes = [1, 8, 1], strides = [1, 1, 1]} : vector<36x8x1xf32> to vector<1x8x1xf32>
    %258 = vector.shape_cast %257 : vector<1x8x1xf32> to vector<8x1xf32>
    %259 = vector.shape_cast %258 : vector<8x1xf32> to vector<8x1x1xf32>
    %260 = vector.shape_cast %256 : vector<16x142xf32> to vector<1x16x142xf32>
    %261 = vector.broadcast %259 : vector<8x1x1xf32> to vector<8x16x142xf32>
    %262 = vector.broadcast %260 : vector<1x16x142xf32> to vector<8x16x142xf32>
    %263 = arith.mulf %261, %262 : vector<8x16x142xf32>
    %264 = arith.addf %255, %263 : vector<8x16x142xf32>
    %265 = vector.extract_strided_slice %1 {offsets = [3, 0, 0], sizes = [1, 16, 144], strides = [1, 1, 1]} : vector<4x18x144xf32> to vector<1x16x144xf32>
    %266 = vector.shape_cast %265 : vector<1x16x144xf32> to vector<16x144xf32>
    %267 = vector.extract_strided_slice %266 {offsets = [0, 0], sizes = [16, 142], strides = [1, 1]} : vector<16x144xf32> to vector<16x142xf32>
    %268 = vector.extract_strided_slice %2 {offsets = [27, 0, 0], sizes = [1, 8, 1], strides = [1, 1, 1]} : vector<36x8x1xf32> to vector<1x8x1xf32>
    %269 = vector.shape_cast %268 : vector<1x8x1xf32> to vector<8x1xf32>
    %270 = vector.shape_cast %269 : vector<8x1xf32> to vector<8x1x1xf32>
    %271 = vector.shape_cast %267 : vector<16x142xf32> to vector<1x16x142xf32>
    %272 = vector.broadcast %270 : vector<8x1x1xf32> to vector<8x16x142xf32>
    %273 = vector.broadcast %271 : vector<1x16x142xf32> to vector<8x16x142xf32>
    %274 = arith.mulf %272, %273 : vector<8x16x142xf32>
    %275 = arith.addf %264, %274 : vector<8x16x142xf32>
    %276 = vector.extract_strided_slice %266 {offsets = [0, 1], sizes = [16, 142], strides = [1, 1]} : vector<16x144xf32> to vector<16x142xf32>
    %277 = vector.extract_strided_slice %2 {offsets = [28, 0, 0], sizes = [1, 8, 1], strides = [1, 1, 1]} : vector<36x8x1xf32> to vector<1x8x1xf32>
    %278 = vector.shape_cast %277 : vector<1x8x1xf32> to vector<8x1xf32>
    %279 = vector.shape_cast %278 : vector<8x1xf32> to vector<8x1x1xf32>
    %280 = vector.shape_cast %276 : vector<16x142xf32> to vector<1x16x142xf32>
    %281 = vector.broadcast %279 : vector<8x1x1xf32> to vector<8x16x142xf32>
    %282 = vector.broadcast %280 : vector<1x16x142xf32> to vector<8x16x142xf32>
    %283 = arith.mulf %281, %282 : vector<8x16x142xf32>
    %284 = arith.addf %275, %283 : vector<8x16x142xf32>
    %285 = vector.extract_strided_slice %266 {offsets = [0, 2], sizes = [16, 142], strides = [1, 1]} : vector<16x144xf32> to vector<16x142xf32>
    %286 = vector.extract_strided_slice %2 {offsets = [29, 0, 0], sizes = [1, 8, 1], strides = [1, 1, 1]} : vector<36x8x1xf32> to vector<1x8x1xf32>
    %287 = vector.shape_cast %286 : vector<1x8x1xf32> to vector<8x1xf32>
    %288 = vector.shape_cast %287 : vector<8x1xf32> to vector<8x1x1xf32>
    %289 = vector.shape_cast %285 : vector<16x142xf32> to vector<1x16x142xf32>
    %290 = vector.broadcast %288 : vector<8x1x1xf32> to vector<8x16x142xf32>
    %291 = vector.broadcast %289 : vector<1x16x142xf32> to vector<8x16x142xf32>
    %292 = arith.mulf %290, %291 : vector<8x16x142xf32>
    %293 = arith.addf %284, %292 : vector<8x16x142xf32>
    %294 = vector.extract_strided_slice %1 {offsets = [3, 1, 0], sizes = [1, 16, 144], strides = [1, 1, 1]} : vector<4x18x144xf32> to vector<1x16x144xf32>
    %295 = vector.shape_cast %294 : vector<1x16x144xf32> to vector<16x144xf32>
    %296 = vector.extract_strided_slice %295 {offsets = [0, 0], sizes = [16, 142], strides = [1, 1]} : vector<16x144xf32> to vector<16x142xf32>
    %297 = vector.extract_strided_slice %2 {offsets = [30, 0, 0], sizes = [1, 8, 1], strides = [1, 1, 1]} : vector<36x8x1xf32> to vector<1x8x1xf32>
    %298 = vector.shape_cast %297 : vector<1x8x1xf32> to vector<8x1xf32>
    %299 = vector.shape_cast %298 : vector<8x1xf32> to vector<8x1x1xf32>
    %300 = vector.shape_cast %296 : vector<16x142xf32> to vector<1x16x142xf32>
    %301 = vector.broadcast %299 : vector<8x1x1xf32> to vector<8x16x142xf32>
    %302 = vector.broadcast %300 : vector<1x16x142xf32> to vector<8x16x142xf32>
    %303 = arith.mulf %301, %302 : vector<8x16x142xf32>
    %304 = arith.addf %293, %303 : vector<8x16x142xf32>
    %305 = vector.extract_strided_slice %295 {offsets = [0, 1], sizes = [16, 142], strides = [1, 1]} : vector<16x144xf32> to vector<16x142xf32>
    %306 = vector.extract_strided_slice %2 {offsets = [31, 0, 0], sizes = [1, 8, 1], strides = [1, 1, 1]} : vector<36x8x1xf32> to vector<1x8x1xf32>
    %307 = vector.shape_cast %306 : vector<1x8x1xf32> to vector<8x1xf32>
    %308 = vector.shape_cast %307 : vector<8x1xf32> to vector<8x1x1xf32>
    %309 = vector.shape_cast %305 : vector<16x142xf32> to vector<1x16x142xf32>
    %310 = vector.broadcast %308 : vector<8x1x1xf32> to vector<8x16x142xf32>
    %311 = vector.broadcast %309 : vector<1x16x142xf32> to vector<8x16x142xf32>
    %312 = arith.mulf %310, %311 : vector<8x16x142xf32>
    %313 = arith.addf %304, %312 : vector<8x16x142xf32>
    %314 = vector.extract_strided_slice %295 {offsets = [0, 2], sizes = [16, 142], strides = [1, 1]} : vector<16x144xf32> to vector<16x142xf32>
    %315 = vector.extract_strided_slice %2 {offsets = [32, 0, 0], sizes = [1, 8, 1], strides = [1, 1, 1]} : vector<36x8x1xf32> to vector<1x8x1xf32>
    %316 = vector.shape_cast %315 : vector<1x8x1xf32> to vector<8x1xf32>
    %317 = vector.shape_cast %316 : vector<8x1xf32> to vector<8x1x1xf32>
    %318 = vector.shape_cast %314 : vector<16x142xf32> to vector<1x16x142xf32>
    %319 = vector.broadcast %317 : vector<8x1x1xf32> to vector<8x16x142xf32>
    %320 = vector.broadcast %318 : vector<1x16x142xf32> to vector<8x16x142xf32>
    %321 = arith.mulf %319, %320 : vector<8x16x142xf32>
    %322 = arith.addf %313, %321 : vector<8x16x142xf32>
    %323 = vector.extract_strided_slice %1 {offsets = [3, 2, 0], sizes = [1, 16, 144], strides = [1, 1, 1]} : vector<4x18x144xf32> to vector<1x16x144xf32>
    %324 = vector.shape_cast %323 : vector<1x16x144xf32> to vector<16x144xf32>
    %325 = vector.extract_strided_slice %324 {offsets = [0, 0], sizes = [16, 142], strides = [1, 1]} : vector<16x144xf32> to vector<16x142xf32>
    %326 = vector.extract_strided_slice %2 {offsets = [33, 0, 0], sizes = [1, 8, 1], strides = [1, 1, 1]} : vector<36x8x1xf32> to vector<1x8x1xf32>
    %327 = vector.shape_cast %326 : vector<1x8x1xf32> to vector<8x1xf32>
    %328 = vector.shape_cast %327 : vector<8x1xf32> to vector<8x1x1xf32>
    %329 = vector.shape_cast %325 : vector<16x142xf32> to vector<1x16x142xf32>
    %330 = vector.broadcast %328 : vector<8x1x1xf32> to vector<8x16x142xf32>
    %331 = vector.broadcast %329 : vector<1x16x142xf32> to vector<8x16x142xf32>
    %332 = arith.mulf %330, %331 : vector<8x16x142xf32>
    %333 = arith.addf %322, %332 : vector<8x16x142xf32>
    %334 = vector.extract_strided_slice %324 {offsets = [0, 1], sizes = [16, 142], strides = [1, 1]} : vector<16x144xf32> to vector<16x142xf32>
    %335 = vector.extract_strided_slice %2 {offsets = [34, 0, 0], sizes = [1, 8, 1], strides = [1, 1, 1]} : vector<36x8x1xf32> to vector<1x8x1xf32>
    %336 = vector.shape_cast %335 : vector<1x8x1xf32> to vector<8x1xf32>
    %337 = vector.shape_cast %336 : vector<8x1xf32> to vector<8x1x1xf32>
    %338 = vector.shape_cast %334 : vector<16x142xf32> to vector<1x16x142xf32>
    %339 = vector.broadcast %337 : vector<8x1x1xf32> to vector<8x16x142xf32>
    %340 = vector.broadcast %338 : vector<1x16x142xf32> to vector<8x16x142xf32>
    %341 = arith.mulf %339, %340 : vector<8x16x142xf32>
    %342 = arith.addf %333, %341 : vector<8x16x142xf32>
    %343 = vector.extract_strided_slice %324 {offsets = [0, 2], sizes = [16, 142], strides = [1, 1]} : vector<16x144xf32> to vector<16x142xf32>
    %344 = vector.extract_strided_slice %2 {offsets = [35, 0, 0], sizes = [1, 8, 1], strides = [1, 1, 1]} : vector<36x8x1xf32> to vector<1x8x1xf32>
    %345 = vector.shape_cast %344 : vector<1x8x1xf32> to vector<8x1xf32>
    %346 = vector.shape_cast %345 : vector<8x1xf32> to vector<8x1x1xf32>
    %347 = vector.shape_cast %343 : vector<16x142xf32> to vector<1x16x142xf32>
    %348 = vector.broadcast %346 : vector<8x1x1xf32> to vector<8x16x142xf32>
    %349 = vector.broadcast %347 : vector<1x16x142xf32> to vector<8x16x142xf32>
    %350 = arith.mulf %348, %349 : vector<8x16x142xf32>
    %351 = arith.addf %342, %350 : vector<8x16x142xf32>
    %c0_6 = arith.constant 0 : index
    %c0_7 = arith.constant 0 : index
    %352 = vector.load %arg3[%c0_6, %c0_7] : memref<8x1xf32, #tpu.memory_space<vmem>>, vector<8x1xf32>
    %353 = vector.shape_cast %352 : vector<8x1xf32> to vector<8x1x1xf32>
    %354 = vector.broadcast %353 : vector<8x1x1xf32> to vector<8x16x142xf32>
    %355 = arith.addf %351, %354 : vector<8x16x142xf32>
    %cst_8 = arith.constant 0.000000e+00 : f32
    %356 = vector.broadcast %cst_8 : f32 to vector<8x16x142xf32>
    %357 = arith.maximumf %355, %356 : vector<8x16x142xf32>
    %cst_9 = arith.constant dense<0.000000e+00> : vector<8x142xf32>
    %358 = vector.multi_reduction <add>, %357, %cst_9 [1] : vector<8x16x142xf32> to vector<8x142xf32>
    %359 = vector.extract_strided_slice %358 {offsets = [0, 0], sizes = [8, 16], strides = [1, 1]} : vector<8x142xf32> to vector<8x16xf32>
    %cst_10 = arith.constant dense<0.000000e+00> : vector<8xf32>
    %360 = vector.multi_reduction <add>, %359, %cst_10 [1] : vector<8x16xf32> to vector<8xf32>
    %361 = vector.shape_cast %360 : vector<8xf32> to vector<8x1xf32>
    %362 = vector.extract_strided_slice %358 {offsets = [0, 18], sizes = [8, 16], strides = [1, 1]} : vector<8x142xf32> to vector<8x16xf32>
    %cst_11 = arith.constant dense<0.000000e+00> : vector<8xf32>
    %363 = vector.multi_reduction <add>, %362, %cst_11 [1] : vector<8x16xf32> to vector<8xf32>
    %364 = vector.shape_cast %363 : vector<8xf32> to vector<8x1xf32>
    %365 = vector.extract_strided_slice %358 {offsets = [0, 36], sizes = [8, 16], strides = [1, 1]} : vector<8x142xf32> to vector<8x16xf32>
    %cst_12 = arith.constant dense<0.000000e+00> : vector<8xf32>
    %366 = vector.multi_reduction <add>, %365, %cst_12 [1] : vector<8x16xf32> to vector<8xf32>
    %367 = vector.shape_cast %366 : vector<8xf32> to vector<8x1xf32>
    %368 = vector.extract_strided_slice %358 {offsets = [0, 54], sizes = [8, 16], strides = [1, 1]} : vector<8x142xf32> to vector<8x16xf32>
    %cst_13 = arith.constant dense<0.000000e+00> : vector<8xf32>
    %369 = vector.multi_reduction <add>, %368, %cst_13 [1] : vector<8x16xf32> to vector<8xf32>
    %370 = vector.shape_cast %369 : vector<8xf32> to vector<8x1xf32>
    %371 = vector.extract_strided_slice %358 {offsets = [0, 72], sizes = [8, 16], strides = [1, 1]} : vector<8x142xf32> to vector<8x16xf32>
    %cst_14 = arith.constant dense<0.000000e+00> : vector<8xf32>
    %372 = vector.multi_reduction <add>, %371, %cst_14 [1] : vector<8x16xf32> to vector<8xf32>
    %373 = vector.shape_cast %372 : vector<8xf32> to vector<8x1xf32>
    %374 = vector.extract_strided_slice %358 {offsets = [0, 90], sizes = [8, 16], strides = [1, 1]} : vector<8x142xf32> to vector<8x16xf32>
    %cst_15 = arith.constant dense<0.000000e+00> : vector<8xf32>
    %375 = vector.multi_reduction <add>, %374, %cst_15 [1] : vector<8x16xf32> to vector<8xf32>
    %376 = vector.shape_cast %375 : vector<8xf32> to vector<8x1xf32>
    %377 = vector.extract_strided_slice %358 {offsets = [0, 108], sizes = [8, 16], strides = [1, 1]} : vector<8x142xf32> to vector<8x16xf32>
    %cst_16 = arith.constant dense<0.000000e+00> : vector<8xf32>
    %378 = vector.multi_reduction <add>, %377, %cst_16 [1] : vector<8x16xf32> to vector<8xf32>
    %379 = vector.shape_cast %378 : vector<8xf32> to vector<8x1xf32>
    %380 = vector.extract_strided_slice %358 {offsets = [0, 126], sizes = [8, 16], strides = [1, 1]} : vector<8x142xf32> to vector<8x16xf32>
    %cst_17 = arith.constant dense<0.000000e+00> : vector<8xf32>
    %381 = vector.multi_reduction <add>, %380, %cst_17 [1] : vector<8x16xf32> to vector<8xf32>
    %382 = vector.shape_cast %381 : vector<8xf32> to vector<8x1xf32>
    %383 = tpu.concatenate %361, %364, %367, %370, %373, %376, %379, %382 in 1 : vector<8x1xf32>, vector<8x1xf32>, vector<8x1xf32>, vector<8x1xf32>, vector<8x1xf32>, vector<8x1xf32>, vector<8x1xf32>, vector<8x1xf32> -> vector<8x8xf32>
    %cst_18 = arith.constant 3.906250e-03 : f32
    %384 = vector.broadcast %cst_18 : f32 to vector<8x8xf32>
    %385 = arith.mulf %383, %384 : vector<8x8xf32>
    %c0_19 = arith.constant 0 : index
    %c0_20 = arith.constant 0 : index
    %386 = vector.load %arg4[%c0_19, %c0_20] : memref<8x128xf32, #tpu.memory_space<vmem>>, vector<8x128xf32>
    %cst_21 = arith.constant dense<0.000000e+00> : vector<8x128xf32>
    %387 = tpu.matmul %385, %386, %cst_21 {dimension_numbers = #tpu.dot_dimension_numbers<[0], [0], [1], [1], [0, 1, 1, 1], [], []>} : vector<8x8xf32>, vector<8x128xf32>, vector<8x128xf32> -> vector<8x128xf32>
    %c0_22 = arith.constant 0 : index
    %c0_23 = arith.constant 0 : index
    %388 = vector.load %arg5[%c0_22, %c0_23] : memref<1x128xf32, #tpu.memory_space<vmem>>, vector<1x128xf32>
    %389 = vector.broadcast %388 : vector<1x128xf32> to vector<8x128xf32>
    %390 = arith.addf %387, %389 : vector<8x128xf32>
    %c0_24 = arith.constant 0 : index
    %c0_25 = arith.constant 0 : index
    %391 = vector.load %arg6[%c0_24, %c0_25] : memref<8x128xf32, #tpu.memory_space<vmem>>, vector<8x128xf32>
    tpu.vector_store %arg6[%c0_24, %c0_25], %390 {strides = array<i32>} : memref<8x128xf32, #tpu.memory_space<vmem>>, vector<8x128xf32>,
    return
  }
  func.func @transform_0(%arg0: i32) -> (i32, i32, i32, i32) {
    %c0_i32 = arith.constant 0 : i32
    %c0_i32_0 = arith.constant 0 : i32
    %c0_i32_1 = arith.constant 0 : i32
    %c0_i32_2 = arith.constant 0 : i32
    return %arg0, %c0_i32, %c0_i32_0, %c0_i32_1 : i32, i32, i32, i32
  }
  func.func @transform_1(%arg0: i32) -> (i32, i32, i32) {
    %c0_i32 = arith.constant 0 : i32
    %c0_i32_0 = arith.constant 0 : i32
    %c0_i32_1 = arith.constant 0 : i32
    %c0_i32_2 = arith.constant 0 : i32
    return %c0_i32, %c0_i32_0, %c0_i32_1 : i32, i32, i32
  }
  func.func @transform_2(%arg0: i32) -> (i32, i32) {
    %c0_i32 = arith.constant 0 : i32
    %c0_i32_0 = arith.constant 0 : i32
    %c0_i32_1 = arith.constant 0 : i32
    return %c0_i32, %c0_i32_0 : i32, i32
  }
  func.func @transform_3(%arg0: i32) -> (i32, i32) {
    %c0_i32 = arith.constant 0 : i32
    %c0_i32_0 = arith.constant 0 : i32
    %c0_i32_1 = arith.constant 0 : i32
    return %c0_i32, %c0_i32_0 : i32, i32
  }
  func.func @transform_4(%arg0: i32) -> (i32, i32) {
    %c0_i32 = arith.constant 0 : i32
    %c0_i32_0 = arith.constant 0 : i32
    %c0_i32_1 = arith.constant 0 : i32
    return %c0_i32, %c0_i32_0 : i32, i32
  }
  func.func @transform_5(%arg0: i32) -> (i32, i32) {
    %c0_i32 = arith.constant 0 : i32
    %c0_i32_0 = arith.constant 0 : i32
    return %arg0, %c0_i32 : i32, i32
  }
}

</mosaic_0001>

<llo_original>
// kernel: triplet_net_forward.1
$region0: #{triplet_net_forward.1}
  #allocation0 [shape = 'u32[]', space=smem, size = 0x4, offset = 0x4, fixed_abs, tag = 'smem constant byte address 0x4 - core index']
  #allocation1 [shape = 'u32[144,128]{1,0:T(1,128)}', space=vmem, size = 0x12000, scoped, tag = 'internal scratch']
  %s0 = inlined_call_operand.vmem [shape: f32[1,4,18,144], index: 0, kind: input, shape index: {}]
  %s1 = inlined_call_operand.vmem [shape: f32[36,8,1], index: 1, kind: input, shape index: {}]
  %s2 = inlined_call_operand.vmem [shape: f32[8,1], index: 2, kind: input, shape index: {}]
  %s3 = inlined_call_operand.vmem [shape: f32[8,128], index: 3, kind: input, shape index: {}]
  %s4 = inlined_call_operand.vmem [shape: f32[1,128], index: 4, kind: input, shape index: {}]
  %s5 = inlined_call_operand.vmem [shape: f32[8,128], index: 5, kind: output, shape index: {}]
  %s6 = sld [smem:[#allocation0]]
  $region30: #{triplet_net_forward.1} parent=0
    _
  %s8 = ssub.s32 1, %s6
  %s9 = scalar_select 0, %s8, %s6
  // Predicated region
  $region2: #{triplet_net_forward.1} parent=0 // pred_check
    _
  $region3: #{triplet_net_forward.1} parent=0 // pred_check_branch
    %11 = sbr.rel (0) target = $region5
  $region4: #{triplet_net_forward.1} parent=0 // pred_region
    _
  $region5: #{triplet_net_forward.1} parent=0 // pred_fallthru
    _
  // Predicated region
  $region6: #{triplet_net_forward.1} parent=0 // pred_check
    _
  $region7: #{triplet_net_forward.1} parent=0 // pred_check_branch
    %13 = sbr.rel (0) target = $region9
  $region8: #{triplet_net_forward.1} parent=0 // pred_region
    _
  $region9: #{triplet_net_forward.1} parent=0 // pred_fallthru
    _
  // Predicated region
  $region10: #{triplet_net_forward.1} parent=0 // pred_check
    _
  $region11: #{triplet_net_forward.1} parent=0 // pred_check_branch
    %15 = sbr.rel (0) target = $region13
  $region12: #{triplet_net_forward.1} parent=0 // pred_region
    _
  $region13: #{triplet_net_forward.1} parent=0 // pred_fallthru
    _
  // Predicated region
  $region14: #{triplet_net_forward.1} parent=0 // pred_check
    _
  $region15: #{triplet_net_forward.1} parent=0 // pred_check_branch
    %17 = sbr.rel (0) target = $region17
  $region16: #{triplet_net_forward.1} parent=0 // pred_region
    _
  $region17: #{triplet_net_forward.1} parent=0 // pred_fallthru
    _
  // Predicated region
  $region18: #{triplet_net_forward.1} parent=0 // pred_check
    _
  $region19: #{triplet_net_forward.1} parent=0 // pred_check_branch
    %19 = sbr.rel (0) target = $region21
  $region20: #{triplet_net_forward.1} parent=0 // pred_region
    _
  $region21: #{triplet_net_forward.1} parent=0 // pred_fallthru
    _
  %v20 = vld [vmem:[%s0] sm:$0xff]
  %v21 = vld [vmem:[%s0 + $0x8] sm:$0xff]
  %v22 = vld [vmem:[%s0 + $0x10] sm:$0xff]
  %v23 = vld [vmem:[%s0 + $0x18] sm:$0xff]
  %v24 = vld [vmem:[%s0 + $0x20] sm:$0x3]
  %v25 = vld [vmem:[%s0 + $0x28] sm:$0x3]
  %v26 = vld [vmem:[%s0 + $0x30] sm:$0xff]
  %v27 = vld [vmem:[%s0 + $0x38] sm:$0xff]
  %v28 = vld [vmem:[%s0 + $0x40] sm:$0xff]
  %v29 = vld [vmem:[%s0 + $0x48] sm:$0xff]
  %v30 = vld [vmem:[%s0 + $0x50] sm:$0x3]
  %v31 = vld [vmem:[%s0 + $0x58] sm:$0x3]
  %v32 = vld [vmem:[%s0 + $0x60] sm:$0xff]
  %v33 = vld [vmem:[%s0 + $0x68] sm:$0xff]
  %v34 = vld [vmem:[%s0 + $0x70] sm:$0xff]
  %v35 = vld [vmem:[%s0 + $0x78] sm:$0xff]
  %v36 = vld [vmem:[%s0 + $0x80] sm:$0x3]
  %v37 = vld [vmem:[%s0 + $0x88] sm:$0x3]
  %v38 = vld [vmem:[%s0 + $0x90] sm:$0xff]
  %v39 = vld [vmem:[%s0 + $0x98] sm:$0xff]
  %v40 = vld [vmem:[%s0 + $0xa0] sm:$0xff]
  %v41 = vld [vmem:[%s0 + $0xa8] sm:$0xff]
  %v42 = vld [vmem:[%s0 + $0xb0] sm:$0x3]
  %v43 = vld [vmem:[%s0 + $0xb8] sm:$0x3]
  %v44 = vld [vmem:[%s1] sm:$0xff]
  %v45 = vld [vmem:[%s1 + $0x8] sm:$0xff]
  %v46 = vld [vmem:[%s1 + $0x10] sm:$0xff]
  %v47 = vld [vmem:[%s1 + $0x18] sm:$0xff]
  %v48 = vld [vmem:[%s1 + $0x20] sm:$0xff]
  %v49 = vld [vmem:[%s1 + $0x28] sm:$0xff]
  %v50 = vld [vmem:[%s1 + $0x30] sm:$0xff]
  %v51 = vld [vmem:[%s1 + $0x38] sm:$0xff]
  %v52 = vld [vmem:[%s1 + $0x40] sm:$0xff]
  %v53 = vld [vmem:[%s1 + $0x48] sm:$0xff]
  %v54 = vld [vmem:[%s1 + $0x50] sm:$0xff]
  %v55 = vld [vmem:[%s1 + $0x58] sm:$0xff]
  %v56 = vld [vmem:[%s1 + $0x60] sm:$0xff]
  %v57 = vld [vmem:[%s1 + $0x68] sm:$0xff]
  %v58 = vld [vmem:[%s1 + $0x70] sm:$0xff]
  %v59 = vld [vmem:[%s1 + $0x78] sm:$0xff]
  %v60 = vld [vmem:[%s1 + $0x80] sm:$0xff]
  %v61 = vld [vmem:[%s1 + $0x88] sm:$0xff]
  %v62 = vld [vmem:[%s1 + $0x90] sm:$0xff]
  %v63 = vld [vmem:[%s1 + $0x98] sm:$0xff]
  %v64 = vld [vmem:[%s1 + $0xa0] sm:$0xff]
  %v65 = vld [vmem:[%s1 + $0xa8] sm:$0xff]
  %v66 = vld [vmem:[%s1 + $0xb0] sm:$0xff]
  %v67 = vld [vmem:[%s1 + $0xb8] sm:$0xff]
  %v68 = vld [vmem:[%s1 + $0xc0] sm:$0xff]
  %v69 = vld [vmem:[%s1 + $0xc8] sm:$0xff]
  %v70 = vld [vmem:[%s1 + $0xd0] sm:$0xff]
  %v71 = vld [vmem:[%s1 + $0xd8] sm:$0xff]
  %v72 = vld [vmem:[%s1 + $0xe0] sm:$0xff]
  %v73 = vld [vmem:[%s1 + $0xe8] sm:$0xff]
  %v74 = vld [vmem:[%s1 + $0xf0] sm:$0xff]
  %v75 = vld [vmem:[%s1 + $0xf8] sm:$0xff]
  %v76 = vld [vmem:[%s1 + $0x100] sm:$0xff]
  %v77 = vld [vmem:[%s1 + $0x108] sm:$0xff]
  %v78 = vld [vmem:[%s1 + $0x110] sm:$0xff]
  %v79 = vld [vmem:[%s1 + $0x118] sm:$0xff]
  %v81 = vcombine.high %v44, %v44
  %v83 = vunpack.c.l.s4 1966171168
  %v84 = vunpack.c.0.s8 %v83
  %v85 = vlaneseq
  %v86 = vshrl.u32 %v85, 7
  %v87 = vsub.s32 %v84, %v86
  %v88 = vrot.slane %v44, %v87
  %v90 = vunpack.c.l.s4 1966171168
  %v91 = vunpack.c.0.s8 %v90
  %v92 = vlaneseq
  %v93 = vshrl.u32 %v92, 7
  %v94 = vsub.s32 %v91, %v93
  %v95 = vrot.slane %v81, %v94
  %v96 = vcombine.high %v88, %v88
  %v97 = vcombine.high %v95, %v95
  %v99 = vunpack.c.l.s4 1966171168
  %v100 = vunpack.c.0.s8 %v99
  %v101 = vlaneseq
  %v102 = vshrl.u32 %v101, 7
  %v103 = vsub.s32 %v100, %v102
  %v104 = vrot.slane %v88, %v103
  %v106 = vunpack.c.l.s4 1966171168
  %v107 = vunpack.c.0.s8 %v106
  %v108 = vlaneseq
  %v109 = vshrl.u32 %v108, 7
  %v110 = vsub.s32 %v107, %v109
  %v111 = vrot.slane %v95, %v110
  %v113 = vunpack.c.l.s4 1966171168
  %v114 = vunpack.c.0.s8 %v113
  %v115 = vlaneseq
  %v116 = vshrl.u32 %v115, 7
  %v117 = vsub.s32 %v114, %v116
  %v118 = vrot.slane %v96, %v117
  %v120 = vunpack.c.l.s4 1966171168
  %v121 = vunpack.c.0.s8 %v120
  %v122 = vlaneseq
  %v123 = vshrl.u32 %v122, 7
  %v124 = vsub.s32 %v121, %v123
  %v125 = vrot.slane %v97, %v124
  %v126 = vcombine.high %v104, %v104
  %v127 = vcombine.high %v111, %v111
  %v128 = vcombine.high %v118, %v118
  %v129 = vcombine.high %v125, %v125
  %v130 = vlaneseq
  %v131 = vshrl.u32 %v130, 7
  %v132 = vsub.s32 0, %v131
  %v133 = vrot.slane %v104, %v132
  %v134 = vlaneseq
  %v135 = vshrl.u32 %v134, 7
  %v136 = vsub.s32 0, %v135
  %v137 = vrot.slane %v118, %v136
  %v138 = vlaneseq
  %v139 = vshrl.u32 %v138, 7
  %v140 = vsub.s32 0, %v139
  %v141 = vrot.slane %v126, %v140
  %v142 = vlaneseq
  %v143 = vshrl.u32 %v142, 7
  %v144 = vsub.s32 0, %v143
  %v145 = vrot.slane %v128, %v144
  %v146 = vlaneseq
  %v147 = vshrl.u32 %v146, 7
  %v148 = vsub.s32 0, %v147
  %v149 = vrot.slane %v111, %v148
  %v150 = vlaneseq
  %v151 = vshrl.u32 %v150, 7
  %v152 = vsub.s32 0, %v151
  %v153 = vrot.slane %v125, %v152
  %v154 = vlaneseq
  %v155 = vshrl.u32 %v154, 7
  %v156 = vsub.s32 0, %v155
  %v157 = vrot.slane %v127, %v156
  %v158 = vlaneseq
  %v159 = vshrl.u32 %v158, 7
  %v160 = vsub.s32 0, %v159
  %v161 = vrot.slane %v129, %v160
  %162 = vset.pattern.permute.xlu0 0
  %163 = vperm.xlu0 %162, %v133
  %v164 = vpop.permute.xlu0 %163
  %166 = vset.pattern.permute.xlu0 0
  %167 = vperm.xlu0 %166, %v137
  %v168 = vpop.permute.xlu0 %167
  %170 = vset.pattern.permute.xlu0 0
  %171 = vperm.xlu0 %170, %v141
  %v172 = vpop.permute.xlu0 %171
  %174 = vset.pattern.permute.xlu0 0
  %175 = vperm.xlu0 %174, %v145
  %v176 = vpop.permute.xlu0 %175
  %178 = vset.pattern.permute.xlu0 0
  %179 = vperm.xlu0 %178, %v149
  %v180 = vpop.permute.xlu0 %179
  %182 = vset.pattern.permute.xlu0 0
  %183 = vperm.xlu0 %182, %v153
  %v184 = vpop.permute.xlu0 %183
  %186 = vset.pattern.permute.xlu0 0
  %187 = vperm.xlu0 %186, %v157
  %v188 = vpop.permute.xlu0 %187
  %190 = vset.pattern.permute.xlu0 0
  %191 = vperm.xlu0 %190, %v161
  %v192 = vpop.permute.xlu0 %191
  %v194 = vmul.f32 %v164, %v20
  %v195 = vmul.f32 %v164, %v21
  %v196 = vmul.f32 %v164, %v22
  %v197 = vmul.f32 %v164, %v23
  %v198 = vmul.f32 %v168, %v20
  %v199 = vmul.f32 %v168, %v21
  %v200 = vmul.f32 %v168, %v22
  %v201 = vmul.f32 %v168, %v23
  %v202 = vmul.f32 %v172, %v20
  %v203 = vmul.f32 %v172, %v21
  %v204 = vmul.f32 %v172, %v22
  %v205 = vmul.f32 %v172, %v23
  %v206 = vmul.f32 %v176, %v20
  %v207 = vmul.f32 %v176, %v21
  %v208 = vmul.f32 %v176, %v22
  %v209 = vmul.f32 %v176, %v23
  %v210 = vmul.f32 %v180, %v20
  %v211 = vmul.f32 %v180, %v21
  %v212 = vmul.f32 %v180, %v22
  %v213 = vmul.f32 %v180, %v23
  %v214 = vmul.f32 %v184, %v20
  %v215 = vmul.f32 %v184, %v21
  %v216 = vmul.f32 %v184, %v22
  %v217 = vmul.f32 %v184, %v23
  %v218 = vmul.f32 %v188, %v20
  %v219 = vmul.f32 %v188, %v21
  %v220 = vmul.f32 %v188, %v22
  %v221 = vmul.f32 %v188, %v23
  %v222 = vmul.f32 %v192, %v20
  %v223 = vmul.f32 %v192, %v21
  %v224 = vmul.f32 %v192, %v22
  %v225 = vmul.f32 %v192, %v23
  %v226 = vadd.f32 %v194, 0.0
  %v227 = vadd.f32 %v195, 0.0
  %v228 = vadd.f32 %v196, 0.0
  %v229 = vadd.f32 %v197, 0.0
  %v230 = vadd.f32 %v198, 0.0
  %v231 = vadd.f32 %v199, 0.0
  %v232 = vadd.f32 %v200, 0.0
  %v233 = vadd.f32 %v201, 0.0
  %v234 = vadd.f32 %v202, 0.0
  %v235 = vadd.f32 %v203, 0.0
  %v236 = vadd.f32 %v204, 0.0
  %v237 = vadd.f32 %v205, 0.0
  %v238 = vadd.f32 %v206, 0.0
  %v239 = vadd.f32 %v207, 0.0
  %v240 = vadd.f32 %v208, 0.0
  %v241 = vadd.f32 %v209, 0.0
  %v242 = vadd.f32 %v210, 0.0
  %v243 = vadd.f32 %v211, 0.0
  %v244 = vadd.f32 %v212, 0.0
  %v245 = vadd.f32 %v213, 0.0
  %v246 = vadd.f32 %v214, 0.0
  %v247 = vadd.f32 %v215, 0.0
  %v248 = vadd.f32 %v216, 0.0
  %v249 = vadd.f32 %v217, 0.0
  %v250 = vadd.f32 %v218, 0.0
  %v251 = vadd.f32 %v219, 0.0
  %v252 = vadd.f32 %v220, 0.0
  %v253 = vadd.f32 %v221, 0.0
  %v254 = vadd.f32 %v222, 0.0
  %v255 = vadd.f32 %v223, 0.0
  %v256 = vadd.f32 %v224, 0.0
  %v257 = vadd.f32 %v225, 0.0
  %v259 = vcombine.high %v45, %v45
  %v261 = vunpack.c.l.s4 1966171168
  %v262 = vunpack.c.0.s8 %v261
  %v263 = vlaneseq
  %v264 = vshrl.u32 %v263, 7
  %v265 = vsub.s32 %v262, %v264
  %v266 = vrot.slane %v45, %v265
  %v268 = vunpack.c.l.s4 1966171168
  %v269 = vunpack.c.0.s8 %v268
  %v270 = vlaneseq
  %v271 = vshrl.u32 %v270, 7
  %v272 = vsub.s32 %v269, %v271
  %v273 = vrot.slane %v259, %v272
  %v274 = vcombine.high %v266, %v266
  %v275 = vcombine.high %v273, %v273
  %v277 = vunpack.c.l.s4 1966171168
  %v278 = vunpack.c.0.s8 %v277
  %v279 = vlaneseq
  %v280 = vshrl.u32 %v279, 7
  %v281 = vsub.s32 %v278, %v280
  %v282 = vrot.slane %v266, %v281
  %v284 = vunpack.c.l.s4 1966171168
  %v285 = vunpack.c.0.s8 %v284
  %v286 = vlaneseq
  %v287 = vshrl.u32 %v286, 7
  %v288 = vsub.s32 %v285, %v287
  %v289 = vrot.slane %v273, %v288
  %v291 = vunpack.c.l.s4 1966171168
  %v292 = vunpack.c.0.s8 %v291
  %v293 = vlaneseq
  %v294 = vshrl.u32 %v293, 7
  %v295 = vsub.s32 %v292, %v294
  %v296 = vrot.slane %v274, %v295
  %v298 = vunpack.c.l.s4 1966171168
  %v299 = vunpack.c.0.s8 %v298
  %v300 = vlaneseq
  %v301 = vshrl.u32 %v300, 7
  %v302 = vsub.s32 %v299, %v301
  %v303 = vrot.slane %v275, %v302
  %v304 = vcombine.high %v282, %v282
  %v305 = vcombine.high %v289, %v289
  %v306 = vcombine.high %v296, %v296
  %v307 = vcombine.high %v303, %v303
  %v308 = vlaneseq
  %v309 = vshrl.u32 %v308, 7
  %v310 = vsub.s32 0, %v309
  %v311 = vrot.slane %v282, %v310
  %v312 = vlaneseq
  %v313 = vshrl.u32 %v312, 7
  %v314 = vsub.s32 0, %v313
  %v315 = vrot.slane %v296, %v314
  %v316 = vlaneseq
  %v317 = vshrl.u32 %v316, 7
  %v318 = vsub.s32 0, %v317
  %v319 = vrot.slane %v304, %v318
  %v320 = vlaneseq
  %v321 = vshrl.u32 %v320, 7
  %v322 = vsub.s32 0, %v321
  %v323 = vrot.slane %v306, %v322
  %v324 = vlaneseq
  %v325 = vshrl.u32 %v324, 7
  %v326 = vsub.s32 0, %v325
  %v327 = vrot.slane %v289, %v326
  %v328 = vlaneseq
  %v329 = vshrl.u32 %v328, 7
  %v330 = vsub.s32 0, %v329
  %v331 = vrot.slane %v303, %v330
  %v332 = vlaneseq
  %v333 = vshrl.u32 %v332, 7
  %v334 = vsub.s32 0, %v333
  %v335 = vrot.slane %v305, %v334
  %v336 = vlaneseq
  %v337 = vshrl.u32 %v336, 7
  %v338 = vsub.s32 0, %v337
  %v339 = vrot.slane %v307, %v338
  %340 = vset.pattern.permute.xlu0 0
  %341 = vperm.xlu0 %340, %v311
  %v342 = vpop.permute.xlu0 %341
  %344 = vset.pattern.permute.xlu0 0
  %345 = vperm.xlu0 %344, %v315
  %v346 = vpop.permute.xlu0 %345
  %348 = vset.pattern.permute.xlu0 0
  %349 = vperm.xlu0 %348, %v319
  %v350 = vpop.permute.xlu0 %349
  %352 = vset.pattern.permute.xlu0 0
  %353 = vperm.xlu0 %352, %v323
  %v354 = vpop.permute.xlu0 %353
  %356 = vset.pattern.permute.xlu0 0
  %357 = vperm.xlu0 %356, %v327
  %v358 = vpop.permute.xlu0 %357
  %360 = vset.pattern.permute.xlu0 0
  %361 = vperm.xlu0 %360, %v331
  %v362 = vpop.permute.xlu0 %361
  %364 = vset.pattern.permute.xlu0 0
  %365 = vperm.xlu0 %364, %v335
  %v366 = vpop.permute.xlu0 %365
  %368 = vset.pattern.permute.xlu0 0
  %369 = vperm.xlu0 %368, %v339
  %v370 = vpop.permute.xlu0 %369
  %v372 = vmul.f32 %v342, %v20
  %v373 = vmul.f32 %v342, %v21
  %v374 = vmul.f32 %v342, %v22
  %v375 = vmul.f32 %v342, %v23
  %v376 = vmul.f32 %v346, %v20
  %v377 = vmul.f32 %v346, %v21
  %v378 = vmul.f32 %v346, %v22
  %v379 = vmul.f32 %v346, %v23
  %v380 = vmul.f32 %v350, %v20
  %v381 = vmul.f32 %v350, %v21
  %v382 = vmul.f32 %v350, %v22
  %v383 = vmul.f32 %v350, %v23
  %v384 = vmul.f32 %v354, %v20
  %v385 = vmul.f32 %v354, %v21
  %v386 = vmul.f32 %v354, %v22
  %v387 = vmul.f32 %v354, %v23
  %v388 = vmul.f32 %v358, %v20
  %v389 = vmul.f32 %v358, %v21
  %v390 = vmul.f32 %v358, %v22
  %v391 = vmul.f32 %v358, %v23
  %v392 = vmul.f32 %v362, %v20
  %v393 = vmul.f32 %v362, %v21
  %v394 = vmul.f32 %v362, %v22
  %v395 = vmul.f32 %v362, %v23
  %v396 = vmul.f32 %v366, %v20
  %v397 = vmul.f32 %v366, %v21
  %v398 = vmul.f32 %v366, %v22
  %v399 = vmul.f32 %v366, %v23
  %v400 = vmul.f32 %v370, %v20
  %v401 = vmul.f32 %v370, %v21
  %v402 = vmul.f32 %v370, %v22
  %v403 = vmul.f32 %v370, %v23
  %436 = vrot.lane.b32.xlu0 %v372, 127
  %v437 = vpop.permute.xlu0 %436
  %438 = vrot.lane.b32.xlu0 %v373, 127
  %v439 = vpop.permute.xlu0 %438
  %440 = vrot.lane.b32.xlu0 %v374, 127
  %v441 = vpop.permute.xlu0 %440
  %442 = vrot.lane.b32.xlu0 %v375, 127
  %v443 = vpop.permute.xlu0 %442
  %444 = vrot.lane.b32.xlu0 %v376, 127
  %v445 = vpop.permute.xlu0 %444
  %446 = vrot.lane.b32.xlu0 %v377, 127
  %v447 = vpop.permute.xlu0 %446
  %448 = vrot.lane.b32.xlu0 %v378, 127
  %v449 = vpop.permute.xlu0 %448
  %450 = vrot.lane.b32.xlu0 %v379, 127
  %v451 = vpop.permute.xlu0 %450
  %452 = vrot.lane.b32.xlu0 %v380, 127
  %v453 = vpop.permute.xlu0 %452
  %454 = vrot.lane.b32.xlu0 %v381, 127
  %v455 = vpop.permute.xlu0 %454
  %456 = vrot.lane.b32.xlu0 %v382, 127
  %v457 = vpop.permute.xlu0 %456
  %458 = vrot.lane.b32.xlu0 %v383, 127
  %v459 = vpop.permute.xlu0 %458
  %460 = vrot.lane.b32.xlu0 %v384, 127
  %v461 = vpop.permute.xlu0 %460
  %462 = vrot.lane.b32.xlu0 %v385, 127
  %v463 = vpop.permute.xlu0 %462
  %464 = vrot.lane.b32.xlu0 %v386, 127
  %v465 = vpop.permute.xlu0 %464
  %466 = vrot.lane.b32.xlu0 %v387, 127
  %v467 = vpop.permute.xlu0 %466
  %468 = vrot.lane.b32.xlu0 %v388, 127
  %v469 = vpop.permute.xlu0 %468
  %470 = vrot.lane.b32.xlu0 %v389, 127
  %v471 = vpop.permute.xlu0 %470
  %472 = vrot.lane.b32.xlu0 %v390, 127
  %v473 = vpop.permute.xlu0 %472
  %474 = vrot.lane.b32.xlu0 %v391, 127
  %v475 = vpop.permute.xlu0 %474
  %476 = vrot.lane.b32.xlu0 %v392, 127
  %v477 = vpop.permute.xlu0 %476
  %478 = vrot.lane.b32.xlu0 %v393, 127
  %v479 = vpop.permute.xlu0 %478
  %480 = vrot.lane.b32.xlu0 %v394, 127
  %v481 = vpop.permute.xlu0 %480
  %482 = vrot.lane.b32.xlu0 %v395, 127
  %v483 = vpop.permute.xlu0 %482
  %484 = vrot.lane.b32.xlu0 %v396, 127
  %v485 = vpop.permute.xlu0 %484
  %486 = vrot.lane.b32.xlu0 %v397, 127
  %v487 = vpop.permute.xlu0 %486
  %488 = vrot.lane.b32.xlu0 %v398, 127
  %v489 = vpop.permute.xlu0 %488
  %490 = vrot.lane.b32.xlu0 %v399, 127
  %v491 = vpop.permute.xlu0 %490
  %492 = vrot.lane.b32.xlu0 %v400, 127
  %v493 = vpop.permute.xlu0 %492
  %494 = vrot.lane.b32.xlu0 %v401, 127
  %v495 = vpop.permute.xlu0 %494
  %496 = vrot.lane.b32.xlu0 %v402, 127
  %v497 = vpop.permute.xlu0 %496
  %498 = vrot.lane.b32.xlu0 %v403, 127
  %v499 = vpop.permute.xlu0 %498
  %vm500 = vcmask 1039360
  %v501 = vsel %vm500, %v437, %v439
  %v502 = vsel %vm500, %v441, %v443
  %v503 = vsel %vm500, %v445, %v447
  %v504 = vsel %vm500, %v449, %v451
  %v505 = vsel %vm500, %v453, %v455
  %v506 = vsel %vm500, %v457, %v459
  %v507 = vsel %vm500, %v461, %v463
  %v508 = vsel %vm500, %v465, %v467
  %v509 = vsel %vm500, %v469, %v471
  %v510 = vsel %vm500, %v473, %v475
  %v511 = vsel %vm500, %v477, %v479
  %v512 = vsel %vm500, %v481, %v483
  %v513 = vsel %vm500, %v485, %v487
  %v514 = vsel %vm500, %v489, %v491
  %v515 = vsel %vm500, %v493, %v495
  %v516 = vsel %vm500, %v497, %v499
  %v549 = vadd.f32 %v226, %v501
  %v550 = vadd.f32 %v227, %v439
  %v551 = vadd.f32 %v228, %v502
  %v552 = vadd.f32 %v229, %v443
  %v553 = vadd.f32 %v230, %v503
  %v554 = vadd.f32 %v231, %v447
  %v555 = vadd.f32 %v232, %v504
  %v556 = vadd.f32 %v233, %v451
  %v557 = vadd.f32 %v234, %v505
  %v558 = vadd.f32 %v235, %v455
  %v559 = vadd.f32 %v236, %v506
  %v560 = vadd.f32 %v237, %v459
  %v561 = vadd.f32 %v238, %v507
  %v562 = vadd.f32 %v239, %v463
  %v563 = vadd.f32 %v240, %v508
  %v564 = vadd.f32 %v241, %v467
  %v565 = vadd.f32 %v242, %v509
  %v566 = vadd.f32 %v243, %v471
  %v567 = vadd.f32 %v244, %v510
  %v568 = vadd.f32 %v245, %v475
  %v569 = vadd.f32 %v246, %v511
  %v570 = vadd.f32 %v247, %v479
  %v571 = vadd.f32 %v248, %v512
  %v572 = vadd.f32 %v249, %v483
  %v573 = vadd.f32 %v250, %v513
  %v574 = vadd.f32 %v251, %v487
  %v575 = vadd.f32 %v252, %v514
  %v576 = vadd.f32 %v253, %v491
  %v577 = vadd.f32 %v254, %v515
  %v578 = vadd.f32 %v255, %v495
  %v579 = vadd.f32 %v256, %v516
  %v580 = vadd.f32 %v257, %v499
  %v582 = vcombine.high %v46, %v46
  %v584 = vunpack.c.l.s4 1966171168
  %v585 = vunpack.c.0.s8 %v584
  %v586 = vlaneseq
  %v587 = vshrl.u32 %v586, 7
  %v588 = vsub.s32 %v585, %v587
  %v589 = vrot.slane %v46, %v588
  %v591 = vunpack.c.l.s4 1966171168
  %v592 = vunpack.c.0.s8 %v591
  %v593 = vlaneseq
  %v594 = vshrl.u32 %v593, 7
  %v595 = vsub.s32 %v592, %v594
  %v596 = vrot.slane %v582, %v595
  %v597 = vcombine.high %v589, %v589
  %v598 = vcombine.high %v596, %v596
  %v600 = vunpack.c.l.s4 1966171168
  %v601 = vunpack.c.0.s8 %v600
  %v602 = vlaneseq
  %v603 = vshrl.u32 %v602, 7
  %v604 = vsub.s32 %v601, %v603
  %v605 = vrot.slane %v589, %v604
  %v607 = vunpack.c.l.s4 1966171168
  %v608 = vunpack.c.0.s8 %v607
  %v609 = vlaneseq
  %v610 = vshrl.u32 %v609, 7
  %v611 = vsub.s32 %v608, %v610
  %v612 = vrot.slane %v596, %v611
  %v614 = vunpack.c.l.s4 1966171168
  %v615 = vunpack.c.0.s8 %v614
  %v616 = vlaneseq
  %v617 = vshrl.u32 %v616, 7
  %v618 = vsub.s32 %v615, %v617
  %v619 = vrot.slane %v597, %v618
  %v621 = vunpack.c.l.s4 1966171168
  %v622 = vunpack.c.0.s8 %v621
  %v623 = vlaneseq
  %v624 = vshrl.u32 %v623, 7
  %v625 = vsub.s32 %v622, %v624
  %v626 = vrot.slane %v598, %v625
  %v627 = vcombine.high %v605, %v605
  %v628 = vcombine.high %v612, %v612
  %v629 = vcombine.high %v619, %v619
  %v630 = vcombine.high %v626, %v626
  %v631 = vlaneseq
  %v632 = vshrl.u32 %v631, 7
  %v633 = vsub.s32 0, %v632
  %v634 = vrot.slane %v605, %v633
  %v635 = vlaneseq
  %v636 = vshrl.u32 %v635, 7
  %v637 = vsub.s32 0, %v636
  %v638 = vrot.slane %v619, %v637
  %v639 = vlaneseq
  %v640 = vshrl.u32 %v639, 7
  %v641 = vsub.s32 0, %v640
  %v642 = vrot.slane %v627, %v641
  %v643 = vlaneseq
  %v644 = vshrl.u32 %v643, 7
  %v645 = vsub.s32 0, %v644
  %v646 = vrot.slane %v629, %v645
  %v647 = vlaneseq
  %v648 = vshrl.u32 %v647, 7
  %v649 = vsub.s32 0, %v648
  %v650 = vrot.slane %v612, %v649
  %v651 = vlaneseq
  %v652 = vshrl.u32 %v651, 7
  %v653 = vsub.s32 0, %v652
  %v654 = vrot.slane %v626, %v653
  %v655 = vlaneseq
  %v656 = vshrl.u32 %v655, 7
  %v657 = vsub.s32 0, %v656
  %v658 = vrot.slane %v628, %v657
  %v659 = vlaneseq
  %v660 = vshrl.u32 %v659, 7
  %v661 = vsub.s32 0, %v660
  %v662 = vrot.slane %v630, %v661
  %663 = vset.pattern.permute.xlu0 0
  %664 = vperm.xlu0 %663, %v634
  %v665 = vpop.permute.xlu0 %664
  %667 = vset.pattern.permute.xlu0 0
  %668 = vperm.xlu0 %667, %v638
  %v669 = vpop.permute.xlu0 %668
  %671 = vset.pattern.permute.xlu0 0
  %672 = vperm.xlu0 %671, %v642
  %v673 = vpop.permute.xlu0 %672
  %675 = vset.pattern.permute.xlu0 0
  %676 = vperm.xlu0 %675, %v646
  %v677 = vpop.permute.xlu0 %676
  %679 = vset.pattern.permute.xlu0 0
  %680 = vperm.xlu0 %679, %v650
  %v681 = vpop.permute.xlu0 %680
  %683 = vset.pattern.permute.xlu0 0
  %684 = vperm.xlu0 %683, %v654
  %v685 = vpop.permute.xlu0 %684
  %687 = vset.pattern.permute.xlu0 0
  %688 = vperm.xlu0 %687, %v658
  %v689 = vpop.permute.xlu0 %688
  %691 = vset.pattern.permute.xlu0 0
  %692 = vperm.xlu0 %691, %v662
  %v693 = vpop.permute.xlu0 %692
  %v695 = vmul.f32 %v665, %v20
  %v696 = vmul.f32 %v665, %v21
  %v697 = vmul.f32 %v665, %v22
  %v698 = vmul.f32 %v665, %v23
  %v699 = vmul.f32 %v669, %v20
  %v700 = vmul.f32 %v669, %v21
  %v701 = vmul.f32 %v669, %v22
  %v702 = vmul.f32 %v669, %v23
  %v703 = vmul.f32 %v673, %v20
  %v704 = vmul.f32 %v673, %v21
  %v705 = vmul.f32 %v673, %v22
  %v706 = vmul.f32 %v673, %v23
  %v707 = vmul.f32 %v677, %v20
  %v708 = vmul.f32 %v677, %v21
  %v709 = vmul.f32 %v677, %v22
  %v710 = vmul.f32 %v677, %v23
  %v711 = vmul.f32 %v681, %v20
  %v712 = vmul.f32 %v681, %v21
  %v713 = vmul.f32 %v681, %v22
  %v714 = vmul.f32 %v681, %v23
  %v715 = vmul.f32 %v685, %v20
  %v716 = vmul.f32 %v685, %v21
  %v717 = vmul.f32 %v685, %v22
  %v718 = vmul.f32 %v685, %v23
  %v719 = vmul.f32 %v689, %v20
  %v720 = vmul.f32 %v689, %v21
  %v721 = vmul.f32 %v689, %v22
  %v722 = vmul.f32 %v689, %v23
  %v723 = vmul.f32 %v693, %v20
  %v724 = vmul.f32 %v693, %v21
  %v725 = vmul.f32 %v693, %v22
  %v726 = vmul.f32 %v693, %v23
  %759 = vrot.lane.b32.xlu0 %v695, 126
  %v760 = vpop.permute.xlu0 %759
  %761 = vrot.lane.b32.xlu0 %v696, 126
  %v762 = vpop.permute.xlu0 %761
  %763 = vrot.lane.b32.xlu0 %v697, 126
  %v764 = vpop.permute.xlu0 %763
  %765 = vrot.lane.b32.xlu0 %v698, 126
  %v766 = vpop.permute.xlu0 %765
  %767 = vrot.lane.b32.xlu0 %v699, 126
  %v768 = vpop.permute.xlu0 %767
  %769 = vrot.lane.b32.xlu0 %v700, 126
  %v770 = vpop.permute.xlu0 %769
  %771 = vrot.lane.b32.xlu0 %v701, 126
  %v772 = vpop.permute.xlu0 %771
  %773 = vrot.lane.b32.xlu0 %v702, 126
  %v774 = vpop.permute.xlu0 %773
  %775 = vrot.lane.b32.xlu0 %v703, 126
  %v776 = vpop.permute.xlu0 %775
  %777 = vrot.lane.b32.xlu0 %v704, 126
  %v778 = vpop.permute.xlu0 %777
  %779 = vrot.lane.b32.xlu0 %v705, 126
  %v780 = vpop.permute.xlu0 %779
  %781 = vrot.lane.b32.xlu0 %v706, 126
  %v782 = vpop.permute.xlu0 %781
  %783 = vrot.lane.b32.xlu0 %v707, 126
  %v784 = vpop.permute.xlu0 %783
  %785 = vrot.lane.b32.xlu0 %v708, 126
  %v786 = vpop.permute.xlu0 %785
  %787 = vrot.lane.b32.xlu0 %v709, 126
  %v788 = vpop.permute.xlu0 %787
  %789 = vrot.lane.b32.xlu0 %v710, 126
  %v790 = vpop.permute.xlu0 %789
  %791 = vrot.lane.b32.xlu0 %v711, 126
  %v792 = vpop.permute.xlu0 %791
  %793 = vrot.lane.b32.xlu0 %v712, 126
  %v794 = vpop.permute.xlu0 %793
  %795 = vrot.lane.b32.xlu0 %v713, 126
  %v796 = vpop.permute.xlu0 %795
  %797 = vrot.lane.b32.xlu0 %v714, 126
  %v798 = vpop.permute.xlu0 %797
  %799 = vrot.lane.b32.xlu0 %v715, 126
  %v800 = vpop.permute.xlu0 %799
  %801 = vrot.lane.b32.xlu0 %v716, 126
  %v802 = vpop.permute.xlu0 %801
  %803 = vrot.lane.b32.xlu0 %v717, 126
  %v804 = vpop.permute.xlu0 %803
  %805 = vrot.lane.b32.xlu0 %v718, 126
  %v806 = vpop.permute.xlu0 %805
  %807 = vrot.lane.b32.xlu0 %v719, 126
  %v808 = vpop.permute.xlu0 %807
  %809 = vrot.lane.b32.xlu0 %v720, 126
  %v810 = vpop.permute.xlu0 %809
  %811 = vrot.lane.b32.xlu0 %v721, 126
  %v812 = vpop.permute.xlu0 %811
  %813 = vrot.lane.b32.xlu0 %v722, 126
  %v814 = vpop.permute.xlu0 %813
  %815 = vrot.lane.b32.xlu0 %v723, 126
  %v816 = vpop.permute.xlu0 %815
  %817 = vrot.lane.b32.xlu0 %v724, 126
  %v818 = vpop.permute.xlu0 %817
  %819 = vrot.lane.b32.xlu0 %v725, 126
  %v820 = vpop.permute.xlu0 %819
  %821 = vrot.lane.b32.xlu0 %v726, 126
  %v822 = vpop.permute.xlu0 %821
  %vm823 = vcmask 1031168
  %v824 = vsel %vm823, %v760, %v762
  %v825 = vsel %vm823, %v764, %v766
  %v826 = vsel %vm823, %v768, %v770
  %v827 = vsel %vm823, %v772, %v774
  %v828 = vsel %vm823, %v776, %v778
  %v829 = vsel %vm823, %v780, %v782
  %v830 = vsel %vm823, %v784, %v786
  %v831 = vsel %vm823, %v788, %v790
  %v832 = vsel %vm823, %v792, %v794
  %v833 = vsel %vm823, %v796, %v798
  %v834 = vsel %vm823, %v800, %v802
  %v835 = vsel %vm823, %v804, %v806
  %v836 = vsel %vm823, %v808, %v810
  %v837 = vsel %vm823, %v812, %v814
  %v838 = vsel %vm823, %v816, %v818
  %v839 = vsel %vm823, %v820, %v822
  %v872 = vadd.f32 %v549, %v824
  %v873 = vadd.f32 %v550, %v762
  %v874 = vadd.f32 %v551, %v825
  %v875 = vadd.f32 %v552, %v766
  %v876 = vadd.f32 %v553, %v826
  %v877 = vadd.f32 %v554, %v770
  %v878 = vadd.f32 %v555, %v827
  %v879 = vadd.f32 %v556, %v774
  %v880 = vadd.f32 %v557, %v828
  %v881 = vadd.f32 %v558, %v778
  %v882 = vadd.f32 %v559, %v829
  %v883 = vadd.f32 %v560, %v782
  %v884 = vadd.f32 %v561, %v830
  %v885 = vadd.f32 %v562, %v786
  %v886 = vadd.f32 %v563, %v831
  %v887 = vadd.f32 %v564, %v790
  %v888 = vadd.f32 %v565, %v832
  %v889 = vadd.f32 %v566, %v794
  %v890 = vadd.f32 %v567, %v833
  %v891 = vadd.f32 %v568, %v798
  %v892 = vadd.f32 %v569, %v834
  %v893 = vadd.f32 %v570, %v802
  %v894 = vadd.f32 %v571, %v835
  %v895 = vadd.f32 %v572, %v806
  %v896 = vadd.f32 %v573, %v836
  %v897 = vadd.f32 %v574, %v810
  %v898 = vadd.f32 %v575, %v837
  %v899 = vadd.f32 %v576, %v814
  %v900 = vadd.f32 %v577, %v838
  %v901 = vadd.f32 %v578, %v818
  %v902 = vadd.f32 %v579, %v839
  %v903 = vadd.f32 %v580, %v822
  %v905 = vcombine.high %v47, %v47
  %v907 = vunpack.c.l.s4 1966171168
  %v908 = vunpack.c.0.s8 %v907
  %v909 = vlaneseq
  %v910 = vshrl.u32 %v909, 7
  %v911 = vsub.s32 %v908, %v910
  %v912 = vrot.slane %v47, %v911
  %v914 = vunpack.c.l.s4 1966171168
  %v915 = vunpack.c.0.s8 %v914
  %v916 = vlaneseq
  %v917 = vshrl.u32 %v916, 7
  %v918 = vsub.s32 %v915, %v917
  %v919 = vrot.slane %v905, %v918
  %v920 = vcombine.high %v912, %v912
  %v921 = vcombine.high %v919, %v919
  %v923 = vunpack.c.l.s4 1966171168
  %v924 = vunpack.c.0.s8 %v923
  %v925 = vlaneseq
  %v926 = vshrl.u32 %v925, 7
  %v927 = vsub.s32 %v924, %v926
  %v928 = vrot.slane %v912, %v927
  %v930 = vunpack.c.l.s4 1966171168
  %v931 = vunpack.c.0.s8 %v930
  %v932 = vlaneseq
  %v933 = vshrl.u32 %v932, 7
  %v934 = vsub.s32 %v931, %v933
  %v935 = vrot.slane %v919, %v934
  %v937 = vunpack.c.l.s4 1966171168
  %v938 = vunpack.c.0.s8 %v937
  %v939 = vlaneseq
  %v940 = vshrl.u32 %v939, 7
  %v941 = vsub.s32 %v938, %v940
  %v942 = vrot.slane %v920, %v941
  %v944 = vunpack.c.l.s4 1966171168
  %v945 = vunpack.c.0.s8 %v944
  %v946 = vlaneseq
  %v947 = vshrl.u32 %v946, 7
  %v948 = vsub.s32 %v945, %v947
  %v949 = vrot.slane %v921, %v948
  %v950 = vcombine.high %v928, %v928
  %v951 = vcombine.high %v935, %v935
  %v952 = vcombine.high %v942, %v942
  %v953 = vcombine.high %v949, %v949
  %v954 = vlaneseq
  %v955 = vshrl.u32 %v954, 7
  %v956 = vsub.s32 0, %v955
  %v957 = vrot.slane %v928, %v956
  %v958 = vlaneseq
  %v959 = vshrl.u32 %v958, 7
  %v960 = vsub.s32 0, %v959
  %v961 = vrot.slane %v942, %v960
  %v962 = vlaneseq
  %v963 = vshrl.u32 %v962, 7
  %v964 = vsub.s32 0, %v963
  %v965 = vrot.slane %v950, %v964
  %v966 = vlaneseq
  %v967 = vshrl.u32 %v966, 7
  %v968 = vsub.s32 0, %v967
  %v969 = vrot.slane %v952, %v968
  %v970 = vlaneseq
  %v971 = vshrl.u32 %v970, 7
  %v972 = vsub.s32 0, %v971
  %v973 = vrot.slane %v935, %v972
  %v974 = vlaneseq
  %v975 = vshrl.u32 %v974, 7
  %v976 = vsub.s32 0, %v975
  %v977 = vrot.slane %v949, %v976
  %v978 = vlaneseq
  %v979 = vshrl.u32 %v978, 7
  %v980 = vsub.s32 0, %v979
  %v981 = vrot.slane %v951, %v980
  %v982 = vlaneseq
  %v983 = vshrl.u32 %v982, 7
  %v984 = vsub.s32 0, %v983
  %v985 = vrot.slane %v953, %v984
  %986 = vset.pattern.permute.xlu0 0
  %987 = vperm.xlu0 %986, %v957
  %v988 = vpop.permute.xlu0 %987
  %990 = vset.pattern.permute.xlu0 0
  %991 = vperm.xlu0 %990, %v961
  %v992 = vpop.permute.xlu0 %991
  %994 = vset.pattern.permute.xlu0 0
  %995 = vperm.xlu0 %994, %v965
  %v996 = vpop.permute.xlu0 %995
  %998 = vset.pattern.permute.xlu0 0
  %999 = vperm.xlu0 %998, %v969
  %v1000 = vpop.permute.xlu0 %999
  %1002 = vset.pattern.permute.xlu0 0
  %1003 = vperm.xlu0 %1002, %v973
  %v1004 = vpop.permute.xlu0 %1003
  %1006 = vset.pattern.permute.xlu0 0
  %1007 = vperm.xlu0 %1006, %v977
  %v1008 = vpop.permute.xlu0 %1007
  %1010 = vset.pattern.permute.xlu0 0
  %1011 = vperm.xlu0 %1010, %v981
  %v1012 = vpop.permute.xlu0 %1011
  %1014 = vset.pattern.permute.xlu0 0
  %1015 = vperm.xlu0 %1014, %v985
  %v1016 = vpop.permute.xlu0 %1015
  %v1018 = vmul.f32 %v988, %v20
  %v1019 = vmul.f32 %v988, %v21
  %v1020 = vmul.f32 %v988, %v22
  %v1021 = vmul.f32 %v988, %v23
  %v1022 = vmul.f32 %v988, %v24
  %v1023 = vmul.f32 %v988, %v25
  %v1024 = vmul.f32 %v992, %v20
  %v1025 = vmul.f32 %v992, %v21
  %v1026 = vmul.f32 %v992, %v22
  %v1027 = vmul.f32 %v992, %v23
  %v1028 = vmul.f32 %v992, %v24
  %v1029 = vmul.f32 %v992, %v25
  %v1030 = vmul.f32 %v996, %v20
  %v1031 = vmul.f32 %v996, %v21
  %v1032 = vmul.f32 %v996, %v22
  %v1033 = vmul.f32 %v996, %v23
  %v1034 = vmul.f32 %v996, %v24
  %v1035 = vmul.f32 %v996, %v25
  %v1036 = vmul.f32 %v1000, %v20
  %v1037 = vmul.f32 %v1000, %v21
  %v1038 = vmul.f32 %v1000, %v22
  %v1039 = vmul.f32 %v1000, %v23
  %v1040 = vmul.f32 %v1000, %v24
  %v1041 = vmul.f32 %v1000, %v25
  %v1042 = vmul.f32 %v1004, %v20
  %v1043 = vmul.f32 %v1004, %v21
  %v1044 = vmul.f32 %v1004, %v22
  %v1045 = vmul.f32 %v1004, %v23
  %v1046 = vmul.f32 %v1004, %v24
  %v1047 = vmul.f32 %v1004, %v25
  %v1048 = vmul.f32 %v1008, %v20
  %v1049 = vmul.f32 %v1008, %v21
  %v1050 = vmul.f32 %v1008, %v22
  %v1051 = vmul.f32 %v1008, %v23
  %v1052 = vmul.f32 %v1008, %v24
  %v1053 = vmul.f32 %v1008, %v25
  %v1054 = vmul.f32 %v1012, %v20
  %v1055 = vmul.f32 %v1012, %v21
  %v1056 = vmul.f32 %v1012, %v22
  %v1057 = vmul.f32 %v1012, %v23
  %v1058 = vmul.f32 %v1012, %v24
  %v1059 = vmul.f32 %v1012, %v25
  %v1060 = vmul.f32 %v1016, %v20
  %v1061 = vmul.f32 %v1016, %v21
  %v1062 = vmul.f32 %v1016, %v22
  %v1063 = vmul.f32 %v1016, %v23
  %v1064 = vmul.f32 %v1016, %v24
  %v1065 = vmul.f32 %v1016, %v25
  %vm1114 = vcmask 1046528
  %v1115 = vrot.slane %v1018, 1
  %v1116 = vrot.slane %v1020, 1
  %v1117 = vsel %vm1114, %v1115, %v1116
  %v1118 = vrot.slane %v1019, 1
  %v1119 = vrot.slane %v1021, 1
  %v1120 = vsel %vm1114, %v1118, %v1119
  %v1121 = vrot.slane %v1022, 1
  %v1122 = vsel %vm1114, %v1116, %v1121
  %v1123 = vrot.slane %v1023, 1
  %v1124 = vsel %vm1114, %v1119, %v1123
  %v1125 = vrot.slane %v1024, 1
  %v1126 = vrot.slane %v1026, 1
  %v1127 = vsel %vm1114, %v1125, %v1126
  %v1128 = vrot.slane %v1025, 1
  %v1129 = vrot.slane %v1027, 1
  %v1130 = vsel %vm1114, %v1128, %v1129
  %v1131 = vrot.slane %v1028, 1
  %v1132 = vsel %vm1114, %v1126, %v1131
  %v1133 = vrot.slane %v1029, 1
  %v1134 = vsel %vm1114, %v1129, %v1133
  %v1135 = vrot.slane %v1030, 1
  %v1136 = vrot.slane %v1032, 1
  %v1137 = vsel %vm1114, %v1135, %v1136
  %v1138 = vrot.slane %v1031, 1
  %v1139 = vrot.slane %v1033, 1
  %v1140 = vsel %vm1114, %v1138, %v1139
  %v1141 = vrot.slane %v1034, 1
  %v1142 = vsel %vm1114, %v1136, %v1141
  %v1143 = vrot.slane %v1035, 1
  %v1144 = vsel %vm1114, %v1139, %v1143
  %v1145 = vrot.slane %v1036, 1
  %v1146 = vrot.slane %v1038, 1
  %v1147 = vsel %vm1114, %v1145, %v1146
  %v1148 = vrot.slane %v1037, 1
  %v1149 = vrot.slane %v1039, 1
  %v1150 = vsel %vm1114, %v1148, %v1149
  %v1151 = vrot.slane %v1040, 1
  %v1152 = vsel %vm1114, %v1146, %v1151
  %v1153 = vrot.slane %v1041, 1
  %v1154 = vsel %vm1114, %v1149, %v1153
  %v1155 = vrot.slane %v1042, 1
  %v1156 = vrot.slane %v1044, 1
  %v1157 = vsel %vm1114, %v1155, %v1156
  %v1158 = vrot.slane %v1043, 1
  %v1159 = vrot.slane %v1045, 1
  %v1160 = vsel %vm1114, %v1158, %v1159
  %v1161 = vrot.slane %v1046, 1
  %v1162 = vsel %vm1114, %v1156, %v1161
  %v1163 = vrot.slane %v1047, 1
  %v1164 = vsel %vm1114, %v1159, %v1163
  %v1165 = vrot.slane %v1048, 1
  %v1166 = vrot.slane %v1050, 1
  %v1167 = vsel %vm1114, %v1165, %v1166
  %v1168 = vrot.slane %v1049, 1
  %v1169 = vrot.slane %v1051, 1
  %v1170 = vsel %vm1114, %v1168, %v1169
  %v1171 = vrot.slane %v1052, 1
  %v1172 = vsel %vm1114, %v1166, %v1171
  %v1173 = vrot.slane %v1053, 1
  %v1174 = vsel %vm1114, %v1169, %v1173
  %v1175 = vrot.slane %v1054, 1
  %v1176 = vrot.slane %v1056, 1
  %v1177 = vsel %vm1114, %v1175, %v1176
  %v1178 = vrot.slane %v1055, 1
  %v1179 = vrot.slane %v1057, 1
  %v1180 = vsel %vm1114, %v1178, %v1179
  %v1181 = vrot.slane %v1058, 1
  %v1182 = vsel %vm1114, %v1176, %v1181
  %v1183 = vrot.slane %v1059, 1
  %v1184 = vsel %vm1114, %v1179, %v1183
  %v1185 = vrot.slane %v1060, 1
  %v1186 = vrot.slane %v1062, 1
  %v1187 = vsel %vm1114, %v1185, %v1186
  %v1188 = vrot.slane %v1061, 1
  %v1189 = vrot.slane %v1063, 1
  %v1190 = vsel %vm1114, %v1188, %v1189
  %v1191 = vrot.slane %v1064, 1
  %v1192 = vsel %vm1114, %v1186, %v1191
  %v1193 = vrot.slane %v1065, 1
  %v1194 = vsel %vm1114, %v1189, %v1193
  %v1227 = vadd.f32 %v872, %v1117
  %v1228 = vadd.f32 %v873, %v1120
  %v1229 = vadd.f32 %v874, %v1122
  %v1230 = vadd.f32 %v875, %v1124
  %v1231 = vadd.f32 %v876, %v1127
  %v1232 = vadd.f32 %v877, %v1130
  %v1233 = vadd.f32 %v878, %v1132
  %v1234 = vadd.f32 %v879, %v1134
  %v1235 = vadd.f32 %v880, %v1137
  %v1236 = vadd.f32 %v881, %v1140
  %v1237 = vadd.f32 %v882, %v1142
  %v1238 = vadd.f32 %v883, %v1144
  %v1239 = vadd.f32 %v884, %v1147
  %v1240 = vadd.f32 %v885, %v1150
  %v1241 = vadd.f32 %v886, %v1152
  %v1242 = vadd.f32 %v887, %v1154
  %v1243 = vadd.f32 %v888, %v1157
  %v1244 = vadd.f32 %v889, %v1160
  %v1245 = vadd.f32 %v890, %v1162
  %v1246 = vadd.f32 %v891, %v1164
  %v1247 = vadd.f32 %v892, %v1167
  %v1248 = vadd.f32 %v893, %v1170
  %v1249 = vadd.f32 %v894, %v1172
  %v1250 = vadd.f32 %v895, %v1174
  %v1251 = vadd.f32 %v896, %v1177
  %v1252 = vadd.f32 %v897, %v1180
  %v1253 = vadd.f32 %v898, %v1182
  %v1254 = vadd.f32 %v899, %v1184
  %v1255 = vadd.f32 %v900, %v1187
  %v1256 = vadd.f32 %v901, %v1190
  %v1257 = vadd.f32 %v902, %v1192
  %v1258 = vadd.f32 %v903, %v1194
  %v1260 = vcombine.high %v48, %v48
  %v1262 = vunpack.c.l.s4 1966171168
  %v1263 = vunpack.c.0.s8 %v1262
  %v1264 = vlaneseq
  %v1265 = vshrl.u32 %v1264, 7
  %v1266 = vsub.s32 %v1263, %v1265
  %v1267 = vrot.slane %v48, %v1266
  %v1269 = vunpack.c.l.s4 1966171168
  %v1270 = vunpack.c.0.s8 %v1269
  %v1271 = vlaneseq
  %v1272 = vshrl.u32 %v1271, 7
  %v1273 = vsub.s32 %v1270, %v1272
  %v1274 = vrot.slane %v1260, %v1273
  %v1275 = vcombine.high %v1267, %v1267
  %v1276 = vcombine.high %v1274, %v1274
  %v1278 = vunpack.c.l.s4 1966171168
  %v1279 = vunpack.c.0.s8 %v1278
  %v1280 = vlaneseq
  %v1281 = vshrl.u32 %v1280, 7
  %v1282 = vsub.s32 %v1279, %v1281
  %v1283 = vrot.slane %v1267, %v1282
  %v1285 = vunpack.c.l.s4 1966171168
  %v1286 = vunpack.c.0.s8 %v1285
  %v1287 = vlaneseq
  %v1288 = vshrl.u32 %v1287, 7
  %v1289 = vsub.s32 %v1286, %v1288
  %v1290 = vrot.slane %v1274, %v1289
  %v1292 = vunpack.c.l.s4 1966171168
  %v1293 = vunpack.c.0.s8 %v1292
  %v1294 = vlaneseq
  %v1295 = vshrl.u32 %v1294, 7
  %v1296 = vsub.s32 %v1293, %v1295
  %v1297 = vrot.slane %v1275, %v1296
  %v1299 = vunpack.c.l.s4 1966171168
  %v1300 = vunpack.c.0.s8 %v1299
  %v1301 = vlaneseq
  %v1302 = vshrl.u32 %v1301, 7
  %v1303 = vsub.s32 %v1300, %v1302
  %v1304 = vrot.slane %v1276, %v1303
  %v1305 = vcombine.high %v1283, %v1283
  %v1306 = vcombine.high %v1290, %v1290
  %v1307 = vcombine.high %v1297, %v1297
  %v1308 = vcombine.high %v1304, %v1304
  %v1309 = vlaneseq
  %v1310 = vshrl.u32 %v1309, 7
  %v1311 = vsub.s32 0, %v1310
  %v1312 = vrot.slane %v1283, %v1311
  %v1313 = vlaneseq
  %v1314 = vshrl.u32 %v1313, 7
  %v1315 = vsub.s32 0, %v1314
  %v1316 = vrot.slane %v1297, %v1315
  %v1317 = vlaneseq
  %v1318 = vshrl.u32 %v1317, 7
  %v1319 = vsub.s32 0, %v1318
  %v1320 = vrot.slane %v1305, %v1319
  %v1321 = vlaneseq
  %v1322 = vshrl.u32 %v1321, 7
  %v1323 = vsub.s32 0, %v1322
  %v1324 = vrot.slane %v1307, %v1323
  %v1325 = vlaneseq
  %v1326 = vshrl.u32 %v1325, 7
  %v1327 = vsub.s32 0, %v1326
  %v1328 = vrot.slane %v1290, %v1327
  %v1329 = vlaneseq
  %v1330 = vshrl.u32 %v1329, 7
  %v1331 = vsub.s32 0, %v1330
  %v1332 = vrot.slane %v1304, %v1331
  %v1333 = vlaneseq
  %v1334 = vshrl.u32 %v1333, 7
  %v1335 = vsub.s32 0, %v1334
  %v1336 = vrot.slane %v1306, %v1335
  %v1337 = vlaneseq
  %v1338 = vshrl.u32 %v1337, 7
  %v1339 = vsub.s32 0, %v1338
  %v1340 = vrot.slane %v1308, %v1339
  %1341 = vset.pattern.permute.xlu0 0
  %1342 = vperm.xlu0 %1341, %v1312
  %v1343 = vpop.permute.xlu0 %1342
  %1345 = vset.pattern.permute.xlu0 0
  %1346 = vperm.xlu0 %1345, %v1316
  %v1347 = vpop.permute.xlu0 %1346
  %1349 = vset.pattern.permute.xlu0 0
  %1350 = vperm.xlu0 %1349, %v1320
  %v1351 = vpop.permute.xlu0 %1350
  %1353 = vset.pattern.permute.xlu0 0
  %1354 = vperm.xlu0 %1353, %v1324
  %v1355 = vpop.permute.xlu0 %1354
  %1357 = vset.pattern.permute.xlu0 0
  %1358 = vperm.xlu0 %1357, %v1328
  %v1359 = vpop.permute.xlu0 %1358
  %1361 = vset.pattern.permute.xlu0 0
  %1362 = vperm.xlu0 %1361, %v1332
  %v1363 = vpop.permute.xlu0 %1362
  %1365 = vset.pattern.permute.xlu0 0
  %1366 = vperm.xlu0 %1365, %v1336
  %v1367 = vpop.permute.xlu0 %1366
  %1369 = vset.pattern.permute.xlu0 0
  %1370 = vperm.xlu0 %1369, %v1340
  %v1371 = vpop.permute.xlu0 %1370
  %v1373 = vmul.f32 %v1343, %v20
  %v1374 = vmul.f32 %v1343, %v21
  %v1375 = vmul.f32 %v1343, %v22
  %v1376 = vmul.f32 %v1343, %v23
  %v1377 = vmul.f32 %v1343, %v24
  %v1378 = vmul.f32 %v1343, %v25
  %v1379 = vmul.f32 %v1347, %v20
  %v1380 = vmul.f32 %v1347, %v21
  %v1381 = vmul.f32 %v1347, %v22
  %v1382 = vmul.f32 %v1347, %v23
  %v1383 = vmul.f32 %v1347, %v24
  %v1384 = vmul.f32 %v1347, %v25
  %v1385 = vmul.f32 %v1351, %v20
  %v1386 = vmul.f32 %v1351, %v21
  %v1387 = vmul.f32 %v1351, %v22
  %v1388 = vmul.f32 %v1351, %v23
  %v1389 = vmul.f32 %v1351, %v24
  %v1390 = vmul.f32 %v1351, %v25
  %v1391 = vmul.f32 %v1355, %v20
  %v1392 = vmul.f32 %v1355, %v21
  %v1393 = vmul.f32 %v1355, %v22
  %v1394 = vmul.f32 %v1355, %v23
  %v1395 = vmul.f32 %v1355, %v24
  %v1396 = vmul.f32 %v1355, %v25
  %v1397 = vmul.f32 %v1359, %v20
  %v1398 = vmul.f32 %v1359, %v21
  %v1399 = vmul.f32 %v1359, %v22
  %v1400 = vmul.f32 %v1359, %v23
  %v1401 = vmul.f32 %v1359, %v24
  %v1402 = vmul.f32 %v1359, %v25
  %v1403 = vmul.f32 %v1363, %v20
  %v1404 = vmul.f32 %v1363, %v21
  %v1405 = vmul.f32 %v1363, %v22
  %v1406 = vmul.f32 %v1363, %v23
  %v1407 = vmul.f32 %v1363, %v24
  %v1408 = vmul.f32 %v1363, %v25
  %v1409 = vmul.f32 %v1367, %v20
  %v1410 = vmul.f32 %v1367, %v21
  %v1411 = vmul.f32 %v1367, %v22
  %v1412 = vmul.f32 %v1367, %v23
  %v1413 = vmul.f32 %v1367, %v24
  %v1414 = vmul.f32 %v1367, %v25
  %v1415 = vmul.f32 %v1371, %v20
  %v1416 = vmul.f32 %v1371, %v21
  %v1417 = vmul.f32 %v1371, %v22
  %v1418 = vmul.f32 %v1371, %v23
  %v1419 = vmul.f32 %v1371, %v24
  %v1420 = vmul.f32 %v1371, %v25
  %v1469 = vrot.slane %v1373, 1
  %v1470 = vrot.slane %v1375, 1
  %v1471 = vsel %vm1114, %v1469, %v1470
  %v1472 = vrot.slane %v1374, 1
  %v1473 = vrot.slane %v1376, 1
  %v1474 = vsel %vm1114, %v1472, %v1473
  %v1475 = vrot.slane %v1377, 1
  %v1476 = vsel %vm1114, %v1470, %v1475
  %v1477 = vrot.slane %v1378, 1
  %v1478 = vsel %vm1114, %v1473, %v1477
  %v1479 = vrot.slane %v1379, 1
  %v1480 = vrot.slane %v1381, 1
  %v1481 = vsel %vm1114, %v1479, %v1480
  %v1482 = vrot.slane %v1380, 1
  %v1483 = vrot.slane %v1382, 1
  %v1484 = vsel %vm1114, %v1482, %v1483
  %v1485 = vrot.slane %v1383, 1
  %v1486 = vsel %vm1114, %v1480, %v1485
  %v1487 = vrot.slane %v1384, 1
  %v1488 = vsel %vm1114, %v1483, %v1487
  %v1489 = vrot.slane %v1385, 1
  %v1490 = vrot.slane %v1387, 1
  %v1491 = vsel %vm1114, %v1489, %v1490
  %v1492 = vrot.slane %v1386, 1
  %v1493 = vrot.slane %v1388, 1
  %v1494 = vsel %vm1114, %v1492, %v1493
  %v1495 = vrot.slane %v1389, 1
  %v1496 = vsel %vm1114, %v1490, %v1495
  %v1497 = vrot.slane %v1390, 1
  %v1498 = vsel %vm1114, %v1493, %v1497
  %v1499 = vrot.slane %v1391, 1
  %v1500 = vrot.slane %v1393, 1
  %v1501 = vsel %vm1114, %v1499, %v1500
  %v1502 = vrot.slane %v1392, 1
  %v1503 = vrot.slane %v1394, 1
  %v1504 = vsel %vm1114, %v1502, %v1503
  %v1505 = vrot.slane %v1395, 1
  %v1506 = vsel %vm1114, %v1500, %v1505
  %v1507 = vrot.slane %v1396, 1
  %v1508 = vsel %vm1114, %v1503, %v1507
  %v1509 = vrot.slane %v1397, 1
  %v1510 = vrot.slane %v1399, 1
  %v1511 = vsel %vm1114, %v1509, %v1510
  %v1512 = vrot.slane %v1398, 1
  %v1513 = vrot.slane %v1400, 1
  %v1514 = vsel %vm1114, %v1512, %v1513
  %v1515 = vrot.slane %v1401, 1
  %v1516 = vsel %vm1114, %v1510, %v1515
  %v1517 = vrot.slane %v1402, 1
  %v1518 = vsel %vm1114, %v1513, %v1517
  %v1519 = vrot.slane %v1403, 1
  %v1520 = vrot.slane %v1405, 1
  %v1521 = vsel %vm1114, %v1519, %v1520
  %v1522 = vrot.slane %v1404, 1
  %v1523 = vrot.slane %v1406, 1
  %v1524 = vsel %vm1114, %v1522, %v1523
  %v1525 = vrot.slane %v1407, 1
  %v1526 = vsel %vm1114, %v1520, %v1525
  %v1527 = vrot.slane %v1408, 1
  %v1528 = vsel %vm1114, %v1523, %v1527
  %v1529 = vrot.slane %v1409, 1
  %v1530 = vrot.slane %v1411, 1
  %v1531 = vsel %vm1114, %v1529, %v1530
  %v1532 = vrot.slane %v1410, 1
  %v1533 = vrot.slane %v1412, 1
  %v1534 = vsel %vm1114, %v1532, %v1533
  %v1535 = vrot.slane %v1413, 1
  %v1536 = vsel %vm1114, %v1530, %v1535
  %v1537 = vrot.slane %v1414, 1
  %v1538 = vsel %vm1114, %v1533, %v1537
  %v1539 = vrot.slane %v1415, 1
  %v1540 = vrot.slane %v1417, 1
  %v1541 = vsel %vm1114, %v1539, %v1540
  %v1542 = vrot.slane %v1416, 1
  %v1543 = vrot.slane %v1418, 1
  %v1544 = vsel %vm1114, %v1542, %v1543
  %v1545 = vrot.slane %v1419, 1
  %v1546 = vsel %vm1114, %v1540, %v1545
  %v1547 = vrot.slane %v1420, 1
  %v1548 = vsel %vm1114, %v1543, %v1547
  %1549 = vrot.lane.b32.xlu0 %v1471, 127
  %v1550 = vpop.permute.xlu0 %1549
  %1551 = vrot.lane.b32.xlu0 %v1474, 127
  %v1552 = vpop.permute.xlu0 %1551
  %1553 = vrot.lane.b32.xlu0 %v1476, 127
  %v1554 = vpop.permute.xlu0 %1553
  %1555 = vrot.lane.b32.xlu0 %v1478, 127
  %v1556 = vpop.permute.xlu0 %1555
  %1557 = vrot.lane.b32.xlu0 %v1481, 127
  %v1558 = vpop.permute.xlu0 %1557
  %1559 = vrot.lane.b32.xlu0 %v1484, 127
  %v1560 = vpop.permute.xlu0 %1559
  %1561 = vrot.lane.b32.xlu0 %v1486, 127
  %v1562 = vpop.permute.xlu0 %1561
  %1563 = vrot.lane.b32.xlu0 %v1488, 127
  %v1564 = vpop.permute.xlu0 %1563
  %1565 = vrot.lane.b32.xlu0 %v1491, 127
  %v1566 = vpop.permute.xlu0 %1565
  %1567 = vrot.lane.b32.xlu0 %v1494, 127
  %v1568 = vpop.permute.xlu0 %1567
  %1569 = vrot.lane.b32.xlu0 %v1496, 127
  %v1570 = vpop.permute.xlu0 %1569
  %1571 = vrot.lane.b32.xlu0 %v1498, 127
  %v1572 = vpop.permute.xlu0 %1571
  %1573 = vrot.lane.b32.xlu0 %v1501, 127
  %v1574 = vpop.permute.xlu0 %1573
  %1575 = vrot.lane.b32.xlu0 %v1504, 127
  %v1576 = vpop.permute.xlu0 %1575
  %1577 = vrot.lane.b32.xlu0 %v1506, 127
  %v1578 = vpop.permute.xlu0 %1577
  %1579 = vrot.lane.b32.xlu0 %v1508, 127
  %v1580 = vpop.permute.xlu0 %1579
  %1581 = vrot.lane.b32.xlu0 %v1511, 127
  %v1582 = vpop.permute.xlu0 %1581
  %1583 = vrot.lane.b32.xlu0 %v1514, 127
  %v1584 = vpop.permute.xlu0 %1583
  %1585 = vrot.lane.b32.xlu0 %v1516, 127
  %v1586 = vpop.permute.xlu0 %1585
  %1587 = vrot.lane.b32.xlu0 %v1518, 127
  %v1588 = vpop.permute.xlu0 %1587
  %1589 = vrot.lane.b32.xlu0 %v1521, 127
  %v1590 = vpop.permute.xlu0 %1589
  %1591 = vrot.lane.b32.xlu0 %v1524, 127
  %v1592 = vpop.permute.xlu0 %1591
  %1593 = vrot.lane.b32.xlu0 %v1526, 127
  %v1594 = vpop.permute.xlu0 %1593
  %1595 = vrot.lane.b32.xlu0 %v1528, 127
  %v1596 = vpop.permute.xlu0 %1595
  %1597 = vrot.lane.b32.xlu0 %v1531, 127
  %v1598 = vpop.permute.xlu0 %1597
  %1599 = vrot.lane.b32.xlu0 %v1534, 127
  %v1600 = vpop.permute.xlu0 %1599
  %1601 = vrot.lane.b32.xlu0 %v1536, 127
  %v1602 = vpop.permute.xlu0 %1601
  %1603 = vrot.lane.b32.xlu0 %v1538, 127
  %v1604 = vpop.permute.xlu0 %1603
  %1605 = vrot.lane.b32.xlu0 %v1541, 127
  %v1606 = vpop.permute.xlu0 %1605
  %1607 = vrot.lane.b32.xlu0 %v1544, 127
  %v1608 = vpop.permute.xlu0 %1607
  %1609 = vrot.lane.b32.xlu0 %v1546, 127
  %v1610 = vpop.permute.xlu0 %1609
  %1611 = vrot.lane.b32.xlu0 %v1548, 127
  %v1612 = vpop.permute.xlu0 %1611
  %v1613 = vsel %vm500, %v1550, %v1552
  %v1614 = vsel %vm500, %v1554, %v1556
  %v1615 = vsel %vm500, %v1558, %v1560
  %v1616 = vsel %vm500, %v1562, %v1564
  %v1617 = vsel %vm500, %v1566, %v1568
  %v1618 = vsel %vm500, %v1570, %v1572
  %v1619 = vsel %vm500, %v1574, %v1576
  %v1620 = vsel %vm500, %v1578, %v1580
  %v1621 = vsel %vm500, %v1582, %v1584
  %v1622 = vsel %vm500, %v1586, %v1588
  %v1623 = vsel %vm500, %v1590, %v1592
  %v1624 = vsel %vm500, %v1594, %v1596
  %v1625 = vsel %vm500, %v1598, %v1600
  %v1626 = vsel %vm500, %v1602, %v1604
  %v1627 = vsel %vm500, %v1606, %v1608
  %v1628 = vsel %vm500, %v1610, %v1612
  %v1661 = vadd.f32 %v1227, %v1613
  %v1662 = vadd.f32 %v1228, %v1552
  %v1663 = vadd.f32 %v1229, %v1614
  %v1664 = vadd.f32 %v1230, %v1556
  %v1665 = vadd.f32 %v1231, %v1615
  %v1666 = vadd.f32 %v1232, %v1560
  %v1667 = vadd.f32 %v1233, %v1616
  %v1668 = vadd.f32 %v1234, %v1564
  %v1669 = vadd.f32 %v1235, %v1617
  %v1670 = vadd.f32 %v1236, %v1568
  %v1671 = vadd.f32 %v1237, %v1618
  %v1672 = vadd.f32 %v1238, %v1572
  %v1673 = vadd.f32 %v1239, %v1619
  %v1674 = vadd.f32 %v1240, %v1576
  %v1675 = vadd.f32 %v1241, %v1620
  %v1676 = vadd.f32 %v1242, %v1580
  %v1677 = vadd.f32 %v1243, %v1621
  %v1678 = vadd.f32 %v1244, %v1584
  %v1679 = vadd.f32 %v1245, %v1622
  %v1680 = vadd.f32 %v1246, %v1588
  %v1681 = vadd.f32 %v1247, %v1623
  %v1682 = vadd.f32 %v1248, %v1592
  %v1683 = vadd.f32 %v1249, %v1624
  %v1684 = vadd.f32 %v1250, %v1596
  %v1685 = vadd.f32 %v1251, %v1625
  %v1686 = vadd.f32 %v1252, %v1600
  %v1687 = vadd.f32 %v1253, %v1626
  %v1688 = vadd.f32 %v1254, %v1604
  %v1689 = vadd.f32 %v1255, %v1627
  %v1690 = vadd.f32 %v1256, %v1608
  %v1691 = vadd.f32 %v1257, %v1628
  %v1692 = vadd.f32 %v1258, %v1612
  %v1694 = vcombine.high %v49, %v49
  %v1696 = vunpack.c.l.s4 1966171168
  %v1697 = vunpack.c.0.s8 %v1696
  %v1698 = vlaneseq
  %v1699 = vshrl.u32 %v1698, 7
  %v1700 = vsub.s32 %v1697, %v1699
  %v1701 = vrot.slane %v49, %v1700
  %v1703 = vunpack.c.l.s4 1966171168
  %v1704 = vunpack.c.0.s8 %v1703
  %v1705 = vlaneseq
  %v1706 = vshrl.u32 %v1705, 7
  %v1707 = vsub.s32 %v1704, %v1706
  %v1708 = vrot.slane %v1694, %v1707
  %v1709 = vcombine.high %v1701, %v1701
  %v1710 = vcombine.high %v1708, %v1708
  %v1712 = vunpack.c.l.s4 1966171168
  %v1713 = vunpack.c.0.s8 %v1712
  %v1714 = vlaneseq
  %v1715 = vshrl.u32 %v1714, 7
  %v1716 = vsub.s32 %v1713, %v1715
  %v1717 = vrot.slane %v1701, %v1716
  %v1719 = vunpack.c.l.s4 1966171168
  %v1720 = vunpack.c.0.s8 %v1719
  %v1721 = vlaneseq
  %v1722 = vshrl.u32 %v1721, 7
  %v1723 = vsub.s32 %v1720, %v1722
  %v1724 = vrot.slane %v1708, %v1723
  %v1726 = vunpack.c.l.s4 1966171168
  %v1727 = vunpack.c.0.s8 %v1726
  %v1728 = vlaneseq
  %v1729 = vshrl.u32 %v1728, 7
  %v1730 = vsub.s32 %v1727, %v1729
  %v1731 = vrot.slane %v1709, %v1730
  %v1733 = vunpack.c.l.s4 1966171168
  %v1734 = vunpack.c.0.s8 %v1733
  %v1735 = vlaneseq
  %v1736 = vshrl.u32 %v1735, 7
  %v1737 = vsub.s32 %v1734, %v1736
  %v1738 = vrot.slane %v1710, %v1737
  %v1739 = vcombine.high %v1717, %v1717
  %v1740 = vcombine.high %v1724, %v1724
  %v1741 = vcombine.high %v1731, %v1731
  %v1742 = vcombine.high %v1738, %v1738
  %v1743 = vlaneseq
  %v1744 = vshrl.u32 %v1743, 7
  %v1745 = vsub.s32 0, %v1744
  %v1746 = vrot.slane %v1717, %v1745
  %v1747 = vlaneseq
  %v1748 = vshrl.u32 %v1747, 7
  %v1749 = vsub.s32 0, %v1748
  %v1750 = vrot.slane %v1731, %v1749
  %v1751 = vlaneseq
  %v1752 = vshrl.u32 %v1751, 7
  %v1753 = vsub.s32 0, %v1752
  %v1754 = vrot.slane %v1739, %v1753
  %v1755 = vlaneseq
  %v1756 = vshrl.u32 %v1755, 7
  %v1757 = vsub.s32 0, %v1756
  %v1758 = vrot.slane %v1741, %v1757
  %v1759 = vlaneseq
  %v1760 = vshrl.u32 %v1759, 7
  %v1761 = vsub.s32 0, %v1760
  %v1762 = vrot.slane %v1724, %v1761
  %v1763 = vlaneseq
  %v1764 = vshrl.u32 %v1763, 7
  %v1765 = vsub.s32 0, %v1764
  %v1766 = vrot.slane %v1738, %v1765
  %v1767 = vlaneseq
  %v1768 = vshrl.u32 %v1767, 7
  %v1769 = vsub.s32 0, %v1768
  %v1770 = vrot.slane %v1740, %v1769
  %v1771 = vlaneseq
  %v1772 = vshrl.u32 %v1771, 7
  %v1773 = vsub.s32 0, %v1772
  %v1774 = vrot.slane %v1742, %v1773
  %1775 = vset.pattern.permute.xlu0 0
  %1776 = vperm.xlu0 %1775, %v1746
  %v1777 = vpop.permute.xlu0 %1776
  %1779 = vset.pattern.permute.xlu0 0
  %1780 = vperm.xlu0 %1779, %v1750
  %v1781 = vpop.permute.xlu0 %1780
  %1783 = vset.pattern.permute.xlu0 0
  %1784 = vperm.xlu0 %1783, %v1754
  %v1785 = vpop.permute.xlu0 %1784
  %1787 = vset.pattern.permute.xlu0 0
  %1788 = vperm.xlu0 %1787, %v1758
  %v1789 = vpop.permute.xlu0 %1788
  %1791 = vset.pattern.permute.xlu0 0
  %1792 = vperm.xlu0 %1791, %v1762
  %v1793 = vpop.permute.xlu0 %1792
  %1795 = vset.pattern.permute.xlu0 0
  %1796 = vperm.xlu0 %1795, %v1766
  %v1797 = vpop.permute.xlu0 %1796
  %1799 = vset.pattern.permute.xlu0 0
  %1800 = vperm.xlu0 %1799, %v1770
  %v1801 = vpop.permute.xlu0 %1800
  %1803 = vset.pattern.permute.xlu0 0
  %1804 = vperm.xlu0 %1803, %v1774
  %v1805 = vpop.permute.xlu0 %1804
  %v1807 = vmul.f32 %v1777, %v20
  %v1808 = vmul.f32 %v1777, %v21
  %v1809 = vmul.f32 %v1777, %v22
  %v1810 = vmul.f32 %v1777, %v23
  %v1811 = vmul.f32 %v1777, %v24
  %v1812 = vmul.f32 %v1777, %v25
  %v1813 = vmul.f32 %v1781, %v20
  %v1814 = vmul.f32 %v1781, %v21
  %v1815 = vmul.f32 %v1781, %v22
  %v1816 = vmul.f32 %v1781, %v23
  %v1817 = vmul.f32 %v1781, %v24
  %v1818 = vmul.f32 %v1781, %v25
  %v1819 = vmul.f32 %v1785, %v20
  %v1820 = vmul.f32 %v1785, %v21
  %v1821 = vmul.f32 %v1785, %v22
  %v1822 = vmul.f32 %v1785, %v23
  %v1823 = vmul.f32 %v1785, %v24
  %v1824 = vmul.f32 %v1785, %v25
  %v1825 = vmul.f32 %v1789, %v20
  %v1826 = vmul.f32 %v1789, %v21
  %v1827 = vmul.f32 %v1789, %v22
  %v1828 = vmul.f32 %v1789, %v23
  %v1829 = vmul.f32 %v1789, %v24
  %v1830 = vmul.f32 %v1789, %v25
  %v1831 = vmul.f32 %v1793, %v20
  %v1832 = vmul.f32 %v1793, %v21
  %v1833 = vmul.f32 %v1793, %v22
  %v1834 = vmul.f32 %v1793, %v23
  %v1835 = vmul.f32 %v1793, %v24
  %v1836 = vmul.f32 %v1793, %v25
  %v1837 = vmul.f32 %v1797, %v20
  %v1838 = vmul.f32 %v1797, %v21
  %v1839 = vmul.f32 %v1797, %v22
  %v1840 = vmul.f32 %v1797, %v23
  %v1841 = vmul.f32 %v1797, %v24
  %v1842 = vmul.f32 %v1797, %v25
  %v1843 = vmul.f32 %v1801, %v20
  %v1844 = vmul.f32 %v1801, %v21
  %v1845 = vmul.f32 %v1801, %v22
  %v1846 = vmul.f32 %v1801, %v23
  %v1847 = vmul.f32 %v1801, %v24
  %v1848 = vmul.f32 %v1801, %v25
  %v1849 = vmul.f32 %v1805, %v20
  %v1850 = vmul.f32 %v1805, %v21
  %v1851 = vmul.f32 %v1805, %v22
  %v1852 = vmul.f32 %v1805, %v23
  %v1853 = vmul.f32 %v1805, %v24
  %v1854 = vmul.f32 %v1805, %v25
  %v1903 = vrot.slane %v1807, 1
  %v1904 = vrot.slane %v1809, 1
  %v1905 = vsel %vm1114, %v1903, %v1904
  %v1906 = vrot.slane %v1808, 1
  %v1907 = vrot.slane %v1810, 1
  %v1908 = vsel %vm1114, %v1906, %v1907
  %v1909 = vrot.slane %v1811, 1
  %v1910 = vsel %vm1114, %v1904, %v1909
  %v1911 = vrot.slane %v1812, 1
  %v1912 = vsel %vm1114, %v1907, %v1911
  %v1913 = vrot.slane %v1813, 1
  %v1914 = vrot.slane %v1815, 1
  %v1915 = vsel %vm1114, %v1913, %v1914
  %v1916 = vrot.slane %v1814, 1
  %v1917 = vrot.slane %v1816, 1
  %v1918 = vsel %vm1114, %v1916, %v1917
  %v1919 = vrot.slane %v1817, 1
  %v1920 = vsel %vm1114, %v1914, %v1919
  %v1921 = vrot.slane %v1818, 1
  %v1922 = vsel %vm1114, %v1917, %v1921
  %v1923 = vrot.slane %v1819, 1
  %v1924 = vrot.slane %v1821, 1
  %v1925 = vsel %vm1114, %v1923, %v1924
  %v1926 = vrot.slane %v1820, 1
  %v1927 = vrot.slane %v1822, 1
  %v1928 = vsel %vm1114, %v1926, %v1927
  %v1929 = vrot.slane %v1823, 1
  %v1930 = vsel %vm1114, %v1924, %v1929
  %v1931 = vrot.slane %v1824, 1
  %v1932 = vsel %vm1114, %v1927, %v1931
  %v1933 = vrot.slane %v1825, 1
  %v1934 = vrot.slane %v1827, 1
  %v1935 = vsel %vm1114, %v1933, %v1934
  %v1936 = vrot.slane %v1826, 1
  %v1937 = vrot.slane %v1828, 1
  %v1938 = vsel %vm1114, %v1936, %v1937
  %v1939 = vrot.slane %v1829, 1
  %v1940 = vsel %vm1114, %v1934, %v1939
  %v1941 = vrot.slane %v1830, 1
  %v1942 = vsel %vm1114, %v1937, %v1941
  %v1943 = vrot.slane %v1831, 1
  %v1944 = vrot.slane %v1833, 1
  %v1945 = vsel %vm1114, %v1943, %v1944
  %v1946 = vrot.slane %v1832, 1
  %v1947 = vrot.slane %v1834, 1
  %v1948 = vsel %vm1114, %v1946, %v1947
  %v1949 = vrot.slane %v1835, 1
  %v1950 = vsel %vm1114, %v1944, %v1949
  %v1951 = vrot.slane %v1836, 1
  %v1952 = vsel %vm1114, %v1947, %v1951
  %v1953 = vrot.slane %v1837, 1
  %v1954 = vrot.slane %v1839, 1
  %v1955 = vsel %vm1114, %v1953, %v1954
  %v1956 = vrot.slane %v1838, 1
  %v1957 = vrot.slane %v1840, 1
  %v1958 = vsel %vm1114, %v1956, %v1957
  %v1959 = vrot.slane %v1841, 1
  %v1960 = vsel %vm1114, %v1954, %v1959
  %v1961 = vrot.slane %v1842, 1
  %v1962 = vsel %vm1114, %v1957, %v1961
  %v1963 = vrot.slane %v1843, 1
  %v1964 = vrot.slane %v1845, 1
  %v1965 = vsel %vm1114, %v1963, %v1964
  %v1966 = vrot.slane %v1844, 1
  %v1967 = vrot.slane %v1846, 1
  %v1968 = vsel %vm1114, %v1966, %v1967
  %v1969 = vrot.slane %v1847, 1
  %v1970 = vsel %vm1114, %v1964, %v1969
  %v1971 = vrot.slane %v1848, 1
  %v1972 = vsel %vm1114, %v1967, %v1971
  %v1973 = vrot.slane %v1849, 1
  %v1974 = vrot.slane %v1851, 1
  %v1975 = vsel %vm1114, %v1973, %v1974
  %v1976 = vrot.slane %v1850, 1
  %v1977 = vrot.slane %v1852, 1
  %v1978 = vsel %vm1114, %v1976, %v1977
  %v1979 = vrot.slane %v1853, 1
  %v1980 = vsel %vm1114, %v1974, %v1979
  %v1981 = vrot.slane %v1854, 1
  %v1982 = vsel %vm1114, %v1977, %v1981
  %1983 = vrot.lane.b32.xlu0 %v1905, 126
  %v1984 = vpop.permute.xlu0 %1983
  %1985 = vrot.lane.b32.xlu0 %v1908, 126
  %v1986 = vpop.permute.xlu0 %1985
  %1987 = vrot.lane.b32.xlu0 %v1910, 126
  %v1988 = vpop.permute.xlu0 %1987
  %1989 = vrot.lane.b32.xlu0 %v1912, 126
  %v1990 = vpop.permute.xlu0 %1989
  %1991 = vrot.lane.b32.xlu0 %v1915, 126
  %v1992 = vpop.permute.xlu0 %1991
  %1993 = vrot.lane.b32.xlu0 %v1918, 126
  %v1994 = vpop.permute.xlu0 %1993
  %1995 = vrot.lane.b32.xlu0 %v1920, 126
  %v1996 = vpop.permute.xlu0 %1995
  %1997 = vrot.lane.b32.xlu0 %v1922, 126
  %v1998 = vpop.permute.xlu0 %1997
  %1999 = vrot.lane.b32.xlu0 %v1925, 126
  %v2000 = vpop.permute.xlu0 %1999
  %2001 = vrot.lane.b32.xlu0 %v1928, 126
  %v2002 = vpop.permute.xlu0 %2001
  %2003 = vrot.lane.b32.xlu0 %v1930, 126
  %v2004 = vpop.permute.xlu0 %2003
  %2005 = vrot.lane.b32.xlu0 %v1932, 126
  %v2006 = vpop.permute.xlu0 %2005
  %2007 = vrot.lane.b32.xlu0 %v1935, 126
  %v2008 = vpop.permute.xlu0 %2007
  %2009 = vrot.lane.b32.xlu0 %v1938, 126
  %v2010 = vpop.permute.xlu0 %2009
  %2011 = vrot.lane.b32.xlu0 %v1940, 126
  %v2012 = vpop.permute.xlu0 %2011
  %2013 = vrot.lane.b32.xlu0 %v1942, 126
  %v2014 = vpop.permute.xlu0 %2013
  %2015 = vrot.lane.b32.xlu0 %v1945, 126
  %v2016 = vpop.permute.xlu0 %2015
  %2017 = vrot.lane.b32.xlu0 %v1948, 126
  %v2018 = vpop.permute.xlu0 %2017
  %2019 = vrot.lane.b32.xlu0 %v1950, 126
  %v2020 = vpop.permute.xlu0 %2019
  %2021 = vrot.lane.b32.xlu0 %v1952, 126
  %v2022 = vpop.permute.xlu0 %2021
  %2023 = vrot.lane.b32.xlu0 %v1955, 126
  %v2024 = vpop.permute.xlu0 %2023
  %2025 = vrot.lane.b32.xlu0 %v1958, 126
  %v2026 = vpop.permute.xlu0 %2025
  %2027 = vrot.lane.b32.xlu0 %v1960, 126
  %v2028 = vpop.permute.xlu0 %2027
  %2029 = vrot.lane.b32.xlu0 %v1962, 126
  %v2030 = vpop.permute.xlu0 %2029
  %2031 = vrot.lane.b32.xlu0 %v1965, 126
  %v2032 = vpop.permute.xlu0 %2031
  %2033 = vrot.lane.b32.xlu0 %v1968, 126
  %v2034 = vpop.permute.xlu0 %2033
  %2035 = vrot.lane.b32.xlu0 %v1970, 126
  %v2036 = vpop.permute.xlu0 %2035
  %2037 = vrot.lane.b32.xlu0 %v1972, 126
  %v2038 = vpop.permute.xlu0 %2037
  %2039 = vrot.lane.b32.xlu0 %v1975, 126
  %v2040 = vpop.permute.xlu0 %2039
  %2041 = vrot.lane.b32.xlu0 %v1978, 126
  %v2042 = vpop.permute.xlu0 %2041
  %2043 = vrot.lane.b32.xlu0 %v1980, 126
  %v2044 = vpop.permute.xlu0 %2043
  %2045 = vrot.lane.b32.xlu0 %v1982, 126
  %v2046 = vpop.permute.xlu0 %2045
  %v2047 = vsel %vm823, %v1984, %v1986
  %v2048 = vsel %vm823, %v1988, %v1990
  %v2049 = vsel %vm823, %v1992, %v1994
  %v2050 = vsel %vm823, %v1996, %v1998
  %v2051 = vsel %vm823, %v2000, %v2002
  %v2052 = vsel %vm823, %v2004, %v2006
  %v2053 = vsel %vm823, %v2008, %v2010
  %v2054 = vsel %vm823, %v2012, %v2014
  %v2055 = vsel %vm823, %v2016, %v2018
  %v2056 = vsel %vm823, %v2020, %v2022
  %v2057 = vsel %vm823, %v2024, %v2026
  %v2058 = vsel %vm823, %v2028, %v2030
  %v2059 = vsel %vm823, %v2032, %v2034
  %v2060 = vsel %vm823, %v2036, %v2038
  %v2061 = vsel %vm823, %v2040, %v2042
  %v2062 = vsel %vm823, %v2044, %v2046
  %v2095 = vadd.f32 %v1661, %v2047
  %v2096 = vadd.f32 %v1662, %v1986
  %v2097 = vadd.f32 %v1663, %v2048
  %v2098 = vadd.f32 %v1664, %v1990
  %v2099 = vadd.f32 %v1665, %v2049
  %v2100 = vadd.f32 %v1666, %v1994
  %v2101 = vadd.f32 %v1667, %v2050
  %v2102 = vadd.f32 %v1668, %v1998
  %v2103 = vadd.f32 %v1669, %v2051
  %v2104 = vadd.f32 %v1670, %v2002
  %v2105 = vadd.f32 %v1671, %v2052
  %v2106 = vadd.f32 %v1672, %v2006
  %v2107 = vadd.f32 %v1673, %v2053
  %v2108 = vadd.f32 %v1674, %v2010
  %v2109 = vadd.f32 %v1675, %v2054
  %v2110 = vadd.f32 %v1676, %v2014
  %v2111 = vadd.f32 %v1677, %v2055
  %v2112 = vadd.f32 %v1678, %v2018
  %v2113 = vadd.f32 %v1679, %v2056
  %v2114 = vadd.f32 %v1680, %v2022
  %v2115 = vadd.f32 %v1681, %v2057
  %v2116 = vadd.f32 %v1682, %v2026
  %v2117 = vadd.f32 %v1683, %v2058
  %v2118 = vadd.f32 %v1684, %v2030
  %v2119 = vadd.f32 %v1685, %v2059
  %v2120 = vadd.f32 %v1686, %v2034
  %v2121 = vadd.f32 %v1687, %v2060
  %v2122 = vadd.f32 %v1688, %v2038
  %v2123 = vadd.f32 %v1689, %v2061
  %v2124 = vadd.f32 %v1690, %v2042
  %v2125 = vadd.f32 %v1691, %v2062
  %v2126 = vadd.f32 %v1692, %v2046
  %v2128 = vcombine.high %v50, %v50
  %v2130 = vunpack.c.l.s4 1966171168
  %v2131 = vunpack.c.0.s8 %v2130
  %v2132 = vlaneseq
  %v2133 = vshrl.u32 %v2132, 7
  %v2134 = vsub.s32 %v2131, %v2133
  %v2135 = vrot.slane %v50, %v2134
  %v2137 = vunpack.c.l.s4 1966171168
  %v2138 = vunpack.c.0.s8 %v2137
  %v2139 = vlaneseq
  %v2140 = vshrl.u32 %v2139, 7
  %v2141 = vsub.s32 %v2138, %v2140
  %v2142 = vrot.slane %v2128, %v2141
  %v2143 = vcombine.high %v2135, %v2135
  %v2144 = vcombine.high %v2142, %v2142
  %v2146 = vunpack.c.l.s4 1966171168
  %v2147 = vunpack.c.0.s8 %v2146
  %v2148 = vlaneseq
  %v2149 = vshrl.u32 %v2148, 7
  %v2150 = vsub.s32 %v2147, %v2149
  %v2151 = vrot.slane %v2135, %v2150
  %v2153 = vunpack.c.l.s4 1966171168
  %v2154 = vunpack.c.0.s8 %v2153
  %v2155 = vlaneseq
  %v2156 = vshrl.u32 %v2155, 7
  %v2157 = vsub.s32 %v2154, %v2156
  %v2158 = vrot.slane %v2142, %v2157
  %v2160 = vunpack.c.l.s4 1966171168
  %v2161 = vunpack.c.0.s8 %v2160
  %v2162 = vlaneseq
  %v2163 = vshrl.u32 %v2162, 7
  %v2164 = vsub.s32 %v2161, %v2163
  %v2165 = vrot.slane %v2143, %v2164
  %v2167 = vunpack.c.l.s4 1966171168
  %v2168 = vunpack.c.0.s8 %v2167
  %v2169 = vlaneseq
  %v2170 = vshrl.u32 %v2169, 7
  %v2171 = vsub.s32 %v2168, %v2170
  %v2172 = vrot.slane %v2144, %v2171
  %v2173 = vcombine.high %v2151, %v2151
  %v2174 = vcombine.high %v2158, %v2158
  %v2175 = vcombine.high %v2165, %v2165
  %v2176 = vcombine.high %v2172, %v2172
  %v2177 = vlaneseq
  %v2178 = vshrl.u32 %v2177, 7
  %v2179 = vsub.s32 0, %v2178
  %v2180 = vrot.slane %v2151, %v2179
  %v2181 = vlaneseq
  %v2182 = vshrl.u32 %v2181, 7
  %v2183 = vsub.s32 0, %v2182
  %v2184 = vrot.slane %v2165, %v2183
  %v2185 = vlaneseq
  %v2186 = vshrl.u32 %v2185, 7
  %v2187 = vsub.s32 0, %v2186
  %v2188 = vrot.slane %v2173, %v2187
  %v2189 = vlaneseq
  %v2190 = vshrl.u32 %v2189, 7
  %v2191 = vsub.s32 0, %v2190
  %v2192 = vrot.slane %v2175, %v2191
  %v2193 = vlaneseq
  %v2194 = vshrl.u32 %v2193, 7
  %v2195 = vsub.s32 0, %v2194
  %v2196 = vrot.slane %v2158, %v2195
  %v2197 = vlaneseq
  %v2198 = vshrl.u32 %v2197, 7
  %v2199 = vsub.s32 0, %v2198
  %v2200 = vrot.slane %v2172, %v2199
  %v2201 = vlaneseq
  %v2202 = vshrl.u32 %v2201, 7
  %v2203 = vsub.s32 0, %v2202
  %v2204 = vrot.slane %v2174, %v2203
  %v2205 = vlaneseq
  %v2206 = vshrl.u32 %v2205, 7
  %v2207 = vsub.s32 0, %v2206
  %v2208 = vrot.slane %v2176, %v2207
  %2209 = vset.pattern.permute.xlu0 0
  %2210 = vperm.xlu0 %2209, %v2180
  %v2211 = vpop.permute.xlu0 %2210
  %2213 = vset.pattern.permute.xlu0 0
  %2214 = vperm.xlu0 %2213, %v2184
  %v2215 = vpop.permute.xlu0 %2214
  %2217 = vset.pattern.permute.xlu0 0
  %2218 = vperm.xlu0 %2217, %v2188
  %v2219 = vpop.permute.xlu0 %2218
  %2221 = vset.pattern.permute.xlu0 0
  %2222 = vperm.xlu0 %2221, %v2192
  %v2223 = vpop.permute.xlu0 %2222
  %2225 = vset.pattern.permute.xlu0 0
  %2226 = vperm.xlu0 %2225, %v2196
  %v2227 = vpop.permute.xlu0 %2226
  %2229 = vset.pattern.permute.xlu0 0
  %2230 = vperm.xlu0 %2229, %v2200
  %v2231 = vpop.permute.xlu0 %2230
  %2233 = vset.pattern.permute.xlu0 0
  %2234 = vperm.xlu0 %2233, %v2204
  %v2235 = vpop.permute.xlu0 %2234
  %2237 = vset.pattern.permute.xlu0 0
  %2238 = vperm.xlu0 %2237, %v2208
  %v2239 = vpop.permute.xlu0 %2238
  %v2241 = vmul.f32 %v2211, %v20
  %v2242 = vmul.f32 %v2211, %v21
  %v2243 = vmul.f32 %v2211, %v22
  %v2244 = vmul.f32 %v2211, %v23
  %v2245 = vmul.f32 %v2211, %v24
  %v2246 = vmul.f32 %v2211, %v25
  %v2247 = vmul.f32 %v2215, %v20
  %v2248 = vmul.f32 %v2215, %v21
  %v2249 = vmul.f32 %v2215, %v22
  %v2250 = vmul.f32 %v2215, %v23
  %v2251 = vmul.f32 %v2215, %v24
  %v2252 = vmul.f32 %v2215, %v25
  %v2253 = vmul.f32 %v2219, %v20
  %v2254 = vmul.f32 %v2219, %v21
  %v2255 = vmul.f32 %v2219, %v22
  %v2256 = vmul.f32 %v2219, %v23
  %v2257 = vmul.f32 %v2219, %v24
  %v2258 = vmul.f32 %v2219, %v25
  %v2259 = vmul.f32 %v2223, %v20
  %v2260 = vmul.f32 %v2223, %v21
  %v2261 = vmul.f32 %v2223, %v22
  %v2262 = vmul.f32 %v2223, %v23
  %v2263 = vmul.f32 %v2223, %v24
  %v2264 = vmul.f32 %v2223, %v25
  %v2265 = vmul.f32 %v2227, %v20
  %v2266 = vmul.f32 %v2227, %v21
  %v2267 = vmul.f32 %v2227, %v22
  %v2268 = vmul.f32 %v2227, %v23
  %v2269 = vmul.f32 %v2227, %v24
  %v2270 = vmul.f32 %v2227, %v25
  %v2271 = vmul.f32 %v2231, %v20
  %v2272 = vmul.f32 %v2231, %v21
  %v2273 = vmul.f32 %v2231, %v22
  %v2274 = vmul.f32 %v2231, %v23
  %v2275 = vmul.f32 %v2231, %v24
  %v2276 = vmul.f32 %v2231, %v25
  %v2277 = vmul.f32 %v2235, %v20
  %v2278 = vmul.f32 %v2235, %v21
  %v2279 = vmul.f32 %v2235, %v22
  %v2280 = vmul.f32 %v2235, %v23
  %v2281 = vmul.f32 %v2235, %v24
  %v2282 = vmul.f32 %v2235, %v25
  %v2283 = vmul.f32 %v2239, %v20
  %v2284 = vmul.f32 %v2239, %v21
  %v2285 = vmul.f32 %v2239, %v22
  %v2286 = vmul.f32 %v2239, %v23
  %v2287 = vmul.f32 %v2239, %v24
  %v2288 = vmul.f32 %v2239, %v25
  %vm2337 = vcmask 1045504
  %v2338 = vrot.slane %v2241, 2
  %v2339 = vrot.slane %v2243, 2
  %v2340 = vsel %vm2337, %v2338, %v2339
  %v2341 = vrot.slane %v2242, 2
  %v2342 = vrot.slane %v2244, 2
  %v2343 = vsel %vm2337, %v2341, %v2342
  %v2344 = vrot.slane %v2245, 2
  %v2345 = vsel %vm2337, %v2339, %v2344
  %v2346 = vrot.slane %v2246, 2
  %v2347 = vsel %vm2337, %v2342, %v2346
  %v2348 = vrot.slane %v2247, 2
  %v2349 = vrot.slane %v2249, 2
  %v2350 = vsel %vm2337, %v2348, %v2349
  %v2351 = vrot.slane %v2248, 2
  %v2352 = vrot.slane %v2250, 2
  %v2353 = vsel %vm2337, %v2351, %v2352
  %v2354 = vrot.slane %v2251, 2
  %v2355 = vsel %vm2337, %v2349, %v2354
  %v2356 = vrot.slane %v2252, 2
  %v2357 = vsel %vm2337, %v2352, %v2356
  %v2358 = vrot.slane %v2253, 2
  %v2359 = vrot.slane %v2255, 2
  %v2360 = vsel %vm2337, %v2358, %v2359
  %v2361 = vrot.slane %v2254, 2
  %v2362 = vrot.slane %v2256, 2
  %v2363 = vsel %vm2337, %v2361, %v2362
  %v2364 = vrot.slane %v2257, 2
  %v2365 = vsel %vm2337, %v2359, %v2364
  %v2366 = vrot.slane %v2258, 2
  %v2367 = vsel %vm2337, %v2362, %v2366
  %v2368 = vrot.slane %v2259, 2
  %v2369 = vrot.slane %v2261, 2
  %v2370 = vsel %vm2337, %v2368, %v2369
  %v2371 = vrot.slane %v2260, 2
  %v2372 = vrot.slane %v2262, 2
  %v2373 = vsel %vm2337, %v2371, %v2372
  %v2374 = vrot.slane %v2263, 2
  %v2375 = vsel %vm2337, %v2369, %v2374
  %v2376 = vrot.slane %v2264, 2
  %v2377 = vsel %vm2337, %v2372, %v2376
  %v2378 = vrot.slane %v2265, 2
  %v2379 = vrot.slane %v2267, 2
  %v2380 = vsel %vm2337, %v2378, %v2379
  %v2381 = vrot.slane %v2266, 2
  %v2382 = vrot.slane %v2268, 2
  %v2383 = vsel %vm2337, %v2381, %v2382
  %v2384 = vrot.slane %v2269, 2
  %v2385 = vsel %vm2337, %v2379, %v2384
  %v2386 = vrot.slane %v2270, 2
  %v2387 = vsel %vm2337, %v2382, %v2386
  %v2388 = vrot.slane %v2271, 2
  %v2389 = vrot.slane %v2273, 2
  %v2390 = vsel %vm2337, %v2388, %v2389
  %v2391 = vrot.slane %v2272, 2
  %v2392 = vrot.slane %v2274, 2
  %v2393 = vsel %vm2337, %v2391, %v2392
  %v2394 = vrot.slane %v2275, 2
  %v2395 = vsel %vm2337, %v2389, %v2394
  %v2396 = vrot.slane %v2276, 2
  %v2397 = vsel %vm2337, %v2392, %v2396
  %v2398 = vrot.slane %v2277, 2
  %v2399 = vrot.slane %v2279, 2
  %v2400 = vsel %vm2337, %v2398, %v2399
  %v2401 = vrot.slane %v2278, 2
  %v2402 = vrot.slane %v2280, 2
  %v2403 = vsel %vm2337, %v2401, %v2402
  %v2404 = vrot.slane %v2281, 2
  %v2405 = vsel %vm2337, %v2399, %v2404
  %v2406 = vrot.slane %v2282, 2
  %v2407 = vsel %vm2337, %v2402, %v2406
  %v2408 = vrot.slane %v2283, 2
  %v2409 = vrot.slane %v2285, 2
  %v2410 = vsel %vm2337, %v2408, %v2409
  %v2411 = vrot.slane %v2284, 2
  %v2412 = vrot.slane %v2286, 2
  %v2413 = vsel %vm2337, %v2411, %v2412
  %v2414 = vrot.slane %v2287, 2
  %v2415 = vsel %vm2337, %v2409, %v2414
  %v2416 = vrot.slane %v2288, 2
  %v2417 = vsel %vm2337, %v2412, %v2416
  %v2450 = vadd.f32 %v2095, %v2340
  %v2451 = vadd.f32 %v2096, %v2343
  %v2452 = vadd.f32 %v2097, %v2345
  %v2453 = vadd.f32 %v2098, %v2347
  %v2454 = vadd.f32 %v2099, %v2350
  %v2455 = vadd.f32 %v2100, %v2353
  %v2456 = vadd.f32 %v2101, %v2355
  %v2457 = vadd.f32 %v2102, %v2357
  %v2458 = vadd.f32 %v2103, %v2360
  %v2459 = vadd.f32 %v2104, %v2363
  %v2460 = vadd.f32 %v2105, %v2365
  %v2461 = vadd.f32 %v2106, %v2367
  %v2462 = vadd.f32 %v2107, %v2370
  %v2463 = vadd.f32 %v2108, %v2373
  %v2464 = vadd.f32 %v2109, %v2375
  %v2465 = vadd.f32 %v2110, %v2377
  %v2466 = vadd.f32 %v2111, %v2380
  %v2467 = vadd.f32 %v2112, %v2383
  %v2468 = vadd.f32 %v2113, %v2385
  %v2469 = vadd.f32 %v2114, %v2387
  %v2470 = vadd.f32 %v2115, %v2390
  %v2471 = vadd.f32 %v2116, %v2393
  %v2472 = vadd.f32 %v2117, %v2395
  %v2473 = vadd.f32 %v2118, %v2397
  %v2474 = vadd.f32 %v2119, %v2400
  %v2475 = vadd.f32 %v2120, %v2403
  %v2476 = vadd.f32 %v2121, %v2405
  %v2477 = vadd.f32 %v2122, %v2407
  %v2478 = vadd.f32 %v2123, %v2410
  %v2479 = vadd.f32 %v2124, %v2413
  %v2480 = vadd.f32 %v2125, %v2415
  %v2481 = vadd.f32 %v2126, %v2417
  %v2483 = vcombine.high %v51, %v51
  %v2485 = vunpack.c.l.s4 1966171168
  %v2486 = vunpack.c.0.s8 %v2485
  %v2487 = vlaneseq
  %v2488 = vshrl.u32 %v2487, 7
  %v2489 = vsub.s32 %v2486, %v2488
  %v2490 = vrot.slane %v51, %v2489
  %v2492 = vunpack.c.l.s4 1966171168
  %v2493 = vunpack.c.0.s8 %v2492
  %v2494 = vlaneseq
  %v2495 = vshrl.u32 %v2494, 7
  %v2496 = vsub.s32 %v2493, %v2495
  %v2497 = vrot.slane %v2483, %v2496
  %v2498 = vcombine.high %v2490, %v2490
  %v2499 = vcombine.high %v2497, %v2497
  %v2501 = vunpack.c.l.s4 1966171168
  %v2502 = vunpack.c.0.s8 %v2501
  %v2503 = vlaneseq
  %v2504 = vshrl.u32 %v2503, 7
  %v2505 = vsub.s32 %v2502, %v2504
  %v2506 = vrot.slane %v2490, %v2505
  %v2508 = vunpack.c.l.s4 1966171168
  %v2509 = vunpack.c.0.s8 %v2508
  %v2510 = vlaneseq
  %v2511 = vshrl.u32 %v2510, 7
  %v2512 = vsub.s32 %v2509, %v2511
  %v2513 = vrot.slane %v2497, %v2512
  %v2515 = vunpack.c.l.s4 1966171168
  %v2516 = vunpack.c.0.s8 %v2515
  %v2517 = vlaneseq
  %v2518 = vshrl.u32 %v2517, 7
  %v2519 = vsub.s32 %v2516, %v2518
  %v2520 = vrot.slane %v2498, %v2519
  %v2522 = vunpack.c.l.s4 1966171168
  %v2523 = vunpack.c.0.s8 %v2522
  %v2524 = vlaneseq
  %v2525 = vshrl.u32 %v2524, 7
  %v2526 = vsub.s32 %v2523, %v2525
  %v2527 = vrot.slane %v2499, %v2526
  %v2528 = vcombine.high %v2506, %v2506
  %v2529 = vcombine.high %v2513, %v2513
  %v2530 = vcombine.high %v2520, %v2520
  %v2531 = vcombine.high %v2527, %v2527
  %v2532 = vlaneseq
  %v2533 = vshrl.u32 %v2532, 7
  %v2534 = vsub.s32 0, %v2533
  %v2535 = vrot.slane %v2506, %v2534
  %v2536 = vlaneseq
  %v2537 = vshrl.u32 %v2536, 7
  %v2538 = vsub.s32 0, %v2537
  %v2539 = vrot.slane %v2520, %v2538
  %v2540 = vlaneseq
  %v2541 = vshrl.u32 %v2540, 7
  %v2542 = vsub.s32 0, %v2541
  %v2543 = vrot.slane %v2528, %v2542
  %v2544 = vlaneseq
  %v2545 = vshrl.u32 %v2544, 7
  %v2546 = vsub.s32 0, %v2545
  %v2547 = vrot.slane %v2530, %v2546
  %v2548 = vlaneseq
  %v2549 = vshrl.u32 %v2548, 7
  %v2550 = vsub.s32 0, %v2549
  %v2551 = vrot.slane %v2513, %v2550
  %v2552 = vlaneseq
  %v2553 = vshrl.u32 %v2552, 7
  %v2554 = vsub.s32 0, %v2553
  %v2555 = vrot.slane %v2527, %v2554
  %v2556 = vlaneseq
  %v2557 = vshrl.u32 %v2556, 7
  %v2558 = vsub.s32 0, %v2557
  %v2559 = vrot.slane %v2529, %v2558
  %v2560 = vlaneseq
  %v2561 = vshrl.u32 %v2560, 7
  %v2562 = vsub.s32 0, %v2561
  %v2563 = vrot.slane %v2531, %v2562
  %2564 = vset.pattern.permute.xlu0 0
  %2565 = vperm.xlu0 %2564, %v2535
  %v2566 = vpop.permute.xlu0 %2565
  %2568 = vset.pattern.permute.xlu0 0
  %2569 = vperm.xlu0 %2568, %v2539
  %v2570 = vpop.permute.xlu0 %2569
  %2572 = vset.pattern.permute.xlu0 0
  %2573 = vperm.xlu0 %2572, %v2543
  %v2574 = vpop.permute.xlu0 %2573
  %2576 = vset.pattern.permute.xlu0 0
  %2577 = vperm.xlu0 %2576, %v2547
  %v2578 = vpop.permute.xlu0 %2577
  %2580 = vset.pattern.permute.xlu0 0
  %2581 = vperm.xlu0 %2580, %v2551
  %v2582 = vpop.permute.xlu0 %2581
  %2584 = vset.pattern.permute.xlu0 0
  %2585 = vperm.xlu0 %2584, %v2555
  %v2586 = vpop.permute.xlu0 %2585
  %2588 = vset.pattern.permute.xlu0 0
  %2589 = vperm.xlu0 %2588, %v2559
  %v2590 = vpop.permute.xlu0 %2589
  %2592 = vset.pattern.permute.xlu0 0
  %2593 = vperm.xlu0 %2592, %v2563
  %v2594 = vpop.permute.xlu0 %2593
  %v2596 = vmul.f32 %v2566, %v20
  %v2597 = vmul.f32 %v2566, %v21
  %v2598 = vmul.f32 %v2566, %v22
  %v2599 = vmul.f32 %v2566, %v23
  %v2600 = vmul.f32 %v2566, %v24
  %v2601 = vmul.f32 %v2566, %v25
  %v2602 = vmul.f32 %v2570, %v20
  %v2603 = vmul.f32 %v2570, %v21
  %v2604 = vmul.f32 %v2570, %v22
  %v2605 = vmul.f32 %v2570, %v23
  %v2606 = vmul.f32 %v2570, %v24
  %v2607 = vmul.f32 %v2570, %v25
  %v2608 = vmul.f32 %v2574, %v20
  %v2609 = vmul.f32 %v2574, %v21
  %v2610 = vmul.f32 %v2574, %v22
  %v2611 = vmul.f32 %v2574, %v23
  %v2612 = vmul.f32 %v2574, %v24
  %v2613 = vmul.f32 %v2574, %v25
  %v2614 = vmul.f32 %v2578, %v20
  %v2615 = vmul.f32 %v2578, %v21
  %v2616 = vmul.f32 %v2578, %v22
  %v2617 = vmul.f32 %v2578, %v23
  %v2618 = vmul.f32 %v2578, %v24
  %v2619 = vmul.f32 %v2578, %v25
  %v2620 = vmul.f32 %v2582, %v20
  %v2621 = vmul.f32 %v2582, %v21
  %v2622 = vmul.f32 %v2582, %v22
  %v2623 = vmul.f32 %v2582, %v23
  %v2624 = vmul.f32 %v2582, %v24
  %v2625 = vmul.f32 %v2582, %v25
  %v2626 = vmul.f32 %v2586, %v20
  %v2627 = vmul.f32 %v2586, %v21
  %v2628 = vmul.f32 %v2586, %v22
  %v2629 = vmul.f32 %v2586, %v23
  %v2630 = vmul.f32 %v2586, %v24
  %v2631 = vmul.f32 %v2586, %v25
  %v2632 = vmul.f32 %v2590, %v20
  %v2633 = vmul.f32 %v2590, %v21
  %v2634 = vmul.f32 %v2590, %v22
  %v2635 = vmul.f32 %v2590, %v23
  %v2636 = vmul.f32 %v2590, %v24
  %v2637 = vmul.f32 %v2590, %v25
  %v2638 = vmul.f32 %v2594, %v20
  %v2639 = vmul.f32 %v2594, %v21
  %v2640 = vmul.f32 %v2594, %v22
  %v2641 = vmul.f32 %v2594, %v23
  %v2642 = vmul.f32 %v2594, %v24
  %v2643 = vmul.f32 %v2594, %v25
  %v2692 = vrot.slane %v2596, 2
  %v2693 = vrot.slane %v2598, 2
  %v2694 = vsel %vm2337, %v2692, %v2693
  %v2695 = vrot.slane %v2597, 2
  %v2696 = vrot.slane %v2599, 2
  %v2697 = vsel %vm2337, %v2695, %v2696
  %v2698 = vrot.slane %v2600, 2
  %v2699 = vsel %vm2337, %v2693, %v2698
  %v2700 = vrot.slane %v2601, 2
  %v2701 = vsel %vm2337, %v2696, %v2700
  %v2702 = vrot.slane %v2602, 2
  %v2703 = vrot.slane %v2604, 2
  %v2704 = vsel %vm2337, %v2702, %v2703
  %v2705 = vrot.slane %v2603, 2
  %v2706 = vrot.slane %v2605, 2
  %v2707 = vsel %vm2337, %v2705, %v2706
  %v2708 = vrot.slane %v2606, 2
  %v2709 = vsel %vm2337, %v2703, %v2708
  %v2710 = vrot.slane %v2607, 2
  %v2711 = vsel %vm2337, %v2706, %v2710
  %v2712 = vrot.slane %v2608, 2
  %v2713 = vrot.slane %v2610, 2
  %v2714 = vsel %vm2337, %v2712, %v2713
  %v2715 = vrot.slane %v2609, 2
  %v2716 = vrot.slane %v2611, 2
  %v2717 = vsel %vm2337, %v2715, %v2716
  %v2718 = vrot.slane %v2612, 2
  %v2719 = vsel %vm2337, %v2713, %v2718
  %v2720 = vrot.slane %v2613, 2
  %v2721 = vsel %vm2337, %v2716, %v2720
  %v2722 = vrot.slane %v2614, 2
  %v2723 = vrot.slane %v2616, 2
  %v2724 = vsel %vm2337, %v2722, %v2723
  %v2725 = vrot.slane %v2615, 2
  %v2726 = vrot.slane %v2617, 2
  %v2727 = vsel %vm2337, %v2725, %v2726
  %v2728 = vrot.slane %v2618, 2
  %v2729 = vsel %vm2337, %v2723, %v2728
  %v2730 = vrot.slane %v2619, 2
  %v2731 = vsel %vm2337, %v2726, %v2730
  %v2732 = vrot.slane %v2620, 2
  %v2733 = vrot.slane %v2622, 2
  %v2734 = vsel %vm2337, %v2732, %v2733
  %v2735 = vrot.slane %v2621, 2
  %v2736 = vrot.slane %v2623, 2
  %v2737 = vsel %vm2337, %v2735, %v2736
  %v2738 = vrot.slane %v2624, 2
  %v2739 = vsel %vm2337, %v2733, %v2738
  %v2740 = vrot.slane %v2625, 2
  %v2741 = vsel %vm2337, %v2736, %v2740
  %v2742 = vrot.slane %v2626, 2
  %v2743 = vrot.slane %v2628, 2
  %v2744 = vsel %vm2337, %v2742, %v2743
  %v2745 = vrot.slane %v2627, 2
  %v2746 = vrot.slane %v2629, 2
  %v2747 = vsel %vm2337, %v2745, %v2746
  %v2748 = vrot.slane %v2630, 2
  %v2749 = vsel %vm2337, %v2743, %v2748
  %v2750 = vrot.slane %v2631, 2
  %v2751 = vsel %vm2337, %v2746, %v2750
  %v2752 = vrot.slane %v2632, 2
  %v2753 = vrot.slane %v2634, 2
  %v2754 = vsel %vm2337, %v2752, %v2753
  %v2755 = vrot.slane %v2633, 2
  %v2756 = vrot.slane %v2635, 2
  %v2757 = vsel %vm2337, %v2755, %v2756
  %v2758 = vrot.slane %v2636, 2
  %v2759 = vsel %vm2337, %v2753, %v2758
  %v2760 = vrot.slane %v2637, 2
  %v2761 = vsel %vm2337, %v2756, %v2760
  %v2762 = vrot.slane %v2638, 2
  %v2763 = vrot.slane %v2640, 2
  %v2764 = vsel %vm2337, %v2762, %v2763
  %v2765 = vrot.slane %v2639, 2
  %v2766 = vrot.slane %v2641, 2
  %v2767 = vsel %vm2337, %v2765, %v2766
  %v2768 = vrot.slane %v2642, 2
  %v2769 = vsel %vm2337, %v2763, %v2768
  %v2770 = vrot.slane %v2643, 2
  %v2771 = vsel %vm2337, %v2766, %v2770
  %2772 = vrot.lane.b32.xlu0 %v2694, 127
  %v2773 = vpop.permute.xlu0 %2772
  %2774 = vrot.lane.b32.xlu0 %v2697, 127
  %v2775 = vpop.permute.xlu0 %2774
  %2776 = vrot.lane.b32.xlu0 %v2699, 127
  %v2777 = vpop.permute.xlu0 %2776
  %2778 = vrot.lane.b32.xlu0 %v2701, 127
  %v2779 = vpop.permute.xlu0 %2778
  %2780 = vrot.lane.b32.xlu0 %v2704, 127
  %v2781 = vpop.permute.xlu0 %2780
  %2782 = vrot.lane.b32.xlu0 %v2707, 127
  %v2783 = vpop.permute.xlu0 %2782
  %2784 = vrot.lane.b32.xlu0 %v2709, 127
  %v2785 = vpop.permute.xlu0 %2784
  %2786 = vrot.lane.b32.xlu0 %v2711, 127
  %v2787 = vpop.permute.xlu0 %2786
  %2788 = vrot.lane.b32.xlu0 %v2714, 127
  %v2789 = vpop.permute.xlu0 %2788
  %2790 = vrot.lane.b32.xlu0 %v2717, 127
  %v2791 = vpop.permute.xlu0 %2790
  %2792 = vrot.lane.b32.xlu0 %v2719, 127
  %v2793 = vpop.permute.xlu0 %2792
  %2794 = vrot.lane.b32.xlu0 %v2721, 127
  %v2795 = vpop.permute.xlu0 %2794
  %2796 = vrot.lane.b32.xlu0 %v2724, 127
  %v2797 = vpop.permute.xlu0 %2796
  %2798 = vrot.lane.b32.xlu0 %v2727, 127
  %v2799 = vpop.permute.xlu0 %2798
  %2800 = vrot.lane.b32.xlu0 %v2729, 127
  %v2801 = vpop.permute.xlu0 %2800
  %2802 = vrot.lane.b32.xlu0 %v2731, 127
  %v2803 = vpop.permute.xlu0 %2802
  %2804 = vrot.lane.b32.xlu0 %v2734, 127
  %v2805 = vpop.permute.xlu0 %2804
  %2806 = vrot.lane.b32.xlu0 %v2737, 127
  %v2807 = vpop.permute.xlu0 %2806
  %2808 = vrot.lane.b32.xlu0 %v2739, 127
  %v2809 = vpop.permute.xlu0 %2808
  %2810 = vrot.lane.b32.xlu0 %v2741, 127
  %v2811 = vpop.permute.xlu0 %2810
  %2812 = vrot.lane.b32.xlu0 %v2744, 127
  %v2813 = vpop.permute.xlu0 %2812
  %2814 = vrot.lane.b32.xlu0 %v2747, 127
  %v2815 = vpop.permute.xlu0 %2814
  %2816 = vrot.lane.b32.xlu0 %v2749, 127
  %v2817 = vpop.permute.xlu0 %2816
  %2818 = vrot.lane.b32.xlu0 %v2751, 127
  %v2819 = vpop.permute.xlu0 %2818
  %2820 = vrot.lane.b32.xlu0 %v2754, 127
  %v2821 = vpop.permute.xlu0 %2820
  %2822 = vrot.lane.b32.xlu0 %v2757, 127
  %v2823 = vpop.permute.xlu0 %2822
  %2824 = vrot.lane.b32.xlu0 %v2759, 127
  %v2825 = vpop.permute.xlu0 %2824
  %2826 = vrot.lane.b32.xlu0 %v2761, 127
  %v2827 = vpop.permute.xlu0 %2826
  %2828 = vrot.lane.b32.xlu0 %v2764, 127
  %v2829 = vpop.permute.xlu0 %2828
  %2830 = vrot.lane.b32.xlu0 %v2767, 127
  %v2831 = vpop.permute.xlu0 %2830
  %2832 = vrot.lane.b32.xlu0 %v2769, 127
  %v2833 = vpop.permute.xlu0 %2832
  %2834 = vrot.lane.b32.xlu0 %v2771, 127
  %v2835 = vpop.permute.xlu0 %2834
  %v2836 = vsel %vm500, %v2773, %v2775
  %v2837 = vsel %vm500, %v2777, %v2779
  %v2838 = vsel %vm500, %v2781, %v2783
  %v2839 = vsel %vm500, %v2785, %v2787
  %v2840 = vsel %vm500, %v2789, %v2791
  %v2841 = vsel %vm500, %v2793, %v2795
  %v2842 = vsel %vm500, %v2797, %v2799
  %v2843 = vsel %vm500, %v2801, %v2803
  %v2844 = vsel %vm500, %v2805, %v2807
  %v2845 = vsel %vm500, %v2809, %v2811
  %v2846 = vsel %vm500, %v2813, %v2815
  %v2847 = vsel %vm500, %v2817, %v2819
  %v2848 = vsel %vm500, %v2821, %v2823
  %v2849 = vsel %vm500, %v2825, %v2827
  %v2850 = vsel %vm500, %v2829, %v2831
  %v2851 = vsel %vm500, %v2833, %v2835
  %v2884 = vadd.f32 %v2450, %v2836
  %v2885 = vadd.f32 %v2451, %v2775
  %v2886 = vadd.f32 %v2452, %v2837
  %v2887 = vadd.f32 %v2453, %v2779
  %v2888 = vadd.f32 %v2454, %v2838
  %v2889 = vadd.f32 %v2455, %v2783
  %v2890 = vadd.f32 %v2456, %v2839
  %v2891 = vadd.f32 %v2457, %v2787
  %v2892 = vadd.f32 %v2458, %v2840
  %v2893 = vadd.f32 %v2459, %v2791
  %v2894 = vadd.f32 %v2460, %v2841
  %v2895 = vadd.f32 %v2461, %v2795
  %v2896 = vadd.f32 %v2462, %v2842
  %v2897 = vadd.f32 %v2463, %v2799
  %v2898 = vadd.f32 %v2464, %v2843
  %v2899 = vadd.f32 %v2465, %v2803
  %v2900 = vadd.f32 %v2466, %v2844
  %v2901 = vadd.f32 %v2467, %v2807
  %v2902 = vadd.f32 %v2468, %v2845
  %v2903 = vadd.f32 %v2469, %v2811
  %v2904 = vadd.f32 %v2470, %v2846
  %v2905 = vadd.f32 %v2471, %v2815
  %v2906 = vadd.f32 %v2472, %v2847
  %v2907 = vadd.f32 %v2473, %v2819
  %v2908 = vadd.f32 %v2474, %v2848
  %v2909 = vadd.f32 %v2475, %v2823
  %v2910 = vadd.f32 %v2476, %v2849
  %v2911 = vadd.f32 %v2477, %v2827
  %v2912 = vadd.f32 %v2478, %v2850
  %v2913 = vadd.f32 %v2479, %v2831
  %v2914 = vadd.f32 %v2480, %v2851
  %v2915 = vadd.f32 %v2481, %v2835
  %v2917 = vcombine.high %v52, %v52
  %v2919 = vunpack.c.l.s4 1966171168
  %v2920 = vunpack.c.0.s8 %v2919
  %v2921 = vlaneseq
  %v2922 = vshrl.u32 %v2921, 7
  %v2923 = vsub.s32 %v2920, %v2922
  %v2924 = vrot.slane %v52, %v2923
  %v2926 = vunpack.c.l.s4 1966171168
  %v2927 = vunpack.c.0.s8 %v2926
  %v2928 = vlaneseq
  %v2929 = vshrl.u32 %v2928, 7
  %v2930 = vsub.s32 %v2927, %v2929
  %v2931 = vrot.slane %v2917, %v2930
  %v2932 = vcombine.high %v2924, %v2924
  %v2933 = vcombine.high %v2931, %v2931
  %v2935 = vunpack.c.l.s4 1966171168
  %v2936 = vunpack.c.0.s8 %v2935
  %v2937 = vlaneseq
  %v2938 = vshrl.u32 %v2937, 7
  %v2939 = vsub.s32 %v2936, %v2938
  %v2940 = vrot.slane %v2924, %v2939
  %v2942 = vunpack.c.l.s4 1966171168
  %v2943 = vunpack.c.0.s8 %v2942
  %v2944 = vlaneseq
  %v2945 = vshrl.u32 %v2944, 7
  %v2946 = vsub.s32 %v2943, %v2945
  %v2947 = vrot.slane %v2931, %v2946
  %v2949 = vunpack.c.l.s4 1966171168
  %v2950 = vunpack.c.0.s8 %v2949
  %v2951 = vlaneseq
  %v2952 = vshrl.u32 %v2951, 7
  %v2953 = vsub.s32 %v2950, %v2952
  %v2954 = vrot.slane %v2932, %v2953
  %v2956 = vunpack.c.l.s4 1966171168
  %v2957 = vunpack.c.0.s8 %v2956
  %v2958 = vlaneseq
  %v2959 = vshrl.u32 %v2958, 7
  %v2960 = vsub.s32 %v2957, %v2959
  %v2961 = vrot.slane %v2933, %v2960
  %v2962 = vcombine.high %v2940, %v2940
  %v2963 = vcombine.high %v2947, %v2947
  %v2964 = vcombine.high %v2954, %v2954
  %v2965 = vcombine.high %v2961, %v2961
  %v2966 = vlaneseq
  %v2967 = vshrl.u32 %v2966, 7
  %v2968 = vsub.s32 0, %v2967
  %v2969 = vrot.slane %v2940, %v2968
  %v2970 = vlaneseq
  %v2971 = vshrl.u32 %v2970, 7
  %v2972 = vsub.s32 0, %v2971
  %v2973 = vrot.slane %v2954, %v2972
  %v2974 = vlaneseq
  %v2975 = vshrl.u32 %v2974, 7
  %v2976 = vsub.s32 0, %v2975
  %v2977 = vrot.slane %v2962, %v2976
  %v2978 = vlaneseq
  %v2979 = vshrl.u32 %v2978, 7
  %v2980 = vsub.s32 0, %v2979
  %v2981 = vrot.slane %v2964, %v2980
  %v2982 = vlaneseq
  %v2983 = vshrl.u32 %v2982, 7
  %v2984 = vsub.s32 0, %v2983
  %v2985 = vrot.slane %v2947, %v2984
  %v2986 = vlaneseq
  %v2987 = vshrl.u32 %v2986, 7
  %v2988 = vsub.s32 0, %v2987
  %v2989 = vrot.slane %v2961, %v2988
  %v2990 = vlaneseq
  %v2991 = vshrl.u32 %v2990, 7
  %v2992 = vsub.s32 0, %v2991
  %v2993 = vrot.slane %v2963, %v2992
  %v2994 = vlaneseq
  %v2995 = vshrl.u32 %v2994, 7
  %v2996 = vsub.s32 0, %v2995
  %v2997 = vrot.slane %v2965, %v2996
  %2998 = vset.pattern.permute.xlu0 0
  %2999 = vperm.xlu0 %2998, %v2969
  %v3000 = vpop.permute.xlu0 %2999
  %3002 = vset.pattern.permute.xlu0 0
  %3003 = vperm.xlu0 %3002, %v2973
  %v3004 = vpop.permute.xlu0 %3003
  %3006 = vset.pattern.permute.xlu0 0
  %3007 = vperm.xlu0 %3006, %v2977
  %v3008 = vpop.permute.xlu0 %3007
  %3010 = vset.pattern.permute.xlu0 0
  %3011 = vperm.xlu0 %3010, %v2981
  %v3012 = vpop.permute.xlu0 %3011
  %3014 = vset.pattern.permute.xlu0 0
  %3015 = vperm.xlu0 %3014, %v2985
  %v3016 = vpop.permute.xlu0 %3015
  %3018 = vset.pattern.permute.xlu0 0
  %3019 = vperm.xlu0 %3018, %v2989
  %v3020 = vpop.permute.xlu0 %3019
  %3022 = vset.pattern.permute.xlu0 0
  %3023 = vperm.xlu0 %3022, %v2993
  %v3024 = vpop.permute.xlu0 %3023
  %3026 = vset.pattern.permute.xlu0 0
  %3027 = vperm.xlu0 %3026, %v2997
  %v3028 = vpop.permute.xlu0 %3027
  %v3030 = vmul.f32 %v3000, %v20
  %v3031 = vmul.f32 %v3000, %v21
  %v3032 = vmul.f32 %v3000, %v22
  %v3033 = vmul.f32 %v3000, %v23
  %v3034 = vmul.f32 %v3000, %v24
  %v3035 = vmul.f32 %v3000, %v25
  %v3036 = vmul.f32 %v3004, %v20
  %v3037 = vmul.f32 %v3004, %v21
  %v3038 = vmul.f32 %v3004, %v22
  %v3039 = vmul.f32 %v3004, %v23
  %v3040 = vmul.f32 %v3004, %v24
  %v3041 = vmul.f32 %v3004, %v25
  %v3042 = vmul.f32 %v3008, %v20
  %v3043 = vmul.f32 %v3008, %v21
  %v3044 = vmul.f32 %v3008, %v22
  %v3045 = vmul.f32 %v3008, %v23
  %v3046 = vmul.f32 %v3008, %v24
  %v3047 = vmul.f32 %v3008, %v25
  %v3048 = vmul.f32 %v3012, %v20
  %v3049 = vmul.f32 %v3012, %v21
  %v3050 = vmul.f32 %v3012, %v22
  %v3051 = vmul.f32 %v3012, %v23
  %v3052 = vmul.f32 %v3012, %v24
  %v3053 = vmul.f32 %v3012, %v25
  %v3054 = vmul.f32 %v3016, %v20
  %v3055 = vmul.f32 %v3016, %v21
  %v3056 = vmul.f32 %v3016, %v22
  %v3057 = vmul.f32 %v3016, %v23
  %v3058 = vmul.f32 %v3016, %v24
  %v3059 = vmul.f32 %v3016, %v25
  %v3060 = vmul.f32 %v3020, %v20
  %v3061 = vmul.f32 %v3020, %v21
  %v3062 = vmul.f32 %v3020, %v22
  %v3063 = vmul.f32 %v3020, %v23
  %v3064 = vmul.f32 %v3020, %v24
  %v3065 = vmul.f32 %v3020, %v25
  %v3066 = vmul.f32 %v3024, %v20
  %v3067 = vmul.f32 %v3024, %v21
  %v3068 = vmul.f32 %v3024, %v22
  %v3069 = vmul.f32 %v3024, %v23
  %v3070 = vmul.f32 %v3024, %v24
  %v3071 = vmul.f32 %v3024, %v25
  %v3072 = vmul.f32 %v3028, %v20
  %v3073 = vmul.f32 %v3028, %v21
  %v3074 = vmul.f32 %v3028, %v22
  %v3075 = vmul.f32 %v3028, %v23
  %v3076 = vmul.f32 %v3028, %v24
  %v3077 = vmul.f32 %v3028, %v25
  %v3126 = vrot.slane %v3030, 2
  %v3127 = vrot.slane %v3032, 2
  %v3128 = vsel %vm2337, %v3126, %v3127
  %v3129 = vrot.slane %v3031, 2
  %v3130 = vrot.slane %v3033, 2
  %v3131 = vsel %vm2337, %v3129, %v3130
  %v3132 = vrot.slane %v3034, 2
  %v3133 = vsel %vm2337, %v3127, %v3132
  %v3134 = vrot.slane %v3035, 2
  %v3135 = vsel %vm2337, %v3130, %v3134
  %v3136 = vrot.slane %v3036, 2
  %v3137 = vrot.slane %v3038, 2
  %v3138 = vsel %vm2337, %v3136, %v3137
  %v3139 = vrot.slane %v3037, 2
  %v3140 = vrot.slane %v3039, 2
  %v3141 = vsel %vm2337, %v3139, %v3140
  %v3142 = vrot.slane %v3040, 2
  %v3143 = vsel %vm2337, %v3137, %v3142
  %v3144 = vrot.slane %v3041, 2
  %v3145 = vsel %vm2337, %v3140, %v3144
  %v3146 = vrot.slane %v3042, 2
  %v3147 = vrot.slane %v3044, 2
  %v3148 = vsel %vm2337, %v3146, %v3147
  %v3149 = vrot.slane %v3043, 2
  %v3150 = vrot.slane %v3045, 2
  %v3151 = vsel %vm2337, %v3149, %v3150
  %v3152 = vrot.slane %v3046, 2
  %v3153 = vsel %vm2337, %v3147, %v3152
  %v3154 = vrot.slane %v3047, 2
  %v3155 = vsel %vm2337, %v3150, %v3154
  %v3156 = vrot.slane %v3048, 2
  %v3157 = vrot.slane %v3050, 2
  %v3158 = vsel %vm2337, %v3156, %v3157
  %v3159 = vrot.slane %v3049, 2
  %v3160 = vrot.slane %v3051, 2
  %v3161 = vsel %vm2337, %v3159, %v3160
  %v3162 = vrot.slane %v3052, 2
  %v3163 = vsel %vm2337, %v3157, %v3162
  %v3164 = vrot.slane %v3053, 2
  %v3165 = vsel %vm2337, %v3160, %v3164
  %v3166 = vrot.slane %v3054, 2
  %v3167 = vrot.slane %v3056, 2
  %v3168 = vsel %vm2337, %v3166, %v3167
  %v3169 = vrot.slane %v3055, 2
  %v3170 = vrot.slane %v3057, 2
  %v3171 = vsel %vm2337, %v3169, %v3170
  %v3172 = vrot.slane %v3058, 2
  %v3173 = vsel %vm2337, %v3167, %v3172
  %v3174 = vrot.slane %v3059, 2
  %v3175 = vsel %vm2337, %v3170, %v3174
  %v3176 = vrot.slane %v3060, 2
  %v3177 = vrot.slane %v3062, 2
  %v3178 = vsel %vm2337, %v3176, %v3177
  %v3179 = vrot.slane %v3061, 2
  %v3180 = vrot.slane %v3063, 2
  %v3181 = vsel %vm2337, %v3179, %v3180
  %v3182 = vrot.slane %v3064, 2
  %v3183 = vsel %vm2337, %v3177, %v3182
  %v3184 = vrot.slane %v3065, 2
  %v3185 = vsel %vm2337, %v3180, %v3184
  %v3186 = vrot.slane %v3066, 2
  %v3187 = vrot.slane %v3068, 2
  %v3188 = vsel %vm2337, %v3186, %v3187
  %v3189 = vrot.slane %v3067, 2
  %v3190 = vrot.slane %v3069, 2
  %v3191 = vsel %vm2337, %v3189, %v3190
  %v3192 = vrot.slane %v3070, 2
  %v3193 = vsel %vm2337, %v3187, %v3192
  %v3194 = vrot.slane %v3071, 2
  %v3195 = vsel %vm2337, %v3190, %v3194
  %v3196 = vrot.slane %v3072, 2
  %v3197 = vrot.slane %v3074, 2
  %v3198 = vsel %vm2337, %v3196, %v3197
  %v3199 = vrot.slane %v3073, 2
  %v3200 = vrot.slane %v3075, 2
  %v3201 = vsel %vm2337, %v3199, %v3200
  %v3202 = vrot.slane %v3076, 2
  %v3203 = vsel %vm2337, %v3197, %v3202
  %v3204 = vrot.slane %v3077, 2
  %v3205 = vsel %vm2337, %v3200, %v3204
  %3206 = vrot.lane.b32.xlu0 %v3128, 126
  %v3207 = vpop.permute.xlu0 %3206
  %3208 = vrot.lane.b32.xlu0 %v3131, 126
  %v3209 = vpop.permute.xlu0 %3208
  %3210 = vrot.lane.b32.xlu0 %v3133, 126
  %v3211 = vpop.permute.xlu0 %3210
  %3212 = vrot.lane.b32.xlu0 %v3135, 126
  %v3213 = vpop.permute.xlu0 %3212
  %3214 = vrot.lane.b32.xlu0 %v3138, 126
  %v3215 = vpop.permute.xlu0 %3214
  %3216 = vrot.lane.b32.xlu0 %v3141, 126
  %v3217 = vpop.permute.xlu0 %3216
  %3218 = vrot.lane.b32.xlu0 %v3143, 126
  %v3219 = vpop.permute.xlu0 %3218
  %3220 = vrot.lane.b32.xlu0 %v3145, 126
  %v3221 = vpop.permute.xlu0 %3220
  %3222 = vrot.lane.b32.xlu0 %v3148, 126
  %v3223 = vpop.permute.xlu0 %3222
  %3224 = vrot.lane.b32.xlu0 %v3151, 126
  %v3225 = vpop.permute.xlu0 %3224
  %3226 = vrot.lane.b32.xlu0 %v3153, 126
  %v3227 = vpop.permute.xlu0 %3226
  %3228 = vrot.lane.b32.xlu0 %v3155, 126
  %v3229 = vpop.permute.xlu0 %3228
  %3230 = vrot.lane.b32.xlu0 %v3158, 126
  %v3231 = vpop.permute.xlu0 %3230
  %3232 = vrot.lane.b32.xlu0 %v3161, 126
  %v3233 = vpop.permute.xlu0 %3232
  %3234 = vrot.lane.b32.xlu0 %v3163, 126
  %v3235 = vpop.permute.xlu0 %3234
  %3236 = vrot.lane.b32.xlu0 %v3165, 126
  %v3237 = vpop.permute.xlu0 %3236
  %3238 = vrot.lane.b32.xlu0 %v3168, 126
  %v3239 = vpop.permute.xlu0 %3238
  %3240 = vrot.lane.b32.xlu0 %v3171, 126
  %v3241 = vpop.permute.xlu0 %3240
  %3242 = vrot.lane.b32.xlu0 %v3173, 126
  %v3243 = vpop.permute.xlu0 %3242
  %3244 = vrot.lane.b32.xlu0 %v3175, 126
  %v3245 = vpop.permute.xlu0 %3244
  %3246 = vrot.lane.b32.xlu0 %v3178, 126
  %v3247 = vpop.permute.xlu0 %3246
  %3248 = vrot.lane.b32.xlu0 %v3181, 126
  %v3249 = vpop.permute.xlu0 %3248
  %3250 = vrot.lane.b32.xlu0 %v3183, 126
  %v3251 = vpop.permute.xlu0 %3250
  %3252 = vrot.lane.b32.xlu0 %v3185, 126
  %v3253 = vpop.permute.xlu0 %3252
  %3254 = vrot.lane.b32.xlu0 %v3188, 126
  %v3255 = vpop.permute.xlu0 %3254
  %3256 = vrot.lane.b32.xlu0 %v3191, 126
  %v3257 = vpop.permute.xlu0 %3256
  %3258 = vrot.lane.b32.xlu0 %v3193, 126
  %v3259 = vpop.permute.xlu0 %3258
  %3260 = vrot.lane.b32.xlu0 %v3195, 126
  %v3261 = vpop.permute.xlu0 %3260
  %3262 = vrot.lane.b32.xlu0 %v3198, 126
  %v3263 = vpop.permute.xlu0 %3262
  %3264 = vrot.lane.b32.xlu0 %v3201, 126
  %v3265 = vpop.permute.xlu0 %3264
  %3266 = vrot.lane.b32.xlu0 %v3203, 126
  %v3267 = vpop.permute.xlu0 %3266
  %3268 = vrot.lane.b32.xlu0 %v3205, 126
  %v3269 = vpop.permute.xlu0 %3268
  %v3270 = vsel %vm823, %v3207, %v3209
  %v3271 = vsel %vm823, %v3211, %v3213
  %v3272 = vsel %vm823, %v3215, %v3217
  %v3273 = vsel %vm823, %v3219, %v3221
  %v3274 = vsel %vm823, %v3223, %v3225
  %v3275 = vsel %vm823, %v3227, %v3229
  %v3276 = vsel %vm823, %v3231, %v3233
  %v3277 = vsel %vm823, %v3235, %v3237
  %v3278 = vsel %vm823, %v3239, %v3241
  %v3279 = vsel %vm823, %v3243, %v3245
  %v3280 = vsel %vm823, %v3247, %v3249
  %v3281 = vsel %vm823, %v3251, %v3253
  %v3282 = vsel %vm823, %v3255, %v3257
  %v3283 = vsel %vm823, %v3259, %v3261
  %v3284 = vsel %vm823, %v3263, %v3265
  %v3285 = vsel %vm823, %v3267, %v3269
  %v3318 = vadd.f32 %v2884, %v3270
  %v3319 = vadd.f32 %v2885, %v3209
  %v3320 = vadd.f32 %v2886, %v3271
  %v3321 = vadd.f32 %v2887, %v3213
  %v3322 = vadd.f32 %v2888, %v3272
  %v3323 = vadd.f32 %v2889, %v3217
  %v3324 = vadd.f32 %v2890, %v3273
  %v3325 = vadd.f32 %v2891, %v3221
  %v3326 = vadd.f32 %v2892, %v3274
  %v3327 = vadd.f32 %v2893, %v3225
  %v3328 = vadd.f32 %v2894, %v3275
  %v3329 = vadd.f32 %v2895, %v3229
  %v3330 = vadd.f32 %v2896, %v3276
  %v3331 = vadd.f32 %v2897, %v3233
  %v3332 = vadd.f32 %v2898, %v3277
  %v3333 = vadd.f32 %v2899, %v3237
  %v3334 = vadd.f32 %v2900, %v3278
  %v3335 = vadd.f32 %v2901, %v3241
  %v3336 = vadd.f32 %v2902, %v3279
  %v3337 = vadd.f32 %v2903, %v3245
  %v3338 = vadd.f32 %v2904, %v3280
  %v3339 = vadd.f32 %v2905, %v3249
  %v3340 = vadd.f32 %v2906, %v3281
  %v3341 = vadd.f32 %v2907, %v3253
  %v3342 = vadd.f32 %v2908, %v3282
  %v3343 = vadd.f32 %v2909, %v3257
  %v3344 = vadd.f32 %v2910, %v3283
  %v3345 = vadd.f32 %v2911, %v3261
  %v3346 = vadd.f32 %v2912, %v3284
  %v3347 = vadd.f32 %v2913, %v3265
  %v3348 = vadd.f32 %v2914, %v3285
  %v3349 = vadd.f32 %v2915, %v3269
  %v3351 = vcombine.high %v53, %v53
  %v3353 = vunpack.c.l.s4 1966171168
  %v3354 = vunpack.c.0.s8 %v3353
  %v3355 = vlaneseq
  %v3356 = vshrl.u32 %v3355, 7
  %v3357 = vsub.s32 %v3354, %v3356
  %v3358 = vrot.slane %v53, %v3357
  %v3360 = vunpack.c.l.s4 1966171168
  %v3361 = vunpack.c.0.s8 %v3360
  %v3362 = vlaneseq
  %v3363 = vshrl.u32 %v3362, 7
  %v3364 = vsub.s32 %v3361, %v3363
  %v3365 = vrot.slane %v3351, %v3364
  %v3366 = vcombine.high %v3358, %v3358
  %v3367 = vcombine.high %v3365, %v3365
  %v3369 = vunpack.c.l.s4 1966171168
  %v3370 = vunpack.c.0.s8 %v3369
  %v3371 = vlaneseq
  %v3372 = vshrl.u32 %v3371, 7
  %v3373 = vsub.s32 %v3370, %v3372
  %v3374 = vrot.slane %v3358, %v3373
  %v3376 = vunpack.c.l.s4 1966171168
  %v3377 = vunpack.c.0.s8 %v3376
  %v3378 = vlaneseq
  %v3379 = vshrl.u32 %v3378, 7
  %v3380 = vsub.s32 %v3377, %v3379
  %v3381 = vrot.slane %v3365, %v3380
  %v3383 = vunpack.c.l.s4 1966171168
  %v3384 = vunpack.c.0.s8 %v3383
  %v3385 = vlaneseq
  %v3386 = vshrl.u32 %v3385, 7
  %v3387 = vsub.s32 %v3384, %v3386
  %v3388 = vrot.slane %v3366, %v3387
  %v3390 = vunpack.c.l.s4 1966171168
  %v3391 = vunpack.c.0.s8 %v3390
  %v3392 = vlaneseq
  %v3393 = vshrl.u32 %v3392, 7
  %v3394 = vsub.s32 %v3391, %v3393
  %v3395 = vrot.slane %v3367, %v3394
  %v3396 = vcombine.high %v3374, %v3374
  %v3397 = vcombine.high %v3381, %v3381
  %v3398 = vcombine.high %v3388, %v3388
  %v3399 = vcombine.high %v3395, %v3395
  %v3400 = vlaneseq
  %v3401 = vshrl.u32 %v3400, 7
  %v3402 = vsub.s32 0, %v3401
  %v3403 = vrot.slane %v3374, %v3402
  %v3404 = vlaneseq
  %v3405 = vshrl.u32 %v3404, 7
  %v3406 = vsub.s32 0, %v3405
  %v3407 = vrot.slane %v3388, %v3406
  %v3408 = vlaneseq
  %v3409 = vshrl.u32 %v3408, 7
  %v3410 = vsub.s32 0, %v3409
  %v3411 = vrot.slane %v3396, %v3410
  %v3412 = vlaneseq
  %v3413 = vshrl.u32 %v3412, 7
  %v3414 = vsub.s32 0, %v3413
  %v3415 = vrot.slane %v3398, %v3414
  %v3416 = vlaneseq
  %v3417 = vshrl.u32 %v3416, 7
  %v3418 = vsub.s32 0, %v3417
  %v3419 = vrot.slane %v3381, %v3418
  %v3420 = vlaneseq
  %v3421 = vshrl.u32 %v3420, 7
  %v3422 = vsub.s32 0, %v3421
  %v3423 = vrot.slane %v3395, %v3422
  %v3424 = vlaneseq
  %v3425 = vshrl.u32 %v3424, 7
  %v3426 = vsub.s32 0, %v3425
  %v3427 = vrot.slane %v3397, %v3426
  %v3428 = vlaneseq
  %v3429 = vshrl.u32 %v3428, 7
  %v3430 = vsub.s32 0, %v3429
  %v3431 = vrot.slane %v3399, %v3430
  %3432 = vset.pattern.permute.xlu0 0
  %3433 = vperm.xlu0 %3432, %v3403
  %v3434 = vpop.permute.xlu0 %3433
  %3436 = vset.pattern.permute.xlu0 0
  %3437 = vperm.xlu0 %3436, %v3407
  %v3438 = vpop.permute.xlu0 %3437
  %3440 = vset.pattern.permute.xlu0 0
  %3441 = vperm.xlu0 %3440, %v3411
  %v3442 = vpop.permute.xlu0 %3441
  %3444 = vset.pattern.permute.xlu0 0
  %3445 = vperm.xlu0 %3444, %v3415
  %v3446 = vpop.permute.xlu0 %3445
  %3448 = vset.pattern.permute.xlu0 0
  %3449 = vperm.xlu0 %3448, %v3419
  %v3450 = vpop.permute.xlu0 %3449
  %3452 = vset.pattern.permute.xlu0 0
  %3453 = vperm.xlu0 %3452, %v3423
  %v3454 = vpop.permute.xlu0 %3453
  %3456 = vset.pattern.permute.xlu0 0
  %3457 = vperm.xlu0 %3456, %v3427
  %v3458 = vpop.permute.xlu0 %3457
  %3460 = vset.pattern.permute.xlu0 0
  %3461 = vperm.xlu0 %3460, %v3431
  %v3462 = vpop.permute.xlu0 %3461
  %v3464 = vmul.f32 %v3434, %v26
  %v3465 = vmul.f32 %v3434, %v27
  %v3466 = vmul.f32 %v3434, %v28
  %v3467 = vmul.f32 %v3434, %v29
  %v3468 = vmul.f32 %v3438, %v26
  %v3469 = vmul.f32 %v3438, %v27
  %v3470 = vmul.f32 %v3438, %v28
  %v3471 = vmul.f32 %v3438, %v29
  %v3472 = vmul.f32 %v3442, %v26
  %v3473 = vmul.f32 %v3442, %v27
  %v3474 = vmul.f32 %v3442, %v28
  %v3475 = vmul.f32 %v3442, %v29
  %v3476 = vmul.f32 %v3446, %v26
  %v3477 = vmul.f32 %v3446, %v27
  %v3478 = vmul.f32 %v3446, %v28
  %v3479 = vmul.f32 %v3446, %v29
  %v3480 = vmul.f32 %v3450, %v26
  %v3481 = vmul.f32 %v3450, %v27
  %v3482 = vmul.f32 %v3450, %v28
  %v3483 = vmul.f32 %v3450, %v29
  %v3484 = vmul.f32 %v3454, %v26
  %v3485 = vmul.f32 %v3454, %v27
  %v3486 = vmul.f32 %v3454, %v28
  %v3487 = vmul.f32 %v3454, %v29
  %v3488 = vmul.f32 %v3458, %v26
  %v3489 = vmul.f32 %v3458, %v27
  %v3490 = vmul.f32 %v3458, %v28
  %v3491 = vmul.f32 %v3458, %v29
  %v3492 = vmul.f32 %v3462, %v26
  %v3493 = vmul.f32 %v3462, %v27
  %v3494 = vmul.f32 %v3462, %v28
  %v3495 = vmul.f32 %v3462, %v29
  %v3496 = vadd.f32 %v3318, %v3464
  %v3497 = vadd.f32 %v3319, %v3465
  %v3498 = vadd.f32 %v3320, %v3466
  %v3499 = vadd.f32 %v3321, %v3467
  %v3500 = vadd.f32 %v3322, %v3468
  %v3501 = vadd.f32 %v3323, %v3469
  %v3502 = vadd.f32 %v3324, %v3470
  %v3503 = vadd.f32 %v3325, %v3471
  %v3504 = vadd.f32 %v3326, %v3472
  %v3505 = vadd.f32 %v3327, %v3473
  %v3506 = vadd.f32 %v3328, %v3474
  %v3507 = vadd.f32 %v3329, %v3475
  %v3508 = vadd.f32 %v3330, %v3476
  %v3509 = vadd.f32 %v3331, %v3477
  %v3510 = vadd.f32 %v3332, %v3478
  %v3511 = vadd.f32 %v3333, %v3479
  %v3512 = vadd.f32 %v3334, %v3480
  %v3513 = vadd.f32 %v3335, %v3481
  %v3514 = vadd.f32 %v3336, %v3482
  %v3515 = vadd.f32 %v3337, %v3483
  %v3516 = vadd.f32 %v3338, %v3484
  %v3517 = vadd.f32 %v3339, %v3485
  %v3518 = vadd.f32 %v3340, %v3486
  %v3519 = vadd.f32 %v3341, %v3487
  %v3520 = vadd.f32 %v3342, %v3488
  %v3521 = vadd.f32 %v3343, %v3489
  %v3522 = vadd.f32 %v3344, %v3490
  %v3523 = vadd.f32 %v3345, %v3491
  %v3524 = vadd.f32 %v3346, %v3492
  %v3525 = vadd.f32 %v3347, %v3493
  %v3526 = vadd.f32 %v3348, %v3494
  %v3527 = vadd.f32 %v3349, %v3495
  %v3529 = vcombine.high %v54, %v54
  %v3531 = vunpack.c.l.s4 1966171168
  %v3532 = vunpack.c.0.s8 %v3531
  %v3533 = vlaneseq
  %v3534 = vshrl.u32 %v3533, 7
  %v3535 = vsub.s32 %v3532, %v3534
  %v3536 = vrot.slane %v54, %v3535
  %v3538 = vunpack.c.l.s4 1966171168
  %v3539 = vunpack.c.0.s8 %v3538
  %v3540 = vlaneseq
  %v3541 = vshrl.u32 %v3540, 7
  %v3542 = vsub.s32 %v3539, %v3541
  %v3543 = vrot.slane %v3529, %v3542
  %v3544 = vcombine.high %v3536, %v3536
  %v3545 = vcombine.high %v3543, %v3543
  %v3547 = vunpack.c.l.s4 1966171168
  %v3548 = vunpack.c.0.s8 %v3547
  %v3549 = vlaneseq
  %v3550 = vshrl.u32 %v3549, 7
  %v3551 = vsub.s32 %v3548, %v3550
  %v3552 = vrot.slane %v3536, %v3551
  %v3554 = vunpack.c.l.s4 1966171168
  %v3555 = vunpack.c.0.s8 %v3554
  %v3556 = vlaneseq
  %v3557 = vshrl.u32 %v3556, 7
  %v3558 = vsub.s32 %v3555, %v3557
  %v3559 = vrot.slane %v3543, %v3558
  %v3561 = vunpack.c.l.s4 1966171168
  %v3562 = vunpack.c.0.s8 %v3561
  %v3563 = vlaneseq
  %v3564 = vshrl.u32 %v3563, 7
  %v3565 = vsub.s32 %v3562, %v3564
  %v3566 = vrot.slane %v3544, %v3565
  %v3568 = vunpack.c.l.s4 1966171168
  %v3569 = vunpack.c.0.s8 %v3568
  %v3570 = vlaneseq
  %v3571 = vshrl.u32 %v3570, 7
  %v3572 = vsub.s32 %v3569, %v3571
  %v3573 = vrot.slane %v3545, %v3572
  %v3574 = vcombine.high %v3552, %v3552
  %v3575 = vcombine.high %v3559, %v3559
  %v3576 = vcombine.high %v3566, %v3566
  %v3577 = vcombine.high %v3573, %v3573
  %v3578 = vlaneseq
  %v3579 = vshrl.u32 %v3578, 7
  %v3580 = vsub.s32 0, %v3579
  %v3581 = vrot.slane %v3552, %v3580
  %v3582 = vlaneseq
  %v3583 = vshrl.u32 %v3582, 7
  %v3584 = vsub.s32 0, %v3583
  %v3585 = vrot.slane %v3566, %v3584
  %v3586 = vlaneseq
  %v3587 = vshrl.u32 %v3586, 7
  %v3588 = vsub.s32 0, %v3587
  %v3589 = vrot.slane %v3574, %v3588
  %v3590 = vlaneseq
  %v3591 = vshrl.u32 %v3590, 7
  %v3592 = vsub.s32 0, %v3591
  %v3593 = vrot.slane %v3576, %v3592
  %v3594 = vlaneseq
  %v3595 = vshrl.u32 %v3594, 7
  %v3596 = vsub.s32 0, %v3595
  %v3597 = vrot.slane %v3559, %v3596
  %v3598 = vlaneseq
  %v3599 = vshrl.u32 %v3598, 7
  %v3600 = vsub.s32 0, %v3599
  %v3601 = vrot.slane %v3573, %v3600
  %v3602 = vlaneseq
  %v3603 = vshrl.u32 %v3602, 7
  %v3604 = vsub.s32 0, %v3603
  %v3605 = vrot.slane %v3575, %v3604
  %v3606 = vlaneseq
  %v3607 = vshrl.u32 %v3606, 7
  %v3608 = vsub.s32 0, %v3607
  %v3609 = vrot.slane %v3577, %v3608
  %3610 = vset.pattern.permute.xlu0 0
  %3611 = vperm.xlu0 %3610, %v3581
  %v3612 = vpop.permute.xlu0 %3611
  %3614 = vset.pattern.permute.xlu0 0
  %3615 = vperm.xlu0 %3614, %v3585
  %v3616 = vpop.permute.xlu0 %3615
  %3618 = vset.pattern.permute.xlu0 0
  %3619 = vperm.xlu0 %3618, %v3589
  %v3620 = vpop.permute.xlu0 %3619
  %3622 = vset.pattern.permute.xlu0 0
  %3623 = vperm.xlu0 %3622, %v3593
  %v3624 = vpop.permute.xlu0 %3623
  %3626 = vset.pattern.permute.xlu0 0
  %3627 = vperm.xlu0 %3626, %v3597
  %v3628 = vpop.permute.xlu0 %3627
  %3630 = vset.pattern.permute.xlu0 0
  %3631 = vperm.xlu0 %3630, %v3601
  %v3632 = vpop.permute.xlu0 %3631
  %3634 = vset.pattern.permute.xlu0 0
  %3635 = vperm.xlu0 %3634, %v3605
  %v3636 = vpop.permute.xlu0 %3635
  %3638 = vset.pattern.permute.xlu0 0
  %3639 = vperm.xlu0 %3638, %v3609
  %v3640 = vpop.permute.xlu0 %3639
  %v3642 = vmul.f32 %v3612, %v26
  %v3643 = vmul.f32 %v3612, %v27
  %v3644 = vmul.f32 %v3612, %v28
  %v3645 = vmul.f32 %v3612, %v29
  %v3646 = vmul.f32 %v3616, %v26
  %v3647 = vmul.f32 %v3616, %v27
  %v3648 = vmul.f32 %v3616, %v28
  %v3649 = vmul.f32 %v3616, %v29
  %v3650 = vmul.f32 %v3620, %v26
  %v3651 = vmul.f32 %v3620, %v27
  %v3652 = vmul.f32 %v3620, %v28
  %v3653 = vmul.f32 %v3620, %v29
  %v3654 = vmul.f32 %v3624, %v26
  %v3655 = vmul.f32 %v3624, %v27
  %v3656 = vmul.f32 %v3624, %v28
  %v3657 = vmul.f32 %v3624, %v29
  %v3658 = vmul.f32 %v3628, %v26
  %v3659 = vmul.f32 %v3628, %v27
  %v3660 = vmul.f32 %v3628, %v28
  %v3661 = vmul.f32 %v3628, %v29
  %v3662 = vmul.f32 %v3632, %v26
  %v3663 = vmul.f32 %v3632, %v27
  %v3664 = vmul.f32 %v3632, %v28
  %v3665 = vmul.f32 %v3632, %v29
  %v3666 = vmul.f32 %v3636, %v26
  %v3667 = vmul.f32 %v3636, %v27
  %v3668 = vmul.f32 %v3636, %v28
  %v3669 = vmul.f32 %v3636, %v29
  %v3670 = vmul.f32 %v3640, %v26
  %v3671 = vmul.f32 %v3640, %v27
  %v3672 = vmul.f32 %v3640, %v28
  %v3673 = vmul.f32 %v3640, %v29
  %3706 = vrot.lane.b32.xlu0 %v3642, 127
  %v3707 = vpop.permute.xlu0 %3706
  %3708 = vrot.lane.b32.xlu0 %v3643, 127
  %v3709 = vpop.permute.xlu0 %3708
  %3710 = vrot.lane.b32.xlu0 %v3644, 127
  %v3711 = vpop.permute.xlu0 %3710
  %3712 = vrot.lane.b32.xlu0 %v3645, 127
  %v3713 = vpop.permute.xlu0 %3712
  %3714 = vrot.lane.b32.xlu0 %v3646, 127
  %v3715 = vpop.permute.xlu0 %3714
  %3716 = vrot.lane.b32.xlu0 %v3647, 127
  %v3717 = vpop.permute.xlu0 %3716
  %3718 = vrot.lane.b32.xlu0 %v3648, 127
  %v3719 = vpop.permute.xlu0 %3718
  %3720 = vrot.lane.b32.xlu0 %v3649, 127
  %v3721 = vpop.permute.xlu0 %3720
  %3722 = vrot.lane.b32.xlu0 %v3650, 127
  %v3723 = vpop.permute.xlu0 %3722
  %3724 = vrot.lane.b32.xlu0 %v3651, 127
  %v3725 = vpop.permute.xlu0 %3724
  %3726 = vrot.lane.b32.xlu0 %v3652, 127
  %v3727 = vpop.permute.xlu0 %3726
  %3728 = vrot.lane.b32.xlu0 %v3653, 127
  %v3729 = vpop.permute.xlu0 %3728
  %3730 = vrot.lane.b32.xlu0 %v3654, 127
  %v3731 = vpop.permute.xlu0 %3730
  %3732 = vrot.lane.b32.xlu0 %v3655, 127
  %v3733 = vpop.permute.xlu0 %3732
  %3734 = vrot.lane.b32.xlu0 %v3656, 127
  %v3735 = vpop.permute.xlu0 %3734
  %3736 = vrot.lane.b32.xlu0 %v3657, 127
  %v3737 = vpop.permute.xlu0 %3736
  %3738 = vrot.lane.b32.xlu0 %v3658, 127
  %v3739 = vpop.permute.xlu0 %3738
  %3740 = vrot.lane.b32.xlu0 %v3659, 127
  %v3741 = vpop.permute.xlu0 %3740
  %3742 = vrot.lane.b32.xlu0 %v3660, 127
  %v3743 = vpop.permute.xlu0 %3742
  %3744 = vrot.lane.b32.xlu0 %v3661, 127
  %v3745 = vpop.permute.xlu0 %3744
  %3746 = vrot.lane.b32.xlu0 %v3662, 127
  %v3747 = vpop.permute.xlu0 %3746
  %3748 = vrot.lane.b32.xlu0 %v3663, 127
  %v3749 = vpop.permute.xlu0 %3748
  %3750 = vrot.lane.b32.xlu0 %v3664, 127
  %v3751 = vpop.permute.xlu0 %3750
  %3752 = vrot.lane.b32.xlu0 %v3665, 127
  %v3753 = vpop.permute.xlu0 %3752
  %3754 = vrot.lane.b32.xlu0 %v3666, 127
  %v3755 = vpop.permute.xlu0 %3754
  %3756 = vrot.lane.b32.xlu0 %v3667, 127
  %v3757 = vpop.permute.xlu0 %3756
  %3758 = vrot.lane.b32.xlu0 %v3668, 127
  %v3759 = vpop.permute.xlu0 %3758
  %3760 = vrot.lane.b32.xlu0 %v3669, 127
  %v3761 = vpop.permute.xlu0 %3760
  %3762 = vrot.lane.b32.xlu0 %v3670, 127
  %v3763 = vpop.permute.xlu0 %3762
  %3764 = vrot.lane.b32.xlu0 %v3671, 127
  %v3765 = vpop.permute.xlu0 %3764
  %3766 = vrot.lane.b32.xlu0 %v3672, 127
  %v3767 = vpop.permute.xlu0 %3766
  %3768 = vrot.lane.b32.xlu0 %v3673, 127
  %v3769 = vpop.permute.xlu0 %3768
  %v3770 = vsel %vm500, %v3707, %v3709
  %v3771 = vsel %vm500, %v3711, %v3713
  %v3772 = vsel %vm500, %v3715, %v3717
  %v3773 = vsel %vm500, %v3719, %v3721
  %v3774 = vsel %vm500, %v3723, %v3725
  %v3775 = vsel %vm500, %v3727, %v3729
  %v3776 = vsel %vm500, %v3731, %v3733
  %v3777 = vsel %vm500, %v3735, %v3737
  %v3778 = vsel %vm500, %v3739, %v3741
  %v3779 = vsel %vm500, %v3743, %v3745
  %v3780 = vsel %vm500, %v3747, %v3749
  %v3781 = vsel %vm500, %v3751, %v3753
  %v3782 = vsel %vm500, %v3755, %v3757
  %v3783 = vsel %vm500, %v3759, %v3761
  %v3784 = vsel %vm500, %v3763, %v3765
  %v3785 = vsel %vm500, %v3767, %v3769
  %v3818 = vadd.f32 %v3496, %v3770
  %v3819 = vadd.f32 %v3497, %v3709
  %v3820 = vadd.f32 %v3498, %v3771
  %v3821 = vadd.f32 %v3499, %v3713
  %v3822 = vadd.f32 %v3500, %v3772
  %v3823 = vadd.f32 %v3501, %v3717
  %v3824 = vadd.f32 %v3502, %v3773
  %v3825 = vadd.f32 %v3503, %v3721
  %v3826 = vadd.f32 %v3504, %v3774
  %v3827 = vadd.f32 %v3505, %v3725
  %v3828 = vadd.f32 %v3506, %v3775
  %v3829 = vadd.f32 %v3507, %v3729
  %v3830 = vadd.f32 %v3508, %v3776
  %v3831 = vadd.f32 %v3509, %v3733
  %v3832 = vadd.f32 %v3510, %v3777
  %v3833 = vadd.f32 %v3511, %v3737
  %v3834 = vadd.f32 %v3512, %v3778
  %v3835 = vadd.f32 %v3513, %v3741
  %v3836 = vadd.f32 %v3514, %v3779
  %v3837 = vadd.f32 %v3515, %v3745
  %v3838 = vadd.f32 %v3516, %v3780
  %v3839 = vadd.f32 %v3517, %v3749
  %v3840 = vadd.f32 %v3518, %v3781
  %v3841 = vadd.f32 %v3519, %v3753
  %v3842 = vadd.f32 %v3520, %v3782
  %v3843 = vadd.f32 %v3521, %v3757
  %v3844 = vadd.f32 %v3522, %v3783
  %v3845 = vadd.f32 %v3523, %v3761
  %v3846 = vadd.f32 %v3524, %v3784
  %v3847 = vadd.f32 %v3525, %v3765
  %v3848 = vadd.f32 %v3526, %v3785
  %v3849 = vadd.f32 %v3527, %v3769
  %v3851 = vcombine.high %v55, %v55
  %v3853 = vunpack.c.l.s4 1966171168
  %v3854 = vunpack.c.0.s8 %v3853
  %v3855 = vlaneseq
  %v3856 = vshrl.u32 %v3855, 7
  %v3857 = vsub.s32 %v3854, %v3856
  %v3858 = vrot.slane %v55, %v3857
  %v3860 = vunpack.c.l.s4 1966171168
  %v3861 = vunpack.c.0.s8 %v3860
  %v3862 = vlaneseq
  %v3863 = vshrl.u32 %v3862, 7
  %v3864 = vsub.s32 %v3861, %v3863
  %v3865 = vrot.slane %v3851, %v3864
  %v3866 = vcombine.high %v3858, %v3858
  %v3867 = vcombine.high %v3865, %v3865
  %v3869 = vunpack.c.l.s4 1966171168
  %v3870 = vunpack.c.0.s8 %v3869
  %v3871 = vlaneseq
  %v3872 = vshrl.u32 %v3871, 7
  %v3873 = vsub.s32 %v3870, %v3872
  %v3874 = vrot.slane %v3858, %v3873
  %v3876 = vunpack.c.l.s4 1966171168
  %v3877 = vunpack.c.0.s8 %v3876
  %v3878 = vlaneseq
  %v3879 = vshrl.u32 %v3878, 7
  %v3880 = vsub.s32 %v3877, %v3879
  %v3881 = vrot.slane %v3865, %v3880
  %v3883 = vunpack.c.l.s4 1966171168
  %v3884 = vunpack.c.0.s8 %v3883
  %v3885 = vlaneseq
  %v3886 = vshrl.u32 %v3885, 7
  %v3887 = vsub.s32 %v3884, %v3886
  %v3888 = vrot.slane %v3866, %v3887
  %v3890 = vunpack.c.l.s4 1966171168
  %v3891 = vunpack.c.0.s8 %v3890
  %v3892 = vlaneseq
  %v3893 = vshrl.u32 %v3892, 7
  %v3894 = vsub.s32 %v3891, %v3893
  %v3895 = vrot.slane %v3867, %v3894
  %v3896 = vcombine.high %v3874, %v3874
  %v3897 = vcombine.high %v3881, %v3881
  %v3898 = vcombine.high %v3888, %v3888
  %v3899 = vcombine.high %v3895, %v3895
  %v3900 = vlaneseq
  %v3901 = vshrl.u32 %v3900, 7
  %v3902 = vsub.s32 0, %v3901
  %v3903 = vrot.slane %v3874, %v3902
  %v3904 = vlaneseq
  %v3905 = vshrl.u32 %v3904, 7
  %v3906 = vsub.s32 0, %v3905
  %v3907 = vrot.slane %v3888, %v3906
  %v3908 = vlaneseq
  %v3909 = vshrl.u32 %v3908, 7
  %v3910 = vsub.s32 0, %v3909
  %v3911 = vrot.slane %v3896, %v3910
  %v3912 = vlaneseq
  %v3913 = vshrl.u32 %v3912, 7
  %v3914 = vsub.s32 0, %v3913
  %v3915 = vrot.slane %v3898, %v3914
  %v3916 = vlaneseq
  %v3917 = vshrl.u32 %v3916, 7
  %v3918 = vsub.s32 0, %v3917
  %v3919 = vrot.slane %v3881, %v3918
  %v3920 = vlaneseq
  %v3921 = vshrl.u32 %v3920, 7
  %v3922 = vsub.s32 0, %v3921
  %v3923 = vrot.slane %v3895, %v3922
  %v3924 = vlaneseq
  %v3925 = vshrl.u32 %v3924, 7
  %v3926 = vsub.s32 0, %v3925
  %v3927 = vrot.slane %v3897, %v3926
  %v3928 = vlaneseq
  %v3929 = vshrl.u32 %v3928, 7
  %v3930 = vsub.s32 0, %v3929
  %v3931 = vrot.slane %v3899, %v3930
  %3932 = vset.pattern.permute.xlu0 0
  %3933 = vperm.xlu0 %3932, %v3903
  %v3934 = vpop.permute.xlu0 %3933
  %3936 = vset.pattern.permute.xlu0 0
  %3937 = vperm.xlu0 %3936, %v3907
  %v3938 = vpop.permute.xlu0 %3937
  %3940 = vset.pattern.permute.xlu0 0
  %3941 = vperm.xlu0 %3940, %v3911
  %v3942 = vpop.permute.xlu0 %3941
  %3944 = vset.pattern.permute.xlu0 0
  %3945 = vperm.xlu0 %3944, %v3915
  %v3946 = vpop.permute.xlu0 %3945
  %3948 = vset.pattern.permute.xlu0 0
  %3949 = vperm.xlu0 %3948, %v3919
  %v3950 = vpop.permute.xlu0 %3949
  %3952 = vset.pattern.permute.xlu0 0
  %3953 = vperm.xlu0 %3952, %v3923
  %v3954 = vpop.permute.xlu0 %3953
  %3956 = vset.pattern.permute.xlu0 0
  %3957 = vperm.xlu0 %3956, %v3927
  %v3958 = vpop.permute.xlu0 %3957
  %3960 = vset.pattern.permute.xlu0 0
  %3961 = vperm.xlu0 %3960, %v3931
  %v3962 = vpop.permute.xlu0 %3961
  %v3964 = vmul.f32 %v3934, %v26
  %v3965 = vmul.f32 %v3934, %v27
  %v3966 = vmul.f32 %v3934, %v28
  %v3967 = vmul.f32 %v3934, %v29
  %v3968 = vmul.f32 %v3938, %v26
  %v3969 = vmul.f32 %v3938, %v27
  %v3970 = vmul.f32 %v3938, %v28
  %v3971 = vmul.f32 %v3938, %v29
  %v3972 = vmul.f32 %v3942, %v26
  %v3973 = vmul.f32 %v3942, %v27
  %v3974 = vmul.f32 %v3942, %v28
  %v3975 = vmul.f32 %v3942, %v29
  %v3976 = vmul.f32 %v3946, %v26
  %v3977 = vmul.f32 %v3946, %v27
  %v3978 = vmul.f32 %v3946, %v28
  %v3979 = vmul.f32 %v3946, %v29
  %v3980 = vmul.f32 %v3950, %v26
  %v3981 = vmul.f32 %v3950, %v27
  %v3982 = vmul.f32 %v3950, %v28
  %v3983 = vmul.f32 %v3950, %v29
  %v3984 = vmul.f32 %v3954, %v26
  %v3985 = vmul.f32 %v3954, %v27
  %v3986 = vmul.f32 %v3954, %v28
  %v3987 = vmul.f32 %v3954, %v29
  %v3988 = vmul.f32 %v3958, %v26
  %v3989 = vmul.f32 %v3958, %v27
  %v3990 = vmul.f32 %v3958, %v28
  %v3991 = vmul.f32 %v3958, %v29
  %v3992 = vmul.f32 %v3962, %v26
  %v3993 = vmul.f32 %v3962, %v27
  %v3994 = vmul.f32 %v3962, %v28
  %v3995 = vmul.f32 %v3962, %v29
  %4028 = vrot.lane.b32.xlu0 %v3964, 126
  %v4029 = vpop.permute.xlu0 %4028
  %4030 = vrot.lane.b32.xlu0 %v3965, 126
  %v4031 = vpop.permute.xlu0 %4030
  %4032 = vrot.lane.b32.xlu0 %v3966, 126
  %v4033 = vpop.permute.xlu0 %4032
  %4034 = vrot.lane.b32.xlu0 %v3967, 126
  %v4035 = vpop.permute.xlu0 %4034
  %4036 = vrot.lane.b32.xlu0 %v3968, 126
  %v4037 = vpop.permute.xlu0 %4036
  %4038 = vrot.lane.b32.xlu0 %v3969, 126
  %v4039 = vpop.permute.xlu0 %4038
  %4040 = vrot.lane.b32.xlu0 %v3970, 126
  %v4041 = vpop.permute.xlu0 %4040
  %4042 = vrot.lane.b32.xlu0 %v3971, 126
  %v4043 = vpop.permute.xlu0 %4042
  %4044 = vrot.lane.b32.xlu0 %v3972, 126
  %v4045 = vpop.permute.xlu0 %4044
  %4046 = vrot.lane.b32.xlu0 %v3973, 126
  %v4047 = vpop.permute.xlu0 %4046
  %4048 = vrot.lane.b32.xlu0 %v3974, 126
  %v4049 = vpop.permute.xlu0 %4048
  %4050 = vrot.lane.b32.xlu0 %v3975, 126
  %v4051 = vpop.permute.xlu0 %4050
  %4052 = vrot.lane.b32.xlu0 %v3976, 126
  %v4053 = vpop.permute.xlu0 %4052
  %4054 = vrot.lane.b32.xlu0 %v3977, 126
  %v4055 = vpop.permute.xlu0 %4054
  %4056 = vrot.lane.b32.xlu0 %v3978, 126
  %v4057 = vpop.permute.xlu0 %4056
  %4058 = vrot.lane.b32.xlu0 %v3979, 126
  %v4059 = vpop.permute.xlu0 %4058
  %4060 = vrot.lane.b32.xlu0 %v3980, 126
  %v4061 = vpop.permute.xlu0 %4060
  %4062 = vrot.lane.b32.xlu0 %v3981, 126
  %v4063 = vpop.permute.xlu0 %4062
  %4064 = vrot.lane.b32.xlu0 %v3982, 126
  %v4065 = vpop.permute.xlu0 %4064
  %4066 = vrot.lane.b32.xlu0 %v3983, 126
  %v4067 = vpop.permute.xlu0 %4066
  %4068 = vrot.lane.b32.xlu0 %v3984, 126
  %v4069 = vpop.permute.xlu0 %4068
  %4070 = vrot.lane.b32.xlu0 %v3985, 126
  %v4071 = vpop.permute.xlu0 %4070
  %4072 = vrot.lane.b32.xlu0 %v3986, 126
  %v4073 = vpop.permute.xlu0 %4072
  %4074 = vrot.lane.b32.xlu0 %v3987, 126
  %v4075 = vpop.permute.xlu0 %4074
  %4076 = vrot.lane.b32.xlu0 %v3988, 126
  %v4077 = vpop.permute.xlu0 %4076
  %4078 = vrot.lane.b32.xlu0 %v3989, 126
  %v4079 = vpop.permute.xlu0 %4078
  %4080 = vrot.lane.b32.xlu0 %v3990, 126
  %v4081 = vpop.permute.xlu0 %4080
  %4082 = vrot.lane.b32.xlu0 %v3991, 126
  %v4083 = vpop.permute.xlu0 %4082
  %4084 = vrot.lane.b32.xlu0 %v3992, 126
  %v4085 = vpop.permute.xlu0 %4084
  %4086 = vrot.lane.b32.xlu0 %v3993, 126
  %v4087 = vpop.permute.xlu0 %4086
  %4088 = vrot.lane.b32.xlu0 %v3994, 126
  %v4089 = vpop.permute.xlu0 %4088
  %4090 = vrot.lane.b32.xlu0 %v3995, 126
  %v4091 = vpop.permute.xlu0 %4090
  %v4092 = vsel %vm823, %v4029, %v4031
  %v4093 = vsel %vm823, %v4033, %v4035
  %v4094 = vsel %vm823, %v4037, %v4039
  %v4095 = vsel %vm823, %v4041, %v4043
  %v4096 = vsel %vm823, %v4045, %v4047
  %v4097 = vsel %vm823, %v4049, %v4051
  %v4098 = vsel %vm823, %v4053, %v4055
  %v4099 = vsel %vm823, %v4057, %v4059
  %v4100 = vsel %vm823, %v4061, %v4063
  %v4101 = vsel %vm823, %v4065, %v4067
  %v4102 = vsel %vm823, %v4069, %v4071
  %v4103 = vsel %vm823, %v4073, %v4075
  %v4104 = vsel %vm823, %v4077, %v4079
  %v4105 = vsel %vm823, %v4081, %v4083
  %v4106 = vsel %vm823, %v4085, %v4087
  %v4107 = vsel %vm823, %v4089, %v4091
  %v4140 = vadd.f32 %v3818, %v4092
  %v4141 = vadd.f32 %v3819, %v4031
  %v4142 = vadd.f32 %v3820, %v4093
  %v4143 = vadd.f32 %v3821, %v4035
  %v4144 = vadd.f32 %v3822, %v4094
  %v4145 = vadd.f32 %v3823, %v4039
  %v4146 = vadd.f32 %v3824, %v4095
  %v4147 = vadd.f32 %v3825, %v4043
  %v4148 = vadd.f32 %v3826, %v4096
  %v4149 = vadd.f32 %v3827, %v4047
  %v4150 = vadd.f32 %v3828, %v4097
  %v4151 = vadd.f32 %v3829, %v4051
  %v4152 = vadd.f32 %v3830, %v4098
  %v4153 = vadd.f32 %v3831, %v4055
  %v4154 = vadd.f32 %v3832, %v4099
  %v4155 = vadd.f32 %v3833, %v4059
  %v4156 = vadd.f32 %v3834, %v4100
  %v4157 = vadd.f32 %v3835, %v4063
  %v4158 = vadd.f32 %v3836, %v4101
  %v4159 = vadd.f32 %v3837, %v4067
  %v4160 = vadd.f32 %v3838, %v4102
  %v4161 = vadd.f32 %v3839, %v4071
  %v4162 = vadd.f32 %v3840, %v4103
  %v4163 = vadd.f32 %v3841, %v4075
  %v4164 = vadd.f32 %v3842, %v4104
  %v4165 = vadd.f32 %v3843, %v4079
  %v4166 = vadd.f32 %v3844, %v4105
  %v4167 = vadd.f32 %v3845, %v4083
  %v4168 = vadd.f32 %v3846, %v4106
  %v4169 = vadd.f32 %v3847, %v4087
  %v4170 = vadd.f32 %v3848, %v4107
  %v4171 = vadd.f32 %v3849, %v4091
  %v4173 = vcombine.high %v56, %v56
  %v4175 = vunpack.c.l.s4 1966171168
  %v4176 = vunpack.c.0.s8 %v4175
  %v4177 = vlaneseq
  %v4178 = vshrl.u32 %v4177, 7
  %v4179 = vsub.s32 %v4176, %v4178
  %v4180 = vrot.slane %v56, %v4179
  %v4182 = vunpack.c.l.s4 1966171168
  %v4183 = vunpack.c.0.s8 %v4182
  %v4184 = vlaneseq
  %v4185 = vshrl.u32 %v4184, 7
  %v4186 = vsub.s32 %v4183, %v4185
  %v4187 = vrot.slane %v4173, %v4186
  %v4188 = vcombine.high %v4180, %v4180
  %v4189 = vcombine.high %v4187, %v4187
  %v4191 = vunpack.c.l.s4 1966171168
  %v4192 = vunpack.c.0.s8 %v4191
  %v4193 = vlaneseq
  %v4194 = vshrl.u32 %v4193, 7
  %v4195 = vsub.s32 %v4192, %v4194
  %v4196 = vrot.slane %v4180, %v4195
  %v4198 = vunpack.c.l.s4 1966171168
  %v4199 = vunpack.c.0.s8 %v4198
  %v4200 = vlaneseq
  %v4201 = vshrl.u32 %v4200, 7
  %v4202 = vsub.s32 %v4199, %v4201
  %v4203 = vrot.slane %v4187, %v4202
  %v4205 = vunpack.c.l.s4 1966171168
  %v4206 = vunpack.c.0.s8 %v4205
  %v4207 = vlaneseq
  %v4208 = vshrl.u32 %v4207, 7
  %v4209 = vsub.s32 %v4206, %v4208
  %v4210 = vrot.slane %v4188, %v4209
  %v4212 = vunpack.c.l.s4 1966171168
  %v4213 = vunpack.c.0.s8 %v4212
  %v4214 = vlaneseq
  %v4215 = vshrl.u32 %v4214, 7
  %v4216 = vsub.s32 %v4213, %v4215
  %v4217 = vrot.slane %v4189, %v4216
  %v4218 = vcombine.high %v4196, %v4196
  %v4219 = vcombine.high %v4203, %v4203
  %v4220 = vcombine.high %v4210, %v4210
  %v4221 = vcombine.high %v4217, %v4217
  %v4222 = vlaneseq
  %v4223 = vshrl.u32 %v4222, 7
  %v4224 = vsub.s32 0, %v4223
  %v4225 = vrot.slane %v4196, %v4224
  %v4226 = vlaneseq
  %v4227 = vshrl.u32 %v4226, 7
  %v4228 = vsub.s32 0, %v4227
  %v4229 = vrot.slane %v4210, %v4228
  %v4230 = vlaneseq
  %v4231 = vshrl.u32 %v4230, 7
  %v4232 = vsub.s32 0, %v4231
  %v4233 = vrot.slane %v4218, %v4232
  %v4234 = vlaneseq
  %v4235 = vshrl.u32 %v4234, 7
  %v4236 = vsub.s32 0, %v4235
  %v4237 = vrot.slane %v4220, %v4236
  %v4238 = vlaneseq
  %v4239 = vshrl.u32 %v4238, 7
  %v4240 = vsub.s32 0, %v4239
  %v4241 = vrot.slane %v4203, %v4240
  %v4242 = vlaneseq
  %v4243 = vshrl.u32 %v4242, 7
  %v4244 = vsub.s32 0, %v4243
  %v4245 = vrot.slane %v4217, %v4244
  %v4246 = vlaneseq
  %v4247 = vshrl.u32 %v4246, 7
  %v4248 = vsub.s32 0, %v4247
  %v4249 = vrot.slane %v4219, %v4248
  %v4250 = vlaneseq
  %v4251 = vshrl.u32 %v4250, 7
  %v4252 = vsub.s32 0, %v4251
  %v4253 = vrot.slane %v4221, %v4252
  %4254 = vset.pattern.permute.xlu0 0
  %4255 = vperm.xlu0 %4254, %v4225
  %v4256 = vpop.permute.xlu0 %4255
  %4258 = vset.pattern.permute.xlu0 0
  %4259 = vperm.xlu0 %4258, %v4229
  %v4260 = vpop.permute.xlu0 %4259
  %4262 = vset.pattern.permute.xlu0 0
  %4263 = vperm.xlu0 %4262, %v4233
  %v4264 = vpop.permute.xlu0 %4263
  %4266 = vset.pattern.permute.xlu0 0
  %4267 = vperm.xlu0 %4266, %v4237
  %v4268 = vpop.permute.xlu0 %4267
  %4270 = vset.pattern.permute.xlu0 0
  %4271 = vperm.xlu0 %4270, %v4241
  %v4272 = vpop.permute.xlu0 %4271
  %4274 = vset.pattern.permute.xlu0 0
  %4275 = vperm.xlu0 %4274, %v4245
  %v4276 = vpop.permute.xlu0 %4275
  %4278 = vset.pattern.permute.xlu0 0
  %4279 = vperm.xlu0 %4278, %v4249
  %v4280 = vpop.permute.xlu0 %4279
  %4282 = vset.pattern.permute.xlu0 0
  %4283 = vperm.xlu0 %4282, %v4253
  %v4284 = vpop.permute.xlu0 %4283
  %v4286 = vmul.f32 %v4256, %v26
  %v4287 = vmul.f32 %v4256, %v27
  %v4288 = vmul.f32 %v4256, %v28
  %v4289 = vmul.f32 %v4256, %v29
  %v4290 = vmul.f32 %v4256, %v30
  %v4291 = vmul.f32 %v4256, %v31
  %v4292 = vmul.f32 %v4260, %v26
  %v4293 = vmul.f32 %v4260, %v27
  %v4294 = vmul.f32 %v4260, %v28
  %v4295 = vmul.f32 %v4260, %v29
  %v4296 = vmul.f32 %v4260, %v30
  %v4297 = vmul.f32 %v4260, %v31
  %v4298 = vmul.f32 %v4264, %v26
  %v4299 = vmul.f32 %v4264, %v27
  %v4300 = vmul.f32 %v4264, %v28
  %v4301 = vmul.f32 %v4264, %v29
  %v4302 = vmul.f32 %v4264, %v30
  %v4303 = vmul.f32 %v4264, %v31
  %v4304 = vmul.f32 %v4268, %v26
  %v4305 = vmul.f32 %v4268, %v27
  %v4306 = vmul.f32 %v4268, %v28
  %v4307 = vmul.f32 %v4268, %v29
  %v4308 = vmul.f32 %v4268, %v30
  %v4309 = vmul.f32 %v4268, %v31
  %v4310 = vmul.f32 %v4272, %v26
  %v4311 = vmul.f32 %v4272, %v27
  %v4312 = vmul.f32 %v4272, %v28
  %v4313 = vmul.f32 %v4272, %v29
  %v4314 = vmul.f32 %v4272, %v30
  %v4315 = vmul.f32 %v4272, %v31
  %v4316 = vmul.f32 %v4276, %v26
  %v4317 = vmul.f32 %v4276, %v27
  %v4318 = vmul.f32 %v4276, %v28
  %v4319 = vmul.f32 %v4276, %v29
  %v4320 = vmul.f32 %v4276, %v30
  %v4321 = vmul.f32 %v4276, %v31
  %v4322 = vmul.f32 %v4280, %v26
  %v4323 = vmul.f32 %v4280, %v27
  %v4324 = vmul.f32 %v4280, %v28
  %v4325 = vmul.f32 %v4280, %v29
  %v4326 = vmul.f32 %v4280, %v30
  %v4327 = vmul.f32 %v4280, %v31
  %v4328 = vmul.f32 %v4284, %v26
  %v4329 = vmul.f32 %v4284, %v27
  %v4330 = vmul.f32 %v4284, %v28
  %v4331 = vmul.f32 %v4284, %v29
  %v4332 = vmul.f32 %v4284, %v30
  %v4333 = vmul.f32 %v4284, %v31
  %v4382 = vrot.slane %v4286, 1
  %v4383 = vrot.slane %v4288, 1
  %v4384 = vsel %vm1114, %v4382, %v4383
  %v4385 = vrot.slane %v4287, 1
  %v4386 = vrot.slane %v4289, 1
  %v4387 = vsel %vm1114, %v4385, %v4386
  %v4388 = vrot.slane %v4290, 1
  %v4389 = vsel %vm1114, %v4383, %v4388
  %v4390 = vrot.slane %v4291, 1
  %v4391 = vsel %vm1114, %v4386, %v4390
  %v4392 = vrot.slane %v4292, 1
  %v4393 = vrot.slane %v4294, 1
  %v4394 = vsel %vm1114, %v4392, %v4393
  %v4395 = vrot.slane %v4293, 1
  %v4396 = vrot.slane %v4295, 1
  %v4397 = vsel %vm1114, %v4395, %v4396
  %v4398 = vrot.slane %v4296, 1
  %v4399 = vsel %vm1114, %v4393, %v4398
  %v4400 = vrot.slane %v4297, 1
  %v4401 = vsel %vm1114, %v4396, %v4400
  %v4402 = vrot.slane %v4298, 1
  %v4403 = vrot.slane %v4300, 1
  %v4404 = vsel %vm1114, %v4402, %v4403
  %v4405 = vrot.slane %v4299, 1
  %v4406 = vrot.slane %v4301, 1
  %v4407 = vsel %vm1114, %v4405, %v4406
  %v4408 = vrot.slane %v4302, 1
  %v4409 = vsel %vm1114, %v4403, %v4408
  %v4410 = vrot.slane %v4303, 1
  %v4411 = vsel %vm1114, %v4406, %v4410
  %v4412 = vrot.slane %v4304, 1
  %v4413 = vrot.slane %v4306, 1
  %v4414 = vsel %vm1114, %v4412, %v4413
  %v4415 = vrot.slane %v4305, 1
  %v4416 = vrot.slane %v4307, 1
  %v4417 = vsel %vm1114, %v4415, %v4416
  %v4418 = vrot.slane %v4308, 1
  %v4419 = vsel %vm1114, %v4413, %v4418
  %v4420 = vrot.slane %v4309, 1
  %v4421 = vsel %vm1114, %v4416, %v4420
  %v4422 = vrot.slane %v4310, 1
  %v4423 = vrot.slane %v4312, 1
  %v4424 = vsel %vm1114, %v4422, %v4423
  %v4425 = vrot.slane %v4311, 1
  %v4426 = vrot.slane %v4313, 1
  %v4427 = vsel %vm1114, %v4425, %v4426
  %v4428 = vrot.slane %v4314, 1
  %v4429 = vsel %vm1114, %v4423, %v4428
  %v4430 = vrot.slane %v4315, 1
  %v4431 = vsel %vm1114, %v4426, %v4430
  %v4432 = vrot.slane %v4316, 1
  %v4433 = vrot.slane %v4318, 1
  %v4434 = vsel %vm1114, %v4432, %v4433
  %v4435 = vrot.slane %v4317, 1
  %v4436 = vrot.slane %v4319, 1
  %v4437 = vsel %vm1114, %v4435, %v4436
  %v4438 = vrot.slane %v4320, 1
  %v4439 = vsel %vm1114, %v4433, %v4438
  %v4440 = vrot.slane %v4321, 1
  %v4441 = vsel %vm1114, %v4436, %v4440
  %v4442 = vrot.slane %v4322, 1
  %v4443 = vrot.slane %v4324, 1
  %v4444 = vsel %vm1114, %v4442, %v4443
  %v4445 = vrot.slane %v4323, 1
  %v4446 = vrot.slane %v4325, 1
  %v4447 = vsel %vm1114, %v4445, %v4446
  %v4448 = vrot.slane %v4326, 1
  %v4449 = vsel %vm1114, %v4443, %v4448
  %v4450 = vrot.slane %v4327, 1
  %v4451 = vsel %vm1114, %v4446, %v4450
  %v4452 = vrot.slane %v4328, 1
  %v4453 = vrot.slane %v4330, 1
  %v4454 = vsel %vm1114, %v4452, %v4453
  %v4455 = vrot.slane %v4329, 1
  %v4456 = vrot.slane %v4331, 1
  %v4457 = vsel %vm1114, %v4455, %v4456
  %v4458 = vrot.slane %v4332, 1
  %v4459 = vsel %vm1114, %v4453, %v4458
  %v4460 = vrot.slane %v4333, 1
  %v4461 = vsel %vm1114, %v4456, %v4460
  %v4494 = vadd.f32 %v4140, %v4384
  %v4495 = vadd.f32 %v4141, %v4387
  %v4496 = vadd.f32 %v4142, %v4389
  %v4497 = vadd.f32 %v4143, %v4391
  %v4498 = vadd.f32 %v4144, %v4394
  %v4499 = vadd.f32 %v4145, %v4397
  %v4500 = vadd.f32 %v4146, %v4399
  %v4501 = vadd.f32 %v4147, %v4401
  %v4502 = vadd.f32 %v4148, %v4404
  %v4503 = vadd.f32 %v4149, %v4407
  %v4504 = vadd.f32 %v4150, %v4409
  %v4505 = vadd.f32 %v4151, %v4411
  %v4506 = vadd.f32 %v4152, %v4414
  %v4507 = vadd.f32 %v4153, %v4417
  %v4508 = vadd.f32 %v4154, %v4419
  %v4509 = vadd.f32 %v4155, %v4421
  %v4510 = vadd.f32 %v4156, %v4424
  %v4511 = vadd.f32 %v4157, %v4427
  %v4512 = vadd.f32 %v4158, %v4429
  %v4513 = vadd.f32 %v4159, %v4431
  %v4514 = vadd.f32 %v4160, %v4434
  %v4515 = vadd.f32 %v4161, %v4437
  %v4516 = vadd.f32 %v4162, %v4439
  %v4517 = vadd.f32 %v4163, %v4441
  %v4518 = vadd.f32 %v4164, %v4444
  %v4519 = vadd.f32 %v4165, %v4447
  %v4520 = vadd.f32 %v4166, %v4449
  %v4521 = vadd.f32 %v4167, %v4451
  %v4522 = vadd.f32 %v4168, %v4454
  %v4523 = vadd.f32 %v4169, %v4457
  %v4524 = vadd.f32 %v4170, %v4459
  %v4525 = vadd.f32 %v4171, %v4461
  %v4527 = vcombine.high %v57, %v57
  %v4529 = vunpack.c.l.s4 1966171168
  %v4530 = vunpack.c.0.s8 %v4529
  %v4531 = vlaneseq
  %v4532 = vshrl.u32 %v4531, 7
  %v4533 = vsub.s32 %v4530, %v4532
  %v4534 = vrot.slane %v57, %v4533
  %v4536 = vunpack.c.l.s4 1966171168
  %v4537 = vunpack.c.0.s8 %v4536
  %v4538 = vlaneseq
  %v4539 = vshrl.u32 %v4538, 7
  %v4540 = vsub.s32 %v4537, %v4539
  %v4541 = vrot.slane %v4527, %v4540
  %v4542 = vcombine.high %v4534, %v4534
  %v4543 = vcombine.high %v4541, %v4541
  %v4545 = vunpack.c.l.s4 1966171168
  %v4546 = vunpack.c.0.s8 %v4545
  %v4547 = vlaneseq
  %v4548 = vshrl.u32 %v4547, 7
  %v4549 = vsub.s32 %v4546, %v4548
  %v4550 = vrot.slane %v4534, %v4549
  %v4552 = vunpack.c.l.s4 1966171168
  %v4553 = vunpack.c.0.s8 %v4552
  %v4554 = vlaneseq
  %v4555 = vshrl.u32 %v4554, 7
  %v4556 = vsub.s32 %v4553, %v4555
  %v4557 = vrot.slane %v4541, %v4556
  %v4559 = vunpack.c.l.s4 1966171168
  %v4560 = vunpack.c.0.s8 %v4559
  %v4561 = vlaneseq
  %v4562 = vshrl.u32 %v4561, 7
  %v4563 = vsub.s32 %v4560, %v4562
  %v4564 = vrot.slane %v4542, %v4563
  %v4566 = vunpack.c.l.s4 1966171168
  %v4567 = vunpack.c.0.s8 %v4566
  %v4568 = vlaneseq
  %v4569 = vshrl.u32 %v4568, 7
  %v4570 = vsub.s32 %v4567, %v4569
  %v4571 = vrot.slane %v4543, %v4570
  %v4572 = vcombine.high %v4550, %v4550
  %v4573 = vcombine.high %v4557, %v4557
  %v4574 = vcombine.high %v4564, %v4564
  %v4575 = vcombine.high %v4571, %v4571
  %v4576 = vlaneseq
  %v4577 = vshrl.u32 %v4576, 7
  %v4578 = vsub.s32 0, %v4577
  %v4579 = vrot.slane %v4550, %v4578
  %v4580 = vlaneseq
  %v4581 = vshrl.u32 %v4580, 7
  %v4582 = vsub.s32 0, %v4581
  %v4583 = vrot.slane %v4564, %v4582
  %v4584 = vlaneseq
  %v4585 = vshrl.u32 %v4584, 7
  %v4586 = vsub.s32 0, %v4585
  %v4587 = vrot.slane %v4572, %v4586
  %v4588 = vlaneseq
  %v4589 = vshrl.u32 %v4588, 7
  %v4590 = vsub.s32 0, %v4589
  %v4591 = vrot.slane %v4574, %v4590
  %v4592 = vlaneseq
  %v4593 = vshrl.u32 %v4592, 7
  %v4594 = vsub.s32 0, %v4593
  %v4595 = vrot.slane %v4557, %v4594
  %v4596 = vlaneseq
  %v4597 = vshrl.u32 %v4596, 7
  %v4598 = vsub.s32 0, %v4597
  %v4599 = vrot.slane %v4571, %v4598
  %v4600 = vlaneseq
  %v4601 = vshrl.u32 %v4600, 7
  %v4602 = vsub.s32 0, %v4601
  %v4603 = vrot.slane %v4573, %v4602
  %v4604 = vlaneseq
  %v4605 = vshrl.u32 %v4604, 7
  %v4606 = vsub.s32 0, %v4605
  %v4607 = vrot.slane %v4575, %v4606
  %4608 = vset.pattern.permute.xlu0 0
  %4609 = vperm.xlu0 %4608, %v4579
  %v4610 = vpop.permute.xlu0 %4609
  %4612 = vset.pattern.permute.xlu0 0
  %4613 = vperm.xlu0 %4612, %v4583
  %v4614 = vpop.permute.xlu0 %4613
  %4616 = vset.pattern.permute.xlu0 0
  %4617 = vperm.xlu0 %4616, %v4587
  %v4618 = vpop.permute.xlu0 %4617
  %4620 = vset.pattern.permute.xlu0 0
  %4621 = vperm.xlu0 %4620, %v4591
  %v4622 = vpop.permute.xlu0 %4621
  %4624 = vset.pattern.permute.xlu0 0
  %4625 = vperm.xlu0 %4624, %v4595
  %v4626 = vpop.permute.xlu0 %4625
  %4628 = vset.pattern.permute.xlu0 0
  %4629 = vperm.xlu0 %4628, %v4599
  %v4630 = vpop.permute.xlu0 %4629
  %4632 = vset.pattern.permute.xlu0 0
  %4633 = vperm.xlu0 %4632, %v4603
  %v4634 = vpop.permute.xlu0 %4633
  %4636 = vset.pattern.permute.xlu0 0
  %4637 = vperm.xlu0 %4636, %v4607
  %v4638 = vpop.permute.xlu0 %4637
  %v4640 = vmul.f32 %v4610, %v26
  %v4641 = vmul.f32 %v4610, %v27
  %v4642 = vmul.f32 %v4610, %v28
  %v4643 = vmul.f32 %v4610, %v29
  %v4644 = vmul.f32 %v4610, %v30
  %v4645 = vmul.f32 %v4610, %v31
  %v4646 = vmul.f32 %v4614, %v26
  %v4647 = vmul.f32 %v4614, %v27
  %v4648 = vmul.f32 %v4614, %v28
  %v4649 = vmul.f32 %v4614, %v29
  %v4650 = vmul.f32 %v4614, %v30
  %v4651 = vmul.f32 %v4614, %v31
  %v4652 = vmul.f32 %v4618, %v26
  %v4653 = vmul.f32 %v4618, %v27
  %v4654 = vmul.f32 %v4618, %v28
  %v4655 = vmul.f32 %v4618, %v29
  %v4656 = vmul.f32 %v4618, %v30
  %v4657 = vmul.f32 %v4618, %v31
  %v4658 = vmul.f32 %v4622, %v26
  %v4659 = vmul.f32 %v4622, %v27
  %v4660 = vmul.f32 %v4622, %v28
  %v4661 = vmul.f32 %v4622, %v29
  %v4662 = vmul.f32 %v4622, %v30
  %v4663 = vmul.f32 %v4622, %v31
  %v4664 = vmul.f32 %v4626, %v26
  %v4665 = vmul.f32 %v4626, %v27
  %v4666 = vmul.f32 %v4626, %v28
  %v4667 = vmul.f32 %v4626, %v29
  %v4668 = vmul.f32 %v4626, %v30
  %v4669 = vmul.f32 %v4626, %v31
  %v4670 = vmul.f32 %v4630, %v26
  %v4671 = vmul.f32 %v4630, %v27
  %v4672 = vmul.f32 %v4630, %v28
  %v4673 = vmul.f32 %v4630, %v29
  %v4674 = vmul.f32 %v4630, %v30
  %v4675 = vmul.f32 %v4630, %v31
  %v4676 = vmul.f32 %v4634, %v26
  %v4677 = vmul.f32 %v4634, %v27
  %v4678 = vmul.f32 %v4634, %v28
  %v4679 = vmul.f32 %v4634, %v29
  %v4680 = vmul.f32 %v4634, %v30
  %v4681 = vmul.f32 %v4634, %v31
  %v4682 = vmul.f32 %v4638, %v26
  %v4683 = vmul.f32 %v4638, %v27
  %v4684 = vmul.f32 %v4638, %v28
  %v4685 = vmul.f32 %v4638, %v29
  %v4686 = vmul.f32 %v4638, %v30
  %v4687 = vmul.f32 %v4638, %v31
  %v4736 = vrot.slane %v4640, 1
  %v4737 = vrot.slane %v4642, 1
  %v4738 = vsel %vm1114, %v4736, %v4737
  %v4739 = vrot.slane %v4641, 1
  %v4740 = vrot.slane %v4643, 1
  %v4741 = vsel %vm1114, %v4739, %v4740
  %v4742 = vrot.slane %v4644, 1
  %v4743 = vsel %vm1114, %v4737, %v4742
  %v4744 = vrot.slane %v4645, 1
  %v4745 = vsel %vm1114, %v4740, %v4744
  %v4746 = vrot.slane %v4646, 1
  %v4747 = vrot.slane %v4648, 1
  %v4748 = vsel %vm1114, %v4746, %v4747
  %v4749 = vrot.slane %v4647, 1
  %v4750 = vrot.slane %v4649, 1
  %v4751 = vsel %vm1114, %v4749, %v4750
  %v4752 = vrot.slane %v4650, 1
  %v4753 = vsel %vm1114, %v4747, %v4752
  %v4754 = vrot.slane %v4651, 1
  %v4755 = vsel %vm1114, %v4750, %v4754
  %v4756 = vrot.slane %v4652, 1
  %v4757 = vrot.slane %v4654, 1
  %v4758 = vsel %vm1114, %v4756, %v4757
  %v4759 = vrot.slane %v4653, 1
  %v4760 = vrot.slane %v4655, 1
  %v4761 = vsel %vm1114, %v4759, %v4760
  %v4762 = vrot.slane %v4656, 1
  %v4763 = vsel %vm1114, %v4757, %v4762
  %v4764 = vrot.slane %v4657, 1
  %v4765 = vsel %vm1114, %v4760, %v4764
  %v4766 = vrot.slane %v4658, 1
  %v4767 = vrot.slane %v4660, 1
  %v4768 = vsel %vm1114, %v4766, %v4767
  %v4769 = vrot.slane %v4659, 1
  %v4770 = vrot.slane %v4661, 1
  %v4771 = vsel %vm1114, %v4769, %v4770
  %v4772 = vrot.slane %v4662, 1
  %v4773 = vsel %vm1114, %v4767, %v4772
  %v4774 = vrot.slane %v4663, 1
  %v4775 = vsel %vm1114, %v4770, %v4774
  %v4776 = vrot.slane %v4664, 1
  %v4777 = vrot.slane %v4666, 1
  %v4778 = vsel %vm1114, %v4776, %v4777
  %v4779 = vrot.slane %v4665, 1
  %v4780 = vrot.slane %v4667, 1
  %v4781 = vsel %vm1114, %v4779, %v4780
  %v4782 = vrot.slane %v4668, 1
  %v4783 = vsel %vm1114, %v4777, %v4782
  %v4784 = vrot.slane %v4669, 1
  %v4785 = vsel %vm1114, %v4780, %v4784
  %v4786 = vrot.slane %v4670, 1
  %v4787 = vrot.slane %v4672, 1
  %v4788 = vsel %vm1114, %v4786, %v4787
  %v4789 = vrot.slane %v4671, 1
  %v4790 = vrot.slane %v4673, 1
  %v4791 = vsel %vm1114, %v4789, %v4790
  %v4792 = vrot.slane %v4674, 1
  %v4793 = vsel %vm1114, %v4787, %v4792
  %v4794 = vrot.slane %v4675, 1
  %v4795 = vsel %vm1114, %v4790, %v4794
  %v4796 = vrot.slane %v4676, 1
  %v4797 = vrot.slane %v4678, 1
  %v4798 = vsel %vm1114, %v4796, %v4797
  %v4799 = vrot.slane %v4677, 1
  %v4800 = vrot.slane %v4679, 1
  %v4801 = vsel %vm1114, %v4799, %v4800
  %v4802 = vrot.slane %v4680, 1
  %v4803 = vsel %vm1114, %v4797, %v4802
  %v4804 = vrot.slane %v4681, 1
  %v4805 = vsel %vm1114, %v4800, %v4804
  %v4806 = vrot.slane %v4682, 1
  %v4807 = vrot.slane %v4684, 1
  %v4808 = vsel %vm1114, %v4806, %v4807
  %v4809 = vrot.slane %v4683, 1
  %v4810 = vrot.slane %v4685, 1
  %v4811 = vsel %vm1114, %v4809, %v4810
  %v4812 = vrot.slane %v4686, 1
  %v4813 = vsel %vm1114, %v4807, %v4812
  %v4814 = vrot.slane %v4687, 1
  %v4815 = vsel %vm1114, %v4810, %v4814
  %4816 = vrot.lane.b32.xlu0 %v4738, 127
  %v4817 = vpop.permute.xlu0 %4816
  %4818 = vrot.lane.b32.xlu0 %v4741, 127
  %v4819 = vpop.permute.xlu0 %4818
  %4820 = vrot.lane.b32.xlu0 %v4743, 127
  %v4821 = vpop.permute.xlu0 %4820
  %4822 = vrot.lane.b32.xlu0 %v4745, 127
  %v4823 = vpop.permute.xlu0 %4822
  %4824 = vrot.lane.b32.xlu0 %v4748, 127
  %v4825 = vpop.permute.xlu0 %4824
  %4826 = vrot.lane.b32.xlu0 %v4751, 127
  %v4827 = vpop.permute.xlu0 %4826
  %4828 = vrot.lane.b32.xlu0 %v4753, 127
  %v4829 = vpop.permute.xlu0 %4828
  %4830 = vrot.lane.b32.xlu0 %v4755, 127
  %v4831 = vpop.permute.xlu0 %4830
  %4832 = vrot.lane.b32.xlu0 %v4758, 127
  %v4833 = vpop.permute.xlu0 %4832
  %4834 = vrot.lane.b32.xlu0 %v4761, 127
  %v4835 = vpop.permute.xlu0 %4834
  %4836 = vrot.lane.b32.xlu0 %v4763, 127
  %v4837 = vpop.permute.xlu0 %4836
  %4838 = vrot.lane.b32.xlu0 %v4765, 127
  %v4839 = vpop.permute.xlu0 %4838
  %4840 = vrot.lane.b32.xlu0 %v4768, 127
  %v4841 = vpop.permute.xlu0 %4840
  %4842 = vrot.lane.b32.xlu0 %v4771, 127
  %v4843 = vpop.permute.xlu0 %4842
  %4844 = vrot.lane.b32.xlu0 %v4773, 127
  %v4845 = vpop.permute.xlu0 %4844
  %4846 = vrot.lane.b32.xlu0 %v4775, 127
  %v4847 = vpop.permute.xlu0 %4846
  %4848 = vrot.lane.b32.xlu0 %v4778, 127
  %v4849 = vpop.permute.xlu0 %4848
  %4850 = vrot.lane.b32.xlu0 %v4781, 127
  %v4851 = vpop.permute.xlu0 %4850
  %4852 = vrot.lane.b32.xlu0 %v4783, 127
  %v4853 = vpop.permute.xlu0 %4852
  %4854 = vrot.lane.b32.xlu0 %v4785, 127
  %v4855 = vpop.permute.xlu0 %4854
  %4856 = vrot.lane.b32.xlu0 %v4788, 127
  %v4857 = vpop.permute.xlu0 %4856
  %4858 = vrot.lane.b32.xlu0 %v4791, 127
  %v4859 = vpop.permute.xlu0 %4858
  %4860 = vrot.lane.b32.xlu0 %v4793, 127
  %v4861 = vpop.permute.xlu0 %4860
  %4862 = vrot.lane.b32.xlu0 %v4795, 127
  %v4863 = vpop.permute.xlu0 %4862
  %4864 = vrot.lane.b32.xlu0 %v4798, 127
  %v4865 = vpop.permute.xlu0 %4864
  %4866 = vrot.lane.b32.xlu0 %v4801, 127
  %v4867 = vpop.permute.xlu0 %4866
  %4868 = vrot.lane.b32.xlu0 %v4803, 127
  %v4869 = vpop.permute.xlu0 %4868
  %4870 = vrot.lane.b32.xlu0 %v4805, 127
  %v4871 = vpop.permute.xlu0 %4870
  %4872 = vrot.lane.b32.xlu0 %v4808, 127
  %v4873 = vpop.permute.xlu0 %4872
  %4874 = vrot.lane.b32.xlu0 %v4811, 127
  %v4875 = vpop.permute.xlu0 %4874
  %4876 = vrot.lane.b32.xlu0 %v4813, 127
  %v4877 = vpop.permute.xlu0 %4876
  %4878 = vrot.lane.b32.xlu0 %v4815, 127
  %v4879 = vpop.permute.xlu0 %4878
  %v4880 = vsel %vm500, %v4817, %v4819
  %v4881 = vsel %vm500, %v4821, %v4823
  %v4882 = vsel %vm500, %v4825, %v4827
  %v4883 = vsel %vm500, %v4829, %v4831
  %v4884 = vsel %vm500, %v4833, %v4835
  %v4885 = vsel %vm500, %v4837, %v4839
  %v4886 = vsel %vm500, %v4841, %v4843
  %v4887 = vsel %vm500, %v4845, %v4847
  %v4888 = vsel %vm500, %v4849, %v4851
  %v4889 = vsel %vm500, %v4853, %v4855
  %v4890 = vsel %vm500, %v4857, %v4859
  %v4891 = vsel %vm500, %v4861, %v4863
  %v4892 = vsel %vm500, %v4865, %v4867
  %v4893 = vsel %vm500, %v4869, %v4871
  %v4894 = vsel %vm500, %v4873, %v4875
  %v4895 = vsel %vm500, %v4877, %v4879
  %v4928 = vadd.f32 %v4494, %v4880
  %v4929 = vadd.f32 %v4495, %v4819
  %v4930 = vadd.f32 %v4496, %v4881
  %v4931 = vadd.f32 %v4497, %v4823
  %v4932 = vadd.f32 %v4498, %v4882
  %v4933 = vadd.f32 %v4499, %v4827
  %v4934 = vadd.f32 %v4500, %v4883
  %v4935 = vadd.f32 %v4501, %v4831
  %v4936 = vadd.f32 %v4502, %v4884
  %v4937 = vadd.f32 %v4503, %v4835
  %v4938 = vadd.f32 %v4504, %v4885
  %v4939 = vadd.f32 %v4505, %v4839
  %v4940 = vadd.f32 %v4506, %v4886
  %v4941 = vadd.f32 %v4507, %v4843
  %v4942 = vadd.f32 %v4508, %v4887
  %v4943 = vadd.f32 %v4509, %v4847
  %v4944 = vadd.f32 %v4510, %v4888
  %v4945 = vadd.f32 %v4511, %v4851
  %v4946 = vadd.f32 %v4512, %v4889
  %v4947 = vadd.f32 %v4513, %v4855
  %v4948 = vadd.f32 %v4514, %v4890
  %v4949 = vadd.f32 %v4515, %v4859
  %v4950 = vadd.f32 %v4516, %v4891
  %v4951 = vadd.f32 %v4517, %v4863
  %v4952 = vadd.f32 %v4518, %v4892
  %v4953 = vadd.f32 %v4519, %v4867
  %v4954 = vadd.f32 %v4520, %v4893
  %v4955 = vadd.f32 %v4521, %v4871
  %v4956 = vadd.f32 %v4522, %v4894
  %v4957 = vadd.f32 %v4523, %v4875
  %v4958 = vadd.f32 %v4524, %v4895
  %v4959 = vadd.f32 %v4525, %v4879
  %v4961 = vcombine.high %v58, %v58
  %v4963 = vunpack.c.l.s4 1966171168
  %v4964 = vunpack.c.0.s8 %v4963
  %v4965 = vlaneseq
  %v4966 = vshrl.u32 %v4965, 7
  %v4967 = vsub.s32 %v4964, %v4966
  %v4968 = vrot.slane %v58, %v4967
  %v4970 = vunpack.c.l.s4 1966171168
  %v4971 = vunpack.c.0.s8 %v4970
  %v4972 = vlaneseq
  %v4973 = vshrl.u32 %v4972, 7
  %v4974 = vsub.s32 %v4971, %v4973
  %v4975 = vrot.slane %v4961, %v4974
  %v4976 = vcombine.high %v4968, %v4968
  %v4977 = vcombine.high %v4975, %v4975
  %v4979 = vunpack.c.l.s4 1966171168
  %v4980 = vunpack.c.0.s8 %v4979
  %v4981 = vlaneseq
  %v4982 = vshrl.u32 %v4981, 7
  %v4983 = vsub.s32 %v4980, %v4982
  %v4984 = vrot.slane %v4968, %v4983
  %v4986 = vunpack.c.l.s4 1966171168
  %v4987 = vunpack.c.0.s8 %v4986
  %v4988 = vlaneseq
  %v4989 = vshrl.u32 %v4988, 7
  %v4990 = vsub.s32 %v4987, %v4989
  %v4991 = vrot.slane %v4975, %v4990
  %v4993 = vunpack.c.l.s4 1966171168
  %v4994 = vunpack.c.0.s8 %v4993
  %v4995 = vlaneseq
  %v4996 = vshrl.u32 %v4995, 7
  %v4997 = vsub.s32 %v4994, %v4996
  %v4998 = vrot.slane %v4976, %v4997
  %v5000 = vunpack.c.l.s4 1966171168
  %v5001 = vunpack.c.0.s8 %v5000
  %v5002 = vlaneseq
  %v5003 = vshrl.u32 %v5002, 7
  %v5004 = vsub.s32 %v5001, %v5003
  %v5005 = vrot.slane %v4977, %v5004
  %v5006 = vcombine.high %v4984, %v4984
  %v5007 = vcombine.high %v4991, %v4991
  %v5008 = vcombine.high %v4998, %v4998
  %v5009 = vcombine.high %v5005, %v5005
  %v5010 = vlaneseq
  %v5011 = vshrl.u32 %v5010, 7
  %v5012 = vsub.s32 0, %v5011
  %v5013 = vrot.slane %v4984, %v5012
  %v5014 = vlaneseq
  %v5015 = vshrl.u32 %v5014, 7
  %v5016 = vsub.s32 0, %v5015
  %v5017 = vrot.slane %v4998, %v5016
  %v5018 = vlaneseq
  %v5019 = vshrl.u32 %v5018, 7
  %v5020 = vsub.s32 0, %v5019
  %v5021 = vrot.slane %v5006, %v5020
  %v5022 = vlaneseq
  %v5023 = vshrl.u32 %v5022, 7
  %v5024 = vsub.s32 0, %v5023
  %v5025 = vrot.slane %v5008, %v5024
  %v5026 = vlaneseq
  %v5027 = vshrl.u32 %v5026, 7
  %v5028 = vsub.s32 0, %v5027
  %v5029 = vrot.slane %v4991, %v5028
  %v5030 = vlaneseq
  %v5031 = vshrl.u32 %v5030, 7
  %v5032 = vsub.s32 0, %v5031
  %v5033 = vrot.slane %v5005, %v5032
  %v5034 = vlaneseq
  %v5035 = vshrl.u32 %v5034, 7
  %v5036 = vsub.s32 0, %v5035
  %v5037 = vrot.slane %v5007, %v5036
  %v5038 = vlaneseq
  %v5039 = vshrl.u32 %v5038, 7
  %v5040 = vsub.s32 0, %v5039
  %v5041 = vrot.slane %v5009, %v5040
  %5042 = vset.pattern.permute.xlu0 0
  %5043 = vperm.xlu0 %5042, %v5013
  %v5044 = vpop.permute.xlu0 %5043
  %5046 = vset.pattern.permute.xlu0 0
  %5047 = vperm.xlu0 %5046, %v5017
  %v5048 = vpop.permute.xlu0 %5047
  %5050 = vset.pattern.permute.xlu0 0
  %5051 = vperm.xlu0 %5050, %v5021
  %v5052 = vpop.permute.xlu0 %5051
  %5054 = vset.pattern.permute.xlu0 0
  %5055 = vperm.xlu0 %5054, %v5025
  %v5056 = vpop.permute.xlu0 %5055
  %5058 = vset.pattern.permute.xlu0 0
  %5059 = vperm.xlu0 %5058, %v5029
  %v5060 = vpop.permute.xlu0 %5059
  %5062 = vset.pattern.permute.xlu0 0
  %5063 = vperm.xlu0 %5062, %v5033
  %v5064 = vpop.permute.xlu0 %5063
  %5066 = vset.pattern.permute.xlu0 0
  %5067 = vperm.xlu0 %5066, %v5037
  %v5068 = vpop.permute.xlu0 %5067
  %5070 = vset.pattern.permute.xlu0 0
  %5071 = vperm.xlu0 %5070, %v5041
  %v5072 = vpop.permute.xlu0 %5071
  %v5074 = vmul.f32 %v5044, %v26
  %v5075 = vmul.f32 %v5044, %v27
  %v5076 = vmul.f32 %v5044, %v28
  %v5077 = vmul.f32 %v5044, %v29
  %v5078 = vmul.f32 %v5044, %v30
  %v5079 = vmul.f32 %v5044, %v31
  %v5080 = vmul.f32 %v5048, %v26
  %v5081 = vmul.f32 %v5048, %v27
  %v5082 = vmul.f32 %v5048, %v28
  %v5083 = vmul.f32 %v5048, %v29
  %v5084 = vmul.f32 %v5048, %v30
  %v5085 = vmul.f32 %v5048, %v31
  %v5086 = vmul.f32 %v5052, %v26
  %v5087 = vmul.f32 %v5052, %v27
  %v5088 = vmul.f32 %v5052, %v28
  %v5089 = vmul.f32 %v5052, %v29
  %v5090 = vmul.f32 %v5052, %v30
  %v5091 = vmul.f32 %v5052, %v31
  %v5092 = vmul.f32 %v5056, %v26
  %v5093 = vmul.f32 %v5056, %v27
  %v5094 = vmul.f32 %v5056, %v28
  %v5095 = vmul.f32 %v5056, %v29
  %v5096 = vmul.f32 %v5056, %v30
  %v5097 = vmul.f32 %v5056, %v31
  %v5098 = vmul.f32 %v5060, %v26
  %v5099 = vmul.f32 %v5060, %v27
  %v5100 = vmul.f32 %v5060, %v28
  %v5101 = vmul.f32 %v5060, %v29
  %v5102 = vmul.f32 %v5060, %v30
  %v5103 = vmul.f32 %v5060, %v31
  %v5104 = vmul.f32 %v5064, %v26
  %v5105 = vmul.f32 %v5064, %v27
  %v5106 = vmul.f32 %v5064, %v28
  %v5107 = vmul.f32 %v5064, %v29
  %v5108 = vmul.f32 %v5064, %v30
  %v5109 = vmul.f32 %v5064, %v31
  %v5110 = vmul.f32 %v5068, %v26
  %v5111 = vmul.f32 %v5068, %v27
  %v5112 = vmul.f32 %v5068, %v28
  %v5113 = vmul.f32 %v5068, %v29
  %v5114 = vmul.f32 %v5068, %v30
  %v5115 = vmul.f32 %v5068, %v31
  %v5116 = vmul.f32 %v5072, %v26
  %v5117 = vmul.f32 %v5072, %v27
  %v5118 = vmul.f32 %v5072, %v28
  %v5119 = vmul.f32 %v5072, %v29
  %v5120 = vmul.f32 %v5072, %v30
  %v5121 = vmul.f32 %v5072, %v31
  %v5170 = vrot.slane %v5074, 1
  %v5171 = vrot.slane %v5076, 1
  %v5172 = vsel %vm1114, %v5170, %v5171
  %v5173 = vrot.slane %v5075, 1
  %v5174 = vrot.slane %v5077, 1
  %v5175 = vsel %vm1114, %v5173, %v5174
  %v5176 = vrot.slane %v5078, 1
  %v5177 = vsel %vm1114, %v5171, %v5176
  %v5178 = vrot.slane %v5079, 1
  %v5179 = vsel %vm1114, %v5174, %v5178
  %v5180 = vrot.slane %v5080, 1
  %v5181 = vrot.slane %v5082, 1
  %v5182 = vsel %vm1114, %v5180, %v5181
  %v5183 = vrot.slane %v5081, 1
  %v5184 = vrot.slane %v5083, 1
  %v5185 = vsel %vm1114, %v5183, %v5184
  %v5186 = vrot.slane %v5084, 1
  %v5187 = vsel %vm1114, %v5181, %v5186
  %v5188 = vrot.slane %v5085, 1
  %v5189 = vsel %vm1114, %v5184, %v5188
  %v5190 = vrot.slane %v5086, 1
  %v5191 = vrot.slane %v5088, 1
  %v5192 = vsel %vm1114, %v5190, %v5191
  %v5193 = vrot.slane %v5087, 1
  %v5194 = vrot.slane %v5089, 1
  %v5195 = vsel %vm1114, %v5193, %v5194
  %v5196 = vrot.slane %v5090, 1
  %v5197 = vsel %vm1114, %v5191, %v5196
  %v5198 = vrot.slane %v5091, 1
  %v5199 = vsel %vm1114, %v5194, %v5198
  %v5200 = vrot.slane %v5092, 1
  %v5201 = vrot.slane %v5094, 1
  %v5202 = vsel %vm1114, %v5200, %v5201
  %v5203 = vrot.slane %v5093, 1
  %v5204 = vrot.slane %v5095, 1
  %v5205 = vsel %vm1114, %v5203, %v5204
  %v5206 = vrot.slane %v5096, 1
  %v5207 = vsel %vm1114, %v5201, %v5206
  %v5208 = vrot.slane %v5097, 1
  %v5209 = vsel %vm1114, %v5204, %v5208
  %v5210 = vrot.slane %v5098, 1
  %v5211 = vrot.slane %v5100, 1
  %v5212 = vsel %vm1114, %v5210, %v5211
  %v5213 = vrot.slane %v5099, 1
  %v5214 = vrot.slane %v5101, 1
  %v5215 = vsel %vm1114, %v5213, %v5214
  %v5216 = vrot.slane %v5102, 1
  %v5217 = vsel %vm1114, %v5211, %v5216
  %v5218 = vrot.slane %v5103, 1
  %v5219 = vsel %vm1114, %v5214, %v5218
  %v5220 = vrot.slane %v5104, 1
  %v5221 = vrot.slane %v5106, 1
  %v5222 = vsel %vm1114, %v5220, %v5221
  %v5223 = vrot.slane %v5105, 1
  %v5224 = vrot.slane %v5107, 1
  %v5225 = vsel %vm1114, %v5223, %v5224
  %v5226 = vrot.slane %v5108, 1
  %v5227 = vsel %vm1114, %v5221, %v5226
  %v5228 = vrot.slane %v5109, 1
  %v5229 = vsel %vm1114, %v5224, %v5228
  %v5230 = vrot.slane %v5110, 1
  %v5231 = vrot.slane %v5112, 1
  %v5232 = vsel %vm1114, %v5230, %v5231
  %v5233 = vrot.slane %v5111, 1
  %v5234 = vrot.slane %v5113, 1
  %v5235 = vsel %vm1114, %v5233, %v5234
  %v5236 = vrot.slane %v5114, 1
  %v5237 = vsel %vm1114, %v5231, %v5236
  %v5238 = vrot.slane %v5115, 1
  %v5239 = vsel %vm1114, %v5234, %v5238
  %v5240 = vrot.slane %v5116, 1
  %v5241 = vrot.slane %v5118, 1
  %v5242 = vsel %vm1114, %v5240, %v5241
  %v5243 = vrot.slane %v5117, 1
  %v5244 = vrot.slane %v5119, 1
  %v5245 = vsel %vm1114, %v5243, %v5244
  %v5246 = vrot.slane %v5120, 1
  %v5247 = vsel %vm1114, %v5241, %v5246
  %v5248 = vrot.slane %v5121, 1
  %v5249 = vsel %vm1114, %v5244, %v5248
  %5250 = vrot.lane.b32.xlu0 %v5172, 126
  %v5251 = vpop.permute.xlu0 %5250
  %5252 = vrot.lane.b32.xlu0 %v5175, 126
  %v5253 = vpop.permute.xlu0 %5252
  %5254 = vrot.lane.b32.xlu0 %v5177, 126
  %v5255 = vpop.permute.xlu0 %5254
  %5256 = vrot.lane.b32.xlu0 %v5179, 126
  %v5257 = vpop.permute.xlu0 %5256
  %5258 = vrot.lane.b32.xlu0 %v5182, 126
  %v5259 = vpop.permute.xlu0 %5258
  %5260 = vrot.lane.b32.xlu0 %v5185, 126
  %v5261 = vpop.permute.xlu0 %5260
  %5262 = vrot.lane.b32.xlu0 %v5187, 126
  %v5263 = vpop.permute.xlu0 %5262
  %5264 = vrot.lane.b32.xlu0 %v5189, 126
  %v5265 = vpop.permute.xlu0 %5264
  %5266 = vrot.lane.b32.xlu0 %v5192, 126
  %v5267 = vpop.permute.xlu0 %5266
  %5268 = vrot.lane.b32.xlu0 %v5195, 126
  %v5269 = vpop.permute.xlu0 %5268
  %5270 = vrot.lane.b32.xlu0 %v5197, 126
  %v5271 = vpop.permute.xlu0 %5270
  %5272 = vrot.lane.b32.xlu0 %v5199, 126
  %v5273 = vpop.permute.xlu0 %5272
  %5274 = vrot.lane.b32.xlu0 %v5202, 126
  %v5275 = vpop.permute.xlu0 %5274
  %5276 = vrot.lane.b32.xlu0 %v5205, 126
  %v5277 = vpop.permute.xlu0 %5276
  %5278 = vrot.lane.b32.xlu0 %v5207, 126
  %v5279 = vpop.permute.xlu0 %5278
  %5280 = vrot.lane.b32.xlu0 %v5209, 126
  %v5281 = vpop.permute.xlu0 %5280
  %5282 = vrot.lane.b32.xlu0 %v5212, 126
  %v5283 = vpop.permute.xlu0 %5282
  %5284 = vrot.lane.b32.xlu0 %v5215, 126
  %v5285 = vpop.permute.xlu0 %5284
  %5286 = vrot.lane.b32.xlu0 %v5217, 126
  %v5287 = vpop.permute.xlu0 %5286
  %5288 = vrot.lane.b32.xlu0 %v5219, 126
  %v5289 = vpop.permute.xlu0 %5288
  %5290 = vrot.lane.b32.xlu0 %v5222, 126
  %v5291 = vpop.permute.xlu0 %5290
  %5292 = vrot.lane.b32.xlu0 %v5225, 126
  %v5293 = vpop.permute.xlu0 %5292
  %5294 = vrot.lane.b32.xlu0 %v5227, 126
  %v5295 = vpop.permute.xlu0 %5294
  %5296 = vrot.lane.b32.xlu0 %v5229, 126
  %v5297 = vpop.permute.xlu0 %5296
  %5298 = vrot.lane.b32.xlu0 %v5232, 126
  %v5299 = vpop.permute.xlu0 %5298
  %5300 = vrot.lane.b32.xlu0 %v5235, 126
  %v5301 = vpop.permute.xlu0 %5300
  %5302 = vrot.lane.b32.xlu0 %v5237, 126
  %v5303 = vpop.permute.xlu0 %5302
  %5304 = vrot.lane.b32.xlu0 %v5239, 126
  %v5305 = vpop.permute.xlu0 %5304
  %5306 = vrot.lane.b32.xlu0 %v5242, 126
  %v5307 = vpop.permute.xlu0 %5306
  %5308 = vrot.lane.b32.xlu0 %v5245, 126
  %v5309 = vpop.permute.xlu0 %5308
  %5310 = vrot.lane.b32.xlu0 %v5247, 126
  %v5311 = vpop.permute.xlu0 %5310
  %5312 = vrot.lane.b32.xlu0 %v5249, 126
  %v5313 = vpop.permute.xlu0 %5312
  %v5314 = vsel %vm823, %v5251, %v5253
  %v5315 = vsel %vm823, %v5255, %v5257
  %v5316 = vsel %vm823, %v5259, %v5261
  %v5317 = vsel %vm823, %v5263, %v5265
  %v5318 = vsel %vm823, %v5267, %v5269
  %v5319 = vsel %vm823, %v5271, %v5273
  %v5320 = vsel %vm823, %v5275, %v5277
  %v5321 = vsel %vm823, %v5279, %v5281
  %v5322 = vsel %vm823, %v5283, %v5285
  %v5323 = vsel %vm823, %v5287, %v5289
  %v5324 = vsel %vm823, %v5291, %v5293
  %v5325 = vsel %vm823, %v5295, %v5297
  %v5326 = vsel %vm823, %v5299, %v5301
  %v5327 = vsel %vm823, %v5303, %v5305
  %v5328 = vsel %vm823, %v5307, %v5309
  %v5329 = vsel %vm823, %v5311, %v5313
  %v5362 = vadd.f32 %v4928, %v5314
  %v5363 = vadd.f32 %v4929, %v5253
  %v5364 = vadd.f32 %v4930, %v5315
  %v5365 = vadd.f32 %v4931, %v5257
  %v5366 = vadd.f32 %v4932, %v5316
  %v5367 = vadd.f32 %v4933, %v5261
  %v5368 = vadd.f32 %v4934, %v5317
  %v5369 = vadd.f32 %v4935, %v5265
  %v5370 = vadd.f32 %v4936, %v5318
  %v5371 = vadd.f32 %v4937, %v5269
  %v5372 = vadd.f32 %v4938, %v5319
  %v5373 = vadd.f32 %v4939, %v5273
  %v5374 = vadd.f32 %v4940, %v5320
  %v5375 = vadd.f32 %v4941, %v5277
  %v5376 = vadd.f32 %v4942, %v5321
  %v5377 = vadd.f32 %v4943, %v5281
  %v5378 = vadd.f32 %v4944, %v5322
  %v5379 = vadd.f32 %v4945, %v5285
  %v5380 = vadd.f32 %v4946, %v5323
  %v5381 = vadd.f32 %v4947, %v5289
  %v5382 = vadd.f32 %v4948, %v5324
  %v5383 = vadd.f32 %v4949, %v5293
  %v5384 = vadd.f32 %v4950, %v5325
  %v5385 = vadd.f32 %v4951, %v5297
  %v5386 = vadd.f32 %v4952, %v5326
  %v5387 = vadd.f32 %v4953, %v5301
  %v5388 = vadd.f32 %v4954, %v5327
  %v5389 = vadd.f32 %v4955, %v5305
  %v5390 = vadd.f32 %v4956, %v5328
  %v5391 = vadd.f32 %v4957, %v5309
  %v5392 = vadd.f32 %v4958, %v5329
  %v5393 = vadd.f32 %v4959, %v5313
  %v5395 = vcombine.high %v59, %v59
  %v5397 = vunpack.c.l.s4 1966171168
  %v5398 = vunpack.c.0.s8 %v5397
  %v5399 = vlaneseq
  %v5400 = vshrl.u32 %v5399, 7
  %v5401 = vsub.s32 %v5398, %v5400
  %v5402 = vrot.slane %v59, %v5401
  %v5404 = vunpack.c.l.s4 1966171168
  %v5405 = vunpack.c.0.s8 %v5404
  %v5406 = vlaneseq
  %v5407 = vshrl.u32 %v5406, 7
  %v5408 = vsub.s32 %v5405, %v5407
  %v5409 = vrot.slane %v5395, %v5408
  %v5410 = vcombine.high %v5402, %v5402
  %v5411 = vcombine.high %v5409, %v5409
  %v5413 = vunpack.c.l.s4 1966171168
  %v5414 = vunpack.c.0.s8 %v5413
  %v5415 = vlaneseq
  %v5416 = vshrl.u32 %v5415, 7
  %v5417 = vsub.s32 %v5414, %v5416
  %v5418 = vrot.slane %v5402, %v5417
  %v5420 = vunpack.c.l.s4 1966171168
  %v5421 = vunpack.c.0.s8 %v5420
  %v5422 = vlaneseq
  %v5423 = vshrl.u32 %v5422, 7
  %v5424 = vsub.s32 %v5421, %v5423
  %v5425 = vrot.slane %v5409, %v5424
  %v5427 = vunpack.c.l.s4 1966171168
  %v5428 = vunpack.c.0.s8 %v5427
  %v5429 = vlaneseq
  %v5430 = vshrl.u32 %v5429, 7
  %v5431 = vsub.s32 %v5428, %v5430
  %v5432 = vrot.slane %v5410, %v5431
  %v5434 = vunpack.c.l.s4 1966171168
  %v5435 = vunpack.c.0.s8 %v5434
  %v5436 = vlaneseq
  %v5437 = vshrl.u32 %v5436, 7
  %v5438 = vsub.s32 %v5435, %v5437
  %v5439 = vrot.slane %v5411, %v5438
  %v5440 = vcombine.high %v5418, %v5418
  %v5441 = vcombine.high %v5425, %v5425
  %v5442 = vcombine.high %v5432, %v5432
  %v5443 = vcombine.high %v5439, %v5439
  %v5444 = vlaneseq
  %v5445 = vshrl.u32 %v5444, 7
  %v5446 = vsub.s32 0, %v5445
  %v5447 = vrot.slane %v5418, %v5446
  %v5448 = vlaneseq
  %v5449 = vshrl.u32 %v5448, 7
  %v5450 = vsub.s32 0, %v5449
  %v5451 = vrot.slane %v5432, %v5450
  %v5452 = vlaneseq
  %v5453 = vshrl.u32 %v5452, 7
  %v5454 = vsub.s32 0, %v5453
  %v5455 = vrot.slane %v5440, %v5454
  %v5456 = vlaneseq
  %v5457 = vshrl.u32 %v5456, 7
  %v5458 = vsub.s32 0, %v5457
  %v5459 = vrot.slane %v5442, %v5458
  %v5460 = vlaneseq
  %v5461 = vshrl.u32 %v5460, 7
  %v5462 = vsub.s32 0, %v5461
  %v5463 = vrot.slane %v5425, %v5462
  %v5464 = vlaneseq
  %v5465 = vshrl.u32 %v5464, 7
  %v5466 = vsub.s32 0, %v5465
  %v5467 = vrot.slane %v5439, %v5466
  %v5468 = vlaneseq
  %v5469 = vshrl.u32 %v5468, 7
  %v5470 = vsub.s32 0, %v5469
  %v5471 = vrot.slane %v5441, %v5470
  %v5472 = vlaneseq
  %v5473 = vshrl.u32 %v5472, 7
  %v5474 = vsub.s32 0, %v5473
  %v5475 = vrot.slane %v5443, %v5474
  %5476 = vset.pattern.permute.xlu0 0
  %5477 = vperm.xlu0 %5476, %v5447
  %v5478 = vpop.permute.xlu0 %5477
  %5480 = vset.pattern.permute.xlu0 0
  %5481 = vperm.xlu0 %5480, %v5451
  %v5482 = vpop.permute.xlu0 %5481
  %5484 = vset.pattern.permute.xlu0 0
  %5485 = vperm.xlu0 %5484, %v5455
  %v5486 = vpop.permute.xlu0 %5485
  %5488 = vset.pattern.permute.xlu0 0
  %5489 = vperm.xlu0 %5488, %v5459
  %v5490 = vpop.permute.xlu0 %5489
  %5492 = vset.pattern.permute.xlu0 0
  %5493 = vperm.xlu0 %5492, %v5463
  %v5494 = vpop.permute.xlu0 %5493
  %5496 = vset.pattern.permute.xlu0 0
  %5497 = vperm.xlu0 %5496, %v5467
  %v5498 = vpop.permute.xlu0 %5497
  %5500 = vset.pattern.permute.xlu0 0
  %5501 = vperm.xlu0 %5500, %v5471
  %v5502 = vpop.permute.xlu0 %5501
  %5504 = vset.pattern.permute.xlu0 0
  %5505 = vperm.xlu0 %5504, %v5475
  %v5506 = vpop.permute.xlu0 %5505
  %v5508 = vmul.f32 %v5478, %v26
  %v5509 = vmul.f32 %v5478, %v27
  %v5510 = vmul.f32 %v5478, %v28
  %v5511 = vmul.f32 %v5478, %v29
  %v5512 = vmul.f32 %v5478, %v30
  %v5513 = vmul.f32 %v5478, %v31
  %v5514 = vmul.f32 %v5482, %v26
  %v5515 = vmul.f32 %v5482, %v27
  %v5516 = vmul.f32 %v5482, %v28
  %v5517 = vmul.f32 %v5482, %v29
  %v5518 = vmul.f32 %v5482, %v30
  %v5519 = vmul.f32 %v5482, %v31
  %v5520 = vmul.f32 %v5486, %v26
  %v5521 = vmul.f32 %v5486, %v27
  %v5522 = vmul.f32 %v5486, %v28
  %v5523 = vmul.f32 %v5486, %v29
  %v5524 = vmul.f32 %v5486, %v30
  %v5525 = vmul.f32 %v5486, %v31
  %v5526 = vmul.f32 %v5490, %v26
  %v5527 = vmul.f32 %v5490, %v27
  %v5528 = vmul.f32 %v5490, %v28
  %v5529 = vmul.f32 %v5490, %v29
  %v5530 = vmul.f32 %v5490, %v30
  %v5531 = vmul.f32 %v5490, %v31
  %v5532 = vmul.f32 %v5494, %v26
  %v5533 = vmul.f32 %v5494, %v27
  %v5534 = vmul.f32 %v5494, %v28
  %v5535 = vmul.f32 %v5494, %v29
  %v5536 = vmul.f32 %v5494, %v30
  %v5537 = vmul.f32 %v5494, %v31
  %v5538 = vmul.f32 %v5498, %v26
  %v5539 = vmul.f32 %v5498, %v27
  %v5540 = vmul.f32 %v5498, %v28
  %v5541 = vmul.f32 %v5498, %v29
  %v5542 = vmul.f32 %v5498, %v30
  %v5543 = vmul.f32 %v5498, %v31
  %v5544 = vmul.f32 %v5502, %v26
  %v5545 = vmul.f32 %v5502, %v27
  %v5546 = vmul.f32 %v5502, %v28
  %v5547 = vmul.f32 %v5502, %v29
  %v5548 = vmul.f32 %v5502, %v30
  %v5549 = vmul.f32 %v5502, %v31
  %v5550 = vmul.f32 %v5506, %v26
  %v5551 = vmul.f32 %v5506, %v27
  %v5552 = vmul.f32 %v5506, %v28
  %v5553 = vmul.f32 %v5506, %v29
  %v5554 = vmul.f32 %v5506, %v30
  %v5555 = vmul.f32 %v5506, %v31
  %v5604 = vrot.slane %v5508, 2
  %v5605 = vrot.slane %v5510, 2
  %v5606 = vsel %vm2337, %v5604, %v5605
  %v5607 = vrot.slane %v5509, 2
  %v5608 = vrot.slane %v5511, 2
  %v5609 = vsel %vm2337, %v5607, %v5608
  %v5610 = vrot.slane %v5512, 2
  %v5611 = vsel %vm2337, %v5605, %v5610
  %v5612 = vrot.slane %v5513, 2
  %v5613 = vsel %vm2337, %v5608, %v5612
  %v5614 = vrot.slane %v5514, 2
  %v5615 = vrot.slane %v5516, 2
  %v5616 = vsel %vm2337, %v5614, %v5615
  %v5617 = vrot.slane %v5515, 2
  %v5618 = vrot.slane %v5517, 2
  %v5619 = vsel %vm2337, %v5617, %v5618
  %v5620 = vrot.slane %v5518, 2
  %v5621 = vsel %vm2337, %v5615, %v5620
  %v5622 = vrot.slane %v5519, 2
  %v5623 = vsel %vm2337, %v5618, %v5622
  %v5624 = vrot.slane %v5520, 2
  %v5625 = vrot.slane %v5522, 2
  %v5626 = vsel %vm2337, %v5624, %v5625
  %v5627 = vrot.slane %v5521, 2
  %v5628 = vrot.slane %v5523, 2
  %v5629 = vsel %vm2337, %v5627, %v5628
  %v5630 = vrot.slane %v5524, 2
  %v5631 = vsel %vm2337, %v5625, %v5630
  %v5632 = vrot.slane %v5525, 2
  %v5633 = vsel %vm2337, %v5628, %v5632
  %v5634 = vrot.slane %v5526, 2
  %v5635 = vrot.slane %v5528, 2
  %v5636 = vsel %vm2337, %v5634, %v5635
  %v5637 = vrot.slane %v5527, 2
  %v5638 = vrot.slane %v5529, 2
  %v5639 = vsel %vm2337, %v5637, %v5638
  %v5640 = vrot.slane %v5530, 2
  %v5641 = vsel %vm2337, %v5635, %v5640
  %v5642 = vrot.slane %v5531, 2
  %v5643 = vsel %vm2337, %v5638, %v5642
  %v5644 = vrot.slane %v5532, 2
  %v5645 = vrot.slane %v5534, 2
  %v5646 = vsel %vm2337, %v5644, %v5645
  %v5647 = vrot.slane %v5533, 2
  %v5648 = vrot.slane %v5535, 2
  %v5649 = vsel %vm2337, %v5647, %v5648
  %v5650 = vrot.slane %v5536, 2
  %v5651 = vsel %vm2337, %v5645, %v5650
  %v5652 = vrot.slane %v5537, 2
  %v5653 = vsel %vm2337, %v5648, %v5652
  %v5654 = vrot.slane %v5538, 2
  %v5655 = vrot.slane %v5540, 2
  %v5656 = vsel %vm2337, %v5654, %v5655
  %v5657 = vrot.slane %v5539, 2
  %v5658 = vrot.slane %v5541, 2
  %v5659 = vsel %vm2337, %v5657, %v5658
  %v5660 = vrot.slane %v5542, 2
  %v5661 = vsel %vm2337, %v5655, %v5660
  %v5662 = vrot.slane %v5543, 2
  %v5663 = vsel %vm2337, %v5658, %v5662
  %v5664 = vrot.slane %v5544, 2
  %v5665 = vrot.slane %v5546, 2
  %v5666 = vsel %vm2337, %v5664, %v5665
  %v5667 = vrot.slane %v5545, 2
  %v5668 = vrot.slane %v5547, 2
  %v5669 = vsel %vm2337, %v5667, %v5668
  %v5670 = vrot.slane %v5548, 2
  %v5671 = vsel %vm2337, %v5665, %v5670
  %v5672 = vrot.slane %v5549, 2
  %v5673 = vsel %vm2337, %v5668, %v5672
  %v5674 = vrot.slane %v5550, 2
  %v5675 = vrot.slane %v5552, 2
  %v5676 = vsel %vm2337, %v5674, %v5675
  %v5677 = vrot.slane %v5551, 2
  %v5678 = vrot.slane %v5553, 2
  %v5679 = vsel %vm2337, %v5677, %v5678
  %v5680 = vrot.slane %v5554, 2
  %v5681 = vsel %vm2337, %v5675, %v5680
  %v5682 = vrot.slane %v5555, 2
  %v5683 = vsel %vm2337, %v5678, %v5682
  %v5716 = vadd.f32 %v5362, %v5606
  %v5717 = vadd.f32 %v5363, %v5609
  %v5718 = vadd.f32 %v5364, %v5611
  %v5719 = vadd.f32 %v5365, %v5613
  %v5720 = vadd.f32 %v5366, %v5616
  %v5721 = vadd.f32 %v5367, %v5619
  %v5722 = vadd.f32 %v5368, %v5621
  %v5723 = vadd.f32 %v5369, %v5623
  %v5724 = vadd.f32 %v5370, %v5626
  %v5725 = vadd.f32 %v5371, %v5629
  %v5726 = vadd.f32 %v5372, %v5631
  %v5727 = vadd.f32 %v5373, %v5633
  %v5728 = vadd.f32 %v5374, %v5636
  %v5729 = vadd.f32 %v5375, %v5639
  %v5730 = vadd.f32 %v5376, %v5641
  %v5731 = vadd.f32 %v5377, %v5643
  %v5732 = vadd.f32 %v5378, %v5646
  %v5733 = vadd.f32 %v5379, %v5649
  %v5734 = vadd.f32 %v5380, %v5651
  %v5735 = vadd.f32 %v5381, %v5653
  %v5736 = vadd.f32 %v5382, %v5656
  %v5737 = vadd.f32 %v5383, %v5659
  %v5738 = vadd.f32 %v5384, %v5661
  %v5739 = vadd.f32 %v5385, %v5663
  %v5740 = vadd.f32 %v5386, %v5666
  %v5741 = vadd.f32 %v5387, %v5669
  %v5742 = vadd.f32 %v5388, %v5671
  %v5743 = vadd.f32 %v5389, %v5673
  %v5744 = vadd.f32 %v5390, %v5676
  %v5745 = vadd.f32 %v5391, %v5679
  %v5746 = vadd.f32 %v5392, %v5681
  %v5747 = vadd.f32 %v5393, %v5683
  %v5749 = vcombine.high %v60, %v60
  %v5751 = vunpack.c.l.s4 1966171168
  %v5752 = vunpack.c.0.s8 %v5751
  %v5753 = vlaneseq
  %v5754 = vshrl.u32 %v5753, 7
  %v5755 = vsub.s32 %v5752, %v5754
  %v5756 = vrot.slane %v60, %v5755
  %v5758 = vunpack.c.l.s4 1966171168
  %v5759 = vunpack.c.0.s8 %v5758
  %v5760 = vlaneseq
  %v5761 = vshrl.u32 %v5760, 7
  %v5762 = vsub.s32 %v5759, %v5761
  %v5763 = vrot.slane %v5749, %v5762
  %v5764 = vcombine.high %v5756, %v5756
  %v5765 = vcombine.high %v5763, %v5763
  %v5767 = vunpack.c.l.s4 1966171168
  %v5768 = vunpack.c.0.s8 %v5767
  %v5769 = vlaneseq
  %v5770 = vshrl.u32 %v5769, 7
  %v5771 = vsub.s32 %v5768, %v5770
  %v5772 = vrot.slane %v5756, %v5771
  %v5774 = vunpack.c.l.s4 1966171168
  %v5775 = vunpack.c.0.s8 %v5774
  %v5776 = vlaneseq
  %v5777 = vshrl.u32 %v5776, 7
  %v5778 = vsub.s32 %v5775, %v5777
  %v5779 = vrot.slane %v5763, %v5778
  %v5781 = vunpack.c.l.s4 1966171168
  %v5782 = vunpack.c.0.s8 %v5781
  %v5783 = vlaneseq
  %v5784 = vshrl.u32 %v5783, 7
  %v5785 = vsub.s32 %v5782, %v5784
  %v5786 = vrot.slane %v5764, %v5785
  %v5788 = vunpack.c.l.s4 1966171168
  %v5789 = vunpack.c.0.s8 %v5788
  %v5790 = vlaneseq
  %v5791 = vshrl.u32 %v5790, 7
  %v5792 = vsub.s32 %v5789, %v5791
  %v5793 = vrot.slane %v5765, %v5792
  %v5794 = vcombine.high %v5772, %v5772
  %v5795 = vcombine.high %v5779, %v5779
  %v5796 = vcombine.high %v5786, %v5786
  %v5797 = vcombine.high %v5793, %v5793
  %v5798 = vlaneseq
  %v5799 = vshrl.u32 %v5798, 7
  %v5800 = vsub.s32 0, %v5799
  %v5801 = vrot.slane %v5772, %v5800
  %v5802 = vlaneseq
  %v5803 = vshrl.u32 %v5802, 7
  %v5804 = vsub.s32 0, %v5803
  %v5805 = vrot.slane %v5786, %v5804
  %v5806 = vlaneseq
  %v5807 = vshrl.u32 %v5806, 7
  %v5808 = vsub.s32 0, %v5807
  %v5809 = vrot.slane %v5794, %v5808
  %v5810 = vlaneseq
  %v5811 = vshrl.u32 %v5810, 7
  %v5812 = vsub.s32 0, %v5811
  %v5813 = vrot.slane %v5796, %v5812
  %v5814 = vlaneseq
  %v5815 = vshrl.u32 %v5814, 7
  %v5816 = vsub.s32 0, %v5815
  %v5817 = vrot.slane %v5779, %v5816
  %v5818 = vlaneseq
  %v5819 = vshrl.u32 %v5818, 7
  %v5820 = vsub.s32 0, %v5819
  %v5821 = vrot.slane %v5793, %v5820
  %v5822 = vlaneseq
  %v5823 = vshrl.u32 %v5822, 7
  %v5824 = vsub.s32 0, %v5823
  %v5825 = vrot.slane %v5795, %v5824
  %v5826 = vlaneseq
  %v5827 = vshrl.u32 %v5826, 7
  %v5828 = vsub.s32 0, %v5827
  %v5829 = vrot.slane %v5797, %v5828
  %5830 = vset.pattern.permute.xlu0 0
  %5831 = vperm.xlu0 %5830, %v5801
  %v5832 = vpop.permute.xlu0 %5831
  %5834 = vset.pattern.permute.xlu0 0
  %5835 = vperm.xlu0 %5834, %v5805
  %v5836 = vpop.permute.xlu0 %5835
  %5838 = vset.pattern.permute.xlu0 0
  %5839 = vperm.xlu0 %5838, %v5809
  %v5840 = vpop.permute.xlu0 %5839
  %5842 = vset.pattern.permute.xlu0 0
  %5843 = vperm.xlu0 %5842, %v5813
  %v5844 = vpop.permute.xlu0 %5843
  %5846 = vset.pattern.permute.xlu0 0
  %5847 = vperm.xlu0 %5846, %v5817
  %v5848 = vpop.permute.xlu0 %5847
  %5850 = vset.pattern.permute.xlu0 0
  %5851 = vperm.xlu0 %5850, %v5821
  %v5852 = vpop.permute.xlu0 %5851
  %5854 = vset.pattern.permute.xlu0 0
  %5855 = vperm.xlu0 %5854, %v5825
  %v5856 = vpop.permute.xlu0 %5855
  %5858 = vset.pattern.permute.xlu0 0
  %5859 = vperm.xlu0 %5858, %v5829
  %v5860 = vpop.permute.xlu0 %5859
  %v5862 = vmul.f32 %v5832, %v26
  %v5863 = vmul.f32 %v5832, %v27
  %v5864 = vmul.f32 %v5832, %v28
  %v5865 = vmul.f32 %v5832, %v29
  %v5866 = vmul.f32 %v5832, %v30
  %v5867 = vmul.f32 %v5832, %v31
  %v5868 = vmul.f32 %v5836, %v26
  %v5869 = vmul.f32 %v5836, %v27
  %v5870 = vmul.f32 %v5836, %v28
  %v5871 = vmul.f32 %v5836, %v29
  %v5872 = vmul.f32 %v5836, %v30
  %v5873 = vmul.f32 %v5836, %v31
  %v5874 = vmul.f32 %v5840, %v26
  %v5875 = vmul.f32 %v5840, %v27
  %v5876 = vmul.f32 %v5840, %v28
  %v5877 = vmul.f32 %v5840, %v29
  %v5878 = vmul.f32 %v5840, %v30
  %v5879 = vmul.f32 %v5840, %v31
  %v5880 = vmul.f32 %v5844, %v26
  %v5881 = vmul.f32 %v5844, %v27
  %v5882 = vmul.f32 %v5844, %v28
  %v5883 = vmul.f32 %v5844, %v29
  %v5884 = vmul.f32 %v5844, %v30
  %v5885 = vmul.f32 %v5844, %v31
  %v5886 = vmul.f32 %v5848, %v26
  %v5887 = vmul.f32 %v5848, %v27
  %v5888 = vmul.f32 %v5848, %v28
  %v5889 = vmul.f32 %v5848, %v29
  %v5890 = vmul.f32 %v5848, %v30
  %v5891 = vmul.f32 %v5848, %v31
  %v5892 = vmul.f32 %v5852, %v26
  %v5893 = vmul.f32 %v5852, %v27
  %v5894 = vmul.f32 %v5852, %v28
  %v5895 = vmul.f32 %v5852, %v29
  %v5896 = vmul.f32 %v5852, %v30
  %v5897 = vmul.f32 %v5852, %v31
  %v5898 = vmul.f32 %v5856, %v26
  %v5899 = vmul.f32 %v5856, %v27
  %v5900 = vmul.f32 %v5856, %v28
  %v5901 = vmul.f32 %v5856, %v29
  %v5902 = vmul.f32 %v5856, %v30
  %v5903 = vmul.f32 %v5856, %v31
  %v5904 = vmul.f32 %v5860, %v26
  %v5905 = vmul.f32 %v5860, %v27
  %v5906 = vmul.f32 %v5860, %v28
  %v5907 = vmul.f32 %v5860, %v29
  %v5908 = vmul.f32 %v5860, %v30
  %v5909 = vmul.f32 %v5860, %v31
  %v5958 = vrot.slane %v5862, 2
  %v5959 = vrot.slane %v5864, 2
  %v5960 = vsel %vm2337, %v5958, %v5959
  %v5961 = vrot.slane %v5863, 2
  %v5962 = vrot.slane %v5865, 2
  %v5963 = vsel %vm2337, %v5961, %v5962
  %v5964 = vrot.slane %v5866, 2
  %v5965 = vsel %vm2337, %v5959, %v5964
  %v5966 = vrot.slane %v5867, 2
  %v5967 = vsel %vm2337, %v5962, %v5966
  %v5968 = vrot.slane %v5868, 2
  %v5969 = vrot.slane %v5870, 2
  %v5970 = vsel %vm2337, %v5968, %v5969
  %v5971 = vrot.slane %v5869, 2
  %v5972 = vrot.slane %v5871, 2
  %v5973 = vsel %vm2337, %v5971, %v5972
  %v5974 = vrot.slane %v5872, 2
  %v5975 = vsel %vm2337, %v5969, %v5974
  %v5976 = vrot.slane %v5873, 2
  %v5977 = vsel %vm2337, %v5972, %v5976
  %v5978 = vrot.slane %v5874, 2
  %v5979 = vrot.slane %v5876, 2
  %v5980 = vsel %vm2337, %v5978, %v5979
  %v5981 = vrot.slane %v5875, 2
  %v5982 = vrot.slane %v5877, 2
  %v5983 = vsel %vm2337, %v5981, %v5982
  %v5984 = vrot.slane %v5878, 2
  %v5985 = vsel %vm2337, %v5979, %v5984
  %v5986 = vrot.slane %v5879, 2
  %v5987 = vsel %vm2337, %v5982, %v5986
  %v5988 = vrot.slane %v5880, 2
  %v5989 = vrot.slane %v5882, 2
  %v5990 = vsel %vm2337, %v5988, %v5989
  %v5991 = vrot.slane %v5881, 2
  %v5992 = vrot.slane %v5883, 2
  %v5993 = vsel %vm2337, %v5991, %v5992
  %v5994 = vrot.slane %v5884, 2
  %v5995 = vsel %vm2337, %v5989, %v5994
  %v5996 = vrot.slane %v5885, 2
  %v5997 = vsel %vm2337, %v5992, %v5996
  %v5998 = vrot.slane %v5886, 2
  %v5999 = vrot.slane %v5888, 2
  %v6000 = vsel %vm2337, %v5998, %v5999
  %v6001 = vrot.slane %v5887, 2
  %v6002 = vrot.slane %v5889, 2
  %v6003 = vsel %vm2337, %v6001, %v6002
  %v6004 = vrot.slane %v5890, 2
  %v6005 = vsel %vm2337, %v5999, %v6004
  %v6006 = vrot.slane %v5891, 2
  %v6007 = vsel %vm2337, %v6002, %v6006
  %v6008 = vrot.slane %v5892, 2
  %v6009 = vrot.slane %v5894, 2
  %v6010 = vsel %vm2337, %v6008, %v6009
  %v6011 = vrot.slane %v5893, 2
  %v6012 = vrot.slane %v5895, 2
  %v6013 = vsel %vm2337, %v6011, %v6012
  %v6014 = vrot.slane %v5896, 2
  %v6015 = vsel %vm2337, %v6009, %v6014
  %v6016 = vrot.slane %v5897, 2
  %v6017 = vsel %vm2337, %v6012, %v6016
  %v6018 = vrot.slane %v5898, 2
  %v6019 = vrot.slane %v5900, 2
  %v6020 = vsel %vm2337, %v6018, %v6019
  %v6021 = vrot.slane %v5899, 2
  %v6022 = vrot.slane %v5901, 2
  %v6023 = vsel %vm2337, %v6021, %v6022
  %v6024 = vrot.slane %v5902, 2
  %v6025 = vsel %vm2337, %v6019, %v6024
  %v6026 = vrot.slane %v5903, 2
  %v6027 = vsel %vm2337, %v6022, %v6026
  %v6028 = vrot.slane %v5904, 2
  %v6029 = vrot.slane %v5906, 2
  %v6030 = vsel %vm2337, %v6028, %v6029
  %v6031 = vrot.slane %v5905, 2
  %v6032 = vrot.slane %v5907, 2
  %v6033 = vsel %vm2337, %v6031, %v6032
  %v6034 = vrot.slane %v5908, 2
  %v6035 = vsel %vm2337, %v6029, %v6034
  %v6036 = vrot.slane %v5909, 2
  %v6037 = vsel %vm2337, %v6032, %v6036
  %6038 = vrot.lane.b32.xlu0 %v5960, 127
  %v6039 = vpop.permute.xlu0 %6038
  %6040 = vrot.lane.b32.xlu0 %v5963, 127
  %v6041 = vpop.permute.xlu0 %6040
  %6042 = vrot.lane.b32.xlu0 %v5965, 127
  %v6043 = vpop.permute.xlu0 %6042
  %6044 = vrot.lane.b32.xlu0 %v5967, 127
  %v6045 = vpop.permute.xlu0 %6044
  %6046 = vrot.lane.b32.xlu0 %v5970, 127
  %v6047 = vpop.permute.xlu0 %6046
  %6048 = vrot.lane.b32.xlu0 %v5973, 127
  %v6049 = vpop.permute.xlu0 %6048
  %6050 = vrot.lane.b32.xlu0 %v5975, 127
  %v6051 = vpop.permute.xlu0 %6050
  %6052 = vrot.lane.b32.xlu0 %v5977, 127
  %v6053 = vpop.permute.xlu0 %6052
  %6054 = vrot.lane.b32.xlu0 %v5980, 127
  %v6055 = vpop.permute.xlu0 %6054
  %6056 = vrot.lane.b32.xlu0 %v5983, 127
  %v6057 = vpop.permute.xlu0 %6056
  %6058 = vrot.lane.b32.xlu0 %v5985, 127
  %v6059 = vpop.permute.xlu0 %6058
  %6060 = vrot.lane.b32.xlu0 %v5987, 127
  %v6061 = vpop.permute.xlu0 %6060
  %6062 = vrot.lane.b32.xlu0 %v5990, 127
  %v6063 = vpop.permute.xlu0 %6062
  %6064 = vrot.lane.b32.xlu0 %v5993, 127
  %v6065 = vpop.permute.xlu0 %6064
  %6066 = vrot.lane.b32.xlu0 %v5995, 127
  %v6067 = vpop.permute.xlu0 %6066
  %6068 = vrot.lane.b32.xlu0 %v5997, 127
  %v6069 = vpop.permute.xlu0 %6068
  %6070 = vrot.lane.b32.xlu0 %v6000, 127
  %v6071 = vpop.permute.xlu0 %6070
  %6072 = vrot.lane.b32.xlu0 %v6003, 127
  %v6073 = vpop.permute.xlu0 %6072
  %6074 = vrot.lane.b32.xlu0 %v6005, 127
  %v6075 = vpop.permute.xlu0 %6074
  %6076 = vrot.lane.b32.xlu0 %v6007, 127
  %v6077 = vpop.permute.xlu0 %6076
  %6078 = vrot.lane.b32.xlu0 %v6010, 127
  %v6079 = vpop.permute.xlu0 %6078
  %6080 = vrot.lane.b32.xlu0 %v6013, 127
  %v6081 = vpop.permute.xlu0 %6080
  %6082 = vrot.lane.b32.xlu0 %v6015, 127
  %v6083 = vpop.permute.xlu0 %6082
  %6084 = vrot.lane.b32.xlu0 %v6017, 127
  %v6085 = vpop.permute.xlu0 %6084
  %6086 = vrot.lane.b32.xlu0 %v6020, 127
  %v6087 = vpop.permute.xlu0 %6086
  %6088 = vrot.lane.b32.xlu0 %v6023, 127
  %v6089 = vpop.permute.xlu0 %6088
  %6090 = vrot.lane.b32.xlu0 %v6025, 127
  %v6091 = vpop.permute.xlu0 %6090
  %6092 = vrot.lane.b32.xlu0 %v6027, 127
  %v6093 = vpop.permute.xlu0 %6092
  %6094 = vrot.lane.b32.xlu0 %v6030, 127
  %v6095 = vpop.permute.xlu0 %6094
  %6096 = vrot.lane.b32.xlu0 %v6033, 127
  %v6097 = vpop.permute.xlu0 %6096
  %6098 = vrot.lane.b32.xlu0 %v6035, 127
  %v6099 = vpop.permute.xlu0 %6098
  %6100 = vrot.lane.b32.xlu0 %v6037, 127
  %v6101 = vpop.permute.xlu0 %6100
  %v6102 = vsel %vm500, %v6039, %v6041
  %v6103 = vsel %vm500, %v6043, %v6045
  %v6104 = vsel %vm500, %v6047, %v6049
  %v6105 = vsel %vm500, %v6051, %v6053
  %v6106 = vsel %vm500, %v6055, %v6057
  %v6107 = vsel %vm500, %v6059, %v6061
  %v6108 = vsel %vm500, %v6063, %v6065
  %v6109 = vsel %vm500, %v6067, %v6069
  %v6110 = vsel %vm500, %v6071, %v6073
  %v6111 = vsel %vm500, %v6075, %v6077
  %v6112 = vsel %vm500, %v6079, %v6081
  %v6113 = vsel %vm500, %v6083, %v6085
  %v6114 = vsel %vm500, %v6087, %v6089
  %v6115 = vsel %vm500, %v6091, %v6093
  %v6116 = vsel %vm500, %v6095, %v6097
  %v6117 = vsel %vm500, %v6099, %v6101
  %v6150 = vadd.f32 %v5716, %v6102
  %v6151 = vadd.f32 %v5717, %v6041
  %v6152 = vadd.f32 %v5718, %v6103
  %v6153 = vadd.f32 %v5719, %v6045
  %v6154 = vadd.f32 %v5720, %v6104
  %v6155 = vadd.f32 %v5721, %v6049
  %v6156 = vadd.f32 %v5722, %v6105
  %v6157 = vadd.f32 %v5723, %v6053
  %v6158 = vadd.f32 %v5724, %v6106
  %v6159 = vadd.f32 %v5725, %v6057
  %v6160 = vadd.f32 %v5726, %v6107
  %v6161 = vadd.f32 %v5727, %v6061
  %v6162 = vadd.f32 %v5728, %v6108
  %v6163 = vadd.f32 %v5729, %v6065
  %v6164 = vadd.f32 %v5730, %v6109
  %v6165 = vadd.f32 %v5731, %v6069
  %v6166 = vadd.f32 %v5732, %v6110
  %v6167 = vadd.f32 %v5733, %v6073
  %v6168 = vadd.f32 %v5734, %v6111
  %v6169 = vadd.f32 %v5735, %v6077
  %v6170 = vadd.f32 %v5736, %v6112
  %v6171 = vadd.f32 %v5737, %v6081
  %v6172 = vadd.f32 %v5738, %v6113
  %v6173 = vadd.f32 %v5739, %v6085
  %v6174 = vadd.f32 %v5740, %v6114
  %v6175 = vadd.f32 %v5741, %v6089
  %v6176 = vadd.f32 %v5742, %v6115
  %v6177 = vadd.f32 %v5743, %v6093
  %v6178 = vadd.f32 %v5744, %v6116
  %v6179 = vadd.f32 %v5745, %v6097
  %v6180 = vadd.f32 %v5746, %v6117
  %v6181 = vadd.f32 %v5747, %v6101
  %v6183 = vcombine.high %v61, %v61
  %v6185 = vunpack.c.l.s4 1966171168
  %v6186 = vunpack.c.0.s8 %v6185
  %v6187 = vlaneseq
  %v6188 = vshrl.u32 %v6187, 7
  %v6189 = vsub.s32 %v6186, %v6188
  %v6190 = vrot.slane %v61, %v6189
  %v6192 = vunpack.c.l.s4 1966171168
  %v6193 = vunpack.c.0.s8 %v6192
  %v6194 = vlaneseq
  %v6195 = vshrl.u32 %v6194, 7
  %v6196 = vsub.s32 %v6193, %v6195
  %v6197 = vrot.slane %v6183, %v6196
  %v6198 = vcombine.high %v6190, %v6190
  %v6199 = vcombine.high %v6197, %v6197
  %v6201 = vunpack.c.l.s4 1966171168
  %v6202 = vunpack.c.0.s8 %v6201
  %v6203 = vlaneseq
  %v6204 = vshrl.u32 %v6203, 7
  %v6205 = vsub.s32 %v6202, %v6204
  %v6206 = vrot.slane %v6190, %v6205
  %v6208 = vunpack.c.l.s4 1966171168
  %v6209 = vunpack.c.0.s8 %v6208
  %v6210 = vlaneseq
  %v6211 = vshrl.u32 %v6210, 7
  %v6212 = vsub.s32 %v6209, %v6211
  %v6213 = vrot.slane %v6197, %v6212
  %v6215 = vunpack.c.l.s4 1966171168
  %v6216 = vunpack.c.0.s8 %v6215
  %v6217 = vlaneseq
  %v6218 = vshrl.u32 %v6217, 7
  %v6219 = vsub.s32 %v6216, %v6218
  %v6220 = vrot.slane %v6198, %v6219
  %v6222 = vunpack.c.l.s4 1966171168
  %v6223 = vunpack.c.0.s8 %v6222
  %v6224 = vlaneseq
  %v6225 = vshrl.u32 %v6224, 7
  %v6226 = vsub.s32 %v6223, %v6225
  %v6227 = vrot.slane %v6199, %v6226
  %v6228 = vcombine.high %v6206, %v6206
  %v6229 = vcombine.high %v6213, %v6213
  %v6230 = vcombine.high %v6220, %v6220
  %v6231 = vcombine.high %v6227, %v6227
  %v6232 = vlaneseq
  %v6233 = vshrl.u32 %v6232, 7
  %v6234 = vsub.s32 0, %v6233
  %v6235 = vrot.slane %v6206, %v6234
  %v6236 = vlaneseq
  %v6237 = vshrl.u32 %v6236, 7
  %v6238 = vsub.s32 0, %v6237
  %v6239 = vrot.slane %v6220, %v6238
  %v6240 = vlaneseq
  %v6241 = vshrl.u32 %v6240, 7
  %v6242 = vsub.s32 0, %v6241
  %v6243 = vrot.slane %v6228, %v6242
  %v6244 = vlaneseq
  %v6245 = vshrl.u32 %v6244, 7
  %v6246 = vsub.s32 0, %v6245
  %v6247 = vrot.slane %v6230, %v6246
  %v6248 = vlaneseq
  %v6249 = vshrl.u32 %v6248, 7
  %v6250 = vsub.s32 0, %v6249
  %v6251 = vrot.slane %v6213, %v6250
  %v6252 = vlaneseq
  %v6253 = vshrl.u32 %v6252, 7
  %v6254 = vsub.s32 0, %v6253
  %v6255 = vrot.slane %v6227, %v6254
  %v6256 = vlaneseq
  %v6257 = vshrl.u32 %v6256, 7
  %v6258 = vsub.s32 0, %v6257
  %v6259 = vrot.slane %v6229, %v6258
  %v6260 = vlaneseq
  %v6261 = vshrl.u32 %v6260, 7
  %v6262 = vsub.s32 0, %v6261
  %v6263 = vrot.slane %v6231, %v6262
  %6264 = vset.pattern.permute.xlu0 0
  %6265 = vperm.xlu0 %6264, %v6235
  %v6266 = vpop.permute.xlu0 %6265
  %6268 = vset.pattern.permute.xlu0 0
  %6269 = vperm.xlu0 %6268, %v6239
  %v6270 = vpop.permute.xlu0 %6269
  %6272 = vset.pattern.permute.xlu0 0
  %6273 = vperm.xlu0 %6272, %v6243
  %v6274 = vpop.permute.xlu0 %6273
  %6276 = vset.pattern.permute.xlu0 0
  %6277 = vperm.xlu0 %6276, %v6247
  %v6278 = vpop.permute.xlu0 %6277
  %6280 = vset.pattern.permute.xlu0 0
  %6281 = vperm.xlu0 %6280, %v6251
  %v6282 = vpop.permute.xlu0 %6281
  %6284 = vset.pattern.permute.xlu0 0
  %6285 = vperm.xlu0 %6284, %v6255
  %v6286 = vpop.permute.xlu0 %6285
  %6288 = vset.pattern.permute.xlu0 0
  %6289 = vperm.xlu0 %6288, %v6259
  %v6290 = vpop.permute.xlu0 %6289
  %6292 = vset.pattern.permute.xlu0 0
  %6293 = vperm.xlu0 %6292, %v6263
  %v6294 = vpop.permute.xlu0 %6293
  %v6296 = vmul.f32 %v6266, %v26
  %v6297 = vmul.f32 %v6266, %v27
  %v6298 = vmul.f32 %v6266, %v28
  %v6299 = vmul.f32 %v6266, %v29
  %v6300 = vmul.f32 %v6266, %v30
  %v6301 = vmul.f32 %v6266, %v31
  %v6302 = vmul.f32 %v6270, %v26
  %v6303 = vmul.f32 %v6270, %v27
  %v6304 = vmul.f32 %v6270, %v28
  %v6305 = vmul.f32 %v6270, %v29
  %v6306 = vmul.f32 %v6270, %v30
  %v6307 = vmul.f32 %v6270, %v31
  %v6308 = vmul.f32 %v6274, %v26
  %v6309 = vmul.f32 %v6274, %v27
  %v6310 = vmul.f32 %v6274, %v28
  %v6311 = vmul.f32 %v6274, %v29
  %v6312 = vmul.f32 %v6274, %v30
  %v6313 = vmul.f32 %v6274, %v31
  %v6314 = vmul.f32 %v6278, %v26
  %v6315 = vmul.f32 %v6278, %v27
  %v6316 = vmul.f32 %v6278, %v28
  %v6317 = vmul.f32 %v6278, %v29
  %v6318 = vmul.f32 %v6278, %v30
  %v6319 = vmul.f32 %v6278, %v31
  %v6320 = vmul.f32 %v6282, %v26
  %v6321 = vmul.f32 %v6282, %v27
  %v6322 = vmul.f32 %v6282, %v28
  %v6323 = vmul.f32 %v6282, %v29
  %v6324 = vmul.f32 %v6282, %v30
  %v6325 = vmul.f32 %v6282, %v31
  %v6326 = vmul.f32 %v6286, %v26
  %v6327 = vmul.f32 %v6286, %v27
  %v6328 = vmul.f32 %v6286, %v28
  %v6329 = vmul.f32 %v6286, %v29
  %v6330 = vmul.f32 %v6286, %v30
  %v6331 = vmul.f32 %v6286, %v31
  %v6332 = vmul.f32 %v6290, %v26
  %v6333 = vmul.f32 %v6290, %v27
  %v6334 = vmul.f32 %v6290, %v28
  %v6335 = vmul.f32 %v6290, %v29
  %v6336 = vmul.f32 %v6290, %v30
  %v6337 = vmul.f32 %v6290, %v31
  %v6338 = vmul.f32 %v6294, %v26
  %v6339 = vmul.f32 %v6294, %v27
  %v6340 = vmul.f32 %v6294, %v28
  %v6341 = vmul.f32 %v6294, %v29
  %v6342 = vmul.f32 %v6294, %v30
  %v6343 = vmul.f32 %v6294, %v31
  %v6392 = vrot.slane %v6296, 2
  %v6393 = vrot.slane %v6298, 2
  %v6394 = vsel %vm2337, %v6392, %v6393
  %v6395 = vrot.slane %v6297, 2
  %v6396 = vrot.slane %v6299, 2
  %v6397 = vsel %vm2337, %v6395, %v6396
  %v6398 = vrot.slane %v6300, 2
  %v6399 = vsel %vm2337, %v6393, %v6398
  %v6400 = vrot.slane %v6301, 2
  %v6401 = vsel %vm2337, %v6396, %v6400
  %v6402 = vrot.slane %v6302, 2
  %v6403 = vrot.slane %v6304, 2
  %v6404 = vsel %vm2337, %v6402, %v6403
  %v6405 = vrot.slane %v6303, 2
  %v6406 = vrot.slane %v6305, 2
  %v6407 = vsel %vm2337, %v6405, %v6406
  %v6408 = vrot.slane %v6306, 2
  %v6409 = vsel %vm2337, %v6403, %v6408
  %v6410 = vrot.slane %v6307, 2
  %v6411 = vsel %vm2337, %v6406, %v6410
  %v6412 = vrot.slane %v6308, 2
  %v6413 = vrot.slane %v6310, 2
  %v6414 = vsel %vm2337, %v6412, %v6413
  %v6415 = vrot.slane %v6309, 2
  %v6416 = vrot.slane %v6311, 2
  %v6417 = vsel %vm2337, %v6415, %v6416
  %v6418 = vrot.slane %v6312, 2
  %v6419 = vsel %vm2337, %v6413, %v6418
  %v6420 = vrot.slane %v6313, 2
  %v6421 = vsel %vm2337, %v6416, %v6420
  %v6422 = vrot.slane %v6314, 2
  %v6423 = vrot.slane %v6316, 2
  %v6424 = vsel %vm2337, %v6422, %v6423
  %v6425 = vrot.slane %v6315, 2
  %v6426 = vrot.slane %v6317, 2
  %v6427 = vsel %vm2337, %v6425, %v6426
  %v6428 = vrot.slane %v6318, 2
  %v6429 = vsel %vm2337, %v6423, %v6428
  %v6430 = vrot.slane %v6319, 2
  %v6431 = vsel %vm2337, %v6426, %v6430
  %v6432 = vrot.slane %v6320, 2
  %v6433 = vrot.slane %v6322, 2
  %v6434 = vsel %vm2337, %v6432, %v6433
  %v6435 = vrot.slane %v6321, 2
  %v6436 = vrot.slane %v6323, 2
  %v6437 = vsel %vm2337, %v6435, %v6436
  %v6438 = vrot.slane %v6324, 2
  %v6439 = vsel %vm2337, %v6433, %v6438
  %v6440 = vrot.slane %v6325, 2
  %v6441 = vsel %vm2337, %v6436, %v6440
  %v6442 = vrot.slane %v6326, 2
  %v6443 = vrot.slane %v6328, 2
  %v6444 = vsel %vm2337, %v6442, %v6443
  %v6445 = vrot.slane %v6327, 2
  %v6446 = vrot.slane %v6329, 2
  %v6447 = vsel %vm2337, %v6445, %v6446
  %v6448 = vrot.slane %v6330, 2
  %v6449 = vsel %vm2337, %v6443, %v6448
  %v6450 = vrot.slane %v6331, 2
  %v6451 = vsel %vm2337, %v6446, %v6450
  %v6452 = vrot.slane %v6332, 2
  %v6453 = vrot.slane %v6334, 2
  %v6454 = vsel %vm2337, %v6452, %v6453
  %v6455 = vrot.slane %v6333, 2
  %v6456 = vrot.slane %v6335, 2
  %v6457 = vsel %vm2337, %v6455, %v6456
  %v6458 = vrot.slane %v6336, 2
  %v6459 = vsel %vm2337, %v6453, %v6458
  %v6460 = vrot.slane %v6337, 2
  %v6461 = vsel %vm2337, %v6456, %v6460
  %v6462 = vrot.slane %v6338, 2
  %v6463 = vrot.slane %v6340, 2
  %v6464 = vsel %vm2337, %v6462, %v6463
  %v6465 = vrot.slane %v6339, 2
  %v6466 = vrot.slane %v6341, 2
  %v6467 = vsel %vm2337, %v6465, %v6466
  %v6468 = vrot.slane %v6342, 2
  %v6469 = vsel %vm2337, %v6463, %v6468
  %v6470 = vrot.slane %v6343, 2
  %v6471 = vsel %vm2337, %v6466, %v6470
  %6472 = vrot.lane.b32.xlu0 %v6394, 126
  %v6473 = vpop.permute.xlu0 %6472
  %6474 = vrot.lane.b32.xlu0 %v6397, 126
  %v6475 = vpop.permute.xlu0 %6474
  %6476 = vrot.lane.b32.xlu0 %v6399, 126
  %v6477 = vpop.permute.xlu0 %6476
  %6478 = vrot.lane.b32.xlu0 %v6401, 126
  %v6479 = vpop.permute.xlu0 %6478
  %6480 = vrot.lane.b32.xlu0 %v6404, 126
  %v6481 = vpop.permute.xlu0 %6480
  %6482 = vrot.lane.b32.xlu0 %v6407, 126
  %v6483 = vpop.permute.xlu0 %6482
  %6484 = vrot.lane.b32.xlu0 %v6409, 126
  %v6485 = vpop.permute.xlu0 %6484
  %6486 = vrot.lane.b32.xlu0 %v6411, 126
  %v6487 = vpop.permute.xlu0 %6486
  %6488 = vrot.lane.b32.xlu0 %v6414, 126
  %v6489 = vpop.permute.xlu0 %6488
  %6490 = vrot.lane.b32.xlu0 %v6417, 126
  %v6491 = vpop.permute.xlu0 %6490
  %6492 = vrot.lane.b32.xlu0 %v6419, 126
  %v6493 = vpop.permute.xlu0 %6492
  %6494 = vrot.lane.b32.xlu0 %v6421, 126
  %v6495 = vpop.permute.xlu0 %6494
  %6496 = vrot.lane.b32.xlu0 %v6424, 126
  %v6497 = vpop.permute.xlu0 %6496
  %6498 = vrot.lane.b32.xlu0 %v6427, 126
  %v6499 = vpop.permute.xlu0 %6498
  %6500 = vrot.lane.b32.xlu0 %v6429, 126
  %v6501 = vpop.permute.xlu0 %6500
  %6502 = vrot.lane.b32.xlu0 %v6431, 126
  %v6503 = vpop.permute.xlu0 %6502
  %6504 = vrot.lane.b32.xlu0 %v6434, 126
  %v6505 = vpop.permute.xlu0 %6504
  %6506 = vrot.lane.b32.xlu0 %v6437, 126
  %v6507 = vpop.permute.xlu0 %6506
  %6508 = vrot.lane.b32.xlu0 %v6439, 126
  %v6509 = vpop.permute.xlu0 %6508
  %6510 = vrot.lane.b32.xlu0 %v6441, 126
  %v6511 = vpop.permute.xlu0 %6510
  %6512 = vrot.lane.b32.xlu0 %v6444, 126
  %v6513 = vpop.permute.xlu0 %6512
  %6514 = vrot.lane.b32.xlu0 %v6447, 126
  %v6515 = vpop.permute.xlu0 %6514
  %6516 = vrot.lane.b32.xlu0 %v6449, 126
  %v6517 = vpop.permute.xlu0 %6516
  %6518 = vrot.lane.b32.xlu0 %v6451, 126
  %v6519 = vpop.permute.xlu0 %6518
  %6520 = vrot.lane.b32.xlu0 %v6454, 126
  %v6521 = vpop.permute.xlu0 %6520
  %6522 = vrot.lane.b32.xlu0 %v6457, 126
  %v6523 = vpop.permute.xlu0 %6522
  %6524 = vrot.lane.b32.xlu0 %v6459, 126
  %v6525 = vpop.permute.xlu0 %6524
  %6526 = vrot.lane.b32.xlu0 %v6461, 126
  %v6527 = vpop.permute.xlu0 %6526
  %6528 = vrot.lane.b32.xlu0 %v6464, 126
  %v6529 = vpop.permute.xlu0 %6528
  %6530 = vrot.lane.b32.xlu0 %v6467, 126
  %v6531 = vpop.permute.xlu0 %6530
  %6532 = vrot.lane.b32.xlu0 %v6469, 126
  %v6533 = vpop.permute.xlu0 %6532
  %6534 = vrot.lane.b32.xlu0 %v6471, 126
  %v6535 = vpop.permute.xlu0 %6534
  %v6536 = vsel %vm823, %v6473, %v6475
  %v6537 = vsel %vm823, %v6477, %v6479
  %v6538 = vsel %vm823, %v6481, %v6483
  %v6539 = vsel %vm823, %v6485, %v6487
  %v6540 = vsel %vm823, %v6489, %v6491
  %v6541 = vsel %vm823, %v6493, %v6495
  %v6542 = vsel %vm823, %v6497, %v6499
  %v6543 = vsel %vm823, %v6501, %v6503
  %v6544 = vsel %vm823, %v6505, %v6507
  %v6545 = vsel %vm823, %v6509, %v6511
  %v6546 = vsel %vm823, %v6513, %v6515
  %v6547 = vsel %vm823, %v6517, %v6519
  %v6548 = vsel %vm823, %v6521, %v6523
  %v6549 = vsel %vm823, %v6525, %v6527
  %v6550 = vsel %vm823, %v6529, %v6531
  %v6551 = vsel %vm823, %v6533, %v6535
  %v6584 = vadd.f32 %v6150, %v6536
  %v6585 = vadd.f32 %v6151, %v6475
  %v6586 = vadd.f32 %v6152, %v6537
  %v6587 = vadd.f32 %v6153, %v6479
  %v6588 = vadd.f32 %v6154, %v6538
  %v6589 = vadd.f32 %v6155, %v6483
  %v6590 = vadd.f32 %v6156, %v6539
  %v6591 = vadd.f32 %v6157, %v6487
  %v6592 = vadd.f32 %v6158, %v6540
  %v6593 = vadd.f32 %v6159, %v6491
  %v6594 = vadd.f32 %v6160, %v6541
  %v6595 = vadd.f32 %v6161, %v6495
  %v6596 = vadd.f32 %v6162, %v6542
  %v6597 = vadd.f32 %v6163, %v6499
  %v6598 = vadd.f32 %v6164, %v6543
  %v6599 = vadd.f32 %v6165, %v6503
  %v6600 = vadd.f32 %v6166, %v6544
  %v6601 = vadd.f32 %v6167, %v6507
  %v6602 = vadd.f32 %v6168, %v6545
  %v6603 = vadd.f32 %v6169, %v6511
  %v6604 = vadd.f32 %v6170, %v6546
  %v6605 = vadd.f32 %v6171, %v6515
  %v6606 = vadd.f32 %v6172, %v6547
  %v6607 = vadd.f32 %v6173, %v6519
  %v6608 = vadd.f32 %v6174, %v6548
  %v6609 = vadd.f32 %v6175, %v6523
  %v6610 = vadd.f32 %v6176, %v6549
  %v6611 = vadd.f32 %v6177, %v6527
  %v6612 = vadd.f32 %v6178, %v6550
  %v6613 = vadd.f32 %v6179, %v6531
  %v6614 = vadd.f32 %v6180, %v6551
  %v6615 = vadd.f32 %v6181, %v6535
  %v6617 = vcombine.high %v62, %v62
  %v6619 = vunpack.c.l.s4 1966171168
  %v6620 = vunpack.c.0.s8 %v6619
  %v6621 = vlaneseq
  %v6622 = vshrl.u32 %v6621, 7
  %v6623 = vsub.s32 %v6620, %v6622
  %v6624 = vrot.slane %v62, %v6623
  %v6626 = vunpack.c.l.s4 1966171168
  %v6627 = vunpack.c.0.s8 %v6626
  %v6628 = vlaneseq
  %v6629 = vshrl.u32 %v6628, 7
  %v6630 = vsub.s32 %v6627, %v6629
  %v6631 = vrot.slane %v6617, %v6630
  %v6632 = vcombine.high %v6624, %v6624
  %v6633 = vcombine.high %v6631, %v6631
  %v6635 = vunpack.c.l.s4 1966171168
  %v6636 = vunpack.c.0.s8 %v6635
  %v6637 = vlaneseq
  %v6638 = vshrl.u32 %v6637, 7
  %v6639 = vsub.s32 %v6636, %v6638
  %v6640 = vrot.slane %v6624, %v6639
  %v6642 = vunpack.c.l.s4 1966171168
  %v6643 = vunpack.c.0.s8 %v6642
  %v6644 = vlaneseq
  %v6645 = vshrl.u32 %v6644, 7
  %v6646 = vsub.s32 %v6643, %v6645
  %v6647 = vrot.slane %v6631, %v6646
  %v6649 = vunpack.c.l.s4 1966171168
  %v6650 = vunpack.c.0.s8 %v6649
  %v6651 = vlaneseq
  %v6652 = vshrl.u32 %v6651, 7
  %v6653 = vsub.s32 %v6650, %v6652
  %v6654 = vrot.slane %v6632, %v6653
  %v6656 = vunpack.c.l.s4 1966171168
  %v6657 = vunpack.c.0.s8 %v6656
  %v6658 = vlaneseq
  %v6659 = vshrl.u32 %v6658, 7
  %v6660 = vsub.s32 %v6657, %v6659
  %v6661 = vrot.slane %v6633, %v6660
  %v6662 = vcombine.high %v6640, %v6640
  %v6663 = vcombine.high %v6647, %v6647
  %v6664 = vcombine.high %v6654, %v6654
  %v6665 = vcombine.high %v6661, %v6661
  %v6666 = vlaneseq
  %v6667 = vshrl.u32 %v6666, 7
  %v6668 = vsub.s32 0, %v6667
  %v6669 = vrot.slane %v6640, %v6668
  %v6670 = vlaneseq
  %v6671 = vshrl.u32 %v6670, 7
  %v6672 = vsub.s32 0, %v6671
  %v6673 = vrot.slane %v6654, %v6672
  %v6674 = vlaneseq
  %v6675 = vshrl.u32 %v6674, 7
  %v6676 = vsub.s32 0, %v6675
  %v6677 = vrot.slane %v6662, %v6676
  %v6678 = vlaneseq
  %v6679 = vshrl.u32 %v6678, 7
  %v6680 = vsub.s32 0, %v6679
  %v6681 = vrot.slane %v6664, %v6680
  %v6682 = vlaneseq
  %v6683 = vshrl.u32 %v6682, 7
  %v6684 = vsub.s32 0, %v6683
  %v6685 = vrot.slane %v6647, %v6684
  %v6686 = vlaneseq
  %v6687 = vshrl.u32 %v6686, 7
  %v6688 = vsub.s32 0, %v6687
  %v6689 = vrot.slane %v6661, %v6688
  %v6690 = vlaneseq
  %v6691 = vshrl.u32 %v6690, 7
  %v6692 = vsub.s32 0, %v6691
  %v6693 = vrot.slane %v6663, %v6692
  %v6694 = vlaneseq
  %v6695 = vshrl.u32 %v6694, 7
  %v6696 = vsub.s32 0, %v6695
  %v6697 = vrot.slane %v6665, %v6696
  %6698 = vset.pattern.permute.xlu0 0
  %6699 = vperm.xlu0 %6698, %v6669
  %v6700 = vpop.permute.xlu0 %6699
  %6702 = vset.pattern.permute.xlu0 0
  %6703 = vperm.xlu0 %6702, %v6673
  %v6704 = vpop.permute.xlu0 %6703
  %6706 = vset.pattern.permute.xlu0 0
  %6707 = vperm.xlu0 %6706, %v6677
  %v6708 = vpop.permute.xlu0 %6707
  %6710 = vset.pattern.permute.xlu0 0
  %6711 = vperm.xlu0 %6710, %v6681
  %v6712 = vpop.permute.xlu0 %6711
  %6714 = vset.pattern.permute.xlu0 0
  %6715 = vperm.xlu0 %6714, %v6685
  %v6716 = vpop.permute.xlu0 %6715
  %6718 = vset.pattern.permute.xlu0 0
  %6719 = vperm.xlu0 %6718, %v6689
  %v6720 = vpop.permute.xlu0 %6719
  %6722 = vset.pattern.permute.xlu0 0
  %6723 = vperm.xlu0 %6722, %v6693
  %v6724 = vpop.permute.xlu0 %6723
  %6726 = vset.pattern.permute.xlu0 0
  %6727 = vperm.xlu0 %6726, %v6697
  %v6728 = vpop.permute.xlu0 %6727
  %v6730 = vmul.f32 %v6700, %v32
  %v6731 = vmul.f32 %v6700, %v33
  %v6732 = vmul.f32 %v6700, %v34
  %v6733 = vmul.f32 %v6700, %v35
  %v6734 = vmul.f32 %v6704, %v32
  %v6735 = vmul.f32 %v6704, %v33
  %v6736 = vmul.f32 %v6704, %v34
  %v6737 = vmul.f32 %v6704, %v35
  %v6738 = vmul.f32 %v6708, %v32
  %v6739 = vmul.f32 %v6708, %v33
  %v6740 = vmul.f32 %v6708, %v34
  %v6741 = vmul.f32 %v6708, %v35
  %v6742 = vmul.f32 %v6712, %v32
  %v6743 = vmul.f32 %v6712, %v33
  %v6744 = vmul.f32 %v6712, %v34
  %v6745 = vmul.f32 %v6712, %v35
  %v6746 = vmul.f32 %v6716, %v32
  %v6747 = vmul.f32 %v6716, %v33
  %v6748 = vmul.f32 %v6716, %v34
  %v6749 = vmul.f32 %v6716, %v35
  %v6750 = vmul.f32 %v6720, %v32
  %v6751 = vmul.f32 %v6720, %v33
  %v6752 = vmul.f32 %v6720, %v34
  %v6753 = vmul.f32 %v6720, %v35
  %v6754 = vmul.f32 %v6724, %v32
  %v6755 = vmul.f32 %v6724, %v33
  %v6756 = vmul.f32 %v6724, %v34
  %v6757 = vmul.f32 %v6724, %v35
  %v6758 = vmul.f32 %v6728, %v32
  %v6759 = vmul.f32 %v6728, %v33
  %v6760 = vmul.f32 %v6728, %v34
  %v6761 = vmul.f32 %v6728, %v35
  %v6762 = vadd.f32 %v6584, %v6730
  %v6763 = vadd.f32 %v6585, %v6731
  %v6764 = vadd.f32 %v6586, %v6732
  %v6765 = vadd.f32 %v6587, %v6733
  %v6766 = vadd.f32 %v6588, %v6734
  %v6767 = vadd.f32 %v6589, %v6735
  %v6768 = vadd.f32 %v6590, %v6736
  %v6769 = vadd.f32 %v6591, %v6737
  %v6770 = vadd.f32 %v6592, %v6738
  %v6771 = vadd.f32 %v6593, %v6739
  %v6772 = vadd.f32 %v6594, %v6740
  %v6773 = vadd.f32 %v6595, %v6741
  %v6774 = vadd.f32 %v6596, %v6742
  %v6775 = vadd.f32 %v6597, %v6743
  %v6776 = vadd.f32 %v6598, %v6744
  %v6777 = vadd.f32 %v6599, %v6745
  %v6778 = vadd.f32 %v6600, %v6746
  %v6779 = vadd.f32 %v6601, %v6747
  %v6780 = vadd.f32 %v6602, %v6748
  %v6781 = vadd.f32 %v6603, %v6749
  %v6782 = vadd.f32 %v6604, %v6750
  %v6783 = vadd.f32 %v6605, %v6751
  %v6784 = vadd.f32 %v6606, %v6752
  %v6785 = vadd.f32 %v6607, %v6753
  %v6786 = vadd.f32 %v6608, %v6754
  %v6787 = vadd.f32 %v6609, %v6755
  %v6788 = vadd.f32 %v6610, %v6756
  %v6789 = vadd.f32 %v6611, %v6757
  %v6790 = vadd.f32 %v6612, %v6758
  %v6791 = vadd.f32 %v6613, %v6759
  %v6792 = vadd.f32 %v6614, %v6760
  %v6793 = vadd.f32 %v6615, %v6761
  %v6795 = vcombine.high %v63, %v63
  %v6797 = vunpack.c.l.s4 1966171168
  %v6798 = vunpack.c.0.s8 %v6797
  %v6799 = vlaneseq
  %v6800 = vshrl.u32 %v6799, 7
  %v6801 = vsub.s32 %v6798, %v6800
  %v6802 = vrot.slane %v63, %v6801
  %v6804 = vunpack.c.l.s4 1966171168
  %v6805 = vunpack.c.0.s8 %v6804
  %v6806 = vlaneseq
  %v6807 = vshrl.u32 %v6806, 7
  %v6808 = vsub.s32 %v6805, %v6807
  %v6809 = vrot.slane %v6795, %v6808
  %v6810 = vcombine.high %v6802, %v6802
  %v6811 = vcombine.high %v6809, %v6809
  %v6813 = vunpack.c.l.s4 1966171168
  %v6814 = vunpack.c.0.s8 %v6813
  %v6815 = vlaneseq
  %v6816 = vshrl.u32 %v6815, 7
  %v6817 = vsub.s32 %v6814, %v6816
  %v6818 = vrot.slane %v6802, %v6817
  %v6820 = vunpack.c.l.s4 1966171168
  %v6821 = vunpack.c.0.s8 %v6820
  %v6822 = vlaneseq
  %v6823 = vshrl.u32 %v6822, 7
  %v6824 = vsub.s32 %v6821, %v6823
  %v6825 = vrot.slane %v6809, %v6824
  %v6827 = vunpack.c.l.s4 1966171168
  %v6828 = vunpack.c.0.s8 %v6827
  %v6829 = vlaneseq
  %v6830 = vshrl.u32 %v6829, 7
  %v6831 = vsub.s32 %v6828, %v6830
  %v6832 = vrot.slane %v6810, %v6831
  %v6834 = vunpack.c.l.s4 1966171168
  %v6835 = vunpack.c.0.s8 %v6834
  %v6836 = vlaneseq
  %v6837 = vshrl.u32 %v6836, 7
  %v6838 = vsub.s32 %v6835, %v6837
  %v6839 = vrot.slane %v6811, %v6838
  %v6840 = vcombine.high %v6818, %v6818
  %v6841 = vcombine.high %v6825, %v6825
  %v6842 = vcombine.high %v6832, %v6832
  %v6843 = vcombine.high %v6839, %v6839
  %v6844 = vlaneseq
  %v6845 = vshrl.u32 %v6844, 7
  %v6846 = vsub.s32 0, %v6845
  %v6847 = vrot.slane %v6818, %v6846
  %v6848 = vlaneseq
  %v6849 = vshrl.u32 %v6848, 7
  %v6850 = vsub.s32 0, %v6849
  %v6851 = vrot.slane %v6832, %v6850
  %v6852 = vlaneseq
  %v6853 = vshrl.u32 %v6852, 7
  %v6854 = vsub.s32 0, %v6853
  %v6855 = vrot.slane %v6840, %v6854
  %v6856 = vlaneseq
  %v6857 = vshrl.u32 %v6856, 7
  %v6858 = vsub.s32 0, %v6857
  %v6859 = vrot.slane %v6842, %v6858
  %v6860 = vlaneseq
  %v6861 = vshrl.u32 %v6860, 7
  %v6862 = vsub.s32 0, %v6861
  %v6863 = vrot.slane %v6825, %v6862
  %v6864 = vlaneseq
  %v6865 = vshrl.u32 %v6864, 7
  %v6866 = vsub.s32 0, %v6865
  %v6867 = vrot.slane %v6839, %v6866
  %v6868 = vlaneseq
  %v6869 = vshrl.u32 %v6868, 7
  %v6870 = vsub.s32 0, %v6869
  %v6871 = vrot.slane %v6841, %v6870
  %v6872 = vlaneseq
  %v6873 = vshrl.u32 %v6872, 7
  %v6874 = vsub.s32 0, %v6873
  %v6875 = vrot.slane %v6843, %v6874
  %6876 = vset.pattern.permute.xlu0 0
  %6877 = vperm.xlu0 %6876, %v6847
  %v6878 = vpop.permute.xlu0 %6877
  %6880 = vset.pattern.permute.xlu0 0
  %6881 = vperm.xlu0 %6880, %v6851
  %v6882 = vpop.permute.xlu0 %6881
  %6884 = vset.pattern.permute.xlu0 0
  %6885 = vperm.xlu0 %6884, %v6855
  %v6886 = vpop.permute.xlu0 %6885
  %6888 = vset.pattern.permute.xlu0 0
  %6889 = vperm.xlu0 %6888, %v6859
  %v6890 = vpop.permute.xlu0 %6889
  %6892 = vset.pattern.permute.xlu0 0
  %6893 = vperm.xlu0 %6892, %v6863
  %v6894 = vpop.permute.xlu0 %6893
  %6896 = vset.pattern.permute.xlu0 0
  %6897 = vperm.xlu0 %6896, %v6867
  %v6898 = vpop.permute.xlu0 %6897
  %6900 = vset.pattern.permute.xlu0 0
  %6901 = vperm.xlu0 %6900, %v6871
  %v6902 = vpop.permute.xlu0 %6901
  %6904 = vset.pattern.permute.xlu0 0
  %6905 = vperm.xlu0 %6904, %v6875
  %v6906 = vpop.permute.xlu0 %6905
  %v6908 = vmul.f32 %v6878, %v32
  %v6909 = vmul.f32 %v6878, %v33
  %v6910 = vmul.f32 %v6878, %v34
  %v6911 = vmul.f32 %v6878, %v35
  %v6912 = vmul.f32 %v6882, %v32
  %v6913 = vmul.f32 %v6882, %v33
  %v6914 = vmul.f32 %v6882, %v34
  %v6915 = vmul.f32 %v6882, %v35
  %v6916 = vmul.f32 %v6886, %v32
  %v6917 = vmul.f32 %v6886, %v33
  %v6918 = vmul.f32 %v6886, %v34
  %v6919 = vmul.f32 %v6886, %v35
  %v6920 = vmul.f32 %v6890, %v32
  %v6921 = vmul.f32 %v6890, %v33
  %v6922 = vmul.f32 %v6890, %v34
  %v6923 = vmul.f32 %v6890, %v35
  %v6924 = vmul.f32 %v6894, %v32
  %v6925 = vmul.f32 %v6894, %v33
  %v6926 = vmul.f32 %v6894, %v34
  %v6927 = vmul.f32 %v6894, %v35
  %v6928 = vmul.f32 %v6898, %v32
  %v6929 = vmul.f32 %v6898, %v33
  %v6930 = vmul.f32 %v6898, %v34
  %v6931 = vmul.f32 %v6898, %v35
  %v6932 = vmul.f32 %v6902, %v32
  %v6933 = vmul.f32 %v6902, %v33
  %v6934 = vmul.f32 %v6902, %v34
  %v6935 = vmul.f32 %v6902, %v35
  %v6936 = vmul.f32 %v6906, %v32
  %v6937 = vmul.f32 %v6906, %v33
  %v6938 = vmul.f32 %v6906, %v34
  %v6939 = vmul.f32 %v6906, %v35
  %6972 = vrot.lane.b32.xlu0 %v6908, 127
  %v6973 = vpop.permute.xlu0 %6972
  %6974 = vrot.lane.b32.xlu0 %v6909, 127
  %v6975 = vpop.permute.xlu0 %6974
  %6976 = vrot.lane.b32.xlu0 %v6910, 127
  %v6977 = vpop.permute.xlu0 %6976
  %6978 = vrot.lane.b32.xlu0 %v6911, 127
  %v6979 = vpop.permute.xlu0 %6978
  %6980 = vrot.lane.b32.xlu0 %v6912, 127
  %v6981 = vpop.permute.xlu0 %6980
  %6982 = vrot.lane.b32.xlu0 %v6913, 127
  %v6983 = vpop.permute.xlu0 %6982
  %6984 = vrot.lane.b32.xlu0 %v6914, 127
  %v6985 = vpop.permute.xlu0 %6984
  %6986 = vrot.lane.b32.xlu0 %v6915, 127
  %v6987 = vpop.permute.xlu0 %6986
  %6988 = vrot.lane.b32.xlu0 %v6916, 127
  %v6989 = vpop.permute.xlu0 %6988
  %6990 = vrot.lane.b32.xlu0 %v6917, 127
  %v6991 = vpop.permute.xlu0 %6990
  %6992 = vrot.lane.b32.xlu0 %v6918, 127
  %v6993 = vpop.permute.xlu0 %6992
  %6994 = vrot.lane.b32.xlu0 %v6919, 127
  %v6995 = vpop.permute.xlu0 %6994
  %6996 = vrot.lane.b32.xlu0 %v6920, 127
  %v6997 = vpop.permute.xlu0 %6996
  %6998 = vrot.lane.b32.xlu0 %v6921, 127
  %v6999 = vpop.permute.xlu0 %6998
  %7000 = vrot.lane.b32.xlu0 %v6922, 127
  %v7001 = vpop.permute.xlu0 %7000
  %7002 = vrot.lane.b32.xlu0 %v6923, 127
  %v7003 = vpop.permute.xlu0 %7002
  %7004 = vrot.lane.b32.xlu0 %v6924, 127
  %v7005 = vpop.permute.xlu0 %7004
  %7006 = vrot.lane.b32.xlu0 %v6925, 127
  %v7007 = vpop.permute.xlu0 %7006
  %7008 = vrot.lane.b32.xlu0 %v6926, 127
  %v7009 = vpop.permute.xlu0 %7008
  %7010 = vrot.lane.b32.xlu0 %v6927, 127
  %v7011 = vpop.permute.xlu0 %7010
  %7012 = vrot.lane.b32.xlu0 %v6928, 127
  %v7013 = vpop.permute.xlu0 %7012
  %7014 = vrot.lane.b32.xlu0 %v6929, 127
  %v7015 = vpop.permute.xlu0 %7014
  %7016 = vrot.lane.b32.xlu0 %v6930, 127
  %v7017 = vpop.permute.xlu0 %7016
  %7018 = vrot.lane.b32.xlu0 %v6931, 127
  %v7019 = vpop.permute.xlu0 %7018
  %7020 = vrot.lane.b32.xlu0 %v6932, 127
  %v7021 = vpop.permute.xlu0 %7020
  %7022 = vrot.lane.b32.xlu0 %v6933, 127
  %v7023 = vpop.permute.xlu0 %7022
  %7024 = vrot.lane.b32.xlu0 %v6934, 127
  %v7025 = vpop.permute.xlu0 %7024
  %7026 = vrot.lane.b32.xlu0 %v6935, 127
  %v7027 = vpop.permute.xlu0 %7026
  %7028 = vrot.lane.b32.xlu0 %v6936, 127
  %v7029 = vpop.permute.xlu0 %7028
  %7030 = vrot.lane.b32.xlu0 %v6937, 127
  %v7031 = vpop.permute.xlu0 %7030
  %7032 = vrot.lane.b32.xlu0 %v6938, 127
  %v7033 = vpop.permute.xlu0 %7032
  %7034 = vrot.lane.b32.xlu0 %v6939, 127
  %v7035 = vpop.permute.xlu0 %7034
  %v7036 = vsel %vm500, %v6973, %v6975
  %v7037 = vsel %vm500, %v6977, %v6979
  %v7038 = vsel %vm500, %v6981, %v6983
  %v7039 = vsel %vm500, %v6985, %v6987
  %v7040 = vsel %vm500, %v6989, %v6991
  %v7041 = vsel %vm500, %v6993, %v6995
  %v7042 = vsel %vm500, %v6997, %v6999
  %v7043 = vsel %vm500, %v7001, %v7003
  %v7044 = vsel %vm500, %v7005, %v7007
  %v7045 = vsel %vm500, %v7009, %v7011
  %v7046 = vsel %vm500, %v7013, %v7015
  %v7047 = vsel %vm500, %v7017, %v7019
  %v7048 = vsel %vm500, %v7021, %v7023
  %v7049 = vsel %vm500, %v7025, %v7027
  %v7050 = vsel %vm500, %v7029, %v7031
  %v7051 = vsel %vm500, %v7033, %v7035
  %v7084 = vadd.f32 %v6762, %v7036
  %v7085 = vadd.f32 %v6763, %v6975
  %v7086 = vadd.f32 %v6764, %v7037
  %v7087 = vadd.f32 %v6765, %v6979
  %v7088 = vadd.f32 %v6766, %v7038
  %v7089 = vadd.f32 %v6767, %v6983
  %v7090 = vadd.f32 %v6768, %v7039
  %v7091 = vadd.f32 %v6769, %v6987
  %v7092 = vadd.f32 %v6770, %v7040
  %v7093 = vadd.f32 %v6771, %v6991
  %v7094 = vadd.f32 %v6772, %v7041
  %v7095 = vadd.f32 %v6773, %v6995
  %v7096 = vadd.f32 %v6774, %v7042
  %v7097 = vadd.f32 %v6775, %v6999
  %v7098 = vadd.f32 %v6776, %v7043
  %v7099 = vadd.f32 %v6777, %v7003
  %v7100 = vadd.f32 %v6778, %v7044
  %v7101 = vadd.f32 %v6779, %v7007
  %v7102 = vadd.f32 %v6780, %v7045
  %v7103 = vadd.f32 %v6781, %v7011
  %v7104 = vadd.f32 %v6782, %v7046
  %v7105 = vadd.f32 %v6783, %v7015
  %v7106 = vadd.f32 %v6784, %v7047
  %v7107 = vadd.f32 %v6785, %v7019
  %v7108 = vadd.f32 %v6786, %v7048
  %v7109 = vadd.f32 %v6787, %v7023
  %v7110 = vadd.f32 %v6788, %v7049
  %v7111 = vadd.f32 %v6789, %v7027
  %v7112 = vadd.f32 %v6790, %v7050
  %v7113 = vadd.f32 %v6791, %v7031
  %v7114 = vadd.f32 %v6792, %v7051
  %v7115 = vadd.f32 %v6793, %v7035
  %v7117 = vcombine.high %v64, %v64
  %v7119 = vunpack.c.l.s4 1966171168
  %v7120 = vunpack.c.0.s8 %v7119
  %v7121 = vlaneseq
  %v7122 = vshrl.u32 %v7121, 7
  %v7123 = vsub.s32 %v7120, %v7122
  %v7124 = vrot.slane %v64, %v7123
  %v7126 = vunpack.c.l.s4 1966171168
  %v7127 = vunpack.c.0.s8 %v7126
  %v7128 = vlaneseq
  %v7129 = vshrl.u32 %v7128, 7
  %v7130 = vsub.s32 %v7127, %v7129
  %v7131 = vrot.slane %v7117, %v7130
  %v7132 = vcombine.high %v7124, %v7124
  %v7133 = vcombine.high %v7131, %v7131
  %v7135 = vunpack.c.l.s4 1966171168
  %v7136 = vunpack.c.0.s8 %v7135
  %v7137 = vlaneseq
  %v7138 = vshrl.u32 %v7137, 7
  %v7139 = vsub.s32 %v7136, %v7138
  %v7140 = vrot.slane %v7124, %v7139
  %v7142 = vunpack.c.l.s4 1966171168
  %v7143 = vunpack.c.0.s8 %v7142
  %v7144 = vlaneseq
  %v7145 = vshrl.u32 %v7144, 7
  %v7146 = vsub.s32 %v7143, %v7145
  %v7147 = vrot.slane %v7131, %v7146
  %v7149 = vunpack.c.l.s4 1966171168
  %v7150 = vunpack.c.0.s8 %v7149
  %v7151 = vlaneseq
  %v7152 = vshrl.u32 %v7151, 7
  %v7153 = vsub.s32 %v7150, %v7152
  %v7154 = vrot.slane %v7132, %v7153
  %v7156 = vunpack.c.l.s4 1966171168
  %v7157 = vunpack.c.0.s8 %v7156
  %v7158 = vlaneseq
  %v7159 = vshrl.u32 %v7158, 7
  %v7160 = vsub.s32 %v7157, %v7159
  %v7161 = vrot.slane %v7133, %v7160
  %v7162 = vcombine.high %v7140, %v7140
  %v7163 = vcombine.high %v7147, %v7147
  %v7164 = vcombine.high %v7154, %v7154
  %v7165 = vcombine.high %v7161, %v7161
  %v7166 = vlaneseq
  %v7167 = vshrl.u32 %v7166, 7
  %v7168 = vsub.s32 0, %v7167
  %v7169 = vrot.slane %v7140, %v7168
  %v7170 = vlaneseq
  %v7171 = vshrl.u32 %v7170, 7
  %v7172 = vsub.s32 0, %v7171
  %v7173 = vrot.slane %v7154, %v7172
  %v7174 = vlaneseq
  %v7175 = vshrl.u32 %v7174, 7
  %v7176 = vsub.s32 0, %v7175
  %v7177 = vrot.slane %v7162, %v7176
  %v7178 = vlaneseq
  %v7179 = vshrl.u32 %v7178, 7
  %v7180 = vsub.s32 0, %v7179
  %v7181 = vrot.slane %v7164, %v7180
  %v7182 = vlaneseq
  %v7183 = vshrl.u32 %v7182, 7
  %v7184 = vsub.s32 0, %v7183
  %v7185 = vrot.slane %v7147, %v7184
  %v7186 = vlaneseq
  %v7187 = vshrl.u32 %v7186, 7
  %v7188 = vsub.s32 0, %v7187
  %v7189 = vrot.slane %v7161, %v7188
  %v7190 = vlaneseq
  %v7191 = vshrl.u32 %v7190, 7
  %v7192 = vsub.s32 0, %v7191
  %v7193 = vrot.slane %v7163, %v7192
  %v7194 = vlaneseq
  %v7195 = vshrl.u32 %v7194, 7
  %v7196 = vsub.s32 0, %v7195
  %v7197 = vrot.slane %v7165, %v7196
  %7198 = vset.pattern.permute.xlu0 0
  %7199 = vperm.xlu0 %7198, %v7169
  %v7200 = vpop.permute.xlu0 %7199
  %7202 = vset.pattern.permute.xlu0 0
  %7203 = vperm.xlu0 %7202, %v7173
  %v7204 = vpop.permute.xlu0 %7203
  %7206 = vset.pattern.permute.xlu0 0
  %7207 = vperm.xlu0 %7206, %v7177
  %v7208 = vpop.permute.xlu0 %7207
  %7210 = vset.pattern.permute.xlu0 0
  %7211 = vperm.xlu0 %7210, %v7181
  %v7212 = vpop.permute.xlu0 %7211
  %7214 = vset.pattern.permute.xlu0 0
  %7215 = vperm.xlu0 %7214, %v7185
  %v7216 = vpop.permute.xlu0 %7215
  %7218 = vset.pattern.permute.xlu0 0
  %7219 = vperm.xlu0 %7218, %v7189
  %v7220 = vpop.permute.xlu0 %7219
  %7222 = vset.pattern.permute.xlu0 0
  %7223 = vperm.xlu0 %7222, %v7193
  %v7224 = vpop.permute.xlu0 %7223
  %7226 = vset.pattern.permute.xlu0 0
  %7227 = vperm.xlu0 %7226, %v7197
  %v7228 = vpop.permute.xlu0 %7227
  %v7230 = vmul.f32 %v7200, %v32
  %v7231 = vmul.f32 %v7200, %v33
  %v7232 = vmul.f32 %v7200, %v34
  %v7233 = vmul.f32 %v7200, %v35
  %v7234 = vmul.f32 %v7204, %v32
  %v7235 = vmul.f32 %v7204, %v33
  %v7236 = vmul.f32 %v7204, %v34
  %v7237 = vmul.f32 %v7204, %v35
  %v7238 = vmul.f32 %v7208, %v32
  %v7239 = vmul.f32 %v7208, %v33
  %v7240 = vmul.f32 %v7208, %v34
  %v7241 = vmul.f32 %v7208, %v35
  %v7242 = vmul.f32 %v7212, %v32
  %v7243 = vmul.f32 %v7212, %v33
  %v7244 = vmul.f32 %v7212, %v34
  %v7245 = vmul.f32 %v7212, %v35
  %v7246 = vmul.f32 %v7216, %v32
  %v7247 = vmul.f32 %v7216, %v33
  %v7248 = vmul.f32 %v7216, %v34
  %v7249 = vmul.f32 %v7216, %v35
  %v7250 = vmul.f32 %v7220, %v32
  %v7251 = vmul.f32 %v7220, %v33
  %v7252 = vmul.f32 %v7220, %v34
  %v7253 = vmul.f32 %v7220, %v35
  %v7254 = vmul.f32 %v7224, %v32
  %v7255 = vmul.f32 %v7224, %v33
  %v7256 = vmul.f32 %v7224, %v34
  %v7257 = vmul.f32 %v7224, %v35
  %v7258 = vmul.f32 %v7228, %v32
  %v7259 = vmul.f32 %v7228, %v33
  %v7260 = vmul.f32 %v7228, %v34
  %v7261 = vmul.f32 %v7228, %v35
  %7294 = vrot.lane.b32.xlu0 %v7230, 126
  %v7295 = vpop.permute.xlu0 %7294
  %7296 = vrot.lane.b32.xlu0 %v7231, 126
  %v7297 = vpop.permute.xlu0 %7296
  %7298 = vrot.lane.b32.xlu0 %v7232, 126
  %v7299 = vpop.permute.xlu0 %7298
  %7300 = vrot.lane.b32.xlu0 %v7233, 126
  %v7301 = vpop.permute.xlu0 %7300
  %7302 = vrot.lane.b32.xlu0 %v7234, 126
  %v7303 = vpop.permute.xlu0 %7302
  %7304 = vrot.lane.b32.xlu0 %v7235, 126
  %v7305 = vpop.permute.xlu0 %7304
  %7306 = vrot.lane.b32.xlu0 %v7236, 126
  %v7307 = vpop.permute.xlu0 %7306
  %7308 = vrot.lane.b32.xlu0 %v7237, 126
  %v7309 = vpop.permute.xlu0 %7308
  %7310 = vrot.lane.b32.xlu0 %v7238, 126
  %v7311 = vpop.permute.xlu0 %7310
  %7312 = vrot.lane.b32.xlu0 %v7239, 126
  %v7313 = vpop.permute.xlu0 %7312
  %7314 = vrot.lane.b32.xlu0 %v7240, 126
  %v7315 = vpop.permute.xlu0 %7314
  %7316 = vrot.lane.b32.xlu0 %v7241, 126
  %v7317 = vpop.permute.xlu0 %7316
  %7318 = vrot.lane.b32.xlu0 %v7242, 126
  %v7319 = vpop.permute.xlu0 %7318
  %7320 = vrot.lane.b32.xlu0 %v7243, 126
  %v7321 = vpop.permute.xlu0 %7320
  %7322 = vrot.lane.b32.xlu0 %v7244, 126
  %v7323 = vpop.permute.xlu0 %7322
  %7324 = vrot.lane.b32.xlu0 %v7245, 126
  %v7325 = vpop.permute.xlu0 %7324
  %7326 = vrot.lane.b32.xlu0 %v7246, 126
  %v7327 = vpop.permute.xlu0 %7326
  %7328 = vrot.lane.b32.xlu0 %v7247, 126
  %v7329 = vpop.permute.xlu0 %7328
  %7330 = vrot.lane.b32.xlu0 %v7248, 126
  %v7331 = vpop.permute.xlu0 %7330
  %7332 = vrot.lane.b32.xlu0 %v7249, 126
  %v7333 = vpop.permute.xlu0 %7332
  %7334 = vrot.lane.b32.xlu0 %v7250, 126
  %v7335 = vpop.permute.xlu0 %7334
  %7336 = vrot.lane.b32.xlu0 %v7251, 126
  %v7337 = vpop.permute.xlu0 %7336
  %7338 = vrot.lane.b32.xlu0 %v7252, 126
  %v7339 = vpop.permute.xlu0 %7338
  %7340 = vrot.lane.b32.xlu0 %v7253, 126
  %v7341 = vpop.permute.xlu0 %7340
  %7342 = vrot.lane.b32.xlu0 %v7254, 126
  %v7343 = vpop.permute.xlu0 %7342
  %7344 = vrot.lane.b32.xlu0 %v7255, 126
  %v7345 = vpop.permute.xlu0 %7344
  %7346 = vrot.lane.b32.xlu0 %v7256, 126
  %v7347 = vpop.permute.xlu0 %7346
  %7348 = vrot.lane.b32.xlu0 %v7257, 126
  %v7349 = vpop.permute.xlu0 %7348
  %7350 = vrot.lane.b32.xlu0 %v7258, 126
  %v7351 = vpop.permute.xlu0 %7350
  %7352 = vrot.lane.b32.xlu0 %v7259, 126
  %v7353 = vpop.permute.xlu0 %7352
  %7354 = vrot.lane.b32.xlu0 %v7260, 126
  %v7355 = vpop.permute.xlu0 %7354
  %7356 = vrot.lane.b32.xlu0 %v7261, 126
  %v7357 = vpop.permute.xlu0 %7356
  %v7358 = vsel %vm823, %v7295, %v7297
  %v7359 = vsel %vm823, %v7299, %v7301
  %v7360 = vsel %vm823, %v7303, %v7305
  %v7361 = vsel %vm823, %v7307, %v7309
  %v7362 = vsel %vm823, %v7311, %v7313
  %v7363 = vsel %vm823, %v7315, %v7317
  %v7364 = vsel %vm823, %v7319, %v7321
  %v7365 = vsel %vm823, %v7323, %v7325
  %v7366 = vsel %vm823, %v7327, %v7329
  %v7367 = vsel %vm823, %v7331, %v7333
  %v7368 = vsel %vm823, %v7335, %v7337
  %v7369 = vsel %vm823, %v7339, %v7341
  %v7370 = vsel %vm823, %v7343, %v7345
  %v7371 = vsel %vm823, %v7347, %v7349
  %v7372 = vsel %vm823, %v7351, %v7353
  %v7373 = vsel %vm823, %v7355, %v7357
  %v7406 = vadd.f32 %v7084, %v7358
  %v7407 = vadd.f32 %v7085, %v7297
  %v7408 = vadd.f32 %v7086, %v7359
  %v7409 = vadd.f32 %v7087, %v7301
  %v7410 = vadd.f32 %v7088, %v7360
  %v7411 = vadd.f32 %v7089, %v7305
  %v7412 = vadd.f32 %v7090, %v7361
  %v7413 = vadd.f32 %v7091, %v7309
  %v7414 = vadd.f32 %v7092, %v7362
  %v7415 = vadd.f32 %v7093, %v7313
  %v7416 = vadd.f32 %v7094, %v7363
  %v7417 = vadd.f32 %v7095, %v7317
  %v7418 = vadd.f32 %v7096, %v7364
  %v7419 = vadd.f32 %v7097, %v7321
  %v7420 = vadd.f32 %v7098, %v7365
  %v7421 = vadd.f32 %v7099, %v7325
  %v7422 = vadd.f32 %v7100, %v7366
  %v7423 = vadd.f32 %v7101, %v7329
  %v7424 = vadd.f32 %v7102, %v7367
  %v7425 = vadd.f32 %v7103, %v7333
  %v7426 = vadd.f32 %v7104, %v7368
  %v7427 = vadd.f32 %v7105, %v7337
  %v7428 = vadd.f32 %v7106, %v7369
  %v7429 = vadd.f32 %v7107, %v7341
  %v7430 = vadd.f32 %v7108, %v7370
  %v7431 = vadd.f32 %v7109, %v7345
  %v7432 = vadd.f32 %v7110, %v7371
  %v7433 = vadd.f32 %v7111, %v7349
  %v7434 = vadd.f32 %v7112, %v7372
  %v7435 = vadd.f32 %v7113, %v7353
  %v7436 = vadd.f32 %v7114, %v7373
  %v7437 = vadd.f32 %v7115, %v7357
  %v7439 = vcombine.high %v65, %v65
  %v7441 = vunpack.c.l.s4 1966171168
  %v7442 = vunpack.c.0.s8 %v7441
  %v7443 = vlaneseq
  %v7444 = vshrl.u32 %v7443, 7
  %v7445 = vsub.s32 %v7442, %v7444
  %v7446 = vrot.slane %v65, %v7445
  %v7448 = vunpack.c.l.s4 1966171168
  %v7449 = vunpack.c.0.s8 %v7448
  %v7450 = vlaneseq
  %v7451 = vshrl.u32 %v7450, 7
  %v7452 = vsub.s32 %v7449, %v7451
  %v7453 = vrot.slane %v7439, %v7452
  %v7454 = vcombine.high %v7446, %v7446
  %v7455 = vcombine.high %v7453, %v7453
  %v7457 = vunpack.c.l.s4 1966171168
  %v7458 = vunpack.c.0.s8 %v7457
  %v7459 = vlaneseq
  %v7460 = vshrl.u32 %v7459, 7
  %v7461 = vsub.s32 %v7458, %v7460
  %v7462 = vrot.slane %v7446, %v7461
  %v7464 = vunpack.c.l.s4 1966171168
  %v7465 = vunpack.c.0.s8 %v7464
  %v7466 = vlaneseq
  %v7467 = vshrl.u32 %v7466, 7
  %v7468 = vsub.s32 %v7465, %v7467
  %v7469 = vrot.slane %v7453, %v7468
  %v7471 = vunpack.c.l.s4 1966171168
  %v7472 = vunpack.c.0.s8 %v7471
  %v7473 = vlaneseq
  %v7474 = vshrl.u32 %v7473, 7
  %v7475 = vsub.s32 %v7472, %v7474
  %v7476 = vrot.slane %v7454, %v7475
  %v7478 = vunpack.c.l.s4 1966171168
  %v7479 = vunpack.c.0.s8 %v7478
  %v7480 = vlaneseq
  %v7481 = vshrl.u32 %v7480, 7
  %v7482 = vsub.s32 %v7479, %v7481
  %v7483 = vrot.slane %v7455, %v7482
  %v7484 = vcombine.high %v7462, %v7462
  %v7485 = vcombine.high %v7469, %v7469
  %v7486 = vcombine.high %v7476, %v7476
  %v7487 = vcombine.high %v7483, %v7483
  %v7488 = vlaneseq
  %v7489 = vshrl.u32 %v7488, 7
  %v7490 = vsub.s32 0, %v7489
  %v7491 = vrot.slane %v7462, %v7490
  %v7492 = vlaneseq
  %v7493 = vshrl.u32 %v7492, 7
  %v7494 = vsub.s32 0, %v7493
  %v7495 = vrot.slane %v7476, %v7494
  %v7496 = vlaneseq
  %v7497 = vshrl.u32 %v7496, 7
  %v7498 = vsub.s32 0, %v7497
  %v7499 = vrot.slane %v7484, %v7498
  %v7500 = vlaneseq
  %v7501 = vshrl.u32 %v7500, 7
  %v7502 = vsub.s32 0, %v7501
  %v7503 = vrot.slane %v7486, %v7502
  %v7504 = vlaneseq
  %v7505 = vshrl.u32 %v7504, 7
  %v7506 = vsub.s32 0, %v7505
  %v7507 = vrot.slane %v7469, %v7506
  %v7508 = vlaneseq
  %v7509 = vshrl.u32 %v7508, 7
  %v7510 = vsub.s32 0, %v7509
  %v7511 = vrot.slane %v7483, %v7510
  %v7512 = vlaneseq
  %v7513 = vshrl.u32 %v7512, 7
  %v7514 = vsub.s32 0, %v7513
  %v7515 = vrot.slane %v7485, %v7514
  %v7516 = vlaneseq
  %v7517 = vshrl.u32 %v7516, 7
  %v7518 = vsub.s32 0, %v7517
  %v7519 = vrot.slane %v7487, %v7518
  %7520 = vset.pattern.permute.xlu0 0
  %7521 = vperm.xlu0 %7520, %v7491
  %v7522 = vpop.permute.xlu0 %7521
  %7524 = vset.pattern.permute.xlu0 0
  %7525 = vperm.xlu0 %7524, %v7495
  %v7526 = vpop.permute.xlu0 %7525
  %7528 = vset.pattern.permute.xlu0 0
  %7529 = vperm.xlu0 %7528, %v7499
  %v7530 = vpop.permute.xlu0 %7529
  %7532 = vset.pattern.permute.xlu0 0
  %7533 = vperm.xlu0 %7532, %v7503
  %v7534 = vpop.permute.xlu0 %7533
  %7536 = vset.pattern.permute.xlu0 0
  %7537 = vperm.xlu0 %7536, %v7507
  %v7538 = vpop.permute.xlu0 %7537
  %7540 = vset.pattern.permute.xlu0 0
  %7541 = vperm.xlu0 %7540, %v7511
  %v7542 = vpop.permute.xlu0 %7541
  %7544 = vset.pattern.permute.xlu0 0
  %7545 = vperm.xlu0 %7544, %v7515
  %v7546 = vpop.permute.xlu0 %7545
  %7548 = vset.pattern.permute.xlu0 0
  %7549 = vperm.xlu0 %7548, %v7519
  %v7550 = vpop.permute.xlu0 %7549
  %v7552 = vmul.f32 %v7522, %v32
  %v7553 = vmul.f32 %v7522, %v33
  %v7554 = vmul.f32 %v7522, %v34
  %v7555 = vmul.f32 %v7522, %v35
  %v7556 = vmul.f32 %v7522, %v36
  %v7557 = vmul.f32 %v7522, %v37
  %v7558 = vmul.f32 %v7526, %v32
  %v7559 = vmul.f32 %v7526, %v33
  %v7560 = vmul.f32 %v7526, %v34
  %v7561 = vmul.f32 %v7526, %v35
  %v7562 = vmul.f32 %v7526, %v36
  %v7563 = vmul.f32 %v7526, %v37
  %v7564 = vmul.f32 %v7530, %v32
  %v7565 = vmul.f32 %v7530, %v33
  %v7566 = vmul.f32 %v7530, %v34
  %v7567 = vmul.f32 %v7530, %v35
  %v7568 = vmul.f32 %v7530, %v36
  %v7569 = vmul.f32 %v7530, %v37
  %v7570 = vmul.f32 %v7534, %v32
  %v7571 = vmul.f32 %v7534, %v33
  %v7572 = vmul.f32 %v7534, %v34
  %v7573 = vmul.f32 %v7534, %v35
  %v7574 = vmul.f32 %v7534, %v36
  %v7575 = vmul.f32 %v7534, %v37
  %v7576 = vmul.f32 %v7538, %v32
  %v7577 = vmul.f32 %v7538, %v33
  %v7578 = vmul.f32 %v7538, %v34
  %v7579 = vmul.f32 %v7538, %v35
  %v7580 = vmul.f32 %v7538, %v36
  %v7581 = vmul.f32 %v7538, %v37
  %v7582 = vmul.f32 %v7542, %v32
  %v7583 = vmul.f32 %v7542, %v33
  %v7584 = vmul.f32 %v7542, %v34
  %v7585 = vmul.f32 %v7542, %v35
  %v7586 = vmul.f32 %v7542, %v36
  %v7587 = vmul.f32 %v7542, %v37
  %v7588 = vmul.f32 %v7546, %v32
  %v7589 = vmul.f32 %v7546, %v33
  %v7590 = vmul.f32 %v7546, %v34
  %v7591 = vmul.f32 %v7546, %v35
  %v7592 = vmul.f32 %v7546, %v36
  %v7593 = vmul.f32 %v7546, %v37
  %v7594 = vmul.f32 %v7550, %v32
  %v7595 = vmul.f32 %v7550, %v33
  %v7596 = vmul.f32 %v7550, %v34
  %v7597 = vmul.f32 %v7550, %v35
  %v7598 = vmul.f32 %v7550, %v36
  %v7599 = vmul.f32 %v7550, %v37
  %v7648 = vrot.slane %v7552, 1
  %v7649 = vrot.slane %v7554, 1
  %v7650 = vsel %vm1114, %v7648, %v7649
  %v7651 = vrot.slane %v7553, 1
  %v7652 = vrot.slane %v7555, 1
  %v7653 = vsel %vm1114, %v7651, %v7652
  %v7654 = vrot.slane %v7556, 1
  %v7655 = vsel %vm1114, %v7649, %v7654
  %v7656 = vrot.slane %v7557, 1
  %v7657 = vsel %vm1114, %v7652, %v7656
  %v7658 = vrot.slane %v7558, 1
  %v7659 = vrot.slane %v7560, 1
  %v7660 = vsel %vm1114, %v7658, %v7659
  %v7661 = vrot.slane %v7559, 1
  %v7662 = vrot.slane %v7561, 1
  %v7663 = vsel %vm1114, %v7661, %v7662
  %v7664 = vrot.slane %v7562, 1
  %v7665 = vsel %vm1114, %v7659, %v7664
  %v7666 = vrot.slane %v7563, 1
  %v7667 = vsel %vm1114, %v7662, %v7666
  %v7668 = vrot.slane %v7564, 1
  %v7669 = vrot.slane %v7566, 1
  %v7670 = vsel %vm1114, %v7668, %v7669
  %v7671 = vrot.slane %v7565, 1
  %v7672 = vrot.slane %v7567, 1
  %v7673 = vsel %vm1114, %v7671, %v7672
  %v7674 = vrot.slane %v7568, 1
  %v7675 = vsel %vm1114, %v7669, %v7674
  %v7676 = vrot.slane %v7569, 1
  %v7677 = vsel %vm1114, %v7672, %v7676
  %v7678 = vrot.slane %v7570, 1
  %v7679 = vrot.slane %v7572, 1
  %v7680 = vsel %vm1114, %v7678, %v7679
  %v7681 = vrot.slane %v7571, 1
  %v7682 = vrot.slane %v7573, 1
  %v7683 = vsel %vm1114, %v7681, %v7682
  %v7684 = vrot.slane %v7574, 1
  %v7685 = vsel %vm1114, %v7679, %v7684
  %v7686 = vrot.slane %v7575, 1
  %v7687 = vsel %vm1114, %v7682, %v7686
  %v7688 = vrot.slane %v7576, 1
  %v7689 = vrot.slane %v7578, 1
  %v7690 = vsel %vm1114, %v7688, %v7689
  %v7691 = vrot.slane %v7577, 1
  %v7692 = vrot.slane %v7579, 1
  %v7693 = vsel %vm1114, %v7691, %v7692
  %v7694 = vrot.slane %v7580, 1
  %v7695 = vsel %vm1114, %v7689, %v7694
  %v7696 = vrot.slane %v7581, 1
  %v7697 = vsel %vm1114, %v7692, %v7696
  %v7698 = vrot.slane %v7582, 1
  %v7699 = vrot.slane %v7584, 1
  %v7700 = vsel %vm1114, %v7698, %v7699
  %v7701 = vrot.slane %v7583, 1
  %v7702 = vrot.slane %v7585, 1
  %v7703 = vsel %vm1114, %v7701, %v7702
  %v7704 = vrot.slane %v7586, 1
  %v7705 = vsel %vm1114, %v7699, %v7704
  %v7706 = vrot.slane %v7587, 1
  %v7707 = vsel %vm1114, %v7702, %v7706
  %v7708 = vrot.slane %v7588, 1
  %v7709 = vrot.slane %v7590, 1
  %v7710 = vsel %vm1114, %v7708, %v7709
  %v7711 = vrot.slane %v7589, 1
  %v7712 = vrot.slane %v7591, 1
  %v7713 = vsel %vm1114, %v7711, %v7712
  %v7714 = vrot.slane %v7592, 1
  %v7715 = vsel %vm1114, %v7709, %v7714
  %v7716 = vrot.slane %v7593, 1
  %v7717 = vsel %vm1114, %v7712, %v7716
  %v7718 = vrot.slane %v7594, 1
  %v7719 = vrot.slane %v7596, 1
  %v7720 = vsel %vm1114, %v7718, %v7719
  %v7721 = vrot.slane %v7595, 1
  %v7722 = vrot.slane %v7597, 1
  %v7723 = vsel %vm1114, %v7721, %v7722
  %v7724 = vrot.slane %v7598, 1
  %v7725 = vsel %vm1114, %v7719, %v7724
  %v7726 = vrot.slane %v7599, 1
  %v7727 = vsel %vm1114, %v7722, %v7726
  %v7760 = vadd.f32 %v7406, %v7650
  %v7761 = vadd.f32 %v7407, %v7653
  %v7762 = vadd.f32 %v7408, %v7655
  %v7763 = vadd.f32 %v7409, %v7657
  %v7764 = vadd.f32 %v7410, %v7660
  %v7765 = vadd.f32 %v7411, %v7663
  %v7766 = vadd.f32 %v7412, %v7665
  %v7767 = vadd.f32 %v7413, %v7667
  %v7768 = vadd.f32 %v7414, %v7670
  %v7769 = vadd.f32 %v7415, %v7673
  %v7770 = vadd.f32 %v7416, %v7675
  %v7771 = vadd.f32 %v7417, %v7677
  %v7772 = vadd.f32 %v7418, %v7680
  %v7773 = vadd.f32 %v7419, %v7683
  %v7774 = vadd.f32 %v7420, %v7685
  %v7775 = vadd.f32 %v7421, %v7687
  %v7776 = vadd.f32 %v7422, %v7690
  %v7777 = vadd.f32 %v7423, %v7693
  %v7778 = vadd.f32 %v7424, %v7695
  %v7779 = vadd.f32 %v7425, %v7697
  %v7780 = vadd.f32 %v7426, %v7700
  %v7781 = vadd.f32 %v7427, %v7703
  %v7782 = vadd.f32 %v7428, %v7705
  %v7783 = vadd.f32 %v7429, %v7707
  %v7784 = vadd.f32 %v7430, %v7710
  %v7785 = vadd.f32 %v7431, %v7713
  %v7786 = vadd.f32 %v7432, %v7715
  %v7787 = vadd.f32 %v7433, %v7717
  %v7788 = vadd.f32 %v7434, %v7720
  %v7789 = vadd.f32 %v7435, %v7723
  %v7790 = vadd.f32 %v7436, %v7725
  %v7791 = vadd.f32 %v7437, %v7727
  %v7793 = vcombine.high %v66, %v66
  %v7795 = vunpack.c.l.s4 1966171168
  %v7796 = vunpack.c.0.s8 %v7795
  %v7797 = vlaneseq
  %v7798 = vshrl.u32 %v7797, 7
  %v7799 = vsub.s32 %v7796, %v7798
  %v7800 = vrot.slane %v66, %v7799
  %v7802 = vunpack.c.l.s4 1966171168
  %v7803 = vunpack.c.0.s8 %v7802
  %v7804 = vlaneseq
  %v7805 = vshrl.u32 %v7804, 7
  %v7806 = vsub.s32 %v7803, %v7805
  %v7807 = vrot.slane %v7793, %v7806
  %v7808 = vcombine.high %v7800, %v7800
  %v7809 = vcombine.high %v7807, %v7807
  %v7811 = vunpack.c.l.s4 1966171168
  %v7812 = vunpack.c.0.s8 %v7811
  %v7813 = vlaneseq
  %v7814 = vshrl.u32 %v7813, 7
  %v7815 = vsub.s32 %v7812, %v7814
  %v7816 = vrot.slane %v7800, %v7815
  %v7818 = vunpack.c.l.s4 1966171168
  %v7819 = vunpack.c.0.s8 %v7818
  %v7820 = vlaneseq
  %v7821 = vshrl.u32 %v7820, 7
  %v7822 = vsub.s32 %v7819, %v7821
  %v7823 = vrot.slane %v7807, %v7822
  %v7825 = vunpack.c.l.s4 1966171168
  %v7826 = vunpack.c.0.s8 %v7825
  %v7827 = vlaneseq
  %v7828 = vshrl.u32 %v7827, 7
  %v7829 = vsub.s32 %v7826, %v7828
  %v7830 = vrot.slane %v7808, %v7829
  %v7832 = vunpack.c.l.s4 1966171168
  %v7833 = vunpack.c.0.s8 %v7832
  %v7834 = vlaneseq
  %v7835 = vshrl.u32 %v7834, 7
  %v7836 = vsub.s32 %v7833, %v7835
  %v7837 = vrot.slane %v7809, %v7836
  %v7838 = vcombine.high %v7816, %v7816
  %v7839 = vcombine.high %v7823, %v7823
  %v7840 = vcombine.high %v7830, %v7830
  %v7841 = vcombine.high %v7837, %v7837
  %v7842 = vlaneseq
  %v7843 = vshrl.u32 %v7842, 7
  %v7844 = vsub.s32 0, %v7843
  %v7845 = vrot.slane %v7816, %v7844
  %v7846 = vlaneseq
  %v7847 = vshrl.u32 %v7846, 7
  %v7848 = vsub.s32 0, %v7847
  %v7849 = vrot.slane %v7830, %v7848
  %v7850 = vlaneseq
  %v7851 = vshrl.u32 %v7850, 7
  %v7852 = vsub.s32 0, %v7851
  %v7853 = vrot.slane %v7838, %v7852
  %v7854 = vlaneseq
  %v7855 = vshrl.u32 %v7854, 7
  %v7856 = vsub.s32 0, %v7855
  %v7857 = vrot.slane %v7840, %v7856
  %v7858 = vlaneseq
  %v7859 = vshrl.u32 %v7858, 7
  %v7860 = vsub.s32 0, %v7859
  %v7861 = vrot.slane %v7823, %v7860
  %v7862 = vlaneseq
  %v7863 = vshrl.u32 %v7862, 7
  %v7864 = vsub.s32 0, %v7863
  %v7865 = vrot.slane %v7837, %v7864
  %v7866 = vlaneseq
  %v7867 = vshrl.u32 %v7866, 7
  %v7868 = vsub.s32 0, %v7867
  %v7869 = vrot.slane %v7839, %v7868
  %v7870 = vlaneseq
  %v7871 = vshrl.u32 %v7870, 7
  %v7872 = vsub.s32 0, %v7871
  %v7873 = vrot.slane %v7841, %v7872
  %7874 = vset.pattern.permute.xlu0 0
  %7875 = vperm.xlu0 %7874, %v7845
  %v7876 = vpop.permute.xlu0 %7875
  %7878 = vset.pattern.permute.xlu0 0
  %7879 = vperm.xlu0 %7878, %v7849
  %v7880 = vpop.permute.xlu0 %7879
  %7882 = vset.pattern.permute.xlu0 0
  %7883 = vperm.xlu0 %7882, %v7853
  %v7884 = vpop.permute.xlu0 %7883
  %7886 = vset.pattern.permute.xlu0 0
  %7887 = vperm.xlu0 %7886, %v7857
  %v7888 = vpop.permute.xlu0 %7887
  %7890 = vset.pattern.permute.xlu0 0
  %7891 = vperm.xlu0 %7890, %v7861
  %v7892 = vpop.permute.xlu0 %7891
  %7894 = vset.pattern.permute.xlu0 0
  %7895 = vperm.xlu0 %7894, %v7865
  %v7896 = vpop.permute.xlu0 %7895
  %7898 = vset.pattern.permute.xlu0 0
  %7899 = vperm.xlu0 %7898, %v7869
  %v7900 = vpop.permute.xlu0 %7899
  %7902 = vset.pattern.permute.xlu0 0
  %7903 = vperm.xlu0 %7902, %v7873
  %v7904 = vpop.permute.xlu0 %7903
  %v7906 = vmul.f32 %v7876, %v32
  %v7907 = vmul.f32 %v7876, %v33
  %v7908 = vmul.f32 %v7876, %v34
  %v7909 = vmul.f32 %v7876, %v35
  %v7910 = vmul.f32 %v7876, %v36
  %v7911 = vmul.f32 %v7876, %v37
  %v7912 = vmul.f32 %v7880, %v32
  %v7913 = vmul.f32 %v7880, %v33
  %v7914 = vmul.f32 %v7880, %v34
  %v7915 = vmul.f32 %v7880, %v35
  %v7916 = vmul.f32 %v7880, %v36
  %v7917 = vmul.f32 %v7880, %v37
  %v7918 = vmul.f32 %v7884, %v32
  %v7919 = vmul.f32 %v7884, %v33
  %v7920 = vmul.f32 %v7884, %v34
  %v7921 = vmul.f32 %v7884, %v35
  %v7922 = vmul.f32 %v7884, %v36
  %v7923 = vmul.f32 %v7884, %v37
  %v7924 = vmul.f32 %v7888, %v32
  %v7925 = vmul.f32 %v7888, %v33
  %v7926 = vmul.f32 %v7888, %v34
  %v7927 = vmul.f32 %v7888, %v35
  %v7928 = vmul.f32 %v7888, %v36
  %v7929 = vmul.f32 %v7888, %v37
  %v7930 = vmul.f32 %v7892, %v32
  %v7931 = vmul.f32 %v7892, %v33
  %v7932 = vmul.f32 %v7892, %v34
  %v7933 = vmul.f32 %v7892, %v35
  %v7934 = vmul.f32 %v7892, %v36
  %v7935 = vmul.f32 %v7892, %v37
  %v7936 = vmul.f32 %v7896, %v32
  %v7937 = vmul.f32 %v7896, %v33
  %v7938 = vmul.f32 %v7896, %v34
  %v7939 = vmul.f32 %v7896, %v35
  %v7940 = vmul.f32 %v7896, %v36
  %v7941 = vmul.f32 %v7896, %v37
  %v7942 = vmul.f32 %v7900, %v32
  %v7943 = vmul.f32 %v7900, %v33
  %v7944 = vmul.f32 %v7900, %v34
  %v7945 = vmul.f32 %v7900, %v35
  %v7946 = vmul.f32 %v7900, %v36
  %v7947 = vmul.f32 %v7900, %v37
  %v7948 = vmul.f32 %v7904, %v32
  %v7949 = vmul.f32 %v7904, %v33
  %v7950 = vmul.f32 %v7904, %v34
  %v7951 = vmul.f32 %v7904, %v35
  %v7952 = vmul.f32 %v7904, %v36
  %v7953 = vmul.f32 %v7904, %v37
  %v8002 = vrot.slane %v7906, 1
  %v8003 = vrot.slane %v7908, 1
  %v8004 = vsel %vm1114, %v8002, %v8003
  %v8005 = vrot.slane %v7907, 1
  %v8006 = vrot.slane %v7909, 1
  %v8007 = vsel %vm1114, %v8005, %v8006
  %v8008 = vrot.slane %v7910, 1
  %v8009 = vsel %vm1114, %v8003, %v8008
  %v8010 = vrot.slane %v7911, 1
  %v8011 = vsel %vm1114, %v8006, %v8010
  %v8012 = vrot.slane %v7912, 1
  %v8013 = vrot.slane %v7914, 1
  %v8014 = vsel %vm1114, %v8012, %v8013
  %v8015 = vrot.slane %v7913, 1
  %v8016 = vrot.slane %v7915, 1
  %v8017 = vsel %vm1114, %v8015, %v8016
  %v8018 = vrot.slane %v7916, 1
  %v8019 = vsel %vm1114, %v8013, %v8018
  %v8020 = vrot.slane %v7917, 1
  %v8021 = vsel %vm1114, %v8016, %v8020
  %v8022 = vrot.slane %v7918, 1
  %v8023 = vrot.slane %v7920, 1
  %v8024 = vsel %vm1114, %v8022, %v8023
  %v8025 = vrot.slane %v7919, 1
  %v8026 = vrot.slane %v7921, 1
  %v8027 = vsel %vm1114, %v8025, %v8026
  %v8028 = vrot.slane %v7922, 1
  %v8029 = vsel %vm1114, %v8023, %v8028
  %v8030 = vrot.slane %v7923, 1
  %v8031 = vsel %vm1114, %v8026, %v8030
  %v8032 = vrot.slane %v7924, 1
  %v8033 = vrot.slane %v7926, 1
  %v8034 = vsel %vm1114, %v8032, %v8033
  %v8035 = vrot.slane %v7925, 1
  %v8036 = vrot.slane %v7927, 1
  %v8037 = vsel %vm1114, %v8035, %v8036
  %v8038 = vrot.slane %v7928, 1
  %v8039 = vsel %vm1114, %v8033, %v8038
  %v8040 = vrot.slane %v7929, 1
  %v8041 = vsel %vm1114, %v8036, %v8040
  %v8042 = vrot.slane %v7930, 1
  %v8043 = vrot.slane %v7932, 1
  %v8044 = vsel %vm1114, %v8042, %v8043
  %v8045 = vrot.slane %v7931, 1
  %v8046 = vrot.slane %v7933, 1
  %v8047 = vsel %vm1114, %v8045, %v8046
  %v8048 = vrot.slane %v7934, 1
  %v8049 = vsel %vm1114, %v8043, %v8048
  %v8050 = vrot.slane %v7935, 1
  %v8051 = vsel %vm1114, %v8046, %v8050
  %v8052 = vrot.slane %v7936, 1
  %v8053 = vrot.slane %v7938, 1
  %v8054 = vsel %vm1114, %v8052, %v8053
  %v8055 = vrot.slane %v7937, 1
  %v8056 = vrot.slane %v7939, 1
  %v8057 = vsel %vm1114, %v8055, %v8056
  %v8058 = vrot.slane %v7940, 1
  %v8059 = vsel %vm1114, %v8053, %v8058
  %v8060 = vrot.slane %v7941, 1
  %v8061 = vsel %vm1114, %v8056, %v8060
  %v8062 = vrot.slane %v7942, 1
  %v8063 = vrot.slane %v7944, 1
  %v8064 = vsel %vm1114, %v8062, %v8063
  %v8065 = vrot.slane %v7943, 1
  %v8066 = vrot.slane %v7945, 1
  %v8067 = vsel %vm1114, %v8065, %v8066
  %v8068 = vrot.slane %v7946, 1
  %v8069 = vsel %vm1114, %v8063, %v8068
  %v8070 = vrot.slane %v7947, 1
  %v8071 = vsel %vm1114, %v8066, %v8070
  %v8072 = vrot.slane %v7948, 1
  %v8073 = vrot.slane %v7950, 1
  %v8074 = vsel %vm1114, %v8072, %v8073
  %v8075 = vrot.slane %v7949, 1
  %v8076 = vrot.slane %v7951, 1
  %v8077 = vsel %vm1114, %v8075, %v8076
  %v8078 = vrot.slane %v7952, 1
  %v8079 = vsel %vm1114, %v8073, %v8078
  %v8080 = vrot.slane %v7953, 1
  %v8081 = vsel %vm1114, %v8076, %v8080
  %8082 = vrot.lane.b32.xlu0 %v8004, 127
  %v8083 = vpop.permute.xlu0 %8082
  %8084 = vrot.lane.b32.xlu0 %v8007, 127
  %v8085 = vpop.permute.xlu0 %8084
  %8086 = vrot.lane.b32.xlu0 %v8009, 127
  %v8087 = vpop.permute.xlu0 %8086
  %8088 = vrot.lane.b32.xlu0 %v8011, 127
  %v8089 = vpop.permute.xlu0 %8088
  %8090 = vrot.lane.b32.xlu0 %v8014, 127
  %v8091 = vpop.permute.xlu0 %8090
  %8092 = vrot.lane.b32.xlu0 %v8017, 127
  %v8093 = vpop.permute.xlu0 %8092
  %8094 = vrot.lane.b32.xlu0 %v8019, 127
  %v8095 = vpop.permute.xlu0 %8094
  %8096 = vrot.lane.b32.xlu0 %v8021, 127
  %v8097 = vpop.permute.xlu0 %8096
  %8098 = vrot.lane.b32.xlu0 %v8024, 127
  %v8099 = vpop.permute.xlu0 %8098
  %8100 = vrot.lane.b32.xlu0 %v8027, 127
  %v8101 = vpop.permute.xlu0 %8100
  %8102 = vrot.lane.b32.xlu0 %v8029, 127
  %v8103 = vpop.permute.xlu0 %8102
  %8104 = vrot.lane.b32.xlu0 %v8031, 127
  %v8105 = vpop.permute.xlu0 %8104
  %8106 = vrot.lane.b32.xlu0 %v8034, 127
  %v8107 = vpop.permute.xlu0 %8106
  %8108 = vrot.lane.b32.xlu0 %v8037, 127
  %v8109 = vpop.permute.xlu0 %8108
  %8110 = vrot.lane.b32.xlu0 %v8039, 127
  %v8111 = vpop.permute.xlu0 %8110
  %8112 = vrot.lane.b32.xlu0 %v8041, 127
  %v8113 = vpop.permute.xlu0 %8112
  %8114 = vrot.lane.b32.xlu0 %v8044, 127
  %v8115 = vpop.permute.xlu0 %8114
  %8116 = vrot.lane.b32.xlu0 %v8047, 127
  %v8117 = vpop.permute.xlu0 %8116
  %8118 = vrot.lane.b32.xlu0 %v8049, 127
  %v8119 = vpop.permute.xlu0 %8118
  %8120 = vrot.lane.b32.xlu0 %v8051, 127
  %v8121 = vpop.permute.xlu0 %8120
  %8122 = vrot.lane.b32.xlu0 %v8054, 127
  %v8123 = vpop.permute.xlu0 %8122
  %8124 = vrot.lane.b32.xlu0 %v8057, 127
  %v8125 = vpop.permute.xlu0 %8124
  %8126 = vrot.lane.b32.xlu0 %v8059, 127
  %v8127 = vpop.permute.xlu0 %8126
  %8128 = vrot.lane.b32.xlu0 %v8061, 127
  %v8129 = vpop.permute.xlu0 %8128
  %8130 = vrot.lane.b32.xlu0 %v8064, 127
  %v8131 = vpop.permute.xlu0 %8130
  %8132 = vrot.lane.b32.xlu0 %v8067, 127
  %v8133 = vpop.permute.xlu0 %8132
  %8134 = vrot.lane.b32.xlu0 %v8069, 127
  %v8135 = vpop.permute.xlu0 %8134
  %8136 = vrot.lane.b32.xlu0 %v8071, 127
  %v8137 = vpop.permute.xlu0 %8136
  %8138 = vrot.lane.b32.xlu0 %v8074, 127
  %v8139 = vpop.permute.xlu0 %8138
  %8140 = vrot.lane.b32.xlu0 %v8077, 127
  %v8141 = vpop.permute.xlu0 %8140
  %8142 = vrot.lane.b32.xlu0 %v8079, 127
  %v8143 = vpop.permute.xlu0 %8142
  %8144 = vrot.lane.b32.xlu0 %v8081, 127
  %v8145 = vpop.permute.xlu0 %8144
  %v8146 = vsel %vm500, %v8083, %v8085
  %v8147 = vsel %vm500, %v8087, %v8089
  %v8148 = vsel %vm500, %v8091, %v8093
  %v8149 = vsel %vm500, %v8095, %v8097
  %v8150 = vsel %vm500, %v8099, %v8101
  %v8151 = vsel %vm500, %v8103, %v8105
  %v8152 = vsel %vm500, %v8107, %v8109
  %v8153 = vsel %vm500, %v8111, %v8113
  %v8154 = vsel %vm500, %v8115, %v8117
  %v8155 = vsel %vm500, %v8119, %v8121
  %v8156 = vsel %vm500, %v8123, %v8125
  %v8157 = vsel %vm500, %v8127, %v8129
  %v8158 = vsel %vm500, %v8131, %v8133
  %v8159 = vsel %vm500, %v8135, %v8137
  %v8160 = vsel %vm500, %v8139, %v8141
  %v8161 = vsel %vm500, %v8143, %v8145
  %v8194 = vadd.f32 %v7760, %v8146
  %v8195 = vadd.f32 %v7761, %v8085
  %v8196 = vadd.f32 %v7762, %v8147
  %v8197 = vadd.f32 %v7763, %v8089
  %v8198 = vadd.f32 %v7764, %v8148
  %v8199 = vadd.f32 %v7765, %v8093
  %v8200 = vadd.f32 %v7766, %v8149
  %v8201 = vadd.f32 %v7767, %v8097
  %v8202 = vadd.f32 %v7768, %v8150
  %v8203 = vadd.f32 %v7769, %v8101
  %v8204 = vadd.f32 %v7770, %v8151
  %v8205 = vadd.f32 %v7771, %v8105
  %v8206 = vadd.f32 %v7772, %v8152
  %v8207 = vadd.f32 %v7773, %v8109
  %v8208 = vadd.f32 %v7774, %v8153
  %v8209 = vadd.f32 %v7775, %v8113
  %v8210 = vadd.f32 %v7776, %v8154
  %v8211 = vadd.f32 %v7777, %v8117
  %v8212 = vadd.f32 %v7778, %v8155
  %v8213 = vadd.f32 %v7779, %v8121
  %v8214 = vadd.f32 %v7780, %v8156
  %v8215 = vadd.f32 %v7781, %v8125
  %v8216 = vadd.f32 %v7782, %v8157
  %v8217 = vadd.f32 %v7783, %v8129
  %v8218 = vadd.f32 %v7784, %v8158
  %v8219 = vadd.f32 %v7785, %v8133
  %v8220 = vadd.f32 %v7786, %v8159
  %v8221 = vadd.f32 %v7787, %v8137
  %v8222 = vadd.f32 %v7788, %v8160
  %v8223 = vadd.f32 %v7789, %v8141
  %v8224 = vadd.f32 %v7790, %v8161
  %v8225 = vadd.f32 %v7791, %v8145
  %v8227 = vcombine.high %v67, %v67
  %v8229 = vunpack.c.l.s4 1966171168
  %v8230 = vunpack.c.0.s8 %v8229
  %v8231 = vlaneseq
  %v8232 = vshrl.u32 %v8231, 7
  %v8233 = vsub.s32 %v8230, %v8232
  %v8234 = vrot.slane %v67, %v8233
  %v8236 = vunpack.c.l.s4 1966171168
  %v8237 = vunpack.c.0.s8 %v8236
  %v8238 = vlaneseq
  %v8239 = vshrl.u32 %v8238, 7
  %v8240 = vsub.s32 %v8237, %v8239
  %v8241 = vrot.slane %v8227, %v8240
  %v8242 = vcombine.high %v8234, %v8234
  %v8243 = vcombine.high %v8241, %v8241
  %v8245 = vunpack.c.l.s4 1966171168
  %v8246 = vunpack.c.0.s8 %v8245
  %v8247 = vlaneseq
  %v8248 = vshrl.u32 %v8247, 7
  %v8249 = vsub.s32 %v8246, %v8248
  %v8250 = vrot.slane %v8234, %v8249
  %v8252 = vunpack.c.l.s4 1966171168
  %v8253 = vunpack.c.0.s8 %v8252
  %v8254 = vlaneseq
  %v8255 = vshrl.u32 %v8254, 7
  %v8256 = vsub.s32 %v8253, %v8255
  %v8257 = vrot.slane %v8241, %v8256
  %v8259 = vunpack.c.l.s4 1966171168
  %v8260 = vunpack.c.0.s8 %v8259
  %v8261 = vlaneseq
  %v8262 = vshrl.u32 %v8261, 7
  %v8263 = vsub.s32 %v8260, %v8262
  %v8264 = vrot.slane %v8242, %v8263
  %v8266 = vunpack.c.l.s4 1966171168
  %v8267 = vunpack.c.0.s8 %v8266
  %v8268 = vlaneseq
  %v8269 = vshrl.u32 %v8268, 7
  %v8270 = vsub.s32 %v8267, %v8269
  %v8271 = vrot.slane %v8243, %v8270
  %v8272 = vcombine.high %v8250, %v8250
  %v8273 = vcombine.high %v8257, %v8257
  %v8274 = vcombine.high %v8264, %v8264
  %v8275 = vcombine.high %v8271, %v8271
  %v8276 = vlaneseq
  %v8277 = vshrl.u32 %v8276, 7
  %v8278 = vsub.s32 0, %v8277
  %v8279 = vrot.slane %v8250, %v8278
  %v8280 = vlaneseq
  %v8281 = vshrl.u32 %v8280, 7
  %v8282 = vsub.s32 0, %v8281
  %v8283 = vrot.slane %v8264, %v8282
  %v8284 = vlaneseq
  %v8285 = vshrl.u32 %v8284, 7
  %v8286 = vsub.s32 0, %v8285
  %v8287 = vrot.slane %v8272, %v8286
  %v8288 = vlaneseq
  %v8289 = vshrl.u32 %v8288, 7
  %v8290 = vsub.s32 0, %v8289
  %v8291 = vrot.slane %v8274, %v8290
  %v8292 = vlaneseq
  %v8293 = vshrl.u32 %v8292, 7
  %v8294 = vsub.s32 0, %v8293
  %v8295 = vrot.slane %v8257, %v8294
  %v8296 = vlaneseq
  %v8297 = vshrl.u32 %v8296, 7
  %v8298 = vsub.s32 0, %v8297
  %v8299 = vrot.slane %v8271, %v8298
  %v8300 = vlaneseq
  %v8301 = vshrl.u32 %v8300, 7
  %v8302 = vsub.s32 0, %v8301
  %v8303 = vrot.slane %v8273, %v8302
  %v8304 = vlaneseq
  %v8305 = vshrl.u32 %v8304, 7
  %v8306 = vsub.s32 0, %v8305
  %v8307 = vrot.slane %v8275, %v8306
  %8308 = vset.pattern.permute.xlu0 0
  %8309 = vperm.xlu0 %8308, %v8279
  %v8310 = vpop.permute.xlu0 %8309
  %8312 = vset.pattern.permute.xlu0 0
  %8313 = vperm.xlu0 %8312, %v8283
  %v8314 = vpop.permute.xlu0 %8313
  %8316 = vset.pattern.permute.xlu0 0
  %8317 = vperm.xlu0 %8316, %v8287
  %v8318 = vpop.permute.xlu0 %8317
  %8320 = vset.pattern.permute.xlu0 0
  %8321 = vperm.xlu0 %8320, %v8291
  %v8322 = vpop.permute.xlu0 %8321
  %8324 = vset.pattern.permute.xlu0 0
  %8325 = vperm.xlu0 %8324, %v8295
  %v8326 = vpop.permute.xlu0 %8325
  %8328 = vset.pattern.permute.xlu0 0
  %8329 = vperm.xlu0 %8328, %v8299
  %v8330 = vpop.permute.xlu0 %8329
  %8332 = vset.pattern.permute.xlu0 0
  %8333 = vperm.xlu0 %8332, %v8303
  %v8334 = vpop.permute.xlu0 %8333
  %8336 = vset.pattern.permute.xlu0 0
  %8337 = vperm.xlu0 %8336, %v8307
  %v8338 = vpop.permute.xlu0 %8337
  %v8340 = vmul.f32 %v8310, %v32
  %v8341 = vmul.f32 %v8310, %v33
  %v8342 = vmul.f32 %v8310, %v34
  %v8343 = vmul.f32 %v8310, %v35
  %v8344 = vmul.f32 %v8310, %v36
  %v8345 = vmul.f32 %v8310, %v37
  %v8346 = vmul.f32 %v8314, %v32
  %v8347 = vmul.f32 %v8314, %v33
  %v8348 = vmul.f32 %v8314, %v34
  %v8349 = vmul.f32 %v8314, %v35
  %v8350 = vmul.f32 %v8314, %v36
  %v8351 = vmul.f32 %v8314, %v37
  %v8352 = vmul.f32 %v8318, %v32
  %v8353 = vmul.f32 %v8318, %v33
  %v8354 = vmul.f32 %v8318, %v34
  %v8355 = vmul.f32 %v8318, %v35
  %v8356 = vmul.f32 %v8318, %v36
  %v8357 = vmul.f32 %v8318, %v37
  %v8358 = vmul.f32 %v8322, %v32
  %v8359 = vmul.f32 %v8322, %v33
  %v8360 = vmul.f32 %v8322, %v34
  %v8361 = vmul.f32 %v8322, %v35
  %v8362 = vmul.f32 %v8322, %v36
  %v8363 = vmul.f32 %v8322, %v37
  %v8364 = vmul.f32 %v8326, %v32
  %v8365 = vmul.f32 %v8326, %v33
  %v8366 = vmul.f32 %v8326, %v34
  %v8367 = vmul.f32 %v8326, %v35
  %v8368 = vmul.f32 %v8326, %v36
  %v8369 = vmul.f32 %v8326, %v37
  %v8370 = vmul.f32 %v8330, %v32
  %v8371 = vmul.f32 %v8330, %v33
  %v8372 = vmul.f32 %v8330, %v34
  %v8373 = vmul.f32 %v8330, %v35
  %v8374 = vmul.f32 %v8330, %v36
  %v8375 = vmul.f32 %v8330, %v37
  %v8376 = vmul.f32 %v8334, %v32
  %v8377 = vmul.f32 %v8334, %v33
  %v8378 = vmul.f32 %v8334, %v34
  %v8379 = vmul.f32 %v8334, %v35
  %v8380 = vmul.f32 %v8334, %v36
  %v8381 = vmul.f32 %v8334, %v37
  %v8382 = vmul.f32 %v8338, %v32
  %v8383 = vmul.f32 %v8338, %v33
  %v8384 = vmul.f32 %v8338, %v34
  %v8385 = vmul.f32 %v8338, %v35
  %v8386 = vmul.f32 %v8338, %v36
  %v8387 = vmul.f32 %v8338, %v37
  %v8436 = vrot.slane %v8340, 1
  %v8437 = vrot.slane %v8342, 1
  %v8438 = vsel %vm1114, %v8436, %v8437
  %v8439 = vrot.slane %v8341, 1
  %v8440 = vrot.slane %v8343, 1
  %v8441 = vsel %vm1114, %v8439, %v8440
  %v8442 = vrot.slane %v8344, 1
  %v8443 = vsel %vm1114, %v8437, %v8442
  %v8444 = vrot.slane %v8345, 1
  %v8445 = vsel %vm1114, %v8440, %v8444
  %v8446 = vrot.slane %v8346, 1
  %v8447 = vrot.slane %v8348, 1
  %v8448 = vsel %vm1114, %v8446, %v8447
  %v8449 = vrot.slane %v8347, 1
  %v8450 = vrot.slane %v8349, 1
  %v8451 = vsel %vm1114, %v8449, %v8450
  %v8452 = vrot.slane %v8350, 1
  %v8453 = vsel %vm1114, %v8447, %v8452
  %v8454 = vrot.slane %v8351, 1
  %v8455 = vsel %vm1114, %v8450, %v8454
  %v8456 = vrot.slane %v8352, 1
  %v8457 = vrot.slane %v8354, 1
  %v8458 = vsel %vm1114, %v8456, %v8457
  %v8459 = vrot.slane %v8353, 1
  %v8460 = vrot.slane %v8355, 1
  %v8461 = vsel %vm1114, %v8459, %v8460
  %v8462 = vrot.slane %v8356, 1
  %v8463 = vsel %vm1114, %v8457, %v8462
  %v8464 = vrot.slane %v8357, 1
  %v8465 = vsel %vm1114, %v8460, %v8464
  %v8466 = vrot.slane %v8358, 1
  %v8467 = vrot.slane %v8360, 1
  %v8468 = vsel %vm1114, %v8466, %v8467
  %v8469 = vrot.slane %v8359, 1
  %v8470 = vrot.slane %v8361, 1
  %v8471 = vsel %vm1114, %v8469, %v8470
  %v8472 = vrot.slane %v8362, 1
  %v8473 = vsel %vm1114, %v8467, %v8472
  %v8474 = vrot.slane %v8363, 1
  %v8475 = vsel %vm1114, %v8470, %v8474
  %v8476 = vrot.slane %v8364, 1
  %v8477 = vrot.slane %v8366, 1
  %v8478 = vsel %vm1114, %v8476, %v8477
  %v8479 = vrot.slane %v8365, 1
  %v8480 = vrot.slane %v8367, 1
  %v8481 = vsel %vm1114, %v8479, %v8480
  %v8482 = vrot.slane %v8368, 1
  %v8483 = vsel %vm1114, %v8477, %v8482
  %v8484 = vrot.slane %v8369, 1
  %v8485 = vsel %vm1114, %v8480, %v8484
  %v8486 = vrot.slane %v8370, 1
  %v8487 = vrot.slane %v8372, 1
  %v8488 = vsel %vm1114, %v8486, %v8487
  %v8489 = vrot.slane %v8371, 1
  %v8490 = vrot.slane %v8373, 1
  %v8491 = vsel %vm1114, %v8489, %v8490
  %v8492 = vrot.slane %v8374, 1
  %v8493 = vsel %vm1114, %v8487, %v8492
  %v8494 = vrot.slane %v8375, 1
  %v8495 = vsel %vm1114, %v8490, %v8494
  %v8496 = vrot.slane %v8376, 1
  %v8497 = vrot.slane %v8378, 1
  %v8498 = vsel %vm1114, %v8496, %v8497
  %v8499 = vrot.slane %v8377, 1
  %v8500 = vrot.slane %v8379, 1
  %v8501 = vsel %vm1114, %v8499, %v8500
  %v8502 = vrot.slane %v8380, 1
  %v8503 = vsel %vm1114, %v8497, %v8502
  %v8504 = vrot.slane %v8381, 1
  %v8505 = vsel %vm1114, %v8500, %v8504
  %v8506 = vrot.slane %v8382, 1
  %v8507 = vrot.slane %v8384, 1
  %v8508 = vsel %vm1114, %v8506, %v8507
  %v8509 = vrot.slane %v8383, 1
  %v8510 = vrot.slane %v8385, 1
  %v8511 = vsel %vm1114, %v8509, %v8510
  %v8512 = vrot.slane %v8386, 1
  %v8513 = vsel %vm1114, %v8507, %v8512
  %v8514 = vrot.slane %v8387, 1
  %v8515 = vsel %vm1114, %v8510, %v8514
  %8516 = vrot.lane.b32.xlu0 %v8438, 126
  %v8517 = vpop.permute.xlu0 %8516
  %8518 = vrot.lane.b32.xlu0 %v8441, 126
  %v8519 = vpop.permute.xlu0 %8518
  %8520 = vrot.lane.b32.xlu0 %v8443, 126
  %v8521 = vpop.permute.xlu0 %8520
  %8522 = vrot.lane.b32.xlu0 %v8445, 126
  %v8523 = vpop.permute.xlu0 %8522
  %8524 = vrot.lane.b32.xlu0 %v8448, 126
  %v8525 = vpop.permute.xlu0 %8524
  %8526 = vrot.lane.b32.xlu0 %v8451, 126
  %v8527 = vpop.permute.xlu0 %8526
  %8528 = vrot.lane.b32.xlu0 %v8453, 126
  %v8529 = vpop.permute.xlu0 %8528
  %8530 = vrot.lane.b32.xlu0 %v8455, 126
  %v8531 = vpop.permute.xlu0 %8530
  %8532 = vrot.lane.b32.xlu0 %v8458, 126
  %v8533 = vpop.permute.xlu0 %8532
  %8534 = vrot.lane.b32.xlu0 %v8461, 126
  %v8535 = vpop.permute.xlu0 %8534
  %8536 = vrot.lane.b32.xlu0 %v8463, 126
  %v8537 = vpop.permute.xlu0 %8536
  %8538 = vrot.lane.b32.xlu0 %v8465, 126
  %v8539 = vpop.permute.xlu0 %8538
  %8540 = vrot.lane.b32.xlu0 %v8468, 126
  %v8541 = vpop.permute.xlu0 %8540
  %8542 = vrot.lane.b32.xlu0 %v8471, 126
  %v8543 = vpop.permute.xlu0 %8542
  %8544 = vrot.lane.b32.xlu0 %v8473, 126
  %v8545 = vpop.permute.xlu0 %8544
  %8546 = vrot.lane.b32.xlu0 %v8475, 126
  %v8547 = vpop.permute.xlu0 %8546
  %8548 = vrot.lane.b32.xlu0 %v8478, 126
  %v8549 = vpop.permute.xlu0 %8548
  %8550 = vrot.lane.b32.xlu0 %v8481, 126
  %v8551 = vpop.permute.xlu0 %8550
  %8552 = vrot.lane.b32.xlu0 %v8483, 126
  %v8553 = vpop.permute.xlu0 %8552
  %8554 = vrot.lane.b32.xlu0 %v8485, 126
  %v8555 = vpop.permute.xlu0 %8554
  %8556 = vrot.lane.b32.xlu0 %v8488, 126
  %v8557 = vpop.permute.xlu0 %8556
  %8558 = vrot.lane.b32.xlu0 %v8491, 126
  %v8559 = vpop.permute.xlu0 %8558
  %8560 = vrot.lane.b32.xlu0 %v8493, 126
  %v8561 = vpop.permute.xlu0 %8560
  %8562 = vrot.lane.b32.xlu0 %v8495, 126
  %v8563 = vpop.permute.xlu0 %8562
  %8564 = vrot.lane.b32.xlu0 %v8498, 126
  %v8565 = vpop.permute.xlu0 %8564
  %8566 = vrot.lane.b32.xlu0 %v8501, 126
  %v8567 = vpop.permute.xlu0 %8566
  %8568 = vrot.lane.b32.xlu0 %v8503, 126
  %v8569 = vpop.permute.xlu0 %8568
  %8570 = vrot.lane.b32.xlu0 %v8505, 126
  %v8571 = vpop.permute.xlu0 %8570
  %8572 = vrot.lane.b32.xlu0 %v8508, 126
  %v8573 = vpop.permute.xlu0 %8572
  %8574 = vrot.lane.b32.xlu0 %v8511, 126
  %v8575 = vpop.permute.xlu0 %8574
  %8576 = vrot.lane.b32.xlu0 %v8513, 126
  %v8577 = vpop.permute.xlu0 %8576
  %8578 = vrot.lane.b32.xlu0 %v8515, 126
  %v8579 = vpop.permute.xlu0 %8578
  %v8580 = vsel %vm823, %v8517, %v8519
  %v8581 = vsel %vm823, %v8521, %v8523
  %v8582 = vsel %vm823, %v8525, %v8527
  %v8583 = vsel %vm823, %v8529, %v8531
  %v8584 = vsel %vm823, %v8533, %v8535
  %v8585 = vsel %vm823, %v8537, %v8539
  %v8586 = vsel %vm823, %v8541, %v8543
  %v8587 = vsel %vm823, %v8545, %v8547
  %v8588 = vsel %vm823, %v8549, %v8551
  %v8589 = vsel %vm823, %v8553, %v8555
  %v8590 = vsel %vm823, %v8557, %v8559
  %v8591 = vsel %vm823, %v8561, %v8563
  %v8592 = vsel %vm823, %v8565, %v8567
  %v8593 = vsel %vm823, %v8569, %v8571
  %v8594 = vsel %vm823, %v8573, %v8575
  %v8595 = vsel %vm823, %v8577, %v8579
  %v8628 = vadd.f32 %v8194, %v8580
  %v8629 = vadd.f32 %v8195, %v8519
  %v8630 = vadd.f32 %v8196, %v8581
  %v8631 = vadd.f32 %v8197, %v8523
  %v8632 = vadd.f32 %v8198, %v8582
  %v8633 = vadd.f32 %v8199, %v8527
  %v8634 = vadd.f32 %v8200, %v8583
  %v8635 = vadd.f32 %v8201, %v8531
  %v8636 = vadd.f32 %v8202, %v8584
  %v8637 = vadd.f32 %v8203, %v8535
  %v8638 = vadd.f32 %v8204, %v8585
  %v8639 = vadd.f32 %v8205, %v8539
  %v8640 = vadd.f32 %v8206, %v8586
  %v8641 = vadd.f32 %v8207, %v8543
  %v8642 = vadd.f32 %v8208, %v8587
  %v8643 = vadd.f32 %v8209, %v8547
  %v8644 = vadd.f32 %v8210, %v8588
  %v8645 = vadd.f32 %v8211, %v8551
  %v8646 = vadd.f32 %v8212, %v8589
  %v8647 = vadd.f32 %v8213, %v8555
  %v8648 = vadd.f32 %v8214, %v8590
  %v8649 = vadd.f32 %v8215, %v8559
  %v8650 = vadd.f32 %v8216, %v8591
  %v8651 = vadd.f32 %v8217, %v8563
  %v8652 = vadd.f32 %v8218, %v8592
  %v8653 = vadd.f32 %v8219, %v8567
  %v8654 = vadd.f32 %v8220, %v8593
  %v8655 = vadd.f32 %v8221, %v8571
  %v8656 = vadd.f32 %v8222, %v8594
  %v8657 = vadd.f32 %v8223, %v8575
  %v8658 = vadd.f32 %v8224, %v8595
  %v8659 = vadd.f32 %v8225, %v8579
  %v8661 = vcombine.high %v68, %v68
  %v8663 = vunpack.c.l.s4 1966171168
  %v8664 = vunpack.c.0.s8 %v8663
  %v8665 = vlaneseq
  %v8666 = vshrl.u32 %v8665, 7
  %v8667 = vsub.s32 %v8664, %v8666
  %v8668 = vrot.slane %v68, %v8667
  %v8670 = vunpack.c.l.s4 1966171168
  %v8671 = vunpack.c.0.s8 %v8670
  %v8672 = vlaneseq
  %v8673 = vshrl.u32 %v8672, 7
  %v8674 = vsub.s32 %v8671, %v8673
  %v8675 = vrot.slane %v8661, %v8674
  %v8676 = vcombine.high %v8668, %v8668
  %v8677 = vcombine.high %v8675, %v8675
  %v8679 = vunpack.c.l.s4 1966171168
  %v8680 = vunpack.c.0.s8 %v8679
  %v8681 = vlaneseq
  %v8682 = vshrl.u32 %v8681, 7
  %v8683 = vsub.s32 %v8680, %v8682
  %v8684 = vrot.slane %v8668, %v8683
  %v8686 = vunpack.c.l.s4 1966171168
  %v8687 = vunpack.c.0.s8 %v8686
  %v8688 = vlaneseq
  %v8689 = vshrl.u32 %v8688, 7
  %v8690 = vsub.s32 %v8687, %v8689
  %v8691 = vrot.slane %v8675, %v8690
  %v8693 = vunpack.c.l.s4 1966171168
  %v8694 = vunpack.c.0.s8 %v8693
  %v8695 = vlaneseq
  %v8696 = vshrl.u32 %v8695, 7
  %v8697 = vsub.s32 %v8694, %v8696
  %v8698 = vrot.slane %v8676, %v8697
  %v8700 = vunpack.c.l.s4 1966171168
  %v8701 = vunpack.c.0.s8 %v8700
  %v8702 = vlaneseq
  %v8703 = vshrl.u32 %v8702, 7
  %v8704 = vsub.s32 %v8701, %v8703
  %v8705 = vrot.slane %v8677, %v8704
  %v8706 = vcombine.high %v8684, %v8684
  %v8707 = vcombine.high %v8691, %v8691
  %v8708 = vcombine.high %v8698, %v8698
  %v8709 = vcombine.high %v8705, %v8705
  %v8710 = vlaneseq
  %v8711 = vshrl.u32 %v8710, 7
  %v8712 = vsub.s32 0, %v8711
  %v8713 = vrot.slane %v8684, %v8712
  %v8714 = vlaneseq
  %v8715 = vshrl.u32 %v8714, 7
  %v8716 = vsub.s32 0, %v8715
  %v8717 = vrot.slane %v8698, %v8716
  %v8718 = vlaneseq
  %v8719 = vshrl.u32 %v8718, 7
  %v8720 = vsub.s32 0, %v8719
  %v8721 = vrot.slane %v8706, %v8720
  %v8722 = vlaneseq
  %v8723 = vshrl.u32 %v8722, 7
  %v8724 = vsub.s32 0, %v8723
  %v8725 = vrot.slane %v8708, %v8724
  %v8726 = vlaneseq
  %v8727 = vshrl.u32 %v8726, 7
  %v8728 = vsub.s32 0, %v8727
  %v8729 = vrot.slane %v8691, %v8728
  %v8730 = vlaneseq
  %v8731 = vshrl.u32 %v8730, 7
  %v8732 = vsub.s32 0, %v8731
  %v8733 = vrot.slane %v8705, %v8732
  %v8734 = vlaneseq
  %v8735 = vshrl.u32 %v8734, 7
  %v8736 = vsub.s32 0, %v8735
  %v8737 = vrot.slane %v8707, %v8736
  %v8738 = vlaneseq
  %v8739 = vshrl.u32 %v8738, 7
  %v8740 = vsub.s32 0, %v8739
  %v8741 = vrot.slane %v8709, %v8740
  %8742 = vset.pattern.permute.xlu0 0
  %8743 = vperm.xlu0 %8742, %v8713
  %v8744 = vpop.permute.xlu0 %8743
  %8746 = vset.pattern.permute.xlu0 0
  %8747 = vperm.xlu0 %8746, %v8717
  %v8748 = vpop.permute.xlu0 %8747
  %8750 = vset.pattern.permute.xlu0 0
  %8751 = vperm.xlu0 %8750, %v8721
  %v8752 = vpop.permute.xlu0 %8751
  %8754 = vset.pattern.permute.xlu0 0
  %8755 = vperm.xlu0 %8754, %v8725
  %v8756 = vpop.permute.xlu0 %8755
  %8758 = vset.pattern.permute.xlu0 0
  %8759 = vperm.xlu0 %8758, %v8729
  %v8760 = vpop.permute.xlu0 %8759
  %8762 = vset.pattern.permute.xlu0 0
  %8763 = vperm.xlu0 %8762, %v8733
  %v8764 = vpop.permute.xlu0 %8763
  %8766 = vset.pattern.permute.xlu0 0
  %8767 = vperm.xlu0 %8766, %v8737
  %v8768 = vpop.permute.xlu0 %8767
  %8770 = vset.pattern.permute.xlu0 0
  %8771 = vperm.xlu0 %8770, %v8741
  %v8772 = vpop.permute.xlu0 %8771
  %v8774 = vmul.f32 %v8744, %v32
  %v8775 = vmul.f32 %v8744, %v33
  %v8776 = vmul.f32 %v8744, %v34
  %v8777 = vmul.f32 %v8744, %v35
  %v8778 = vmul.f32 %v8744, %v36
  %v8779 = vmul.f32 %v8744, %v37
  %v8780 = vmul.f32 %v8748, %v32
  %v8781 = vmul.f32 %v8748, %v33
  %v8782 = vmul.f32 %v8748, %v34
  %v8783 = vmul.f32 %v8748, %v35
  %v8784 = vmul.f32 %v8748, %v36
  %v8785 = vmul.f32 %v8748, %v37
  %v8786 = vmul.f32 %v8752, %v32
  %v8787 = vmul.f32 %v8752, %v33
  %v8788 = vmul.f32 %v8752, %v34
  %v8789 = vmul.f32 %v8752, %v35
  %v8790 = vmul.f32 %v8752, %v36
  %v8791 = vmul.f32 %v8752, %v37
  %v8792 = vmul.f32 %v8756, %v32
  %v8793 = vmul.f32 %v8756, %v33
  %v8794 = vmul.f32 %v8756, %v34
  %v8795 = vmul.f32 %v8756, %v35
  %v8796 = vmul.f32 %v8756, %v36
  %v8797 = vmul.f32 %v8756, %v37
  %v8798 = vmul.f32 %v8760, %v32
  %v8799 = vmul.f32 %v8760, %v33
  %v8800 = vmul.f32 %v8760, %v34
  %v8801 = vmul.f32 %v8760, %v35
  %v8802 = vmul.f32 %v8760, %v36
  %v8803 = vmul.f32 %v8760, %v37
  %v8804 = vmul.f32 %v8764, %v32
  %v8805 = vmul.f32 %v8764, %v33
  %v8806 = vmul.f32 %v8764, %v34
  %v8807 = vmul.f32 %v8764, %v35
  %v8808 = vmul.f32 %v8764, %v36
  %v8809 = vmul.f32 %v8764, %v37
  %v8810 = vmul.f32 %v8768, %v32
  %v8811 = vmul.f32 %v8768, %v33
  %v8812 = vmul.f32 %v8768, %v34
  %v8813 = vmul.f32 %v8768, %v35
  %v8814 = vmul.f32 %v8768, %v36
  %v8815 = vmul.f32 %v8768, %v37
  %v8816 = vmul.f32 %v8772, %v32
  %v8817 = vmul.f32 %v8772, %v33
  %v8818 = vmul.f32 %v8772, %v34
  %v8819 = vmul.f32 %v8772, %v35
  %v8820 = vmul.f32 %v8772, %v36
  %v8821 = vmul.f32 %v8772, %v37
  %v8870 = vrot.slane %v8774, 2
  %v8871 = vrot.slane %v8776, 2
  %v8872 = vsel %vm2337, %v8870, %v8871
  %v8873 = vrot.slane %v8775, 2
  %v8874 = vrot.slane %v8777, 2
  %v8875 = vsel %vm2337, %v8873, %v8874
  %v8876 = vrot.slane %v8778, 2
  %v8877 = vsel %vm2337, %v8871, %v8876
  %v8878 = vrot.slane %v8779, 2
  %v8879 = vsel %vm2337, %v8874, %v8878
  %v8880 = vrot.slane %v8780, 2
  %v8881 = vrot.slane %v8782, 2
  %v8882 = vsel %vm2337, %v8880, %v8881
  %v8883 = vrot.slane %v8781, 2
  %v8884 = vrot.slane %v8783, 2
  %v8885 = vsel %vm2337, %v8883, %v8884
  %v8886 = vrot.slane %v8784, 2
  %v8887 = vsel %vm2337, %v8881, %v8886
  %v8888 = vrot.slane %v8785, 2
  %v8889 = vsel %vm2337, %v8884, %v8888
  %v8890 = vrot.slane %v8786, 2
  %v8891 = vrot.slane %v8788, 2
  %v8892 = vsel %vm2337, %v8890, %v8891
  %v8893 = vrot.slane %v8787, 2
  %v8894 = vrot.slane %v8789, 2
  %v8895 = vsel %vm2337, %v8893, %v8894
  %v8896 = vrot.slane %v8790, 2
  %v8897 = vsel %vm2337, %v8891, %v8896
  %v8898 = vrot.slane %v8791, 2
  %v8899 = vsel %vm2337, %v8894, %v8898
  %v8900 = vrot.slane %v8792, 2
  %v8901 = vrot.slane %v8794, 2
  %v8902 = vsel %vm2337, %v8900, %v8901
  %v8903 = vrot.slane %v8793, 2
  %v8904 = vrot.slane %v8795, 2
  %v8905 = vsel %vm2337, %v8903, %v8904
  %v8906 = vrot.slane %v8796, 2
  %v8907 = vsel %vm2337, %v8901, %v8906
  %v8908 = vrot.slane %v8797, 2
  %v8909 = vsel %vm2337, %v8904, %v8908
  %v8910 = vrot.slane %v8798, 2
  %v8911 = vrot.slane %v8800, 2
  %v8912 = vsel %vm2337, %v8910, %v8911
  %v8913 = vrot.slane %v8799, 2
  %v8914 = vrot.slane %v8801, 2
  %v8915 = vsel %vm2337, %v8913, %v8914
  %v8916 = vrot.slane %v8802, 2
  %v8917 = vsel %vm2337, %v8911, %v8916
  %v8918 = vrot.slane %v8803, 2
  %v8919 = vsel %vm2337, %v8914, %v8918
  %v8920 = vrot.slane %v8804, 2
  %v8921 = vrot.slane %v8806, 2
  %v8922 = vsel %vm2337, %v8920, %v8921
  %v8923 = vrot.slane %v8805, 2
  %v8924 = vrot.slane %v8807, 2
  %v8925 = vsel %vm2337, %v8923, %v8924
  %v8926 = vrot.slane %v8808, 2
  %v8927 = vsel %vm2337, %v8921, %v8926
  %v8928 = vrot.slane %v8809, 2
  %v8929 = vsel %vm2337, %v8924, %v8928
  %v8930 = vrot.slane %v8810, 2
  %v8931 = vrot.slane %v8812, 2
  %v8932 = vsel %vm2337, %v8930, %v8931
  %v8933 = vrot.slane %v8811, 2
  %v8934 = vrot.slane %v8813, 2
  %v8935 = vsel %vm2337, %v8933, %v8934
  %v8936 = vrot.slane %v8814, 2
  %v8937 = vsel %vm2337, %v8931, %v8936
  %v8938 = vrot.slane %v8815, 2
  %v8939 = vsel %vm2337, %v8934, %v8938
  %v8940 = vrot.slane %v8816, 2
  %v8941 = vrot.slane %v8818, 2
  %v8942 = vsel %vm2337, %v8940, %v8941
  %v8943 = vrot.slane %v8817, 2
  %v8944 = vrot.slane %v8819, 2
  %v8945 = vsel %vm2337, %v8943, %v8944
  %v8946 = vrot.slane %v8820, 2
  %v8947 = vsel %vm2337, %v8941, %v8946
  %v8948 = vrot.slane %v8821, 2
  %v8949 = vsel %vm2337, %v8944, %v8948
  %v8982 = vadd.f32 %v8628, %v8872
  %v8983 = vadd.f32 %v8629, %v8875
  %v8984 = vadd.f32 %v8630, %v8877
  %v8985 = vadd.f32 %v8631, %v8879
  %v8986 = vadd.f32 %v8632, %v8882
  %v8987 = vadd.f32 %v8633, %v8885
  %v8988 = vadd.f32 %v8634, %v8887
  %v8989 = vadd.f32 %v8635, %v8889
  %v8990 = vadd.f32 %v8636, %v8892
  %v8991 = vadd.f32 %v8637, %v8895
  %v8992 = vadd.f32 %v8638, %v8897
  %v8993 = vadd.f32 %v8639, %v8899
  %v8994 = vadd.f32 %v8640, %v8902
  %v8995 = vadd.f32 %v8641, %v8905
  %v8996 = vadd.f32 %v8642, %v8907
  %v8997 = vadd.f32 %v8643, %v8909
  %v8998 = vadd.f32 %v8644, %v8912
  %v8999 = vadd.f32 %v8645, %v8915
  %v9000 = vadd.f32 %v8646, %v8917
  %v9001 = vadd.f32 %v8647, %v8919
  %v9002 = vadd.f32 %v8648, %v8922
  %v9003 = vadd.f32 %v8649, %v8925
  %v9004 = vadd.f32 %v8650, %v8927
  %v9005 = vadd.f32 %v8651, %v8929
  %v9006 = vadd.f32 %v8652, %v8932
  %v9007 = vadd.f32 %v8653, %v8935
  %v9008 = vadd.f32 %v8654, %v8937
  %v9009 = vadd.f32 %v8655, %v8939
  %v9010 = vadd.f32 %v8656, %v8942
  %v9011 = vadd.f32 %v8657, %v8945
  %v9012 = vadd.f32 %v8658, %v8947
  %v9013 = vadd.f32 %v8659, %v8949
  %v9015 = vcombine.high %v69, %v69
  %v9017 = vunpack.c.l.s4 1966171168
  %v9018 = vunpack.c.0.s8 %v9017
  %v9019 = vlaneseq
  %v9020 = vshrl.u32 %v9019, 7
  %v9021 = vsub.s32 %v9018, %v9020
  %v9022 = vrot.slane %v69, %v9021
  %v9024 = vunpack.c.l.s4 1966171168
  %v9025 = vunpack.c.0.s8 %v9024
  %v9026 = vlaneseq
  %v9027 = vshrl.u32 %v9026, 7
  %v9028 = vsub.s32 %v9025, %v9027
  %v9029 = vrot.slane %v9015, %v9028
  %v9030 = vcombine.high %v9022, %v9022
  %v9031 = vcombine.high %v9029, %v9029
  %v9033 = vunpack.c.l.s4 1966171168
  %v9034 = vunpack.c.0.s8 %v9033
  %v9035 = vlaneseq
  %v9036 = vshrl.u32 %v9035, 7
  %v9037 = vsub.s32 %v9034, %v9036
  %v9038 = vrot.slane %v9022, %v9037
  %v9040 = vunpack.c.l.s4 1966171168
  %v9041 = vunpack.c.0.s8 %v9040
  %v9042 = vlaneseq
  %v9043 = vshrl.u32 %v9042, 7
  %v9044 = vsub.s32 %v9041, %v9043
  %v9045 = vrot.slane %v9029, %v9044
  %v9047 = vunpack.c.l.s4 1966171168
  %v9048 = vunpack.c.0.s8 %v9047
  %v9049 = vlaneseq
  %v9050 = vshrl.u32 %v9049, 7
  %v9051 = vsub.s32 %v9048, %v9050
  %v9052 = vrot.slane %v9030, %v9051
  %v9054 = vunpack.c.l.s4 1966171168
  %v9055 = vunpack.c.0.s8 %v9054
  %v9056 = vlaneseq
  %v9057 = vshrl.u32 %v9056, 7
  %v9058 = vsub.s32 %v9055, %v9057
  %v9059 = vrot.slane %v9031, %v9058
  %v9060 = vcombine.high %v9038, %v9038
  %v9061 = vcombine.high %v9045, %v9045
  %v9062 = vcombine.high %v9052, %v9052
  %v9063 = vcombine.high %v9059, %v9059
  %v9064 = vlaneseq
  %v9065 = vshrl.u32 %v9064, 7
  %v9066 = vsub.s32 0, %v9065
  %v9067 = vrot.slane %v9038, %v9066
  %v9068 = vlaneseq
  %v9069 = vshrl.u32 %v9068, 7
  %v9070 = vsub.s32 0, %v9069
  %v9071 = vrot.slane %v9052, %v9070
  %v9072 = vlaneseq
  %v9073 = vshrl.u32 %v9072, 7
  %v9074 = vsub.s32 0, %v9073
  %v9075 = vrot.slane %v9060, %v9074
  %v9076 = vlaneseq
  %v9077 = vshrl.u32 %v9076, 7
  %v9078 = vsub.s32 0, %v9077
  %v9079 = vrot.slane %v9062, %v9078
  %v9080 = vlaneseq
  %v9081 = vshrl.u32 %v9080, 7
  %v9082 = vsub.s32 0, %v9081
  %v9083 = vrot.slane %v9045, %v9082
  %v9084 = vlaneseq
  %v9085 = vshrl.u32 %v9084, 7
  %v9086 = vsub.s32 0, %v9085
  %v9087 = vrot.slane %v9059, %v9086
  %v9088 = vlaneseq
  %v9089 = vshrl.u32 %v9088, 7
  %v9090 = vsub.s32 0, %v9089
  %v9091 = vrot.slane %v9061, %v9090
  %v9092 = vlaneseq
  %v9093 = vshrl.u32 %v9092, 7
  %v9094 = vsub.s32 0, %v9093
  %v9095 = vrot.slane %v9063, %v9094
  %9096 = vset.pattern.permute.xlu0 0
  %9097 = vperm.xlu0 %9096, %v9067
  %v9098 = vpop.permute.xlu0 %9097
  %9100 = vset.pattern.permute.xlu0 0
  %9101 = vperm.xlu0 %9100, %v9071
  %v9102 = vpop.permute.xlu0 %9101
  %9104 = vset.pattern.permute.xlu0 0
  %9105 = vperm.xlu0 %9104, %v9075
  %v9106 = vpop.permute.xlu0 %9105
  %9108 = vset.pattern.permute.xlu0 0
  %9109 = vperm.xlu0 %9108, %v9079
  %v9110 = vpop.permute.xlu0 %9109
  %9112 = vset.pattern.permute.xlu0 0
  %9113 = vperm.xlu0 %9112, %v9083
  %v9114 = vpop.permute.xlu0 %9113
  %9116 = vset.pattern.permute.xlu0 0
  %9117 = vperm.xlu0 %9116, %v9087
  %v9118 = vpop.permute.xlu0 %9117
  %9120 = vset.pattern.permute.xlu0 0
  %9121 = vperm.xlu0 %9120, %v9091
  %v9122 = vpop.permute.xlu0 %9121
  %9124 = vset.pattern.permute.xlu0 0
  %9125 = vperm.xlu0 %9124, %v9095
  %v9126 = vpop.permute.xlu0 %9125
  %v9128 = vmul.f32 %v9098, %v32
  %v9129 = vmul.f32 %v9098, %v33
  %v9130 = vmul.f32 %v9098, %v34
  %v9131 = vmul.f32 %v9098, %v35
  %v9132 = vmul.f32 %v9098, %v36
  %v9133 = vmul.f32 %v9098, %v37
  %v9134 = vmul.f32 %v9102, %v32
  %v9135 = vmul.f32 %v9102, %v33
  %v9136 = vmul.f32 %v9102, %v34
  %v9137 = vmul.f32 %v9102, %v35
  %v9138 = vmul.f32 %v9102, %v36
  %v9139 = vmul.f32 %v9102, %v37
  %v9140 = vmul.f32 %v9106, %v32
  %v9141 = vmul.f32 %v9106, %v33
  %v9142 = vmul.f32 %v9106, %v34
  %v9143 = vmul.f32 %v9106, %v35
  %v9144 = vmul.f32 %v9106, %v36
  %v9145 = vmul.f32 %v9106, %v37
  %v9146 = vmul.f32 %v9110, %v32
  %v9147 = vmul.f32 %v9110, %v33
  %v9148 = vmul.f32 %v9110, %v34
  %v9149 = vmul.f32 %v9110, %v35
  %v9150 = vmul.f32 %v9110, %v36
  %v9151 = vmul.f32 %v9110, %v37
  %v9152 = vmul.f32 %v9114, %v32
  %v9153 = vmul.f32 %v9114, %v33
  %v9154 = vmul.f32 %v9114, %v34
  %v9155 = vmul.f32 %v9114, %v35
  %v9156 = vmul.f32 %v9114, %v36
  %v9157 = vmul.f32 %v9114, %v37
  %v9158 = vmul.f32 %v9118, %v32
  %v9159 = vmul.f32 %v9118, %v33
  %v9160 = vmul.f32 %v9118, %v34
  %v9161 = vmul.f32 %v9118, %v35
  %v9162 = vmul.f32 %v9118, %v36
  %v9163 = vmul.f32 %v9118, %v37
  %v9164 = vmul.f32 %v9122, %v32
  %v9165 = vmul.f32 %v9122, %v33
  %v9166 = vmul.f32 %v9122, %v34
  %v9167 = vmul.f32 %v9122, %v35
  %v9168 = vmul.f32 %v9122, %v36
  %v9169 = vmul.f32 %v9122, %v37
  %v9170 = vmul.f32 %v9126, %v32
  %v9171 = vmul.f32 %v9126, %v33
  %v9172 = vmul.f32 %v9126, %v34
  %v9173 = vmul.f32 %v9126, %v35
  %v9174 = vmul.f32 %v9126, %v36
  %v9175 = vmul.f32 %v9126, %v37
  %v9224 = vrot.slane %v9128, 2
  %v9225 = vrot.slane %v9130, 2
  %v9226 = vsel %vm2337, %v9224, %v9225
  %v9227 = vrot.slane %v9129, 2
  %v9228 = vrot.slane %v9131, 2
  %v9229 = vsel %vm2337, %v9227, %v9228
  %v9230 = vrot.slane %v9132, 2
  %v9231 = vsel %vm2337, %v9225, %v9230
  %v9232 = vrot.slane %v9133, 2
  %v9233 = vsel %vm2337, %v9228, %v9232
  %v9234 = vrot.slane %v9134, 2
  %v9235 = vrot.slane %v9136, 2
  %v9236 = vsel %vm2337, %v9234, %v9235
  %v9237 = vrot.slane %v9135, 2
  %v9238 = vrot.slane %v9137, 2
  %v9239 = vsel %vm2337, %v9237, %v9238
  %v9240 = vrot.slane %v9138, 2
  %v9241 = vsel %vm2337, %v9235, %v9240
  %v9242 = vrot.slane %v9139, 2
  %v9243 = vsel %vm2337, %v9238, %v9242
  %v9244 = vrot.slane %v9140, 2
  %v9245 = vrot.slane %v9142, 2
  %v9246 = vsel %vm2337, %v9244, %v9245
  %v9247 = vrot.slane %v9141, 2
  %v9248 = vrot.slane %v9143, 2
  %v9249 = vsel %vm2337, %v9247, %v9248
  %v9250 = vrot.slane %v9144, 2
  %v9251 = vsel %vm2337, %v9245, %v9250
  %v9252 = vrot.slane %v9145, 2
  %v9253 = vsel %vm2337, %v9248, %v9252
  %v9254 = vrot.slane %v9146, 2
  %v9255 = vrot.slane %v9148, 2
  %v9256 = vsel %vm2337, %v9254, %v9255
  %v9257 = vrot.slane %v9147, 2
  %v9258 = vrot.slane %v9149, 2
  %v9259 = vsel %vm2337, %v9257, %v9258
  %v9260 = vrot.slane %v9150, 2
  %v9261 = vsel %vm2337, %v9255, %v9260
  %v9262 = vrot.slane %v9151, 2
  %v9263 = vsel %vm2337, %v9258, %v9262
  %v9264 = vrot.slane %v9152, 2
  %v9265 = vrot.slane %v9154, 2
  %v9266 = vsel %vm2337, %v9264, %v9265
  %v9267 = vrot.slane %v9153, 2
  %v9268 = vrot.slane %v9155, 2
  %v9269 = vsel %vm2337, %v9267, %v9268
  %v9270 = vrot.slane %v9156, 2
  %v9271 = vsel %vm2337, %v9265, %v9270
  %v9272 = vrot.slane %v9157, 2
  %v9273 = vsel %vm2337, %v9268, %v9272
  %v9274 = vrot.slane %v9158, 2
  %v9275 = vrot.slane %v9160, 2
  %v9276 = vsel %vm2337, %v9274, %v9275
  %v9277 = vrot.slane %v9159, 2
  %v9278 = vrot.slane %v9161, 2
  %v9279 = vsel %vm2337, %v9277, %v9278
  %v9280 = vrot.slane %v9162, 2
  %v9281 = vsel %vm2337, %v9275, %v9280
  %v9282 = vrot.slane %v9163, 2
  %v9283 = vsel %vm2337, %v9278, %v9282
  %v9284 = vrot.slane %v9164, 2
  %v9285 = vrot.slane %v9166, 2
  %v9286 = vsel %vm2337, %v9284, %v9285
  %v9287 = vrot.slane %v9165, 2
  %v9288 = vrot.slane %v9167, 2
  %v9289 = vsel %vm2337, %v9287, %v9288
  %v9290 = vrot.slane %v9168, 2
  %v9291 = vsel %vm2337, %v9285, %v9290
  %v9292 = vrot.slane %v9169, 2
  %v9293 = vsel %vm2337, %v9288, %v9292
  %v9294 = vrot.slane %v9170, 2
  %v9295 = vrot.slane %v9172, 2
  %v9296 = vsel %vm2337, %v9294, %v9295
  %v9297 = vrot.slane %v9171, 2
  %v9298 = vrot.slane %v9173, 2
  %v9299 = vsel %vm2337, %v9297, %v9298
  %v9300 = vrot.slane %v9174, 2
  %v9301 = vsel %vm2337, %v9295, %v9300
  %v9302 = vrot.slane %v9175, 2
  %v9303 = vsel %vm2337, %v9298, %v9302
  %9304 = vrot.lane.b32.xlu0 %v9226, 127
  %v9305 = vpop.permute.xlu0 %9304
  %9306 = vrot.lane.b32.xlu0 %v9229, 127
  %v9307 = vpop.permute.xlu0 %9306
  %9308 = vrot.lane.b32.xlu0 %v9231, 127
  %v9309 = vpop.permute.xlu0 %9308
  %9310 = vrot.lane.b32.xlu0 %v9233, 127
  %v9311 = vpop.permute.xlu0 %9310
  %9312 = vrot.lane.b32.xlu0 %v9236, 127
  %v9313 = vpop.permute.xlu0 %9312
  %9314 = vrot.lane.b32.xlu0 %v9239, 127
  %v9315 = vpop.permute.xlu0 %9314
  %9316 = vrot.lane.b32.xlu0 %v9241, 127
  %v9317 = vpop.permute.xlu0 %9316
  %9318 = vrot.lane.b32.xlu0 %v9243, 127
  %v9319 = vpop.permute.xlu0 %9318
  %9320 = vrot.lane.b32.xlu0 %v9246, 127
  %v9321 = vpop.permute.xlu0 %9320
  %9322 = vrot.lane.b32.xlu0 %v9249, 127
  %v9323 = vpop.permute.xlu0 %9322
  %9324 = vrot.lane.b32.xlu0 %v9251, 127
  %v9325 = vpop.permute.xlu0 %9324
  %9326 = vrot.lane.b32.xlu0 %v9253, 127
  %v9327 = vpop.permute.xlu0 %9326
  %9328 = vrot.lane.b32.xlu0 %v9256, 127
  %v9329 = vpop.permute.xlu0 %9328
  %9330 = vrot.lane.b32.xlu0 %v9259, 127
  %v9331 = vpop.permute.xlu0 %9330
  %9332 = vrot.lane.b32.xlu0 %v9261, 127
  %v9333 = vpop.permute.xlu0 %9332
  %9334 = vrot.lane.b32.xlu0 %v9263, 127
  %v9335 = vpop.permute.xlu0 %9334
  %9336 = vrot.lane.b32.xlu0 %v9266, 127
  %v9337 = vpop.permute.xlu0 %9336
  %9338 = vrot.lane.b32.xlu0 %v9269, 127
  %v9339 = vpop.permute.xlu0 %9338
  %9340 = vrot.lane.b32.xlu0 %v9271, 127
  %v9341 = vpop.permute.xlu0 %9340
  %9342 = vrot.lane.b32.xlu0 %v9273, 127
  %v9343 = vpop.permute.xlu0 %9342
  %9344 = vrot.lane.b32.xlu0 %v9276, 127
  %v9345 = vpop.permute.xlu0 %9344
  %9346 = vrot.lane.b32.xlu0 %v9279, 127
  %v9347 = vpop.permute.xlu0 %9346
  %9348 = vrot.lane.b32.xlu0 %v9281, 127
  %v9349 = vpop.permute.xlu0 %9348
  %9350 = vrot.lane.b32.xlu0 %v9283, 127
  %v9351 = vpop.permute.xlu0 %9350
  %9352 = vrot.lane.b32.xlu0 %v9286, 127
  %v9353 = vpop.permute.xlu0 %9352
  %9354 = vrot.lane.b32.xlu0 %v9289, 127
  %v9355 = vpop.permute.xlu0 %9354
  %9356 = vrot.lane.b32.xlu0 %v9291, 127
  %v9357 = vpop.permute.xlu0 %9356
  %9358 = vrot.lane.b32.xlu0 %v9293, 127
  %v9359 = vpop.permute.xlu0 %9358
  %9360 = vrot.lane.b32.xlu0 %v9296, 127
  %v9361 = vpop.permute.xlu0 %9360
  %9362 = vrot.lane.b32.xlu0 %v9299, 127
  %v9363 = vpop.permute.xlu0 %9362
  %9364 = vrot.lane.b32.xlu0 %v9301, 127
  %v9365 = vpop.permute.xlu0 %9364
  %9366 = vrot.lane.b32.xlu0 %v9303, 127
  %v9367 = vpop.permute.xlu0 %9366
  %v9368 = vsel %vm500, %v9305, %v9307
  %v9369 = vsel %vm500, %v9309, %v9311
  %v9370 = vsel %vm500, %v9313, %v9315
  %v9371 = vsel %vm500, %v9317, %v9319
  %v9372 = vsel %vm500, %v9321, %v9323
  %v9373 = vsel %vm500, %v9325, %v9327
  %v9374 = vsel %vm500, %v9329, %v9331
  %v9375 = vsel %vm500, %v9333, %v9335
  %v9376 = vsel %vm500, %v9337, %v9339
  %v9377 = vsel %vm500, %v9341, %v9343
  %v9378 = vsel %vm500, %v9345, %v9347
  %v9379 = vsel %vm500, %v9349, %v9351
  %v9380 = vsel %vm500, %v9353, %v9355
  %v9381 = vsel %vm500, %v9357, %v9359
  %v9382 = vsel %vm500, %v9361, %v9363
  %v9383 = vsel %vm500, %v9365, %v9367
  %v9416 = vadd.f32 %v8982, %v9368
  %v9417 = vadd.f32 %v8983, %v9307
  %v9418 = vadd.f32 %v8984, %v9369
  %v9419 = vadd.f32 %v8985, %v9311
  %v9420 = vadd.f32 %v8986, %v9370
  %v9421 = vadd.f32 %v8987, %v9315
  %v9422 = vadd.f32 %v8988, %v9371
  %v9423 = vadd.f32 %v8989, %v9319
  %v9424 = vadd.f32 %v8990, %v9372
  %v9425 = vadd.f32 %v8991, %v9323
  %v9426 = vadd.f32 %v8992, %v9373
  %v9427 = vadd.f32 %v8993, %v9327
  %v9428 = vadd.f32 %v8994, %v9374
  %v9429 = vadd.f32 %v8995, %v9331
  %v9430 = vadd.f32 %v8996, %v9375
  %v9431 = vadd.f32 %v8997, %v9335
  %v9432 = vadd.f32 %v8998, %v9376
  %v9433 = vadd.f32 %v8999, %v9339
  %v9434 = vadd.f32 %v9000, %v9377
  %v9435 = vadd.f32 %v9001, %v9343
  %v9436 = vadd.f32 %v9002, %v9378
  %v9437 = vadd.f32 %v9003, %v9347
  %v9438 = vadd.f32 %v9004, %v9379
  %v9439 = vadd.f32 %v9005, %v9351
  %v9440 = vadd.f32 %v9006, %v9380
  %v9441 = vadd.f32 %v9007, %v9355
  %v9442 = vadd.f32 %v9008, %v9381
  %v9443 = vadd.f32 %v9009, %v9359
  %v9444 = vadd.f32 %v9010, %v9382
  %v9445 = vadd.f32 %v9011, %v9363
  %v9446 = vadd.f32 %v9012, %v9383
  %v9447 = vadd.f32 %v9013, %v9367
  %v9449 = vcombine.high %v70, %v70
  %v9451 = vunpack.c.l.s4 1966171168
  %v9452 = vunpack.c.0.s8 %v9451
  %v9453 = vlaneseq
  %v9454 = vshrl.u32 %v9453, 7
  %v9455 = vsub.s32 %v9452, %v9454
  %v9456 = vrot.slane %v70, %v9455
  %v9458 = vunpack.c.l.s4 1966171168
  %v9459 = vunpack.c.0.s8 %v9458
  %v9460 = vlaneseq
  %v9461 = vshrl.u32 %v9460, 7
  %v9462 = vsub.s32 %v9459, %v9461
  %v9463 = vrot.slane %v9449, %v9462
  %v9464 = vcombine.high %v9456, %v9456
  %v9465 = vcombine.high %v9463, %v9463
  %v9467 = vunpack.c.l.s4 1966171168
  %v9468 = vunpack.c.0.s8 %v9467
  %v9469 = vlaneseq
  %v9470 = vshrl.u32 %v9469, 7
  %v9471 = vsub.s32 %v9468, %v9470
  %v9472 = vrot.slane %v9456, %v9471
  %v9474 = vunpack.c.l.s4 1966171168
  %v9475 = vunpack.c.0.s8 %v9474
  %v9476 = vlaneseq
  %v9477 = vshrl.u32 %v9476, 7
  %v9478 = vsub.s32 %v9475, %v9477
  %v9479 = vrot.slane %v9463, %v9478
  %v9481 = vunpack.c.l.s4 1966171168
  %v9482 = vunpack.c.0.s8 %v9481
  %v9483 = vlaneseq
  %v9484 = vshrl.u32 %v9483, 7
  %v9485 = vsub.s32 %v9482, %v9484
  %v9486 = vrot.slane %v9464, %v9485
  %v9488 = vunpack.c.l.s4 1966171168
  %v9489 = vunpack.c.0.s8 %v9488
  %v9490 = vlaneseq
  %v9491 = vshrl.u32 %v9490, 7
  %v9492 = vsub.s32 %v9489, %v9491
  %v9493 = vrot.slane %v9465, %v9492
  %v9494 = vcombine.high %v9472, %v9472
  %v9495 = vcombine.high %v9479, %v9479
  %v9496 = vcombine.high %v9486, %v9486
  %v9497 = vcombine.high %v9493, %v9493
  %v9498 = vlaneseq
  %v9499 = vshrl.u32 %v9498, 7
  %v9500 = vsub.s32 0, %v9499
  %v9501 = vrot.slane %v9472, %v9500
  %v9502 = vlaneseq
  %v9503 = vshrl.u32 %v9502, 7
  %v9504 = vsub.s32 0, %v9503
  %v9505 = vrot.slane %v9486, %v9504
  %v9506 = vlaneseq
  %v9507 = vshrl.u32 %v9506, 7
  %v9508 = vsub.s32 0, %v9507
  %v9509 = vrot.slane %v9494, %v9508
  %v9510 = vlaneseq
  %v9511 = vshrl.u32 %v9510, 7
  %v9512 = vsub.s32 0, %v9511
  %v9513 = vrot.slane %v9496, %v9512
  %v9514 = vlaneseq
  %v9515 = vshrl.u32 %v9514, 7
  %v9516 = vsub.s32 0, %v9515
  %v9517 = vrot.slane %v9479, %v9516
  %v9518 = vlaneseq
  %v9519 = vshrl.u32 %v9518, 7
  %v9520 = vsub.s32 0, %v9519
  %v9521 = vrot.slane %v9493, %v9520
  %v9522 = vlaneseq
  %v9523 = vshrl.u32 %v9522, 7
  %v9524 = vsub.s32 0, %v9523
  %v9525 = vrot.slane %v9495, %v9524
  %v9526 = vlaneseq
  %v9527 = vshrl.u32 %v9526, 7
  %v9528 = vsub.s32 0, %v9527
  %v9529 = vrot.slane %v9497, %v9528
  %9530 = vset.pattern.permute.xlu0 0
  %9531 = vperm.xlu0 %9530, %v9501
  %v9532 = vpop.permute.xlu0 %9531
  %9534 = vset.pattern.permute.xlu0 0
  %9535 = vperm.xlu0 %9534, %v9505
  %v9536 = vpop.permute.xlu0 %9535
  %9538 = vset.pattern.permute.xlu0 0
  %9539 = vperm.xlu0 %9538, %v9509
  %v9540 = vpop.permute.xlu0 %9539
  %9542 = vset.pattern.permute.xlu0 0
  %9543 = vperm.xlu0 %9542, %v9513
  %v9544 = vpop.permute.xlu0 %9543
  %9546 = vset.pattern.permute.xlu0 0
  %9547 = vperm.xlu0 %9546, %v9517
  %v9548 = vpop.permute.xlu0 %9547
  %9550 = vset.pattern.permute.xlu0 0
  %9551 = vperm.xlu0 %9550, %v9521
  %v9552 = vpop.permute.xlu0 %9551
  %9554 = vset.pattern.permute.xlu0 0
  %9555 = vperm.xlu0 %9554, %v9525
  %v9556 = vpop.permute.xlu0 %9555
  %9558 = vset.pattern.permute.xlu0 0
  %9559 = vperm.xlu0 %9558, %v9529
  %v9560 = vpop.permute.xlu0 %9559
  %v9562 = vmul.f32 %v9532, %v32
  %v9563 = vmul.f32 %v9532, %v33
  %v9564 = vmul.f32 %v9532, %v34
  %v9565 = vmul.f32 %v9532, %v35
  %v9566 = vmul.f32 %v9532, %v36
  %v9567 = vmul.f32 %v9532, %v37
  %v9568 = vmul.f32 %v9536, %v32
  %v9569 = vmul.f32 %v9536, %v33
  %v9570 = vmul.f32 %v9536, %v34
  %v9571 = vmul.f32 %v9536, %v35
  %v9572 = vmul.f32 %v9536, %v36
  %v9573 = vmul.f32 %v9536, %v37
  %v9574 = vmul.f32 %v9540, %v32
  %v9575 = vmul.f32 %v9540, %v33
  %v9576 = vmul.f32 %v9540, %v34
  %v9577 = vmul.f32 %v9540, %v35
  %v9578 = vmul.f32 %v9540, %v36
  %v9579 = vmul.f32 %v9540, %v37
  %v9580 = vmul.f32 %v9544, %v32
  %v9581 = vmul.f32 %v9544, %v33
  %v9582 = vmul.f32 %v9544, %v34
  %v9583 = vmul.f32 %v9544, %v35
  %v9584 = vmul.f32 %v9544, %v36
  %v9585 = vmul.f32 %v9544, %v37
  %v9586 = vmul.f32 %v9548, %v32
  %v9587 = vmul.f32 %v9548, %v33
  %v9588 = vmul.f32 %v9548, %v34
  %v9589 = vmul.f32 %v9548, %v35
  %v9590 = vmul.f32 %v9548, %v36
  %v9591 = vmul.f32 %v9548, %v37
  %v9592 = vmul.f32 %v9552, %v32
  %v9593 = vmul.f32 %v9552, %v33
  %v9594 = vmul.f32 %v9552, %v34
  %v9595 = vmul.f32 %v9552, %v35
  %v9596 = vmul.f32 %v9552, %v36
  %v9597 = vmul.f32 %v9552, %v37
  %v9598 = vmul.f32 %v9556, %v32
  %v9599 = vmul.f32 %v9556, %v33
  %v9600 = vmul.f32 %v9556, %v34
  %v9601 = vmul.f32 %v9556, %v35
  %v9602 = vmul.f32 %v9556, %v36
  %v9603 = vmul.f32 %v9556, %v37
  %v9604 = vmul.f32 %v9560, %v32
  %v9605 = vmul.f32 %v9560, %v33
  %v9606 = vmul.f32 %v9560, %v34
  %v9607 = vmul.f32 %v9560, %v35
  %v9608 = vmul.f32 %v9560, %v36
  %v9609 = vmul.f32 %v9560, %v37
  %v9658 = vrot.slane %v9562, 2
  %v9659 = vrot.slane %v9564, 2
  %v9660 = vsel %vm2337, %v9658, %v9659
  %v9661 = vrot.slane %v9563, 2
  %v9662 = vrot.slane %v9565, 2
  %v9663 = vsel %vm2337, %v9661, %v9662
  %v9664 = vrot.slane %v9566, 2
  %v9665 = vsel %vm2337, %v9659, %v9664
  %v9666 = vrot.slane %v9567, 2
  %v9667 = vsel %vm2337, %v9662, %v9666
  %v9668 = vrot.slane %v9568, 2
  %v9669 = vrot.slane %v9570, 2
  %v9670 = vsel %vm2337, %v9668, %v9669
  %v9671 = vrot.slane %v9569, 2
  %v9672 = vrot.slane %v9571, 2
  %v9673 = vsel %vm2337, %v9671, %v9672
  %v9674 = vrot.slane %v9572, 2
  %v9675 = vsel %vm2337, %v9669, %v9674
  %v9676 = vrot.slane %v9573, 2
  %v9677 = vsel %vm2337, %v9672, %v9676
  %v9678 = vrot.slane %v9574, 2
  %v9679 = vrot.slane %v9576, 2
  %v9680 = vsel %vm2337, %v9678, %v9679
  %v9681 = vrot.slane %v9575, 2
  %v9682 = vrot.slane %v9577, 2
  %v9683 = vsel %vm2337, %v9681, %v9682
  %v9684 = vrot.slane %v9578, 2
  %v9685 = vsel %vm2337, %v9679, %v9684
  %v9686 = vrot.slane %v9579, 2
  %v9687 = vsel %vm2337, %v9682, %v9686
  %v9688 = vrot.slane %v9580, 2
  %v9689 = vrot.slane %v9582, 2
  %v9690 = vsel %vm2337, %v9688, %v9689
  %v9691 = vrot.slane %v9581, 2
  %v9692 = vrot.slane %v9583, 2
  %v9693 = vsel %vm2337, %v9691, %v9692
  %v9694 = vrot.slane %v9584, 2
  %v9695 = vsel %vm2337, %v9689, %v9694
  %v9696 = vrot.slane %v9585, 2
  %v9697 = vsel %vm2337, %v9692, %v9696
  %v9698 = vrot.slane %v9586, 2
  %v9699 = vrot.slane %v9588, 2
  %v9700 = vsel %vm2337, %v9698, %v9699
  %v9701 = vrot.slane %v9587, 2
  %v9702 = vrot.slane %v9589, 2
  %v9703 = vsel %vm2337, %v9701, %v9702
  %v9704 = vrot.slane %v9590, 2
  %v9705 = vsel %vm2337, %v9699, %v9704
  %v9706 = vrot.slane %v9591, 2
  %v9707 = vsel %vm2337, %v9702, %v9706
  %v9708 = vrot.slane %v9592, 2
  %v9709 = vrot.slane %v9594, 2
  %v9710 = vsel %vm2337, %v9708, %v9709
  %v9711 = vrot.slane %v9593, 2
  %v9712 = vrot.slane %v9595, 2
  %v9713 = vsel %vm2337, %v9711, %v9712
  %v9714 = vrot.slane %v9596, 2
  %v9715 = vsel %vm2337, %v9709, %v9714
  %v9716 = vrot.slane %v9597, 2
  %v9717 = vsel %vm2337, %v9712, %v9716
  %v9718 = vrot.slane %v9598, 2
  %v9719 = vrot.slane %v9600, 2
  %v9720 = vsel %vm2337, %v9718, %v9719
  %v9721 = vrot.slane %v9599, 2
  %v9722 = vrot.slane %v9601, 2
  %v9723 = vsel %vm2337, %v9721, %v9722
  %v9724 = vrot.slane %v9602, 2
  %v9725 = vsel %vm2337, %v9719, %v9724
  %v9726 = vrot.slane %v9603, 2
  %v9727 = vsel %vm2337, %v9722, %v9726
  %v9728 = vrot.slane %v9604, 2
  %v9729 = vrot.slane %v9606, 2
  %v9730 = vsel %vm2337, %v9728, %v9729
  %v9731 = vrot.slane %v9605, 2
  %v9732 = vrot.slane %v9607, 2
  %v9733 = vsel %vm2337, %v9731, %v9732
  %v9734 = vrot.slane %v9608, 2
  %v9735 = vsel %vm2337, %v9729, %v9734
  %v9736 = vrot.slane %v9609, 2
  %v9737 = vsel %vm2337, %v9732, %v9736
  %9738 = vrot.lane.b32.xlu0 %v9660, 126
  %v9739 = vpop.permute.xlu0 %9738
  %9740 = vrot.lane.b32.xlu0 %v9663, 126
  %v9741 = vpop.permute.xlu0 %9740
  %9742 = vrot.lane.b32.xlu0 %v9665, 126
  %v9743 = vpop.permute.xlu0 %9742
  %9744 = vrot.lane.b32.xlu0 %v9667, 126
  %v9745 = vpop.permute.xlu0 %9744
  %9746 = vrot.lane.b32.xlu0 %v9670, 126
  %v9747 = vpop.permute.xlu0 %9746
  %9748 = vrot.lane.b32.xlu0 %v9673, 126
  %v9749 = vpop.permute.xlu0 %9748
  %9750 = vrot.lane.b32.xlu0 %v9675, 126
  %v9751 = vpop.permute.xlu0 %9750
  %9752 = vrot.lane.b32.xlu0 %v9677, 126
  %v9753 = vpop.permute.xlu0 %9752
  %9754 = vrot.lane.b32.xlu0 %v9680, 126
  %v9755 = vpop.permute.xlu0 %9754
  %9756 = vrot.lane.b32.xlu0 %v9683, 126
  %v9757 = vpop.permute.xlu0 %9756
  %9758 = vrot.lane.b32.xlu0 %v9685, 126
  %v9759 = vpop.permute.xlu0 %9758
  %9760 = vrot.lane.b32.xlu0 %v9687, 126
  %v9761 = vpop.permute.xlu0 %9760
  %9762 = vrot.lane.b32.xlu0 %v9690, 126
  %v9763 = vpop.permute.xlu0 %9762
  %9764 = vrot.lane.b32.xlu0 %v9693, 126
  %v9765 = vpop.permute.xlu0 %9764
  %9766 = vrot.lane.b32.xlu0 %v9695, 126
  %v9767 = vpop.permute.xlu0 %9766
  %9768 = vrot.lane.b32.xlu0 %v9697, 126
  %v9769 = vpop.permute.xlu0 %9768
  %9770 = vrot.lane.b32.xlu0 %v9700, 126
  %v9771 = vpop.permute.xlu0 %9770
  %9772 = vrot.lane.b32.xlu0 %v9703, 126
  %v9773 = vpop.permute.xlu0 %9772
  %9774 = vrot.lane.b32.xlu0 %v9705, 126
  %v9775 = vpop.permute.xlu0 %9774
  %9776 = vrot.lane.b32.xlu0 %v9707, 126
  %v9777 = vpop.permute.xlu0 %9776
  %9778 = vrot.lane.b32.xlu0 %v9710, 126
  %v9779 = vpop.permute.xlu0 %9778
  %9780 = vrot.lane.b32.xlu0 %v9713, 126
  %v9781 = vpop.permute.xlu0 %9780
  %9782 = vrot.lane.b32.xlu0 %v9715, 126
  %v9783 = vpop.permute.xlu0 %9782
  %9784 = vrot.lane.b32.xlu0 %v9717, 126
  %v9785 = vpop.permute.xlu0 %9784
  %9786 = vrot.lane.b32.xlu0 %v9720, 126
  %v9787 = vpop.permute.xlu0 %9786
  %9788 = vrot.lane.b32.xlu0 %v9723, 126
  %v9789 = vpop.permute.xlu0 %9788
  %9790 = vrot.lane.b32.xlu0 %v9725, 126
  %v9791 = vpop.permute.xlu0 %9790
  %9792 = vrot.lane.b32.xlu0 %v9727, 126
  %v9793 = vpop.permute.xlu0 %9792
  %9794 = vrot.lane.b32.xlu0 %v9730, 126
  %v9795 = vpop.permute.xlu0 %9794
  %9796 = vrot.lane.b32.xlu0 %v9733, 126
  %v9797 = vpop.permute.xlu0 %9796
  %9798 = vrot.lane.b32.xlu0 %v9735, 126
  %v9799 = vpop.permute.xlu0 %9798
  %9800 = vrot.lane.b32.xlu0 %v9737, 126
  %v9801 = vpop.permute.xlu0 %9800
  %v9802 = vsel %vm823, %v9739, %v9741
  %v9803 = vsel %vm823, %v9743, %v9745
  %v9804 = vsel %vm823, %v9747, %v9749
  %v9805 = vsel %vm823, %v9751, %v9753
  %v9806 = vsel %vm823, %v9755, %v9757
  %v9807 = vsel %vm823, %v9759, %v9761
  %v9808 = vsel %vm823, %v9763, %v9765
  %v9809 = vsel %vm823, %v9767, %v9769
  %v9810 = vsel %vm823, %v9771, %v9773
  %v9811 = vsel %vm823, %v9775, %v9777
  %v9812 = vsel %vm823, %v9779, %v9781
  %v9813 = vsel %vm823, %v9783, %v9785
  %v9814 = vsel %vm823, %v9787, %v9789
  %v9815 = vsel %vm823, %v9791, %v9793
  %v9816 = vsel %vm823, %v9795, %v9797
  %v9817 = vsel %vm823, %v9799, %v9801
  %v9850 = vadd.f32 %v9416, %v9802
  %v9851 = vadd.f32 %v9417, %v9741
  %v9852 = vadd.f32 %v9418, %v9803
  %v9853 = vadd.f32 %v9419, %v9745
  %v9854 = vadd.f32 %v9420, %v9804
  %v9855 = vadd.f32 %v9421, %v9749
  %v9856 = vadd.f32 %v9422, %v9805
  %v9857 = vadd.f32 %v9423, %v9753
  %v9858 = vadd.f32 %v9424, %v9806
  %v9859 = vadd.f32 %v9425, %v9757
  %v9860 = vadd.f32 %v9426, %v9807
  %v9861 = vadd.f32 %v9427, %v9761
  %v9862 = vadd.f32 %v9428, %v9808
  %v9863 = vadd.f32 %v9429, %v9765
  %v9864 = vadd.f32 %v9430, %v9809
  %v9865 = vadd.f32 %v9431, %v9769
  %v9866 = vadd.f32 %v9432, %v9810
  %v9867 = vadd.f32 %v9433, %v9773
  %v9868 = vadd.f32 %v9434, %v9811
  %v9869 = vadd.f32 %v9435, %v9777
  %v9870 = vadd.f32 %v9436, %v9812
  %v9871 = vadd.f32 %v9437, %v9781
  %v9872 = vadd.f32 %v9438, %v9813
  %v9873 = vadd.f32 %v9439, %v9785
  %v9874 = vadd.f32 %v9440, %v9814
  %v9875 = vadd.f32 %v9441, %v9789
  %v9876 = vadd.f32 %v9442, %v9815
  %v9877 = vadd.f32 %v9443, %v9793
  %v9878 = vadd.f32 %v9444, %v9816
  %v9879 = vadd.f32 %v9445, %v9797
  %v9880 = vadd.f32 %v9446, %v9817
  %v9881 = vadd.f32 %v9447, %v9801
  %v9883 = vcombine.high %v71, %v71
  %v9885 = vunpack.c.l.s4 1966171168
  %v9886 = vunpack.c.0.s8 %v9885
  %v9887 = vlaneseq
  %v9888 = vshrl.u32 %v9887, 7
  %v9889 = vsub.s32 %v9886, %v9888
  %v9890 = vrot.slane %v71, %v9889
  %v9892 = vunpack.c.l.s4 1966171168
  %v9893 = vunpack.c.0.s8 %v9892
  %v9894 = vlaneseq
  %v9895 = vshrl.u32 %v9894, 7
  %v9896 = vsub.s32 %v9893, %v9895
  %v9897 = vrot.slane %v9883, %v9896
  %v9898 = vcombine.high %v9890, %v9890
  %v9899 = vcombine.high %v9897, %v9897
  %v9901 = vunpack.c.l.s4 1966171168
  %v9902 = vunpack.c.0.s8 %v9901
  %v9903 = vlaneseq
  %v9904 = vshrl.u32 %v9903, 7
  %v9905 = vsub.s32 %v9902, %v9904
  %v9906 = vrot.slane %v9890, %v9905
  %v9908 = vunpack.c.l.s4 1966171168
  %v9909 = vunpack.c.0.s8 %v9908
  %v9910 = vlaneseq
  %v9911 = vshrl.u32 %v9910, 7
  %v9912 = vsub.s32 %v9909, %v9911
  %v9913 = vrot.slane %v9897, %v9912
  %v9915 = vunpack.c.l.s4 1966171168
  %v9916 = vunpack.c.0.s8 %v9915
  %v9917 = vlaneseq
  %v9918 = vshrl.u32 %v9917, 7
  %v9919 = vsub.s32 %v9916, %v9918
  %v9920 = vrot.slane %v9898, %v9919
  %v9922 = vunpack.c.l.s4 1966171168
  %v9923 = vunpack.c.0.s8 %v9922
  %v9924 = vlaneseq
  %v9925 = vshrl.u32 %v9924, 7
  %v9926 = vsub.s32 %v9923, %v9925
  %v9927 = vrot.slane %v9899, %v9926
  %v9928 = vcombine.high %v9906, %v9906
  %v9929 = vcombine.high %v9913, %v9913
  %v9930 = vcombine.high %v9920, %v9920
  %v9931 = vcombine.high %v9927, %v9927
  %v9932 = vlaneseq
  %v9933 = vshrl.u32 %v9932, 7
  %v9934 = vsub.s32 0, %v9933
  %v9935 = vrot.slane %v9906, %v9934
  %v9936 = vlaneseq
  %v9937 = vshrl.u32 %v9936, 7
  %v9938 = vsub.s32 0, %v9937
  %v9939 = vrot.slane %v9920, %v9938
  %v9940 = vlaneseq
  %v9941 = vshrl.u32 %v9940, 7
  %v9942 = vsub.s32 0, %v9941
  %v9943 = vrot.slane %v9928, %v9942
  %v9944 = vlaneseq
  %v9945 = vshrl.u32 %v9944, 7
  %v9946 = vsub.s32 0, %v9945
  %v9947 = vrot.slane %v9930, %v9946
  %v9948 = vlaneseq
  %v9949 = vshrl.u32 %v9948, 7
  %v9950 = vsub.s32 0, %v9949
  %v9951 = vrot.slane %v9913, %v9950
  %v9952 = vlaneseq
  %v9953 = vshrl.u32 %v9952, 7
  %v9954 = vsub.s32 0, %v9953
  %v9955 = vrot.slane %v9927, %v9954
  %v9956 = vlaneseq
  %v9957 = vshrl.u32 %v9956, 7
  %v9958 = vsub.s32 0, %v9957
  %v9959 = vrot.slane %v9929, %v9958
  %v9960 = vlaneseq
  %v9961 = vshrl.u32 %v9960, 7
  %v9962 = vsub.s32 0, %v9961
  %v9963 = vrot.slane %v9931, %v9962
  %9964 = vset.pattern.permute.xlu0 0
  %9965 = vperm.xlu0 %9964, %v9935
  %v9966 = vpop.permute.xlu0 %9965
  %9968 = vset.pattern.permute.xlu0 0
  %9969 = vperm.xlu0 %9968, %v9939
  %v9970 = vpop.permute.xlu0 %9969
  %9972 = vset.pattern.permute.xlu0 0
  %9973 = vperm.xlu0 %9972, %v9943
  %v9974 = vpop.permute.xlu0 %9973
  %9976 = vset.pattern.permute.xlu0 0
  %9977 = vperm.xlu0 %9976, %v9947
  %v9978 = vpop.permute.xlu0 %9977
  %9980 = vset.pattern.permute.xlu0 0
  %9981 = vperm.xlu0 %9980, %v9951
  %v9982 = vpop.permute.xlu0 %9981
  %9984 = vset.pattern.permute.xlu0 0
  %9985 = vperm.xlu0 %9984, %v9955
  %v9986 = vpop.permute.xlu0 %9985
  %9988 = vset.pattern.permute.xlu0 0
  %9989 = vperm.xlu0 %9988, %v9959
  %v9990 = vpop.permute.xlu0 %9989
  %9992 = vset.pattern.permute.xlu0 0
  %9993 = vperm.xlu0 %9992, %v9963
  %v9994 = vpop.permute.xlu0 %9993
  %v9996 = vmul.f32 %v9966, %v38
  %v9997 = vmul.f32 %v9966, %v39
  %v9998 = vmul.f32 %v9966, %v40
  %v9999 = vmul.f32 %v9966, %v41
  %v10000 = vmul.f32 %v9970, %v38
  %v10001 = vmul.f32 %v9970, %v39
  %v10002 = vmul.f32 %v9970, %v40
  %v10003 = vmul.f32 %v9970, %v41
  %v10004 = vmul.f32 %v9974, %v38
  %v10005 = vmul.f32 %v9974, %v39
  %v10006 = vmul.f32 %v9974, %v40
  %v10007 = vmul.f32 %v9974, %v41
  %v10008 = vmul.f32 %v9978, %v38
  %v10009 = vmul.f32 %v9978, %v39
  %v10010 = vmul.f32 %v9978, %v40
  %v10011 = vmul.f32 %v9978, %v41
  %v10012 = vmul.f32 %v9982, %v38
  %v10013 = vmul.f32 %v9982, %v39
  %v10014 = vmul.f32 %v9982, %v40
  %v10015 = vmul.f32 %v9982, %v41
  %v10016 = vmul.f32 %v9986, %v38
  %v10017 = vmul.f32 %v9986, %v39
  %v10018 = vmul.f32 %v9986, %v40
  %v10019 = vmul.f32 %v9986, %v41
  %v10020 = vmul.f32 %v9990, %v38
  %v10021 = vmul.f32 %v9990, %v39
  %v10022 = vmul.f32 %v9990, %v40
  %v10023 = vmul.f32 %v9990, %v41
  %v10024 = vmul.f32 %v9994, %v38
  %v10025 = vmul.f32 %v9994, %v39
  %v10026 = vmul.f32 %v9994, %v40
  %v10027 = vmul.f32 %v9994, %v41
  %v10028 = vadd.f32 %v9850, %v9996
  %v10029 = vadd.f32 %v9851, %v9997
  %v10030 = vadd.f32 %v9852, %v9998
  %v10031 = vadd.f32 %v9853, %v9999
  %v10032 = vadd.f32 %v9854, %v10000
  %v10033 = vadd.f32 %v9855, %v10001
  %v10034 = vadd.f32 %v9856, %v10002
  %v10035 = vadd.f32 %v9857, %v10003
  %v10036 = vadd.f32 %v9858, %v10004
  %v10037 = vadd.f32 %v9859, %v10005
  %v10038 = vadd.f32 %v9860, %v10006
  %v10039 = vadd.f32 %v9861, %v10007
  %v10040 = vadd.f32 %v9862, %v10008
  %v10041 = vadd.f32 %v9863, %v10009
  %v10042 = vadd.f32 %v9864, %v10010
  %v10043 = vadd.f32 %v9865, %v10011
  %v10044 = vadd.f32 %v9866, %v10012
  %v10045 = vadd.f32 %v9867, %v10013
  %v10046 = vadd.f32 %v9868, %v10014
  %v10047 = vadd.f32 %v9869, %v10015
  %v10048 = vadd.f32 %v9870, %v10016
  %v10049 = vadd.f32 %v9871, %v10017
  %v10050 = vadd.f32 %v9872, %v10018
  %v10051 = vadd.f32 %v9873, %v10019
  %v10052 = vadd.f32 %v9874, %v10020
  %v10053 = vadd.f32 %v9875, %v10021
  %v10054 = vadd.f32 %v9876, %v10022
  %v10055 = vadd.f32 %v9877, %v10023
  %v10056 = vadd.f32 %v9878, %v10024
  %v10057 = vadd.f32 %v9879, %v10025
  %v10058 = vadd.f32 %v9880, %v10026
  %v10059 = vadd.f32 %v9881, %v10027
  %v10061 = vcombine.high %v72, %v72
  %v10063 = vunpack.c.l.s4 1966171168
  %v10064 = vunpack.c.0.s8 %v10063
  %v10065 = vlaneseq
  %v10066 = vshrl.u32 %v10065, 7
  %v10067 = vsub.s32 %v10064, %v10066
  %v10068 = vrot.slane %v72, %v10067
  %v10070 = vunpack.c.l.s4 1966171168
  %v10071 = vunpack.c.0.s8 %v10070
  %v10072 = vlaneseq
  %v10073 = vshrl.u32 %v10072, 7
  %v10074 = vsub.s32 %v10071, %v10073
  %v10075 = vrot.slane %v10061, %v10074
  %v10076 = vcombine.high %v10068, %v10068
  %v10077 = vcombine.high %v10075, %v10075
  %v10079 = vunpack.c.l.s4 1966171168
  %v10080 = vunpack.c.0.s8 %v10079
  %v10081 = vlaneseq
  %v10082 = vshrl.u32 %v10081, 7
  %v10083 = vsub.s32 %v10080, %v10082
  %v10084 = vrot.slane %v10068, %v10083
  %v10086 = vunpack.c.l.s4 1966171168
  %v10087 = vunpack.c.0.s8 %v10086
  %v10088 = vlaneseq
  %v10089 = vshrl.u32 %v10088, 7
  %v10090 = vsub.s32 %v10087, %v10089
  %v10091 = vrot.slane %v10075, %v10090
  %v10093 = vunpack.c.l.s4 1966171168
  %v10094 = vunpack.c.0.s8 %v10093
  %v10095 = vlaneseq
  %v10096 = vshrl.u32 %v10095, 7
  %v10097 = vsub.s32 %v10094, %v10096
  %v10098 = vrot.slane %v10076, %v10097
  %v10100 = vunpack.c.l.s4 1966171168
  %v10101 = vunpack.c.0.s8 %v10100
  %v10102 = vlaneseq
  %v10103 = vshrl.u32 %v10102, 7
  %v10104 = vsub.s32 %v10101, %v10103
  %v10105 = vrot.slane %v10077, %v10104
  %v10106 = vcombine.high %v10084, %v10084
  %v10107 = vcombine.high %v10091, %v10091
  %v10108 = vcombine.high %v10098, %v10098
  %v10109 = vcombine.high %v10105, %v10105
  %v10110 = vlaneseq
  %v10111 = vshrl.u32 %v10110, 7
  %v10112 = vsub.s32 0, %v10111
  %v10113 = vrot.slane %v10084, %v10112
  %v10114 = vlaneseq
  %v10115 = vshrl.u32 %v10114, 7
  %v10116 = vsub.s32 0, %v10115
  %v10117 = vrot.slane %v10098, %v10116
  %v10118 = vlaneseq
  %v10119 = vshrl.u32 %v10118, 7
  %v10120 = vsub.s32 0, %v10119
  %v10121 = vrot.slane %v10106, %v10120
  %v10122 = vlaneseq
  %v10123 = vshrl.u32 %v10122, 7
  %v10124 = vsub.s32 0, %v10123
  %v10125 = vrot.slane %v10108, %v10124
  %v10126 = vlaneseq
  %v10127 = vshrl.u32 %v10126, 7
  %v10128 = vsub.s32 0, %v10127
  %v10129 = vrot.slane %v10091, %v10128
  %v10130 = vlaneseq
  %v10131 = vshrl.u32 %v10130, 7
  %v10132 = vsub.s32 0, %v10131
  %v10133 = vrot.slane %v10105, %v10132
  %v10134 = vlaneseq
  %v10135 = vshrl.u32 %v10134, 7
  %v10136 = vsub.s32 0, %v10135
  %v10137 = vrot.slane %v10107, %v10136
  %v10138 = vlaneseq
  %v10139 = vshrl.u32 %v10138, 7
  %v10140 = vsub.s32 0, %v10139
  %v10141 = vrot.slane %v10109, %v10140
  %10142 = vset.pattern.permute.xlu0 0
  %10143 = vperm.xlu0 %10142, %v10113
  %v10144 = vpop.permute.xlu0 %10143
  %10146 = vset.pattern.permute.xlu0 0
  %10147 = vperm.xlu0 %10146, %v10117
  %v10148 = vpop.permute.xlu0 %10147
  %10150 = vset.pattern.permute.xlu0 0
  %10151 = vperm.xlu0 %10150, %v10121
  %v10152 = vpop.permute.xlu0 %10151
  %10154 = vset.pattern.permute.xlu0 0
  %10155 = vperm.xlu0 %10154, %v10125
  %v10156 = vpop.permute.xlu0 %10155
  %10158 = vset.pattern.permute.xlu0 0
  %10159 = vperm.xlu0 %10158, %v10129
  %v10160 = vpop.permute.xlu0 %10159
  %10162 = vset.pattern.permute.xlu0 0
  %10163 = vperm.xlu0 %10162, %v10133
  %v10164 = vpop.permute.xlu0 %10163
  %10166 = vset.pattern.permute.xlu0 0
  %10167 = vperm.xlu0 %10166, %v10137
  %v10168 = vpop.permute.xlu0 %10167
  %10170 = vset.pattern.permute.xlu0 0
  %10171 = vperm.xlu0 %10170, %v10141
  %v10172 = vpop.permute.xlu0 %10171
  %v10174 = vmul.f32 %v10144, %v38
  %v10175 = vmul.f32 %v10144, %v39
  %v10176 = vmul.f32 %v10144, %v40
  %v10177 = vmul.f32 %v10144, %v41
  %v10178 = vmul.f32 %v10148, %v38
  %v10179 = vmul.f32 %v10148, %v39
  %v10180 = vmul.f32 %v10148, %v40
  %v10181 = vmul.f32 %v10148, %v41
  %v10182 = vmul.f32 %v10152, %v38
  %v10183 = vmul.f32 %v10152, %v39
  %v10184 = vmul.f32 %v10152, %v40
  %v10185 = vmul.f32 %v10152, %v41
  %v10186 = vmul.f32 %v10156, %v38
  %v10187 = vmul.f32 %v10156, %v39
  %v10188 = vmul.f32 %v10156, %v40
  %v10189 = vmul.f32 %v10156, %v41
  %v10190 = vmul.f32 %v10160, %v38
  %v10191 = vmul.f32 %v10160, %v39
  %v10192 = vmul.f32 %v10160, %v40
  %v10193 = vmul.f32 %v10160, %v41
  %v10194 = vmul.f32 %v10164, %v38
  %v10195 = vmul.f32 %v10164, %v39
  %v10196 = vmul.f32 %v10164, %v40
  %v10197 = vmul.f32 %v10164, %v41
  %v10198 = vmul.f32 %v10168, %v38
  %v10199 = vmul.f32 %v10168, %v39
  %v10200 = vmul.f32 %v10168, %v40
  %v10201 = vmul.f32 %v10168, %v41
  %v10202 = vmul.f32 %v10172, %v38
  %v10203 = vmul.f32 %v10172, %v39
  %v10204 = vmul.f32 %v10172, %v40
  %v10205 = vmul.f32 %v10172, %v41
  %10238 = vrot.lane.b32.xlu0 %v10174, 127
  %v10239 = vpop.permute.xlu0 %10238
  %10240 = vrot.lane.b32.xlu0 %v10175, 127
  %v10241 = vpop.permute.xlu0 %10240
  %10242 = vrot.lane.b32.xlu0 %v10176, 127
  %v10243 = vpop.permute.xlu0 %10242
  %10244 = vrot.lane.b32.xlu0 %v10177, 127
  %v10245 = vpop.permute.xlu0 %10244
  %10246 = vrot.lane.b32.xlu0 %v10178, 127
  %v10247 = vpop.permute.xlu0 %10246
  %10248 = vrot.lane.b32.xlu0 %v10179, 127
  %v10249 = vpop.permute.xlu0 %10248
  %10250 = vrot.lane.b32.xlu0 %v10180, 127
  %v10251 = vpop.permute.xlu0 %10250
  %10252 = vrot.lane.b32.xlu0 %v10181, 127
  %v10253 = vpop.permute.xlu0 %10252
  %10254 = vrot.lane.b32.xlu0 %v10182, 127
  %v10255 = vpop.permute.xlu0 %10254
  %10256 = vrot.lane.b32.xlu0 %v10183, 127
  %v10257 = vpop.permute.xlu0 %10256
  %10258 = vrot.lane.b32.xlu0 %v10184, 127
  %v10259 = vpop.permute.xlu0 %10258
  %10260 = vrot.lane.b32.xlu0 %v10185, 127
  %v10261 = vpop.permute.xlu0 %10260
  %10262 = vrot.lane.b32.xlu0 %v10186, 127
  %v10263 = vpop.permute.xlu0 %10262
  %10264 = vrot.lane.b32.xlu0 %v10187, 127
  %v10265 = vpop.permute.xlu0 %10264
  %10266 = vrot.lane.b32.xlu0 %v10188, 127
  %v10267 = vpop.permute.xlu0 %10266
  %10268 = vrot.lane.b32.xlu0 %v10189, 127
  %v10269 = vpop.permute.xlu0 %10268
  %10270 = vrot.lane.b32.xlu0 %v10190, 127
  %v10271 = vpop.permute.xlu0 %10270
  %10272 = vrot.lane.b32.xlu0 %v10191, 127
  %v10273 = vpop.permute.xlu0 %10272
  %10274 = vrot.lane.b32.xlu0 %v10192, 127
  %v10275 = vpop.permute.xlu0 %10274
  %10276 = vrot.lane.b32.xlu0 %v10193, 127
  %v10277 = vpop.permute.xlu0 %10276
  %10278 = vrot.lane.b32.xlu0 %v10194, 127
  %v10279 = vpop.permute.xlu0 %10278
  %10280 = vrot.lane.b32.xlu0 %v10195, 127
  %v10281 = vpop.permute.xlu0 %10280
  %10282 = vrot.lane.b32.xlu0 %v10196, 127
  %v10283 = vpop.permute.xlu0 %10282
  %10284 = vrot.lane.b32.xlu0 %v10197, 127
  %v10285 = vpop.permute.xlu0 %10284
  %10286 = vrot.lane.b32.xlu0 %v10198, 127
  %v10287 = vpop.permute.xlu0 %10286
  %10288 = vrot.lane.b32.xlu0 %v10199, 127
  %v10289 = vpop.permute.xlu0 %10288
  %10290 = vrot.lane.b32.xlu0 %v10200, 127
  %v10291 = vpop.permute.xlu0 %10290
  %10292 = vrot.lane.b32.xlu0 %v10201, 127
  %v10293 = vpop.permute.xlu0 %10292
  %10294 = vrot.lane.b32.xlu0 %v10202, 127
  %v10295 = vpop.permute.xlu0 %10294
  %10296 = vrot.lane.b32.xlu0 %v10203, 127
  %v10297 = vpop.permute.xlu0 %10296
  %10298 = vrot.lane.b32.xlu0 %v10204, 127
  %v10299 = vpop.permute.xlu0 %10298
  %10300 = vrot.lane.b32.xlu0 %v10205, 127
  %v10301 = vpop.permute.xlu0 %10300
  %v10302 = vsel %vm500, %v10239, %v10241
  %v10303 = vsel %vm500, %v10243, %v10245
  %v10304 = vsel %vm500, %v10247, %v10249
  %v10305 = vsel %vm500, %v10251, %v10253
  %v10306 = vsel %vm500, %v10255, %v10257
  %v10307 = vsel %vm500, %v10259, %v10261
  %v10308 = vsel %vm500, %v10263, %v10265
  %v10309 = vsel %vm500, %v10267, %v10269
  %v10310 = vsel %vm500, %v10271, %v10273
  %v10311 = vsel %vm500, %v10275, %v10277
  %v10312 = vsel %vm500, %v10279, %v10281
  %v10313 = vsel %vm500, %v10283, %v10285
  %v10314 = vsel %vm500, %v10287, %v10289
  %v10315 = vsel %vm500, %v10291, %v10293
  %v10316 = vsel %vm500, %v10295, %v10297
  %v10317 = vsel %vm500, %v10299, %v10301
  %v10350 = vadd.f32 %v10028, %v10302
  %v10351 = vadd.f32 %v10029, %v10241
  %v10352 = vadd.f32 %v10030, %v10303
  %v10353 = vadd.f32 %v10031, %v10245
  %v10354 = vadd.f32 %v10032, %v10304
  %v10355 = vadd.f32 %v10033, %v10249
  %v10356 = vadd.f32 %v10034, %v10305
  %v10357 = vadd.f32 %v10035, %v10253
  %v10358 = vadd.f32 %v10036, %v10306
  %v10359 = vadd.f32 %v10037, %v10257
  %v10360 = vadd.f32 %v10038, %v10307
  %v10361 = vadd.f32 %v10039, %v10261
  %v10362 = vadd.f32 %v10040, %v10308
  %v10363 = vadd.f32 %v10041, %v10265
  %v10364 = vadd.f32 %v10042, %v10309
  %v10365 = vadd.f32 %v10043, %v10269
  %v10366 = vadd.f32 %v10044, %v10310
  %v10367 = vadd.f32 %v10045, %v10273
  %v10368 = vadd.f32 %v10046, %v10311
  %v10369 = vadd.f32 %v10047, %v10277
  %v10370 = vadd.f32 %v10048, %v10312
  %v10371 = vadd.f32 %v10049, %v10281
  %v10372 = vadd.f32 %v10050, %v10313
  %v10373 = vadd.f32 %v10051, %v10285
  %v10374 = vadd.f32 %v10052, %v10314
  %v10375 = vadd.f32 %v10053, %v10289
  %v10376 = vadd.f32 %v10054, %v10315
  %v10377 = vadd.f32 %v10055, %v10293
  %v10378 = vadd.f32 %v10056, %v10316
  %v10379 = vadd.f32 %v10057, %v10297
  %v10380 = vadd.f32 %v10058, %v10317
  %v10381 = vadd.f32 %v10059, %v10301
  %v10383 = vcombine.high %v73, %v73
  %v10385 = vunpack.c.l.s4 1966171168
  %v10386 = vunpack.c.0.s8 %v10385
  %v10387 = vlaneseq
  %v10388 = vshrl.u32 %v10387, 7
  %v10389 = vsub.s32 %v10386, %v10388
  %v10390 = vrot.slane %v73, %v10389
  %v10392 = vunpack.c.l.s4 1966171168
  %v10393 = vunpack.c.0.s8 %v10392
  %v10394 = vlaneseq
  %v10395 = vshrl.u32 %v10394, 7
  %v10396 = vsub.s32 %v10393, %v10395
  %v10397 = vrot.slane %v10383, %v10396
  %v10398 = vcombine.high %v10390, %v10390
  %v10399 = vcombine.high %v10397, %v10397
  %v10401 = vunpack.c.l.s4 1966171168
  %v10402 = vunpack.c.0.s8 %v10401
  %v10403 = vlaneseq
  %v10404 = vshrl.u32 %v10403, 7
  %v10405 = vsub.s32 %v10402, %v10404
  %v10406 = vrot.slane %v10390, %v10405
  %v10408 = vunpack.c.l.s4 1966171168
  %v10409 = vunpack.c.0.s8 %v10408
  %v10410 = vlaneseq
  %v10411 = vshrl.u32 %v10410, 7
  %v10412 = vsub.s32 %v10409, %v10411
  %v10413 = vrot.slane %v10397, %v10412
  %v10415 = vunpack.c.l.s4 1966171168
  %v10416 = vunpack.c.0.s8 %v10415
  %v10417 = vlaneseq
  %v10418 = vshrl.u32 %v10417, 7
  %v10419 = vsub.s32 %v10416, %v10418
  %v10420 = vrot.slane %v10398, %v10419
  %v10422 = vunpack.c.l.s4 1966171168
  %v10423 = vunpack.c.0.s8 %v10422
  %v10424 = vlaneseq
  %v10425 = vshrl.u32 %v10424, 7
  %v10426 = vsub.s32 %v10423, %v10425
  %v10427 = vrot.slane %v10399, %v10426
  %v10428 = vcombine.high %v10406, %v10406
  %v10429 = vcombine.high %v10413, %v10413
  %v10430 = vcombine.high %v10420, %v10420
  %v10431 = vcombine.high %v10427, %v10427
  %v10432 = vlaneseq
  %v10433 = vshrl.u32 %v10432, 7
  %v10434 = vsub.s32 0, %v10433
  %v10435 = vrot.slane %v10406, %v10434
  %v10436 = vlaneseq
  %v10437 = vshrl.u32 %v10436, 7
  %v10438 = vsub.s32 0, %v10437
  %v10439 = vrot.slane %v10420, %v10438
  %v10440 = vlaneseq
  %v10441 = vshrl.u32 %v10440, 7
  %v10442 = vsub.s32 0, %v10441
  %v10443 = vrot.slane %v10428, %v10442
  %v10444 = vlaneseq
  %v10445 = vshrl.u32 %v10444, 7
  %v10446 = vsub.s32 0, %v10445
  %v10447 = vrot.slane %v10430, %v10446
  %v10448 = vlaneseq
  %v10449 = vshrl.u32 %v10448, 7
  %v10450 = vsub.s32 0, %v10449
  %v10451 = vrot.slane %v10413, %v10450
  %v10452 = vlaneseq
  %v10453 = vshrl.u32 %v10452, 7
  %v10454 = vsub.s32 0, %v10453
  %v10455 = vrot.slane %v10427, %v10454
  %v10456 = vlaneseq
  %v10457 = vshrl.u32 %v10456, 7
  %v10458 = vsub.s32 0, %v10457
  %v10459 = vrot.slane %v10429, %v10458
  %v10460 = vlaneseq
  %v10461 = vshrl.u32 %v10460, 7
  %v10462 = vsub.s32 0, %v10461
  %v10463 = vrot.slane %v10431, %v10462
  %10464 = vset.pattern.permute.xlu0 0
  %10465 = vperm.xlu0 %10464, %v10435
  %v10466 = vpop.permute.xlu0 %10465
  %10468 = vset.pattern.permute.xlu0 0
  %10469 = vperm.xlu0 %10468, %v10439
  %v10470 = vpop.permute.xlu0 %10469
  %10472 = vset.pattern.permute.xlu0 0
  %10473 = vperm.xlu0 %10472, %v10443
  %v10474 = vpop.permute.xlu0 %10473
  %10476 = vset.pattern.permute.xlu0 0
  %10477 = vperm.xlu0 %10476, %v10447
  %v10478 = vpop.permute.xlu0 %10477
  %10480 = vset.pattern.permute.xlu0 0
  %10481 = vperm.xlu0 %10480, %v10451
  %v10482 = vpop.permute.xlu0 %10481
  %10484 = vset.pattern.permute.xlu0 0
  %10485 = vperm.xlu0 %10484, %v10455
  %v10486 = vpop.permute.xlu0 %10485
  %10488 = vset.pattern.permute.xlu0 0
  %10489 = vperm.xlu0 %10488, %v10459
  %v10490 = vpop.permute.xlu0 %10489
  %10492 = vset.pattern.permute.xlu0 0
  %10493 = vperm.xlu0 %10492, %v10463
  %v10494 = vpop.permute.xlu0 %10493
  %v10496 = vmul.f32 %v10466, %v38
  %v10497 = vmul.f32 %v10466, %v39
  %v10498 = vmul.f32 %v10466, %v40
  %v10499 = vmul.f32 %v10466, %v41
  %v10500 = vmul.f32 %v10470, %v38
  %v10501 = vmul.f32 %v10470, %v39
  %v10502 = vmul.f32 %v10470, %v40
  %v10503 = vmul.f32 %v10470, %v41
  %v10504 = vmul.f32 %v10474, %v38
  %v10505 = vmul.f32 %v10474, %v39
  %v10506 = vmul.f32 %v10474, %v40
  %v10507 = vmul.f32 %v10474, %v41
  %v10508 = vmul.f32 %v10478, %v38
  %v10509 = vmul.f32 %v10478, %v39
  %v10510 = vmul.f32 %v10478, %v40
  %v10511 = vmul.f32 %v10478, %v41
  %v10512 = vmul.f32 %v10482, %v38
  %v10513 = vmul.f32 %v10482, %v39
  %v10514 = vmul.f32 %v10482, %v40
  %v10515 = vmul.f32 %v10482, %v41
  %v10516 = vmul.f32 %v10486, %v38
  %v10517 = vmul.f32 %v10486, %v39
  %v10518 = vmul.f32 %v10486, %v40
  %v10519 = vmul.f32 %v10486, %v41
  %v10520 = vmul.f32 %v10490, %v38
  %v10521 = vmul.f32 %v10490, %v39
  %v10522 = vmul.f32 %v10490, %v40
  %v10523 = vmul.f32 %v10490, %v41
  %v10524 = vmul.f32 %v10494, %v38
  %v10525 = vmul.f32 %v10494, %v39
  %v10526 = vmul.f32 %v10494, %v40
  %v10527 = vmul.f32 %v10494, %v41
  %10560 = vrot.lane.b32.xlu0 %v10496, 126
  %v10561 = vpop.permute.xlu0 %10560
  %10562 = vrot.lane.b32.xlu0 %v10497, 126
  %v10563 = vpop.permute.xlu0 %10562
  %10564 = vrot.lane.b32.xlu0 %v10498, 126
  %v10565 = vpop.permute.xlu0 %10564
  %10566 = vrot.lane.b32.xlu0 %v10499, 126
  %v10567 = vpop.permute.xlu0 %10566
  %10568 = vrot.lane.b32.xlu0 %v10500, 126
  %v10569 = vpop.permute.xlu0 %10568
  %10570 = vrot.lane.b32.xlu0 %v10501, 126
  %v10571 = vpop.permute.xlu0 %10570
  %10572 = vrot.lane.b32.xlu0 %v10502, 126
  %v10573 = vpop.permute.xlu0 %10572
  %10574 = vrot.lane.b32.xlu0 %v10503, 126
  %v10575 = vpop.permute.xlu0 %10574
  %10576 = vrot.lane.b32.xlu0 %v10504, 126
  %v10577 = vpop.permute.xlu0 %10576
  %10578 = vrot.lane.b32.xlu0 %v10505, 126
  %v10579 = vpop.permute.xlu0 %10578
  %10580 = vrot.lane.b32.xlu0 %v10506, 126
  %v10581 = vpop.permute.xlu0 %10580
  %10582 = vrot.lane.b32.xlu0 %v10507, 126
  %v10583 = vpop.permute.xlu0 %10582
  %10584 = vrot.lane.b32.xlu0 %v10508, 126
  %v10585 = vpop.permute.xlu0 %10584
  %10586 = vrot.lane.b32.xlu0 %v10509, 126
  %v10587 = vpop.permute.xlu0 %10586
  %10588 = vrot.lane.b32.xlu0 %v10510, 126
  %v10589 = vpop.permute.xlu0 %10588
  %10590 = vrot.lane.b32.xlu0 %v10511, 126
  %v10591 = vpop.permute.xlu0 %10590
  %10592 = vrot.lane.b32.xlu0 %v10512, 126
  %v10593 = vpop.permute.xlu0 %10592
  %10594 = vrot.lane.b32.xlu0 %v10513, 126
  %v10595 = vpop.permute.xlu0 %10594
  %10596 = vrot.lane.b32.xlu0 %v10514, 126
  %v10597 = vpop.permute.xlu0 %10596
  %10598 = vrot.lane.b32.xlu0 %v10515, 126
  %v10599 = vpop.permute.xlu0 %10598
  %10600 = vrot.lane.b32.xlu0 %v10516, 126
  %v10601 = vpop.permute.xlu0 %10600
  %10602 = vrot.lane.b32.xlu0 %v10517, 126
  %v10603 = vpop.permute.xlu0 %10602
  %10604 = vrot.lane.b32.xlu0 %v10518, 126
  %v10605 = vpop.permute.xlu0 %10604
  %10606 = vrot.lane.b32.xlu0 %v10519, 126
  %v10607 = vpop.permute.xlu0 %10606
  %10608 = vrot.lane.b32.xlu0 %v10520, 126
  %v10609 = vpop.permute.xlu0 %10608
  %10610 = vrot.lane.b32.xlu0 %v10521, 126
  %v10611 = vpop.permute.xlu0 %10610
  %10612 = vrot.lane.b32.xlu0 %v10522, 126
  %v10613 = vpop.permute.xlu0 %10612
  %10614 = vrot.lane.b32.xlu0 %v10523, 126
  %v10615 = vpop.permute.xlu0 %10614
  %10616 = vrot.lane.b32.xlu0 %v10524, 126
  %v10617 = vpop.permute.xlu0 %10616
  %10618 = vrot.lane.b32.xlu0 %v10525, 126
  %v10619 = vpop.permute.xlu0 %10618
  %10620 = vrot.lane.b32.xlu0 %v10526, 126
  %v10621 = vpop.permute.xlu0 %10620
  %10622 = vrot.lane.b32.xlu0 %v10527, 126
  %v10623 = vpop.permute.xlu0 %10622
  %v10624 = vsel %vm823, %v10561, %v10563
  %v10625 = vsel %vm823, %v10565, %v10567
  %v10626 = vsel %vm823, %v10569, %v10571
  %v10627 = vsel %vm823, %v10573, %v10575
  %v10628 = vsel %vm823, %v10577, %v10579
  %v10629 = vsel %vm823, %v10581, %v10583
  %v10630 = vsel %vm823, %v10585, %v10587
  %v10631 = vsel %vm823, %v10589, %v10591
  %v10632 = vsel %vm823, %v10593, %v10595
  %v10633 = vsel %vm823, %v10597, %v10599
  %v10634 = vsel %vm823, %v10601, %v10603
  %v10635 = vsel %vm823, %v10605, %v10607
  %v10636 = vsel %vm823, %v10609, %v10611
  %v10637 = vsel %vm823, %v10613, %v10615
  %v10638 = vsel %vm823, %v10617, %v10619
  %v10639 = vsel %vm823, %v10621, %v10623
  %v10672 = vadd.f32 %v10350, %v10624
  %v10673 = vadd.f32 %v10351, %v10563
  %v10674 = vadd.f32 %v10352, %v10625
  %v10675 = vadd.f32 %v10353, %v10567
  %v10676 = vadd.f32 %v10354, %v10626
  %v10677 = vadd.f32 %v10355, %v10571
  %v10678 = vadd.f32 %v10356, %v10627
  %v10679 = vadd.f32 %v10357, %v10575
  %v10680 = vadd.f32 %v10358, %v10628
  %v10681 = vadd.f32 %v10359, %v10579
  %v10682 = vadd.f32 %v10360, %v10629
  %v10683 = vadd.f32 %v10361, %v10583
  %v10684 = vadd.f32 %v10362, %v10630
  %v10685 = vadd.f32 %v10363, %v10587
  %v10686 = vadd.f32 %v10364, %v10631
  %v10687 = vadd.f32 %v10365, %v10591
  %v10688 = vadd.f32 %v10366, %v10632
  %v10689 = vadd.f32 %v10367, %v10595
  %v10690 = vadd.f32 %v10368, %v10633
  %v10691 = vadd.f32 %v10369, %v10599
  %v10692 = vadd.f32 %v10370, %v10634
  %v10693 = vadd.f32 %v10371, %v10603
  %v10694 = vadd.f32 %v10372, %v10635
  %v10695 = vadd.f32 %v10373, %v10607
  %v10696 = vadd.f32 %v10374, %v10636
  %v10697 = vadd.f32 %v10375, %v10611
  %v10698 = vadd.f32 %v10376, %v10637
  %v10699 = vadd.f32 %v10377, %v10615
  %v10700 = vadd.f32 %v10378, %v10638
  %v10701 = vadd.f32 %v10379, %v10619
  %v10702 = vadd.f32 %v10380, %v10639
  %v10703 = vadd.f32 %v10381, %v10623
  %v10705 = vcombine.high %v74, %v74
  %v10707 = vunpack.c.l.s4 1966171168
  %v10708 = vunpack.c.0.s8 %v10707
  %v10709 = vlaneseq
  %v10710 = vshrl.u32 %v10709, 7
  %v10711 = vsub.s32 %v10708, %v10710
  %v10712 = vrot.slane %v74, %v10711
  %v10714 = vunpack.c.l.s4 1966171168
  %v10715 = vunpack.c.0.s8 %v10714
  %v10716 = vlaneseq
  %v10717 = vshrl.u32 %v10716, 7
  %v10718 = vsub.s32 %v10715, %v10717
  %v10719 = vrot.slane %v10705, %v10718
  %v10720 = vcombine.high %v10712, %v10712
  %v10721 = vcombine.high %v10719, %v10719
  %v10723 = vunpack.c.l.s4 1966171168
  %v10724 = vunpack.c.0.s8 %v10723
  %v10725 = vlaneseq
  %v10726 = vshrl.u32 %v10725, 7
  %v10727 = vsub.s32 %v10724, %v10726
  %v10728 = vrot.slane %v10712, %v10727
  %v10730 = vunpack.c.l.s4 1966171168
  %v10731 = vunpack.c.0.s8 %v10730
  %v10732 = vlaneseq
  %v10733 = vshrl.u32 %v10732, 7
  %v10734 = vsub.s32 %v10731, %v10733
  %v10735 = vrot.slane %v10719, %v10734
  %v10737 = vunpack.c.l.s4 1966171168
  %v10738 = vunpack.c.0.s8 %v10737
  %v10739 = vlaneseq
  %v10740 = vshrl.u32 %v10739, 7
  %v10741 = vsub.s32 %v10738, %v10740
  %v10742 = vrot.slane %v10720, %v10741
  %v10744 = vunpack.c.l.s4 1966171168
  %v10745 = vunpack.c.0.s8 %v10744
  %v10746 = vlaneseq
  %v10747 = vshrl.u32 %v10746, 7
  %v10748 = vsub.s32 %v10745, %v10747
  %v10749 = vrot.slane %v10721, %v10748
  %v10750 = vcombine.high %v10728, %v10728
  %v10751 = vcombine.high %v10735, %v10735
  %v10752 = vcombine.high %v10742, %v10742
  %v10753 = vcombine.high %v10749, %v10749
  %v10754 = vlaneseq
  %v10755 = vshrl.u32 %v10754, 7
  %v10756 = vsub.s32 0, %v10755
  %v10757 = vrot.slane %v10728, %v10756
  %v10758 = vlaneseq
  %v10759 = vshrl.u32 %v10758, 7
  %v10760 = vsub.s32 0, %v10759
  %v10761 = vrot.slane %v10742, %v10760
  %v10762 = vlaneseq
  %v10763 = vshrl.u32 %v10762, 7
  %v10764 = vsub.s32 0, %v10763
  %v10765 = vrot.slane %v10750, %v10764
  %v10766 = vlaneseq
  %v10767 = vshrl.u32 %v10766, 7
  %v10768 = vsub.s32 0, %v10767
  %v10769 = vrot.slane %v10752, %v10768
  %v10770 = vlaneseq
  %v10771 = vshrl.u32 %v10770, 7
  %v10772 = vsub.s32 0, %v10771
  %v10773 = vrot.slane %v10735, %v10772
  %v10774 = vlaneseq
  %v10775 = vshrl.u32 %v10774, 7
  %v10776 = vsub.s32 0, %v10775
  %v10777 = vrot.slane %v10749, %v10776
  %v10778 = vlaneseq
  %v10779 = vshrl.u32 %v10778, 7
  %v10780 = vsub.s32 0, %v10779
  %v10781 = vrot.slane %v10751, %v10780
  %v10782 = vlaneseq
  %v10783 = vshrl.u32 %v10782, 7
  %v10784 = vsub.s32 0, %v10783
  %v10785 = vrot.slane %v10753, %v10784
  %10786 = vset.pattern.permute.xlu0 0
  %10787 = vperm.xlu0 %10786, %v10757
  %v10788 = vpop.permute.xlu0 %10787
  %10790 = vset.pattern.permute.xlu0 0
  %10791 = vperm.xlu0 %10790, %v10761
  %v10792 = vpop.permute.xlu0 %10791
  %10794 = vset.pattern.permute.xlu0 0
  %10795 = vperm.xlu0 %10794, %v10765
  %v10796 = vpop.permute.xlu0 %10795
  %10798 = vset.pattern.permute.xlu0 0
  %10799 = vperm.xlu0 %10798, %v10769
  %v10800 = vpop.permute.xlu0 %10799
  %10802 = vset.pattern.permute.xlu0 0
  %10803 = vperm.xlu0 %10802, %v10773
  %v10804 = vpop.permute.xlu0 %10803
  %10806 = vset.pattern.permute.xlu0 0
  %10807 = vperm.xlu0 %10806, %v10777
  %v10808 = vpop.permute.xlu0 %10807
  %10810 = vset.pattern.permute.xlu0 0
  %10811 = vperm.xlu0 %10810, %v10781
  %v10812 = vpop.permute.xlu0 %10811
  %10814 = vset.pattern.permute.xlu0 0
  %10815 = vperm.xlu0 %10814, %v10785
  %v10816 = vpop.permute.xlu0 %10815
  %v10818 = vmul.f32 %v10788, %v38
  %v10819 = vmul.f32 %v10788, %v39
  %v10820 = vmul.f32 %v10788, %v40
  %v10821 = vmul.f32 %v10788, %v41
  %v10822 = vmul.f32 %v10788, %v42
  %v10823 = vmul.f32 %v10788, %v43
  %v10824 = vmul.f32 %v10792, %v38
  %v10825 = vmul.f32 %v10792, %v39
  %v10826 = vmul.f32 %v10792, %v40
  %v10827 = vmul.f32 %v10792, %v41
  %v10828 = vmul.f32 %v10792, %v42
  %v10829 = vmul.f32 %v10792, %v43
  %v10830 = vmul.f32 %v10796, %v38
  %v10831 = vmul.f32 %v10796, %v39
  %v10832 = vmul.f32 %v10796, %v40
  %v10833 = vmul.f32 %v10796, %v41
  %v10834 = vmul.f32 %v10796, %v42
  %v10835 = vmul.f32 %v10796, %v43
  %v10836 = vmul.f32 %v10800, %v38
  %v10837 = vmul.f32 %v10800, %v39
  %v10838 = vmul.f32 %v10800, %v40
  %v10839 = vmul.f32 %v10800, %v41
  %v10840 = vmul.f32 %v10800, %v42
  %v10841 = vmul.f32 %v10800, %v43
  %v10842 = vmul.f32 %v10804, %v38
  %v10843 = vmul.f32 %v10804, %v39
  %v10844 = vmul.f32 %v10804, %v40
  %v10845 = vmul.f32 %v10804, %v41
  %v10846 = vmul.f32 %v10804, %v42
  %v10847 = vmul.f32 %v10804, %v43
  %v10848 = vmul.f32 %v10808, %v38
  %v10849 = vmul.f32 %v10808, %v39
  %v10850 = vmul.f32 %v10808, %v40
  %v10851 = vmul.f32 %v10808, %v41
  %v10852 = vmul.f32 %v10808, %v42
  %v10853 = vmul.f32 %v10808, %v43
  %v10854 = vmul.f32 %v10812, %v38
  %v10855 = vmul.f32 %v10812, %v39
  %v10856 = vmul.f32 %v10812, %v40
  %v10857 = vmul.f32 %v10812, %v41
  %v10858 = vmul.f32 %v10812, %v42
  %v10859 = vmul.f32 %v10812, %v43
  %v10860 = vmul.f32 %v10816, %v38
  %v10861 = vmul.f32 %v10816, %v39
  %v10862 = vmul.f32 %v10816, %v40
  %v10863 = vmul.f32 %v10816, %v41
  %v10864 = vmul.f32 %v10816, %v42
  %v10865 = vmul.f32 %v10816, %v43
  %v10914 = vrot.slane %v10818, 1
  %v10915 = vrot.slane %v10820, 1
  %v10916 = vsel %vm1114, %v10914, %v10915
  %v10917 = vrot.slane %v10819, 1
  %v10918 = vrot.slane %v10821, 1
  %v10919 = vsel %vm1114, %v10917, %v10918
  %v10920 = vrot.slane %v10822, 1
  %v10921 = vsel %vm1114, %v10915, %v10920
  %v10922 = vrot.slane %v10823, 1
  %v10923 = vsel %vm1114, %v10918, %v10922
  %v10924 = vrot.slane %v10824, 1
  %v10925 = vrot.slane %v10826, 1
  %v10926 = vsel %vm1114, %v10924, %v10925
  %v10927 = vrot.slane %v10825, 1
  %v10928 = vrot.slane %v10827, 1
  %v10929 = vsel %vm1114, %v10927, %v10928
  %v10930 = vrot.slane %v10828, 1
  %v10931 = vsel %vm1114, %v10925, %v10930
  %v10932 = vrot.slane %v10829, 1
  %v10933 = vsel %vm1114, %v10928, %v10932
  %v10934 = vrot.slane %v10830, 1
  %v10935 = vrot.slane %v10832, 1
  %v10936 = vsel %vm1114, %v10934, %v10935
  %v10937 = vrot.slane %v10831, 1
  %v10938 = vrot.slane %v10833, 1
  %v10939 = vsel %vm1114, %v10937, %v10938
  %v10940 = vrot.slane %v10834, 1
  %v10941 = vsel %vm1114, %v10935, %v10940
  %v10942 = vrot.slane %v10835, 1
  %v10943 = vsel %vm1114, %v10938, %v10942
  %v10944 = vrot.slane %v10836, 1
  %v10945 = vrot.slane %v10838, 1
  %v10946 = vsel %vm1114, %v10944, %v10945
  %v10947 = vrot.slane %v10837, 1
  %v10948 = vrot.slane %v10839, 1
  %v10949 = vsel %vm1114, %v10947, %v10948
  %v10950 = vrot.slane %v10840, 1
  %v10951 = vsel %vm1114, %v10945, %v10950
  %v10952 = vrot.slane %v10841, 1
  %v10953 = vsel %vm1114, %v10948, %v10952
  %v10954 = vrot.slane %v10842, 1
  %v10955 = vrot.slane %v10844, 1
  %v10956 = vsel %vm1114, %v10954, %v10955
  %v10957 = vrot.slane %v10843, 1
  %v10958 = vrot.slane %v10845, 1
  %v10959 = vsel %vm1114, %v10957, %v10958
  %v10960 = vrot.slane %v10846, 1
  %v10961 = vsel %vm1114, %v10955, %v10960
  %v10962 = vrot.slane %v10847, 1
  %v10963 = vsel %vm1114, %v10958, %v10962
  %v10964 = vrot.slane %v10848, 1
  %v10965 = vrot.slane %v10850, 1
  %v10966 = vsel %vm1114, %v10964, %v10965
  %v10967 = vrot.slane %v10849, 1
  %v10968 = vrot.slane %v10851, 1
  %v10969 = vsel %vm1114, %v10967, %v10968
  %v10970 = vrot.slane %v10852, 1
  %v10971 = vsel %vm1114, %v10965, %v10970
  %v10972 = vrot.slane %v10853, 1
  %v10973 = vsel %vm1114, %v10968, %v10972
  %v10974 = vrot.slane %v10854, 1
  %v10975 = vrot.slane %v10856, 1
  %v10976 = vsel %vm1114, %v10974, %v10975
  %v10977 = vrot.slane %v10855, 1
  %v10978 = vrot.slane %v10857, 1
  %v10979 = vsel %vm1114, %v10977, %v10978
  %v10980 = vrot.slane %v10858, 1
  %v10981 = vsel %vm1114, %v10975, %v10980
  %v10982 = vrot.slane %v10859, 1
  %v10983 = vsel %vm1114, %v10978, %v10982
  %v10984 = vrot.slane %v10860, 1
  %v10985 = vrot.slane %v10862, 1
  %v10986 = vsel %vm1114, %v10984, %v10985
  %v10987 = vrot.slane %v10861, 1
  %v10988 = vrot.slane %v10863, 1
  %v10989 = vsel %vm1114, %v10987, %v10988
  %v10990 = vrot.slane %v10864, 1
  %v10991 = vsel %vm1114, %v10985, %v10990
  %v10992 = vrot.slane %v10865, 1
  %v10993 = vsel %vm1114, %v10988, %v10992
  %v11026 = vadd.f32 %v10672, %v10916
  %v11027 = vadd.f32 %v10673, %v10919
  %v11028 = vadd.f32 %v10674, %v10921
  %v11029 = vadd.f32 %v10675, %v10923
  %v11030 = vadd.f32 %v10676, %v10926
  %v11031 = vadd.f32 %v10677, %v10929
  %v11032 = vadd.f32 %v10678, %v10931
  %v11033 = vadd.f32 %v10679, %v10933
  %v11034 = vadd.f32 %v10680, %v10936
  %v11035 = vadd.f32 %v10681, %v10939
  %v11036 = vadd.f32 %v10682, %v10941
  %v11037 = vadd.f32 %v10683, %v10943
  %v11038 = vadd.f32 %v10684, %v10946
  %v11039 = vadd.f32 %v10685, %v10949
  %v11040 = vadd.f32 %v10686, %v10951
  %v11041 = vadd.f32 %v10687, %v10953
  %v11042 = vadd.f32 %v10688, %v10956
  %v11043 = vadd.f32 %v10689, %v10959
  %v11044 = vadd.f32 %v10690, %v10961
  %v11045 = vadd.f32 %v10691, %v10963
  %v11046 = vadd.f32 %v10692, %v10966
  %v11047 = vadd.f32 %v10693, %v10969
  %v11048 = vadd.f32 %v10694, %v10971
  %v11049 = vadd.f32 %v10695, %v10973
  %v11050 = vadd.f32 %v10696, %v10976
  %v11051 = vadd.f32 %v10697, %v10979
  %v11052 = vadd.f32 %v10698, %v10981
  %v11053 = vadd.f32 %v10699, %v10983
  %v11054 = vadd.f32 %v10700, %v10986
  %v11055 = vadd.f32 %v10701, %v10989
  %v11056 = vadd.f32 %v10702, %v10991
  %v11057 = vadd.f32 %v10703, %v10993
  %v11059 = vcombine.high %v75, %v75
  %v11061 = vunpack.c.l.s4 1966171168
  %v11062 = vunpack.c.0.s8 %v11061
  %v11063 = vlaneseq
  %v11064 = vshrl.u32 %v11063, 7
  %v11065 = vsub.s32 %v11062, %v11064
  %v11066 = vrot.slane %v75, %v11065
  %v11068 = vunpack.c.l.s4 1966171168
  %v11069 = vunpack.c.0.s8 %v11068
  %v11070 = vlaneseq
  %v11071 = vshrl.u32 %v11070, 7
  %v11072 = vsub.s32 %v11069, %v11071
  %v11073 = vrot.slane %v11059, %v11072
  %v11074 = vcombine.high %v11066, %v11066
  %v11075 = vcombine.high %v11073, %v11073
  %v11077 = vunpack.c.l.s4 1966171168
  %v11078 = vunpack.c.0.s8 %v11077
  %v11079 = vlaneseq
  %v11080 = vshrl.u32 %v11079, 7
  %v11081 = vsub.s32 %v11078, %v11080
  %v11082 = vrot.slane %v11066, %v11081
  %v11084 = vunpack.c.l.s4 1966171168
  %v11085 = vunpack.c.0.s8 %v11084
  %v11086 = vlaneseq
  %v11087 = vshrl.u32 %v11086, 7
  %v11088 = vsub.s32 %v11085, %v11087
  %v11089 = vrot.slane %v11073, %v11088
  %v11091 = vunpack.c.l.s4 1966171168
  %v11092 = vunpack.c.0.s8 %v11091
  %v11093 = vlaneseq
  %v11094 = vshrl.u32 %v11093, 7
  %v11095 = vsub.s32 %v11092, %v11094
  %v11096 = vrot.slane %v11074, %v11095
  %v11098 = vunpack.c.l.s4 1966171168
  %v11099 = vunpack.c.0.s8 %v11098
  %v11100 = vlaneseq
  %v11101 = vshrl.u32 %v11100, 7
  %v11102 = vsub.s32 %v11099, %v11101
  %v11103 = vrot.slane %v11075, %v11102
  %v11104 = vcombine.high %v11082, %v11082
  %v11105 = vcombine.high %v11089, %v11089
  %v11106 = vcombine.high %v11096, %v11096
  %v11107 = vcombine.high %v11103, %v11103
  %v11108 = vlaneseq
  %v11109 = vshrl.u32 %v11108, 7
  %v11110 = vsub.s32 0, %v11109
  %v11111 = vrot.slane %v11082, %v11110
  %v11112 = vlaneseq
  %v11113 = vshrl.u32 %v11112, 7
  %v11114 = vsub.s32 0, %v11113
  %v11115 = vrot.slane %v11096, %v11114
  %v11116 = vlaneseq
  %v11117 = vshrl.u32 %v11116, 7
  %v11118 = vsub.s32 0, %v11117
  %v11119 = vrot.slane %v11104, %v11118
  %v11120 = vlaneseq
  %v11121 = vshrl.u32 %v11120, 7
  %v11122 = vsub.s32 0, %v11121
  %v11123 = vrot.slane %v11106, %v11122
  %v11124 = vlaneseq
  %v11125 = vshrl.u32 %v11124, 7
  %v11126 = vsub.s32 0, %v11125
  %v11127 = vrot.slane %v11089, %v11126
  %v11128 = vlaneseq
  %v11129 = vshrl.u32 %v11128, 7
  %v11130 = vsub.s32 0, %v11129
  %v11131 = vrot.slane %v11103, %v11130
  %v11132 = vlaneseq
  %v11133 = vshrl.u32 %v11132, 7
  %v11134 = vsub.s32 0, %v11133
  %v11135 = vrot.slane %v11105, %v11134
  %v11136 = vlaneseq
  %v11137 = vshrl.u32 %v11136, 7
  %v11138 = vsub.s32 0, %v11137
  %v11139 = vrot.slane %v11107, %v11138
  %11140 = vset.pattern.permute.xlu0 0
  %11141 = vperm.xlu0 %11140, %v11111
  %v11142 = vpop.permute.xlu0 %11141
  %11144 = vset.pattern.permute.xlu0 0
  %11145 = vperm.xlu0 %11144, %v11115
  %v11146 = vpop.permute.xlu0 %11145
  %11148 = vset.pattern.permute.xlu0 0
  %11149 = vperm.xlu0 %11148, %v11119
  %v11150 = vpop.permute.xlu0 %11149
  %11152 = vset.pattern.permute.xlu0 0
  %11153 = vperm.xlu0 %11152, %v11123
  %v11154 = vpop.permute.xlu0 %11153
  %11156 = vset.pattern.permute.xlu0 0
  %11157 = vperm.xlu0 %11156, %v11127
  %v11158 = vpop.permute.xlu0 %11157
  %11160 = vset.pattern.permute.xlu0 0
  %11161 = vperm.xlu0 %11160, %v11131
  %v11162 = vpop.permute.xlu0 %11161
  %11164 = vset.pattern.permute.xlu0 0
  %11165 = vperm.xlu0 %11164, %v11135
  %v11166 = vpop.permute.xlu0 %11165
  %11168 = vset.pattern.permute.xlu0 0
  %11169 = vperm.xlu0 %11168, %v11139
  %v11170 = vpop.permute.xlu0 %11169
  %v11172 = vmul.f32 %v11142, %v38
  %v11173 = vmul.f32 %v11142, %v39
  %v11174 = vmul.f32 %v11142, %v40
  %v11175 = vmul.f32 %v11142, %v41
  %v11176 = vmul.f32 %v11142, %v42
  %v11177 = vmul.f32 %v11142, %v43
  %v11178 = vmul.f32 %v11146, %v38
  %v11179 = vmul.f32 %v11146, %v39
  %v11180 = vmul.f32 %v11146, %v40
  %v11181 = vmul.f32 %v11146, %v41
  %v11182 = vmul.f32 %v11146, %v42
  %v11183 = vmul.f32 %v11146, %v43
  %v11184 = vmul.f32 %v11150, %v38
  %v11185 = vmul.f32 %v11150, %v39
  %v11186 = vmul.f32 %v11150, %v40
  %v11187 = vmul.f32 %v11150, %v41
  %v11188 = vmul.f32 %v11150, %v42
  %v11189 = vmul.f32 %v11150, %v43
  %v11190 = vmul.f32 %v11154, %v38
  %v11191 = vmul.f32 %v11154, %v39
  %v11192 = vmul.f32 %v11154, %v40
  %v11193 = vmul.f32 %v11154, %v41
  %v11194 = vmul.f32 %v11154, %v42
  %v11195 = vmul.f32 %v11154, %v43
  %v11196 = vmul.f32 %v11158, %v38
  %v11197 = vmul.f32 %v11158, %v39
  %v11198 = vmul.f32 %v11158, %v40
  %v11199 = vmul.f32 %v11158, %v41
  %v11200 = vmul.f32 %v11158, %v42
  %v11201 = vmul.f32 %v11158, %v43
  %v11202 = vmul.f32 %v11162, %v38
  %v11203 = vmul.f32 %v11162, %v39
  %v11204 = vmul.f32 %v11162, %v40
  %v11205 = vmul.f32 %v11162, %v41
  %v11206 = vmul.f32 %v11162, %v42
  %v11207 = vmul.f32 %v11162, %v43
  %v11208 = vmul.f32 %v11166, %v38
  %v11209 = vmul.f32 %v11166, %v39
  %v11210 = vmul.f32 %v11166, %v40
  %v11211 = vmul.f32 %v11166, %v41
  %v11212 = vmul.f32 %v11166, %v42
  %v11213 = vmul.f32 %v11166, %v43
  %v11214 = vmul.f32 %v11170, %v38
  %v11215 = vmul.f32 %v11170, %v39
  %v11216 = vmul.f32 %v11170, %v40
  %v11217 = vmul.f32 %v11170, %v41
  %v11218 = vmul.f32 %v11170, %v42
  %v11219 = vmul.f32 %v11170, %v43
  %v11268 = vrot.slane %v11172, 1
  %v11269 = vrot.slane %v11174, 1
  %v11270 = vsel %vm1114, %v11268, %v11269
  %v11271 = vrot.slane %v11173, 1
  %v11272 = vrot.slane %v11175, 1
  %v11273 = vsel %vm1114, %v11271, %v11272
  %v11274 = vrot.slane %v11176, 1
  %v11275 = vsel %vm1114, %v11269, %v11274
  %v11276 = vrot.slane %v11177, 1
  %v11277 = vsel %vm1114, %v11272, %v11276
  %v11278 = vrot.slane %v11178, 1
  %v11279 = vrot.slane %v11180, 1
  %v11280 = vsel %vm1114, %v11278, %v11279
  %v11281 = vrot.slane %v11179, 1
  %v11282 = vrot.slane %v11181, 1
  %v11283 = vsel %vm1114, %v11281, %v11282
  %v11284 = vrot.slane %v11182, 1
  %v11285 = vsel %vm1114, %v11279, %v11284
  %v11286 = vrot.slane %v11183, 1
  %v11287 = vsel %vm1114, %v11282, %v11286
  %v11288 = vrot.slane %v11184, 1
  %v11289 = vrot.slane %v11186, 1
  %v11290 = vsel %vm1114, %v11288, %v11289
  %v11291 = vrot.slane %v11185, 1
  %v11292 = vrot.slane %v11187, 1
  %v11293 = vsel %vm1114, %v11291, %v11292
  %v11294 = vrot.slane %v11188, 1
  %v11295 = vsel %vm1114, %v11289, %v11294
  %v11296 = vrot.slane %v11189, 1
  %v11297 = vsel %vm1114, %v11292, %v11296
  %v11298 = vrot.slane %v11190, 1
  %v11299 = vrot.slane %v11192, 1
  %v11300 = vsel %vm1114, %v11298, %v11299
  %v11301 = vrot.slane %v11191, 1
  %v11302 = vrot.slane %v11193, 1
  %v11303 = vsel %vm1114, %v11301, %v11302
  %v11304 = vrot.slane %v11194, 1
  %v11305 = vsel %vm1114, %v11299, %v11304
  %v11306 = vrot.slane %v11195, 1
  %v11307 = vsel %vm1114, %v11302, %v11306
  %v11308 = vrot.slane %v11196, 1
  %v11309 = vrot.slane %v11198, 1
  %v11310 = vsel %vm1114, %v11308, %v11309
  %v11311 = vrot.slane %v11197, 1
  %v11312 = vrot.slane %v11199, 1
  %v11313 = vsel %vm1114, %v11311, %v11312
  %v11314 = vrot.slane %v11200, 1
  %v11315 = vsel %vm1114, %v11309, %v11314
  %v11316 = vrot.slane %v11201, 1
  %v11317 = vsel %vm1114, %v11312, %v11316
  %v11318 = vrot.slane %v11202, 1
  %v11319 = vrot.slane %v11204, 1
  %v11320 = vsel %vm1114, %v11318, %v11319
  %v11321 = vrot.slane %v11203, 1
  %v11322 = vrot.slane %v11205, 1
  %v11323 = vsel %vm1114, %v11321, %v11322
  %v11324 = vrot.slane %v11206, 1
  %v11325 = vsel %vm1114, %v11319, %v11324
  %v11326 = vrot.slane %v11207, 1
  %v11327 = vsel %vm1114, %v11322, %v11326
  %v11328 = vrot.slane %v11208, 1
  %v11329 = vrot.slane %v11210, 1
  %v11330 = vsel %vm1114, %v11328, %v11329
  %v11331 = vrot.slane %v11209, 1
  %v11332 = vrot.slane %v11211, 1
  %v11333 = vsel %vm1114, %v11331, %v11332
  %v11334 = vrot.slane %v11212, 1
  %v11335 = vsel %vm1114, %v11329, %v11334
  %v11336 = vrot.slane %v11213, 1
  %v11337 = vsel %vm1114, %v11332, %v11336
  %v11338 = vrot.slane %v11214, 1
  %v11339 = vrot.slane %v11216, 1
  %v11340 = vsel %vm1114, %v11338, %v11339
  %v11341 = vrot.slane %v11215, 1
  %v11342 = vrot.slane %v11217, 1
  %v11343 = vsel %vm1114, %v11341, %v11342
  %v11344 = vrot.slane %v11218, 1
  %v11345 = vsel %vm1114, %v11339, %v11344
  %v11346 = vrot.slane %v11219, 1
  %v11347 = vsel %vm1114, %v11342, %v11346
  %11348 = vrot.lane.b32.xlu0 %v11270, 127
  %v11349 = vpop.permute.xlu0 %11348
  %11350 = vrot.lane.b32.xlu0 %v11273, 127
  %v11351 = vpop.permute.xlu0 %11350
  %11352 = vrot.lane.b32.xlu0 %v11275, 127
  %v11353 = vpop.permute.xlu0 %11352
  %11354 = vrot.lane.b32.xlu0 %v11277, 127
  %v11355 = vpop.permute.xlu0 %11354
  %11356 = vrot.lane.b32.xlu0 %v11280, 127
  %v11357 = vpop.permute.xlu0 %11356
  %11358 = vrot.lane.b32.xlu0 %v11283, 127
  %v11359 = vpop.permute.xlu0 %11358
  %11360 = vrot.lane.b32.xlu0 %v11285, 127
  %v11361 = vpop.permute.xlu0 %11360
  %11362 = vrot.lane.b32.xlu0 %v11287, 127
  %v11363 = vpop.permute.xlu0 %11362
  %11364 = vrot.lane.b32.xlu0 %v11290, 127
  %v11365 = vpop.permute.xlu0 %11364
  %11366 = vrot.lane.b32.xlu0 %v11293, 127
  %v11367 = vpop.permute.xlu0 %11366
  %11368 = vrot.lane.b32.xlu0 %v11295, 127
  %v11369 = vpop.permute.xlu0 %11368
  %11370 = vrot.lane.b32.xlu0 %v11297, 127
  %v11371 = vpop.permute.xlu0 %11370
  %11372 = vrot.lane.b32.xlu0 %v11300, 127
  %v11373 = vpop.permute.xlu0 %11372
  %11374 = vrot.lane.b32.xlu0 %v11303, 127
  %v11375 = vpop.permute.xlu0 %11374
  %11376 = vrot.lane.b32.xlu0 %v11305, 127
  %v11377 = vpop.permute.xlu0 %11376
  %11378 = vrot.lane.b32.xlu0 %v11307, 127
  %v11379 = vpop.permute.xlu0 %11378
  %11380 = vrot.lane.b32.xlu0 %v11310, 127
  %v11381 = vpop.permute.xlu0 %11380
  %11382 = vrot.lane.b32.xlu0 %v11313, 127
  %v11383 = vpop.permute.xlu0 %11382
  %11384 = vrot.lane.b32.xlu0 %v11315, 127
  %v11385 = vpop.permute.xlu0 %11384
  %11386 = vrot.lane.b32.xlu0 %v11317, 127
  %v11387 = vpop.permute.xlu0 %11386
  %11388 = vrot.lane.b32.xlu0 %v11320, 127
  %v11389 = vpop.permute.xlu0 %11388
  %11390 = vrot.lane.b32.xlu0 %v11323, 127
  %v11391 = vpop.permute.xlu0 %11390
  %11392 = vrot.lane.b32.xlu0 %v11325, 127
  %v11393 = vpop.permute.xlu0 %11392
  %11394 = vrot.lane.b32.xlu0 %v11327, 127
  %v11395 = vpop.permute.xlu0 %11394
  %11396 = vrot.lane.b32.xlu0 %v11330, 127
  %v11397 = vpop.permute.xlu0 %11396
  %11398 = vrot.lane.b32.xlu0 %v11333, 127
  %v11399 = vpop.permute.xlu0 %11398
  %11400 = vrot.lane.b32.xlu0 %v11335, 127
  %v11401 = vpop.permute.xlu0 %11400
  %11402 = vrot.lane.b32.xlu0 %v11337, 127
  %v11403 = vpop.permute.xlu0 %11402
  %11404 = vrot.lane.b32.xlu0 %v11340, 127
  %v11405 = vpop.permute.xlu0 %11404
  %11406 = vrot.lane.b32.xlu0 %v11343, 127
  %v11407 = vpop.permute.xlu0 %11406
  %11408 = vrot.lane.b32.xlu0 %v11345, 127
  %v11409 = vpop.permute.xlu0 %11408
  %11410 = vrot.lane.b32.xlu0 %v11347, 127
  %v11411 = vpop.permute.xlu0 %11410
  %v11412 = vsel %vm500, %v11349, %v11351
  %v11413 = vsel %vm500, %v11353, %v11355
  %v11414 = vsel %vm500, %v11357, %v11359
  %v11415 = vsel %vm500, %v11361, %v11363
  %v11416 = vsel %vm500, %v11365, %v11367
  %v11417 = vsel %vm500, %v11369, %v11371
  %v11418 = vsel %vm500, %v11373, %v11375
  %v11419 = vsel %vm500, %v11377, %v11379
  %v11420 = vsel %vm500, %v11381, %v11383
  %v11421 = vsel %vm500, %v11385, %v11387
  %v11422 = vsel %vm500, %v11389, %v11391
  %v11423 = vsel %vm500, %v11393, %v11395
  %v11424 = vsel %vm500, %v11397, %v11399
  %v11425 = vsel %vm500, %v11401, %v11403
  %v11426 = vsel %vm500, %v11405, %v11407
  %v11427 = vsel %vm500, %v11409, %v11411
  %v11460 = vadd.f32 %v11026, %v11412
  %v11461 = vadd.f32 %v11027, %v11351
  %v11462 = vadd.f32 %v11028, %v11413
  %v11463 = vadd.f32 %v11029, %v11355
  %v11464 = vadd.f32 %v11030, %v11414
  %v11465 = vadd.f32 %v11031, %v11359
  %v11466 = vadd.f32 %v11032, %v11415
  %v11467 = vadd.f32 %v11033, %v11363
  %v11468 = vadd.f32 %v11034, %v11416
  %v11469 = vadd.f32 %v11035, %v11367
  %v11470 = vadd.f32 %v11036, %v11417
  %v11471 = vadd.f32 %v11037, %v11371
  %v11472 = vadd.f32 %v11038, %v11418
  %v11473 = vadd.f32 %v11039, %v11375
  %v11474 = vadd.f32 %v11040, %v11419
  %v11475 = vadd.f32 %v11041, %v11379
  %v11476 = vadd.f32 %v11042, %v11420
  %v11477 = vadd.f32 %v11043, %v11383
  %v11478 = vadd.f32 %v11044, %v11421
  %v11479 = vadd.f32 %v11045, %v11387
  %v11480 = vadd.f32 %v11046, %v11422
  %v11481 = vadd.f32 %v11047, %v11391
  %v11482 = vadd.f32 %v11048, %v11423
  %v11483 = vadd.f32 %v11049, %v11395
  %v11484 = vadd.f32 %v11050, %v11424
  %v11485 = vadd.f32 %v11051, %v11399
  %v11486 = vadd.f32 %v11052, %v11425
  %v11487 = vadd.f32 %v11053, %v11403
  %v11488 = vadd.f32 %v11054, %v11426
  %v11489 = vadd.f32 %v11055, %v11407
  %v11490 = vadd.f32 %v11056, %v11427
  %v11491 = vadd.f32 %v11057, %v11411
  %v11493 = vcombine.high %v76, %v76
  %v11495 = vunpack.c.l.s4 1966171168
  %v11496 = vunpack.c.0.s8 %v11495
  %v11497 = vlaneseq
  %v11498 = vshrl.u32 %v11497, 7
  %v11499 = vsub.s32 %v11496, %v11498
  %v11500 = vrot.slane %v76, %v11499
  %v11502 = vunpack.c.l.s4 1966171168
  %v11503 = vunpack.c.0.s8 %v11502
  %v11504 = vlaneseq
  %v11505 = vshrl.u32 %v11504, 7
  %v11506 = vsub.s32 %v11503, %v11505
  %v11507 = vrot.slane %v11493, %v11506
  %v11508 = vcombine.high %v11500, %v11500
  %v11509 = vcombine.high %v11507, %v11507
  %v11511 = vunpack.c.l.s4 1966171168
  %v11512 = vunpack.c.0.s8 %v11511
  %v11513 = vlaneseq
  %v11514 = vshrl.u32 %v11513, 7
  %v11515 = vsub.s32 %v11512, %v11514
  %v11516 = vrot.slane %v11500, %v11515
  %v11518 = vunpack.c.l.s4 1966171168
  %v11519 = vunpack.c.0.s8 %v11518
  %v11520 = vlaneseq
  %v11521 = vshrl.u32 %v11520, 7
  %v11522 = vsub.s32 %v11519, %v11521
  %v11523 = vrot.slane %v11507, %v11522
  %v11525 = vunpack.c.l.s4 1966171168
  %v11526 = vunpack.c.0.s8 %v11525
  %v11527 = vlaneseq
  %v11528 = vshrl.u32 %v11527, 7
  %v11529 = vsub.s32 %v11526, %v11528
  %v11530 = vrot.slane %v11508, %v11529
  %v11532 = vunpack.c.l.s4 1966171168
  %v11533 = vunpack.c.0.s8 %v11532
  %v11534 = vlaneseq
  %v11535 = vshrl.u32 %v11534, 7
  %v11536 = vsub.s32 %v11533, %v11535
  %v11537 = vrot.slane %v11509, %v11536
  %v11538 = vcombine.high %v11516, %v11516
  %v11539 = vcombine.high %v11523, %v11523
  %v11540 = vcombine.high %v11530, %v11530
  %v11541 = vcombine.high %v11537, %v11537
  %v11542 = vlaneseq
  %v11543 = vshrl.u32 %v11542, 7
  %v11544 = vsub.s32 0, %v11543
  %v11545 = vrot.slane %v11516, %v11544
  %v11546 = vlaneseq
  %v11547 = vshrl.u32 %v11546, 7
  %v11548 = vsub.s32 0, %v11547
  %v11549 = vrot.slane %v11530, %v11548
  %v11550 = vlaneseq
  %v11551 = vshrl.u32 %v11550, 7
  %v11552 = vsub.s32 0, %v11551
  %v11553 = vrot.slane %v11538, %v11552
  %v11554 = vlaneseq
  %v11555 = vshrl.u32 %v11554, 7
  %v11556 = vsub.s32 0, %v11555
  %v11557 = vrot.slane %v11540, %v11556
  %v11558 = vlaneseq
  %v11559 = vshrl.u32 %v11558, 7
  %v11560 = vsub.s32 0, %v11559
  %v11561 = vrot.slane %v11523, %v11560
  %v11562 = vlaneseq
  %v11563 = vshrl.u32 %v11562, 7
  %v11564 = vsub.s32 0, %v11563
  %v11565 = vrot.slane %v11537, %v11564
  %v11566 = vlaneseq
  %v11567 = vshrl.u32 %v11566, 7
  %v11568 = vsub.s32 0, %v11567
  %v11569 = vrot.slane %v11539, %v11568
  %v11570 = vlaneseq
  %v11571 = vshrl.u32 %v11570, 7
  %v11572 = vsub.s32 0, %v11571
  %v11573 = vrot.slane %v11541, %v11572
  %11574 = vset.pattern.permute.xlu0 0
  %11575 = vperm.xlu0 %11574, %v11545
  %v11576 = vpop.permute.xlu0 %11575
  %11578 = vset.pattern.permute.xlu0 0
  %11579 = vperm.xlu0 %11578, %v11549
  %v11580 = vpop.permute.xlu0 %11579
  %11582 = vset.pattern.permute.xlu0 0
  %11583 = vperm.xlu0 %11582, %v11553
  %v11584 = vpop.permute.xlu0 %11583
  %11586 = vset.pattern.permute.xlu0 0
  %11587 = vperm.xlu0 %11586, %v11557
  %v11588 = vpop.permute.xlu0 %11587
  %11590 = vset.pattern.permute.xlu0 0
  %11591 = vperm.xlu0 %11590, %v11561
  %v11592 = vpop.permute.xlu0 %11591
  %11594 = vset.pattern.permute.xlu0 0
  %11595 = vperm.xlu0 %11594, %v11565
  %v11596 = vpop.permute.xlu0 %11595
  %11598 = vset.pattern.permute.xlu0 0
  %11599 = vperm.xlu0 %11598, %v11569
  %v11600 = vpop.permute.xlu0 %11599
  %11602 = vset.pattern.permute.xlu0 0
  %11603 = vperm.xlu0 %11602, %v11573
  %v11604 = vpop.permute.xlu0 %11603
  %v11606 = vmul.f32 %v11576, %v38
  %v11607 = vmul.f32 %v11576, %v39
  %v11608 = vmul.f32 %v11576, %v40
  %v11609 = vmul.f32 %v11576, %v41
  %v11610 = vmul.f32 %v11576, %v42
  %v11611 = vmul.f32 %v11576, %v43
  %v11612 = vmul.f32 %v11580, %v38
  %v11613 = vmul.f32 %v11580, %v39
  %v11614 = vmul.f32 %v11580, %v40
  %v11615 = vmul.f32 %v11580, %v41
  %v11616 = vmul.f32 %v11580, %v42
  %v11617 = vmul.f32 %v11580, %v43
  %v11618 = vmul.f32 %v11584, %v38
  %v11619 = vmul.f32 %v11584, %v39
  %v11620 = vmul.f32 %v11584, %v40
  %v11621 = vmul.f32 %v11584, %v41
  %v11622 = vmul.f32 %v11584, %v42
  %v11623 = vmul.f32 %v11584, %v43
  %v11624 = vmul.f32 %v11588, %v38
  %v11625 = vmul.f32 %v11588, %v39
  %v11626 = vmul.f32 %v11588, %v40
  %v11627 = vmul.f32 %v11588, %v41
  %v11628 = vmul.f32 %v11588, %v42
  %v11629 = vmul.f32 %v11588, %v43
  %v11630 = vmul.f32 %v11592, %v38
  %v11631 = vmul.f32 %v11592, %v39
  %v11632 = vmul.f32 %v11592, %v40
  %v11633 = vmul.f32 %v11592, %v41
  %v11634 = vmul.f32 %v11592, %v42
  %v11635 = vmul.f32 %v11592, %v43
  %v11636 = vmul.f32 %v11596, %v38
  %v11637 = vmul.f32 %v11596, %v39
  %v11638 = vmul.f32 %v11596, %v40
  %v11639 = vmul.f32 %v11596, %v41
  %v11640 = vmul.f32 %v11596, %v42
  %v11641 = vmul.f32 %v11596, %v43
  %v11642 = vmul.f32 %v11600, %v38
  %v11643 = vmul.f32 %v11600, %v39
  %v11644 = vmul.f32 %v11600, %v40
  %v11645 = vmul.f32 %v11600, %v41
  %v11646 = vmul.f32 %v11600, %v42
  %v11647 = vmul.f32 %v11600, %v43
  %v11648 = vmul.f32 %v11604, %v38
  %v11649 = vmul.f32 %v11604, %v39
  %v11650 = vmul.f32 %v11604, %v40
  %v11651 = vmul.f32 %v11604, %v41
  %v11652 = vmul.f32 %v11604, %v42
  %v11653 = vmul.f32 %v11604, %v43
  %v11702 = vrot.slane %v11606, 1
  %v11703 = vrot.slane %v11608, 1
  %v11704 = vsel %vm1114, %v11702, %v11703
  %v11705 = vrot.slane %v11607, 1
  %v11706 = vrot.slane %v11609, 1
  %v11707 = vsel %vm1114, %v11705, %v11706
  %v11708 = vrot.slane %v11610, 1
  %v11709 = vsel %vm1114, %v11703, %v11708
  %v11710 = vrot.slane %v11611, 1
  %v11711 = vsel %vm1114, %v11706, %v11710
  %v11712 = vrot.slane %v11612, 1
  %v11713 = vrot.slane %v11614, 1
  %v11714 = vsel %vm1114, %v11712, %v11713
  %v11715 = vrot.slane %v11613, 1
  %v11716 = vrot.slane %v11615, 1
  %v11717 = vsel %vm1114, %v11715, %v11716
  %v11718 = vrot.slane %v11616, 1
  %v11719 = vsel %vm1114, %v11713, %v11718
  %v11720 = vrot.slane %v11617, 1
  %v11721 = vsel %vm1114, %v11716, %v11720
  %v11722 = vrot.slane %v11618, 1
  %v11723 = vrot.slane %v11620, 1
  %v11724 = vsel %vm1114, %v11722, %v11723
  %v11725 = vrot.slane %v11619, 1
  %v11726 = vrot.slane %v11621, 1
  %v11727 = vsel %vm1114, %v11725, %v11726
  %v11728 = vrot.slane %v11622, 1
  %v11729 = vsel %vm1114, %v11723, %v11728
  %v11730 = vrot.slane %v11623, 1
  %v11731 = vsel %vm1114, %v11726, %v11730
  %v11732 = vrot.slane %v11624, 1
  %v11733 = vrot.slane %v11626, 1
  %v11734 = vsel %vm1114, %v11732, %v11733
  %v11735 = vrot.slane %v11625, 1
  %v11736 = vrot.slane %v11627, 1
  %v11737 = vsel %vm1114, %v11735, %v11736
  %v11738 = vrot.slane %v11628, 1
  %v11739 = vsel %vm1114, %v11733, %v11738
  %v11740 = vrot.slane %v11629, 1
  %v11741 = vsel %vm1114, %v11736, %v11740
  %v11742 = vrot.slane %v11630, 1
  %v11743 = vrot.slane %v11632, 1
  %v11744 = vsel %vm1114, %v11742, %v11743
  %v11745 = vrot.slane %v11631, 1
  %v11746 = vrot.slane %v11633, 1
  %v11747 = vsel %vm1114, %v11745, %v11746
  %v11748 = vrot.slane %v11634, 1
  %v11749 = vsel %vm1114, %v11743, %v11748
  %v11750 = vrot.slane %v11635, 1
  %v11751 = vsel %vm1114, %v11746, %v11750
  %v11752 = vrot.slane %v11636, 1
  %v11753 = vrot.slane %v11638, 1
  %v11754 = vsel %vm1114, %v11752, %v11753
  %v11755 = vrot.slane %v11637, 1
  %v11756 = vrot.slane %v11639, 1
  %v11757 = vsel %vm1114, %v11755, %v11756
  %v11758 = vrot.slane %v11640, 1
  %v11759 = vsel %vm1114, %v11753, %v11758
  %v11760 = vrot.slane %v11641, 1
  %v11761 = vsel %vm1114, %v11756, %v11760
  %v11762 = vrot.slane %v11642, 1
  %v11763 = vrot.slane %v11644, 1
  %v11764 = vsel %vm1114, %v11762, %v11763
  %v11765 = vrot.slane %v11643, 1
  %v11766 = vrot.slane %v11645, 1
  %v11767 = vsel %vm1114, %v11765, %v11766
  %v11768 = vrot.slane %v11646, 1
  %v11769 = vsel %vm1114, %v11763, %v11768
  %v11770 = vrot.slane %v11647, 1
  %v11771 = vsel %vm1114, %v11766, %v11770
  %v11772 = vrot.slane %v11648, 1
  %v11773 = vrot.slane %v11650, 1
  %v11774 = vsel %vm1114, %v11772, %v11773
  %v11775 = vrot.slane %v11649, 1
  %v11776 = vrot.slane %v11651, 1
  %v11777 = vsel %vm1114, %v11775, %v11776
  %v11778 = vrot.slane %v11652, 1
  %v11779 = vsel %vm1114, %v11773, %v11778
  %v11780 = vrot.slane %v11653, 1
  %v11781 = vsel %vm1114, %v11776, %v11780
  %11782 = vrot.lane.b32.xlu0 %v11704, 126
  %v11783 = vpop.permute.xlu0 %11782
  %11784 = vrot.lane.b32.xlu0 %v11707, 126
  %v11785 = vpop.permute.xlu0 %11784
  %11786 = vrot.lane.b32.xlu0 %v11709, 126
  %v11787 = vpop.permute.xlu0 %11786
  %11788 = vrot.lane.b32.xlu0 %v11711, 126
  %v11789 = vpop.permute.xlu0 %11788
  %11790 = vrot.lane.b32.xlu0 %v11714, 126
  %v11791 = vpop.permute.xlu0 %11790
  %11792 = vrot.lane.b32.xlu0 %v11717, 126
  %v11793 = vpop.permute.xlu0 %11792
  %11794 = vrot.lane.b32.xlu0 %v11719, 126
  %v11795 = vpop.permute.xlu0 %11794
  %11796 = vrot.lane.b32.xlu0 %v11721, 126
  %v11797 = vpop.permute.xlu0 %11796
  %11798 = vrot.lane.b32.xlu0 %v11724, 126
  %v11799 = vpop.permute.xlu0 %11798
  %11800 = vrot.lane.b32.xlu0 %v11727, 126
  %v11801 = vpop.permute.xlu0 %11800
  %11802 = vrot.lane.b32.xlu0 %v11729, 126
  %v11803 = vpop.permute.xlu0 %11802
  %11804 = vrot.lane.b32.xlu0 %v11731, 126
  %v11805 = vpop.permute.xlu0 %11804
  %11806 = vrot.lane.b32.xlu0 %v11734, 126
  %v11807 = vpop.permute.xlu0 %11806
  %11808 = vrot.lane.b32.xlu0 %v11737, 126
  %v11809 = vpop.permute.xlu0 %11808
  %11810 = vrot.lane.b32.xlu0 %v11739, 126
  %v11811 = vpop.permute.xlu0 %11810
  %11812 = vrot.lane.b32.xlu0 %v11741, 126
  %v11813 = vpop.permute.xlu0 %11812
  %11814 = vrot.lane.b32.xlu0 %v11744, 126
  %v11815 = vpop.permute.xlu0 %11814
  %11816 = vrot.lane.b32.xlu0 %v11747, 126
  %v11817 = vpop.permute.xlu0 %11816
  %11818 = vrot.lane.b32.xlu0 %v11749, 126
  %v11819 = vpop.permute.xlu0 %11818
  %11820 = vrot.lane.b32.xlu0 %v11751, 126
  %v11821 = vpop.permute.xlu0 %11820
  %11822 = vrot.lane.b32.xlu0 %v11754, 126
  %v11823 = vpop.permute.xlu0 %11822
  %11824 = vrot.lane.b32.xlu0 %v11757, 126
  %v11825 = vpop.permute.xlu0 %11824
  %11826 = vrot.lane.b32.xlu0 %v11759, 126
  %v11827 = vpop.permute.xlu0 %11826
  %11828 = vrot.lane.b32.xlu0 %v11761, 126
  %v11829 = vpop.permute.xlu0 %11828
  %11830 = vrot.lane.b32.xlu0 %v11764, 126
  %v11831 = vpop.permute.xlu0 %11830
  %11832 = vrot.lane.b32.xlu0 %v11767, 126
  %v11833 = vpop.permute.xlu0 %11832
  %11834 = vrot.lane.b32.xlu0 %v11769, 126
  %v11835 = vpop.permute.xlu0 %11834
  %11836 = vrot.lane.b32.xlu0 %v11771, 126
  %v11837 = vpop.permute.xlu0 %11836
  %11838 = vrot.lane.b32.xlu0 %v11774, 126
  %v11839 = vpop.permute.xlu0 %11838
  %11840 = vrot.lane.b32.xlu0 %v11777, 126
  %v11841 = vpop.permute.xlu0 %11840
  %11842 = vrot.lane.b32.xlu0 %v11779, 126
  %v11843 = vpop.permute.xlu0 %11842
  %11844 = vrot.lane.b32.xlu0 %v11781, 126
  %v11845 = vpop.permute.xlu0 %11844
  %v11846 = vsel %vm823, %v11783, %v11785
  %v11847 = vsel %vm823, %v11787, %v11789
  %v11848 = vsel %vm823, %v11791, %v11793
  %v11849 = vsel %vm823, %v11795, %v11797
  %v11850 = vsel %vm823, %v11799, %v11801
  %v11851 = vsel %vm823, %v11803, %v11805
  %v11852 = vsel %vm823, %v11807, %v11809
  %v11853 = vsel %vm823, %v11811, %v11813
  %v11854 = vsel %vm823, %v11815, %v11817
  %v11855 = vsel %vm823, %v11819, %v11821
  %v11856 = vsel %vm823, %v11823, %v11825
  %v11857 = vsel %vm823, %v11827, %v11829
  %v11858 = vsel %vm823, %v11831, %v11833
  %v11859 = vsel %vm823, %v11835, %v11837
  %v11860 = vsel %vm823, %v11839, %v11841
  %v11861 = vsel %vm823, %v11843, %v11845
  %v11894 = vadd.f32 %v11460, %v11846
  %v11895 = vadd.f32 %v11461, %v11785
  %v11896 = vadd.f32 %v11462, %v11847
  %v11897 = vadd.f32 %v11463, %v11789
  %v11898 = vadd.f32 %v11464, %v11848
  %v11899 = vadd.f32 %v11465, %v11793
  %v11900 = vadd.f32 %v11466, %v11849
  %v11901 = vadd.f32 %v11467, %v11797
  %v11902 = vadd.f32 %v11468, %v11850
  %v11903 = vadd.f32 %v11469, %v11801
  %v11904 = vadd.f32 %v11470, %v11851
  %v11905 = vadd.f32 %v11471, %v11805
  %v11906 = vadd.f32 %v11472, %v11852
  %v11907 = vadd.f32 %v11473, %v11809
  %v11908 = vadd.f32 %v11474, %v11853
  %v11909 = vadd.f32 %v11475, %v11813
  %v11910 = vadd.f32 %v11476, %v11854
  %v11911 = vadd.f32 %v11477, %v11817
  %v11912 = vadd.f32 %v11478, %v11855
  %v11913 = vadd.f32 %v11479, %v11821
  %v11914 = vadd.f32 %v11480, %v11856
  %v11915 = vadd.f32 %v11481, %v11825
  %v11916 = vadd.f32 %v11482, %v11857
  %v11917 = vadd.f32 %v11483, %v11829
  %v11918 = vadd.f32 %v11484, %v11858
  %v11919 = vadd.f32 %v11485, %v11833
  %v11920 = vadd.f32 %v11486, %v11859
  %v11921 = vadd.f32 %v11487, %v11837
  %v11922 = vadd.f32 %v11488, %v11860
  %v11923 = vadd.f32 %v11489, %v11841
  %v11924 = vadd.f32 %v11490, %v11861
  %v11925 = vadd.f32 %v11491, %v11845
  %v11927 = vcombine.high %v77, %v77
  %v11929 = vunpack.c.l.s4 1966171168
  %v11930 = vunpack.c.0.s8 %v11929
  %v11931 = vlaneseq
  %v11932 = vshrl.u32 %v11931, 7
  %v11933 = vsub.s32 %v11930, %v11932
  %v11934 = vrot.slane %v77, %v11933
  %v11936 = vunpack.c.l.s4 1966171168
  %v11937 = vunpack.c.0.s8 %v11936
  %v11938 = vlaneseq
  %v11939 = vshrl.u32 %v11938, 7
  %v11940 = vsub.s32 %v11937, %v11939
  %v11941 = vrot.slane %v11927, %v11940
  %v11942 = vcombine.high %v11934, %v11934
  %v11943 = vcombine.high %v11941, %v11941
  %v11945 = vunpack.c.l.s4 1966171168
  %v11946 = vunpack.c.0.s8 %v11945
  %v11947 = vlaneseq
  %v11948 = vshrl.u32 %v11947, 7
  %v11949 = vsub.s32 %v11946, %v11948
  %v11950 = vrot.slane %v11934, %v11949
  %v11952 = vunpack.c.l.s4 1966171168
  %v11953 = vunpack.c.0.s8 %v11952
  %v11954 = vlaneseq
  %v11955 = vshrl.u32 %v11954, 7
  %v11956 = vsub.s32 %v11953, %v11955
  %v11957 = vrot.slane %v11941, %v11956
  %v11959 = vunpack.c.l.s4 1966171168
  %v11960 = vunpack.c.0.s8 %v11959
  %v11961 = vlaneseq
  %v11962 = vshrl.u32 %v11961, 7
  %v11963 = vsub.s32 %v11960, %v11962
  %v11964 = vrot.slane %v11942, %v11963
  %v11966 = vunpack.c.l.s4 1966171168
  %v11967 = vunpack.c.0.s8 %v11966
  %v11968 = vlaneseq
  %v11969 = vshrl.u32 %v11968, 7
  %v11970 = vsub.s32 %v11967, %v11969
  %v11971 = vrot.slane %v11943, %v11970
  %v11972 = vcombine.high %v11950, %v11950
  %v11973 = vcombine.high %v11957, %v11957
  %v11974 = vcombine.high %v11964, %v11964
  %v11975 = vcombine.high %v11971, %v11971
  %v11976 = vlaneseq
  %v11977 = vshrl.u32 %v11976, 7
  %v11978 = vsub.s32 0, %v11977
  %v11979 = vrot.slane %v11950, %v11978
  %v11980 = vlaneseq
  %v11981 = vshrl.u32 %v11980, 7
  %v11982 = vsub.s32 0, %v11981
  %v11983 = vrot.slane %v11964, %v11982
  %v11984 = vlaneseq
  %v11985 = vshrl.u32 %v11984, 7
  %v11986 = vsub.s32 0, %v11985
  %v11987 = vrot.slane %v11972, %v11986
  %v11988 = vlaneseq
  %v11989 = vshrl.u32 %v11988, 7
  %v11990 = vsub.s32 0, %v11989
  %v11991 = vrot.slane %v11974, %v11990
  %v11992 = vlaneseq
  %v11993 = vshrl.u32 %v11992, 7
  %v11994 = vsub.s32 0, %v11993
  %v11995 = vrot.slane %v11957, %v11994
  %v11996 = vlaneseq
  %v11997 = vshrl.u32 %v11996, 7
  %v11998 = vsub.s32 0, %v11997
  %v11999 = vrot.slane %v11971, %v11998
  %v12000 = vlaneseq
  %v12001 = vshrl.u32 %v12000, 7
  %v12002 = vsub.s32 0, %v12001
  %v12003 = vrot.slane %v11973, %v12002
  %v12004 = vlaneseq
  %v12005 = vshrl.u32 %v12004, 7
  %v12006 = vsub.s32 0, %v12005
  %v12007 = vrot.slane %v11975, %v12006
  %12008 = vset.pattern.permute.xlu0 0
  %12009 = vperm.xlu0 %12008, %v11979
  %v12010 = vpop.permute.xlu0 %12009
  %12012 = vset.pattern.permute.xlu0 0
  %12013 = vperm.xlu0 %12012, %v11983
  %v12014 = vpop.permute.xlu0 %12013
  %12016 = vset.pattern.permute.xlu0 0
  %12017 = vperm.xlu0 %12016, %v11987
  %v12018 = vpop.permute.xlu0 %12017
  %12020 = vset.pattern.permute.xlu0 0
  %12021 = vperm.xlu0 %12020, %v11991
  %v12022 = vpop.permute.xlu0 %12021
  %12024 = vset.pattern.permute.xlu0 0
  %12025 = vperm.xlu0 %12024, %v11995
  %v12026 = vpop.permute.xlu0 %12025
  %12028 = vset.pattern.permute.xlu0 0
  %12029 = vperm.xlu0 %12028, %v11999
  %v12030 = vpop.permute.xlu0 %12029
  %12032 = vset.pattern.permute.xlu0 0
  %12033 = vperm.xlu0 %12032, %v12003
  %v12034 = vpop.permute.xlu0 %12033
  %12036 = vset.pattern.permute.xlu0 0
  %12037 = vperm.xlu0 %12036, %v12007
  %v12038 = vpop.permute.xlu0 %12037
  %v12040 = vmul.f32 %v12010, %v38
  %v12041 = vmul.f32 %v12010, %v39
  %v12042 = vmul.f32 %v12010, %v40
  %v12043 = vmul.f32 %v12010, %v41
  %v12044 = vmul.f32 %v12010, %v42
  %v12045 = vmul.f32 %v12010, %v43
  %v12046 = vmul.f32 %v12014, %v38
  %v12047 = vmul.f32 %v12014, %v39
  %v12048 = vmul.f32 %v12014, %v40
  %v12049 = vmul.f32 %v12014, %v41
  %v12050 = vmul.f32 %v12014, %v42
  %v12051 = vmul.f32 %v12014, %v43
  %v12052 = vmul.f32 %v12018, %v38
  %v12053 = vmul.f32 %v12018, %v39
  %v12054 = vmul.f32 %v12018, %v40
  %v12055 = vmul.f32 %v12018, %v41
  %v12056 = vmul.f32 %v12018, %v42
  %v12057 = vmul.f32 %v12018, %v43
  %v12058 = vmul.f32 %v12022, %v38
  %v12059 = vmul.f32 %v12022, %v39
  %v12060 = vmul.f32 %v12022, %v40
  %v12061 = vmul.f32 %v12022, %v41
  %v12062 = vmul.f32 %v12022, %v42
  %v12063 = vmul.f32 %v12022, %v43
  %v12064 = vmul.f32 %v12026, %v38
  %v12065 = vmul.f32 %v12026, %v39
  %v12066 = vmul.f32 %v12026, %v40
  %v12067 = vmul.f32 %v12026, %v41
  %v12068 = vmul.f32 %v12026, %v42
  %v12069 = vmul.f32 %v12026, %v43
  %v12070 = vmul.f32 %v12030, %v38
  %v12071 = vmul.f32 %v12030, %v39
  %v12072 = vmul.f32 %v12030, %v40
  %v12073 = vmul.f32 %v12030, %v41
  %v12074 = vmul.f32 %v12030, %v42
  %v12075 = vmul.f32 %v12030, %v43
  %v12076 = vmul.f32 %v12034, %v38
  %v12077 = vmul.f32 %v12034, %v39
  %v12078 = vmul.f32 %v12034, %v40
  %v12079 = vmul.f32 %v12034, %v41
  %v12080 = vmul.f32 %v12034, %v42
  %v12081 = vmul.f32 %v12034, %v43
  %v12082 = vmul.f32 %v12038, %v38
  %v12083 = vmul.f32 %v12038, %v39
  %v12084 = vmul.f32 %v12038, %v40
  %v12085 = vmul.f32 %v12038, %v41
  %v12086 = vmul.f32 %v12038, %v42
  %v12087 = vmul.f32 %v12038, %v43
  %v12136 = vrot.slane %v12040, 2
  %v12137 = vrot.slane %v12042, 2
  %v12138 = vsel %vm2337, %v12136, %v12137
  %v12139 = vrot.slane %v12041, 2
  %v12140 = vrot.slane %v12043, 2
  %v12141 = vsel %vm2337, %v12139, %v12140
  %v12142 = vrot.slane %v12044, 2
  %v12143 = vsel %vm2337, %v12137, %v12142
  %v12144 = vrot.slane %v12045, 2
  %v12145 = vsel %vm2337, %v12140, %v12144
  %v12146 = vrot.slane %v12046, 2
  %v12147 = vrot.slane %v12048, 2
  %v12148 = vsel %vm2337, %v12146, %v12147
  %v12149 = vrot.slane %v12047, 2
  %v12150 = vrot.slane %v12049, 2
  %v12151 = vsel %vm2337, %v12149, %v12150
  %v12152 = vrot.slane %v12050, 2
  %v12153 = vsel %vm2337, %v12147, %v12152
  %v12154 = vrot.slane %v12051, 2
  %v12155 = vsel %vm2337, %v12150, %v12154
  %v12156 = vrot.slane %v12052, 2
  %v12157 = vrot.slane %v12054, 2
  %v12158 = vsel %vm2337, %v12156, %v12157
  %v12159 = vrot.slane %v12053, 2
  %v12160 = vrot.slane %v12055, 2
  %v12161 = vsel %vm2337, %v12159, %v12160
  %v12162 = vrot.slane %v12056, 2
  %v12163 = vsel %vm2337, %v12157, %v12162
  %v12164 = vrot.slane %v12057, 2
  %v12165 = vsel %vm2337, %v12160, %v12164
  %v12166 = vrot.slane %v12058, 2
  %v12167 = vrot.slane %v12060, 2
  %v12168 = vsel %vm2337, %v12166, %v12167
  %v12169 = vrot.slane %v12059, 2
  %v12170 = vrot.slane %v12061, 2
  %v12171 = vsel %vm2337, %v12169, %v12170
  %v12172 = vrot.slane %v12062, 2
  %v12173 = vsel %vm2337, %v12167, %v12172
  %v12174 = vrot.slane %v12063, 2
  %v12175 = vsel %vm2337, %v12170, %v12174
  %v12176 = vrot.slane %v12064, 2
  %v12177 = vrot.slane %v12066, 2
  %v12178 = vsel %vm2337, %v12176, %v12177
  %v12179 = vrot.slane %v12065, 2
  %v12180 = vrot.slane %v12067, 2
  %v12181 = vsel %vm2337, %v12179, %v12180
  %v12182 = vrot.slane %v12068, 2
  %v12183 = vsel %vm2337, %v12177, %v12182
  %v12184 = vrot.slane %v12069, 2
  %v12185 = vsel %vm2337, %v12180, %v12184
  %v12186 = vrot.slane %v12070, 2
  %v12187 = vrot.slane %v12072, 2
  %v12188 = vsel %vm2337, %v12186, %v12187
  %v12189 = vrot.slane %v12071, 2
  %v12190 = vrot.slane %v12073, 2
  %v12191 = vsel %vm2337, %v12189, %v12190
  %v12192 = vrot.slane %v12074, 2
  %v12193 = vsel %vm2337, %v12187, %v12192
  %v12194 = vrot.slane %v12075, 2
  %v12195 = vsel %vm2337, %v12190, %v12194
  %v12196 = vrot.slane %v12076, 2
  %v12197 = vrot.slane %v12078, 2
  %v12198 = vsel %vm2337, %v12196, %v12197
  %v12199 = vrot.slane %v12077, 2
  %v12200 = vrot.slane %v12079, 2
  %v12201 = vsel %vm2337, %v12199, %v12200
  %v12202 = vrot.slane %v12080, 2
  %v12203 = vsel %vm2337, %v12197, %v12202
  %v12204 = vrot.slane %v12081, 2
  %v12205 = vsel %vm2337, %v12200, %v12204
  %v12206 = vrot.slane %v12082, 2
  %v12207 = vrot.slane %v12084, 2
  %v12208 = vsel %vm2337, %v12206, %v12207
  %v12209 = vrot.slane %v12083, 2
  %v12210 = vrot.slane %v12085, 2
  %v12211 = vsel %vm2337, %v12209, %v12210
  %v12212 = vrot.slane %v12086, 2
  %v12213 = vsel %vm2337, %v12207, %v12212
  %v12214 = vrot.slane %v12087, 2
  %v12215 = vsel %vm2337, %v12210, %v12214
  %v12248 = vadd.f32 %v11894, %v12138
  %v12249 = vadd.f32 %v11895, %v12141
  %v12250 = vadd.f32 %v11896, %v12143
  %v12251 = vadd.f32 %v11897, %v12145
  %v12252 = vadd.f32 %v11898, %v12148
  %v12253 = vadd.f32 %v11899, %v12151
  %v12254 = vadd.f32 %v11900, %v12153
  %v12255 = vadd.f32 %v11901, %v12155
  %v12256 = vadd.f32 %v11902, %v12158
  %v12257 = vadd.f32 %v11903, %v12161
  %v12258 = vadd.f32 %v11904, %v12163
  %v12259 = vadd.f32 %v11905, %v12165
  %v12260 = vadd.f32 %v11906, %v12168
  %v12261 = vadd.f32 %v11907, %v12171
  %v12262 = vadd.f32 %v11908, %v12173
  %v12263 = vadd.f32 %v11909, %v12175
  %v12264 = vadd.f32 %v11910, %v12178
  %v12265 = vadd.f32 %v11911, %v12181
  %v12266 = vadd.f32 %v11912, %v12183
  %v12267 = vadd.f32 %v11913, %v12185
  %v12268 = vadd.f32 %v11914, %v12188
  %v12269 = vadd.f32 %v11915, %v12191
  %v12270 = vadd.f32 %v11916, %v12193
  %v12271 = vadd.f32 %v11917, %v12195
  %v12272 = vadd.f32 %v11918, %v12198
  %v12273 = vadd.f32 %v11919, %v12201
  %v12274 = vadd.f32 %v11920, %v12203
  %v12275 = vadd.f32 %v11921, %v12205
  %v12276 = vadd.f32 %v11922, %v12208
  %v12277 = vadd.f32 %v11923, %v12211
  %v12278 = vadd.f32 %v11924, %v12213
  %v12279 = vadd.f32 %v11925, %v12215
  %v12281 = vcombine.high %v78, %v78
  %v12283 = vunpack.c.l.s4 1966171168
  %v12284 = vunpack.c.0.s8 %v12283
  %v12285 = vlaneseq
  %v12286 = vshrl.u32 %v12285, 7
  %v12287 = vsub.s32 %v12284, %v12286
  %v12288 = vrot.slane %v78, %v12287
  %v12290 = vunpack.c.l.s4 1966171168
  %v12291 = vunpack.c.0.s8 %v12290
  %v12292 = vlaneseq
  %v12293 = vshrl.u32 %v12292, 7
  %v12294 = vsub.s32 %v12291, %v12293
  %v12295 = vrot.slane %v12281, %v12294
  %v12296 = vcombine.high %v12288, %v12288
  %v12297 = vcombine.high %v12295, %v12295
  %v12299 = vunpack.c.l.s4 1966171168
  %v12300 = vunpack.c.0.s8 %v12299
  %v12301 = vlaneseq
  %v12302 = vshrl.u32 %v12301, 7
  %v12303 = vsub.s32 %v12300, %v12302
  %v12304 = vrot.slane %v12288, %v12303
  %v12306 = vunpack.c.l.s4 1966171168
  %v12307 = vunpack.c.0.s8 %v12306
  %v12308 = vlaneseq
  %v12309 = vshrl.u32 %v12308, 7
  %v12310 = vsub.s32 %v12307, %v12309
  %v12311 = vrot.slane %v12295, %v12310
  %v12313 = vunpack.c.l.s4 1966171168
  %v12314 = vunpack.c.0.s8 %v12313
  %v12315 = vlaneseq
  %v12316 = vshrl.u32 %v12315, 7
  %v12317 = vsub.s32 %v12314, %v12316
  %v12318 = vrot.slane %v12296, %v12317
  %v12320 = vunpack.c.l.s4 1966171168
  %v12321 = vunpack.c.0.s8 %v12320
  %v12322 = vlaneseq
  %v12323 = vshrl.u32 %v12322, 7
  %v12324 = vsub.s32 %v12321, %v12323
  %v12325 = vrot.slane %v12297, %v12324
  %v12326 = vcombine.high %v12304, %v12304
  %v12327 = vcombine.high %v12311, %v12311
  %v12328 = vcombine.high %v12318, %v12318
  %v12329 = vcombine.high %v12325, %v12325
  %v12330 = vlaneseq
  %v12331 = vshrl.u32 %v12330, 7
  %v12332 = vsub.s32 0, %v12331
  %v12333 = vrot.slane %v12304, %v12332
  %v12334 = vlaneseq
  %v12335 = vshrl.u32 %v12334, 7
  %v12336 = vsub.s32 0, %v12335
  %v12337 = vrot.slane %v12318, %v12336
  %v12338 = vlaneseq
  %v12339 = vshrl.u32 %v12338, 7
  %v12340 = vsub.s32 0, %v12339
  %v12341 = vrot.slane %v12326, %v12340
  %v12342 = vlaneseq
  %v12343 = vshrl.u32 %v12342, 7
  %v12344 = vsub.s32 0, %v12343
  %v12345 = vrot.slane %v12328, %v12344
  %v12346 = vlaneseq
  %v12347 = vshrl.u32 %v12346, 7
  %v12348 = vsub.s32 0, %v12347
  %v12349 = vrot.slane %v12311, %v12348
  %v12350 = vlaneseq
  %v12351 = vshrl.u32 %v12350, 7
  %v12352 = vsub.s32 0, %v12351
  %v12353 = vrot.slane %v12325, %v12352
  %v12354 = vlaneseq
  %v12355 = vshrl.u32 %v12354, 7
  %v12356 = vsub.s32 0, %v12355
  %v12357 = vrot.slane %v12327, %v12356
  %v12358 = vlaneseq
  %v12359 = vshrl.u32 %v12358, 7
  %v12360 = vsub.s32 0, %v12359
  %v12361 = vrot.slane %v12329, %v12360
  %12362 = vset.pattern.permute.xlu0 0
  %12363 = vperm.xlu0 %12362, %v12333
  %v12364 = vpop.permute.xlu0 %12363
  %12366 = vset.pattern.permute.xlu0 0
  %12367 = vperm.xlu0 %12366, %v12337
  %v12368 = vpop.permute.xlu0 %12367
  %12370 = vset.pattern.permute.xlu0 0
  %12371 = vperm.xlu0 %12370, %v12341
  %v12372 = vpop.permute.xlu0 %12371
  %12374 = vset.pattern.permute.xlu0 0
  %12375 = vperm.xlu0 %12374, %v12345
  %v12376 = vpop.permute.xlu0 %12375
  %12378 = vset.pattern.permute.xlu0 0
  %12379 = vperm.xlu0 %12378, %v12349
  %v12380 = vpop.permute.xlu0 %12379
  %12382 = vset.pattern.permute.xlu0 0
  %12383 = vperm.xlu0 %12382, %v12353
  %v12384 = vpop.permute.xlu0 %12383
  %12386 = vset.pattern.permute.xlu0 0
  %12387 = vperm.xlu0 %12386, %v12357
  %v12388 = vpop.permute.xlu0 %12387
  %12390 = vset.pattern.permute.xlu0 0
  %12391 = vperm.xlu0 %12390, %v12361
  %v12392 = vpop.permute.xlu0 %12391
  %v12394 = vmul.f32 %v12364, %v38
  %v12395 = vmul.f32 %v12364, %v39
  %v12396 = vmul.f32 %v12364, %v40
  %v12397 = vmul.f32 %v12364, %v41
  %v12398 = vmul.f32 %v12364, %v42
  %v12399 = vmul.f32 %v12364, %v43
  %v12400 = vmul.f32 %v12368, %v38
  %v12401 = vmul.f32 %v12368, %v39
  %v12402 = vmul.f32 %v12368, %v40
  %v12403 = vmul.f32 %v12368, %v41
  %v12404 = vmul.f32 %v12368, %v42
  %v12405 = vmul.f32 %v12368, %v43
  %v12406 = vmul.f32 %v12372, %v38
  %v12407 = vmul.f32 %v12372, %v39
  %v12408 = vmul.f32 %v12372, %v40
  %v12409 = vmul.f32 %v12372, %v41
  %v12410 = vmul.f32 %v12372, %v42
  %v12411 = vmul.f32 %v12372, %v43
  %v12412 = vmul.f32 %v12376, %v38
  %v12413 = vmul.f32 %v12376, %v39
  %v12414 = vmul.f32 %v12376, %v40
  %v12415 = vmul.f32 %v12376, %v41
  %v12416 = vmul.f32 %v12376, %v42
  %v12417 = vmul.f32 %v12376, %v43
  %v12418 = vmul.f32 %v12380, %v38
  %v12419 = vmul.f32 %v12380, %v39
  %v12420 = vmul.f32 %v12380, %v40
  %v12421 = vmul.f32 %v12380, %v41
  %v12422 = vmul.f32 %v12380, %v42
  %v12423 = vmul.f32 %v12380, %v43
  %v12424 = vmul.f32 %v12384, %v38
  %v12425 = vmul.f32 %v12384, %v39
  %v12426 = vmul.f32 %v12384, %v40
  %v12427 = vmul.f32 %v12384, %v41
  %v12428 = vmul.f32 %v12384, %v42
  %v12429 = vmul.f32 %v12384, %v43
  %v12430 = vmul.f32 %v12388, %v38
  %v12431 = vmul.f32 %v12388, %v39
  %v12432 = vmul.f32 %v12388, %v40
  %v12433 = vmul.f32 %v12388, %v41
  %v12434 = vmul.f32 %v12388, %v42
  %v12435 = vmul.f32 %v12388, %v43
  %v12436 = vmul.f32 %v12392, %v38
  %v12437 = vmul.f32 %v12392, %v39
  %v12438 = vmul.f32 %v12392, %v40
  %v12439 = vmul.f32 %v12392, %v41
  %v12440 = vmul.f32 %v12392, %v42
  %v12441 = vmul.f32 %v12392, %v43
  %v12490 = vrot.slane %v12394, 2
  %v12491 = vrot.slane %v12396, 2
  %v12492 = vsel %vm2337, %v12490, %v12491
  %v12493 = vrot.slane %v12395, 2
  %v12494 = vrot.slane %v12397, 2
  %v12495 = vsel %vm2337, %v12493, %v12494
  %v12496 = vrot.slane %v12398, 2
  %v12497 = vsel %vm2337, %v12491, %v12496
  %v12498 = vrot.slane %v12399, 2
  %v12499 = vsel %vm2337, %v12494, %v12498
  %v12500 = vrot.slane %v12400, 2
  %v12501 = vrot.slane %v12402, 2
  %v12502 = vsel %vm2337, %v12500, %v12501
  %v12503 = vrot.slane %v12401, 2
  %v12504 = vrot.slane %v12403, 2
  %v12505 = vsel %vm2337, %v12503, %v12504
  %v12506 = vrot.slane %v12404, 2
  %v12507 = vsel %vm2337, %v12501, %v12506
  %v12508 = vrot.slane %v12405, 2
  %v12509 = vsel %vm2337, %v12504, %v12508
  %v12510 = vrot.slane %v12406, 2
  %v12511 = vrot.slane %v12408, 2
  %v12512 = vsel %vm2337, %v12510, %v12511
  %v12513 = vrot.slane %v12407, 2
  %v12514 = vrot.slane %v12409, 2
  %v12515 = vsel %vm2337, %v12513, %v12514
  %v12516 = vrot.slane %v12410, 2
  %v12517 = vsel %vm2337, %v12511, %v12516
  %v12518 = vrot.slane %v12411, 2
  %v12519 = vsel %vm2337, %v12514, %v12518
  %v12520 = vrot.slane %v12412, 2
  %v12521 = vrot.slane %v12414, 2
  %v12522 = vsel %vm2337, %v12520, %v12521
  %v12523 = vrot.slane %v12413, 2
  %v12524 = vrot.slane %v12415, 2
  %v12525 = vsel %vm2337, %v12523, %v12524
  %v12526 = vrot.slane %v12416, 2
  %v12527 = vsel %vm2337, %v12521, %v12526
  %v12528 = vrot.slane %v12417, 2
  %v12529 = vsel %vm2337, %v12524, %v12528
  %v12530 = vrot.slane %v12418, 2
  %v12531 = vrot.slane %v12420, 2
  %v12532 = vsel %vm2337, %v12530, %v12531
  %v12533 = vrot.slane %v12419, 2
  %v12534 = vrot.slane %v12421, 2
  %v12535 = vsel %vm2337, %v12533, %v12534
  %v12536 = vrot.slane %v12422, 2
  %v12537 = vsel %vm2337, %v12531, %v12536
  %v12538 = vrot.slane %v12423, 2
  %v12539 = vsel %vm2337, %v12534, %v12538
  %v12540 = vrot.slane %v12424, 2
  %v12541 = vrot.slane %v12426, 2
  %v12542 = vsel %vm2337, %v12540, %v12541
  %v12543 = vrot.slane %v12425, 2
  %v12544 = vrot.slane %v12427, 2
  %v12545 = vsel %vm2337, %v12543, %v12544
  %v12546 = vrot.slane %v12428, 2
  %v12547 = vsel %vm2337, %v12541, %v12546
  %v12548 = vrot.slane %v12429, 2
  %v12549 = vsel %vm2337, %v12544, %v12548
  %v12550 = vrot.slane %v12430, 2
  %v12551 = vrot.slane %v12432, 2
  %v12552 = vsel %vm2337, %v12550, %v12551
  %v12553 = vrot.slane %v12431, 2
  %v12554 = vrot.slane %v12433, 2
  %v12555 = vsel %vm2337, %v12553, %v12554
  %v12556 = vrot.slane %v12434, 2
  %v12557 = vsel %vm2337, %v12551, %v12556
  %v12558 = vrot.slane %v12435, 2
  %v12559 = vsel %vm2337, %v12554, %v12558
  %v12560 = vrot.slane %v12436, 2
  %v12561 = vrot.slane %v12438, 2
  %v12562 = vsel %vm2337, %v12560, %v12561
  %v12563 = vrot.slane %v12437, 2
  %v12564 = vrot.slane %v12439, 2
  %v12565 = vsel %vm2337, %v12563, %v12564
  %v12566 = vrot.slane %v12440, 2
  %v12567 = vsel %vm2337, %v12561, %v12566
  %v12568 = vrot.slane %v12441, 2
  %v12569 = vsel %vm2337, %v12564, %v12568
  %12570 = vrot.lane.b32.xlu0 %v12492, 127
  %v12571 = vpop.permute.xlu0 %12570
  %12572 = vrot.lane.b32.xlu0 %v12495, 127
  %v12573 = vpop.permute.xlu0 %12572
  %12574 = vrot.lane.b32.xlu0 %v12497, 127
  %v12575 = vpop.permute.xlu0 %12574
  %12576 = vrot.lane.b32.xlu0 %v12499, 127
  %v12577 = vpop.permute.xlu0 %12576
  %12578 = vrot.lane.b32.xlu0 %v12502, 127
  %v12579 = vpop.permute.xlu0 %12578
  %12580 = vrot.lane.b32.xlu0 %v12505, 127
  %v12581 = vpop.permute.xlu0 %12580
  %12582 = vrot.lane.b32.xlu0 %v12507, 127
  %v12583 = vpop.permute.xlu0 %12582
  %12584 = vrot.lane.b32.xlu0 %v12509, 127
  %v12585 = vpop.permute.xlu0 %12584
  %12586 = vrot.lane.b32.xlu0 %v12512, 127
  %v12587 = vpop.permute.xlu0 %12586
  %12588 = vrot.lane.b32.xlu0 %v12515, 127
  %v12589 = vpop.permute.xlu0 %12588
  %12590 = vrot.lane.b32.xlu0 %v12517, 127
  %v12591 = vpop.permute.xlu0 %12590
  %12592 = vrot.lane.b32.xlu0 %v12519, 127
  %v12593 = vpop.permute.xlu0 %12592
  %12594 = vrot.lane.b32.xlu0 %v12522, 127
  %v12595 = vpop.permute.xlu0 %12594
  %12596 = vrot.lane.b32.xlu0 %v12525, 127
  %v12597 = vpop.permute.xlu0 %12596
  %12598 = vrot.lane.b32.xlu0 %v12527, 127
  %v12599 = vpop.permute.xlu0 %12598
  %12600 = vrot.lane.b32.xlu0 %v12529, 127
  %v12601 = vpop.permute.xlu0 %12600
  %12602 = vrot.lane.b32.xlu0 %v12532, 127
  %v12603 = vpop.permute.xlu0 %12602
  %12604 = vrot.lane.b32.xlu0 %v12535, 127
  %v12605 = vpop.permute.xlu0 %12604
  %12606 = vrot.lane.b32.xlu0 %v12537, 127
  %v12607 = vpop.permute.xlu0 %12606
  %12608 = vrot.lane.b32.xlu0 %v12539, 127
  %v12609 = vpop.permute.xlu0 %12608
  %12610 = vrot.lane.b32.xlu0 %v12542, 127
  %v12611 = vpop.permute.xlu0 %12610
  %12612 = vrot.lane.b32.xlu0 %v12545, 127
  %v12613 = vpop.permute.xlu0 %12612
  %12614 = vrot.lane.b32.xlu0 %v12547, 127
  %v12615 = vpop.permute.xlu0 %12614
  %12616 = vrot.lane.b32.xlu0 %v12549, 127
  %v12617 = vpop.permute.xlu0 %12616
  %12618 = vrot.lane.b32.xlu0 %v12552, 127
  %v12619 = vpop.permute.xlu0 %12618
  %12620 = vrot.lane.b32.xlu0 %v12555, 127
  %v12621 = vpop.permute.xlu0 %12620
  %12622 = vrot.lane.b32.xlu0 %v12557, 127
  %v12623 = vpop.permute.xlu0 %12622
  %12624 = vrot.lane.b32.xlu0 %v12559, 127
  %v12625 = vpop.permute.xlu0 %12624
  %12626 = vrot.lane.b32.xlu0 %v12562, 127
  %v12627 = vpop.permute.xlu0 %12626
  %12628 = vrot.lane.b32.xlu0 %v12565, 127
  %v12629 = vpop.permute.xlu0 %12628
  %12630 = vrot.lane.b32.xlu0 %v12567, 127
  %v12631 = vpop.permute.xlu0 %12630
  %12632 = vrot.lane.b32.xlu0 %v12569, 127
  %v12633 = vpop.permute.xlu0 %12632
  %v12634 = vsel %vm500, %v12571, %v12573
  %v12635 = vsel %vm500, %v12575, %v12577
  %v12636 = vsel %vm500, %v12579, %v12581
  %v12637 = vsel %vm500, %v12583, %v12585
  %v12638 = vsel %vm500, %v12587, %v12589
  %v12639 = vsel %vm500, %v12591, %v12593
  %v12640 = vsel %vm500, %v12595, %v12597
  %v12641 = vsel %vm500, %v12599, %v12601
  %v12642 = vsel %vm500, %v12603, %v12605
  %v12643 = vsel %vm500, %v12607, %v12609
  %v12644 = vsel %vm500, %v12611, %v12613
  %v12645 = vsel %vm500, %v12615, %v12617
  %v12646 = vsel %vm500, %v12619, %v12621
  %v12647 = vsel %vm500, %v12623, %v12625
  %v12648 = vsel %vm500, %v12627, %v12629
  %v12649 = vsel %vm500, %v12631, %v12633
  %v12682 = vadd.f32 %v12248, %v12634
  %v12683 = vadd.f32 %v12249, %v12573
  %v12684 = vadd.f32 %v12250, %v12635
  %v12685 = vadd.f32 %v12251, %v12577
  %v12686 = vadd.f32 %v12252, %v12636
  %v12687 = vadd.f32 %v12253, %v12581
  %v12688 = vadd.f32 %v12254, %v12637
  %v12689 = vadd.f32 %v12255, %v12585
  %v12690 = vadd.f32 %v12256, %v12638
  %v12691 = vadd.f32 %v12257, %v12589
  %v12692 = vadd.f32 %v12258, %v12639
  %v12693 = vadd.f32 %v12259, %v12593
  %v12694 = vadd.f32 %v12260, %v12640
  %v12695 = vadd.f32 %v12261, %v12597
  %v12696 = vadd.f32 %v12262, %v12641
  %v12697 = vadd.f32 %v12263, %v12601
  %v12698 = vadd.f32 %v12264, %v12642
  %v12699 = vadd.f32 %v12265, %v12605
  %v12700 = vadd.f32 %v12266, %v12643
  %v12701 = vadd.f32 %v12267, %v12609
  %v12702 = vadd.f32 %v12268, %v12644
  %v12703 = vadd.f32 %v12269, %v12613
  %v12704 = vadd.f32 %v12270, %v12645
  %v12705 = vadd.f32 %v12271, %v12617
  %v12706 = vadd.f32 %v12272, %v12646
  %v12707 = vadd.f32 %v12273, %v12621
  %v12708 = vadd.f32 %v12274, %v12647
  %v12709 = vadd.f32 %v12275, %v12625
  %v12710 = vadd.f32 %v12276, %v12648
  %v12711 = vadd.f32 %v12277, %v12629
  %v12712 = vadd.f32 %v12278, %v12649
  %v12713 = vadd.f32 %v12279, %v12633
  %v12715 = vcombine.high %v79, %v79
  %v12717 = vunpack.c.l.s4 1966171168
  %v12718 = vunpack.c.0.s8 %v12717
  %v12719 = vlaneseq
  %v12720 = vshrl.u32 %v12719, 7
  %v12721 = vsub.s32 %v12718, %v12720
  %v12722 = vrot.slane %v79, %v12721
  %v12724 = vunpack.c.l.s4 1966171168
  %v12725 = vunpack.c.0.s8 %v12724
  %v12726 = vlaneseq
  %v12727 = vshrl.u32 %v12726, 7
  %v12728 = vsub.s32 %v12725, %v12727
  %v12729 = vrot.slane %v12715, %v12728
  %v12730 = vcombine.high %v12722, %v12722
  %v12731 = vcombine.high %v12729, %v12729
  %v12733 = vunpack.c.l.s4 1966171168
  %v12734 = vunpack.c.0.s8 %v12733
  %v12735 = vlaneseq
  %v12736 = vshrl.u32 %v12735, 7
  %v12737 = vsub.s32 %v12734, %v12736
  %v12738 = vrot.slane %v12722, %v12737
  %v12740 = vunpack.c.l.s4 1966171168
  %v12741 = vunpack.c.0.s8 %v12740
  %v12742 = vlaneseq
  %v12743 = vshrl.u32 %v12742, 7
  %v12744 = vsub.s32 %v12741, %v12743
  %v12745 = vrot.slane %v12729, %v12744
  %v12747 = vunpack.c.l.s4 1966171168
  %v12748 = vunpack.c.0.s8 %v12747
  %v12749 = vlaneseq
  %v12750 = vshrl.u32 %v12749, 7
  %v12751 = vsub.s32 %v12748, %v12750
  %v12752 = vrot.slane %v12730, %v12751
  %v12754 = vunpack.c.l.s4 1966171168
  %v12755 = vunpack.c.0.s8 %v12754
  %v12756 = vlaneseq
  %v12757 = vshrl.u32 %v12756, 7
  %v12758 = vsub.s32 %v12755, %v12757
  %v12759 = vrot.slane %v12731, %v12758
  %v12760 = vcombine.high %v12738, %v12738
  %v12761 = vcombine.high %v12745, %v12745
  %v12762 = vcombine.high %v12752, %v12752
  %v12763 = vcombine.high %v12759, %v12759
  %v12764 = vlaneseq
  %v12765 = vshrl.u32 %v12764, 7
  %v12766 = vsub.s32 0, %v12765
  %v12767 = vrot.slane %v12738, %v12766
  %v12768 = vlaneseq
  %v12769 = vshrl.u32 %v12768, 7
  %v12770 = vsub.s32 0, %v12769
  %v12771 = vrot.slane %v12752, %v12770
  %v12772 = vlaneseq
  %v12773 = vshrl.u32 %v12772, 7
  %v12774 = vsub.s32 0, %v12773
  %v12775 = vrot.slane %v12760, %v12774
  %v12776 = vlaneseq
  %v12777 = vshrl.u32 %v12776, 7
  %v12778 = vsub.s32 0, %v12777
  %v12779 = vrot.slane %v12762, %v12778
  %v12780 = vlaneseq
  %v12781 = vshrl.u32 %v12780, 7
  %v12782 = vsub.s32 0, %v12781
  %v12783 = vrot.slane %v12745, %v12782
  %v12784 = vlaneseq
  %v12785 = vshrl.u32 %v12784, 7
  %v12786 = vsub.s32 0, %v12785
  %v12787 = vrot.slane %v12759, %v12786
  %v12788 = vlaneseq
  %v12789 = vshrl.u32 %v12788, 7
  %v12790 = vsub.s32 0, %v12789
  %v12791 = vrot.slane %v12761, %v12790
  %v12792 = vlaneseq
  %v12793 = vshrl.u32 %v12792, 7
  %v12794 = vsub.s32 0, %v12793
  %v12795 = vrot.slane %v12763, %v12794
  %12796 = vset.pattern.permute.xlu0 0
  %12797 = vperm.xlu0 %12796, %v12767
  %v12798 = vpop.permute.xlu0 %12797
  %12800 = vset.pattern.permute.xlu0 0
  %12801 = vperm.xlu0 %12800, %v12771
  %v12802 = vpop.permute.xlu0 %12801
  %12804 = vset.pattern.permute.xlu0 0
  %12805 = vperm.xlu0 %12804, %v12775
  %v12806 = vpop.permute.xlu0 %12805
  %12808 = vset.pattern.permute.xlu0 0
  %12809 = vperm.xlu0 %12808, %v12779
  %v12810 = vpop.permute.xlu0 %12809
  %12812 = vset.pattern.permute.xlu0 0
  %12813 = vperm.xlu0 %12812, %v12783
  %v12814 = vpop.permute.xlu0 %12813
  %12816 = vset.pattern.permute.xlu0 0
  %12817 = vperm.xlu0 %12816, %v12787
  %v12818 = vpop.permute.xlu0 %12817
  %12820 = vset.pattern.permute.xlu0 0
  %12821 = vperm.xlu0 %12820, %v12791
  %v12822 = vpop.permute.xlu0 %12821
  %12824 = vset.pattern.permute.xlu0 0
  %12825 = vperm.xlu0 %12824, %v12795
  %v12826 = vpop.permute.xlu0 %12825
  %v12828 = vmul.f32 %v12798, %v38
  %v12829 = vmul.f32 %v12798, %v39
  %v12830 = vmul.f32 %v12798, %v40
  %v12831 = vmul.f32 %v12798, %v41
  %v12832 = vmul.f32 %v12798, %v42
  %v12833 = vmul.f32 %v12798, %v43
  %v12834 = vmul.f32 %v12802, %v38
  %v12835 = vmul.f32 %v12802, %v39
  %v12836 = vmul.f32 %v12802, %v40
  %v12837 = vmul.f32 %v12802, %v41
  %v12838 = vmul.f32 %v12802, %v42
  %v12839 = vmul.f32 %v12802, %v43
  %v12840 = vmul.f32 %v12806, %v38
  %v12841 = vmul.f32 %v12806, %v39
  %v12842 = vmul.f32 %v12806, %v40
  %v12843 = vmul.f32 %v12806, %v41
  %v12844 = vmul.f32 %v12806, %v42
  %v12845 = vmul.f32 %v12806, %v43
  %v12846 = vmul.f32 %v12810, %v38
  %v12847 = vmul.f32 %v12810, %v39
  %v12848 = vmul.f32 %v12810, %v40
  %v12849 = vmul.f32 %v12810, %v41
  %v12850 = vmul.f32 %v12810, %v42
  %v12851 = vmul.f32 %v12810, %v43
  %v12852 = vmul.f32 %v12814, %v38
  %v12853 = vmul.f32 %v12814, %v39
  %v12854 = vmul.f32 %v12814, %v40
  %v12855 = vmul.f32 %v12814, %v41
  %v12856 = vmul.f32 %v12814, %v42
  %v12857 = vmul.f32 %v12814, %v43
  %v12858 = vmul.f32 %v12818, %v38
  %v12859 = vmul.f32 %v12818, %v39
  %v12860 = vmul.f32 %v12818, %v40
  %v12861 = vmul.f32 %v12818, %v41
  %v12862 = vmul.f32 %v12818, %v42
  %v12863 = vmul.f32 %v12818, %v43
  %v12864 = vmul.f32 %v12822, %v38
  %v12865 = vmul.f32 %v12822, %v39
  %v12866 = vmul.f32 %v12822, %v40
  %v12867 = vmul.f32 %v12822, %v41
  %v12868 = vmul.f32 %v12822, %v42
  %v12869 = vmul.f32 %v12822, %v43
  %v12870 = vmul.f32 %v12826, %v38
  %v12871 = vmul.f32 %v12826, %v39
  %v12872 = vmul.f32 %v12826, %v40
  %v12873 = vmul.f32 %v12826, %v41
  %v12874 = vmul.f32 %v12826, %v42
  %v12875 = vmul.f32 %v12826, %v43
  %v12924 = vrot.slane %v12828, 2
  %v12925 = vrot.slane %v12830, 2
  %v12926 = vsel %vm2337, %v12924, %v12925
  %v12927 = vrot.slane %v12829, 2
  %v12928 = vrot.slane %v12831, 2
  %v12929 = vsel %vm2337, %v12927, %v12928
  %v12930 = vrot.slane %v12832, 2
  %v12931 = vsel %vm2337, %v12925, %v12930
  %v12932 = vrot.slane %v12833, 2
  %v12933 = vsel %vm2337, %v12928, %v12932
  %v12934 = vrot.slane %v12834, 2
  %v12935 = vrot.slane %v12836, 2
  %v12936 = vsel %vm2337, %v12934, %v12935
  %v12937 = vrot.slane %v12835, 2
  %v12938 = vrot.slane %v12837, 2
  %v12939 = vsel %vm2337, %v12937, %v12938
  %v12940 = vrot.slane %v12838, 2
  %v12941 = vsel %vm2337, %v12935, %v12940
  %v12942 = vrot.slane %v12839, 2
  %v12943 = vsel %vm2337, %v12938, %v12942
  %v12944 = vrot.slane %v12840, 2
  %v12945 = vrot.slane %v12842, 2
  %v12946 = vsel %vm2337, %v12944, %v12945
  %v12947 = vrot.slane %v12841, 2
  %v12948 = vrot.slane %v12843, 2
  %v12949 = vsel %vm2337, %v12947, %v12948
  %v12950 = vrot.slane %v12844, 2
  %v12951 = vsel %vm2337, %v12945, %v12950
  %v12952 = vrot.slane %v12845, 2
  %v12953 = vsel %vm2337, %v12948, %v12952
  %v12954 = vrot.slane %v12846, 2
  %v12955 = vrot.slane %v12848, 2
  %v12956 = vsel %vm2337, %v12954, %v12955
  %v12957 = vrot.slane %v12847, 2
  %v12958 = vrot.slane %v12849, 2
  %v12959 = vsel %vm2337, %v12957, %v12958
  %v12960 = vrot.slane %v12850, 2
  %v12961 = vsel %vm2337, %v12955, %v12960
  %v12962 = vrot.slane %v12851, 2
  %v12963 = vsel %vm2337, %v12958, %v12962
  %v12964 = vrot.slane %v12852, 2
  %v12965 = vrot.slane %v12854, 2
  %v12966 = vsel %vm2337, %v12964, %v12965
  %v12967 = vrot.slane %v12853, 2
  %v12968 = vrot.slane %v12855, 2
  %v12969 = vsel %vm2337, %v12967, %v12968
  %v12970 = vrot.slane %v12856, 2
  %v12971 = vsel %vm2337, %v12965, %v12970
  %v12972 = vrot.slane %v12857, 2
  %v12973 = vsel %vm2337, %v12968, %v12972
  %v12974 = vrot.slane %v12858, 2
  %v12975 = vrot.slane %v12860, 2
  %v12976 = vsel %vm2337, %v12974, %v12975
  %v12977 = vrot.slane %v12859, 2
  %v12978 = vrot.slane %v12861, 2
  %v12979 = vsel %vm2337, %v12977, %v12978
  %v12980 = vrot.slane %v12862, 2
  %v12981 = vsel %vm2337, %v12975, %v12980
  %v12982 = vrot.slane %v12863, 2
  %v12983 = vsel %vm2337, %v12978, %v12982
  %v12984 = vrot.slane %v12864, 2
  %v12985 = vrot.slane %v12866, 2
  %v12986 = vsel %vm2337, %v12984, %v12985
  %v12987 = vrot.slane %v12865, 2
  %v12988 = vrot.slane %v12867, 2
  %v12989 = vsel %vm2337, %v12987, %v12988
  %v12990 = vrot.slane %v12868, 2
  %v12991 = vsel %vm2337, %v12985, %v12990
  %v12992 = vrot.slane %v12869, 2
  %v12993 = vsel %vm2337, %v12988, %v12992
  %v12994 = vrot.slane %v12870, 2
  %v12995 = vrot.slane %v12872, 2
  %v12996 = vsel %vm2337, %v12994, %v12995
  %v12997 = vrot.slane %v12871, 2
  %v12998 = vrot.slane %v12873, 2
  %v12999 = vsel %vm2337, %v12997, %v12998
  %v13000 = vrot.slane %v12874, 2
  %v13001 = vsel %vm2337, %v12995, %v13000
  %v13002 = vrot.slane %v12875, 2
  %v13003 = vsel %vm2337, %v12998, %v13002
  %13004 = vrot.lane.b32.xlu0 %v12926, 126
  %v13005 = vpop.permute.xlu0 %13004
  %13006 = vrot.lane.b32.xlu0 %v12929, 126
  %v13007 = vpop.permute.xlu0 %13006
  %13008 = vrot.lane.b32.xlu0 %v12931, 126
  %v13009 = vpop.permute.xlu0 %13008
  %13010 = vrot.lane.b32.xlu0 %v12933, 126
  %v13011 = vpop.permute.xlu0 %13010
  %13012 = vrot.lane.b32.xlu0 %v12936, 126
  %v13013 = vpop.permute.xlu0 %13012
  %13014 = vrot.lane.b32.xlu0 %v12939, 126
  %v13015 = vpop.permute.xlu0 %13014
  %13016 = vrot.lane.b32.xlu0 %v12941, 126
  %v13017 = vpop.permute.xlu0 %13016
  %13018 = vrot.lane.b32.xlu0 %v12943, 126
  %v13019 = vpop.permute.xlu0 %13018
  %13020 = vrot.lane.b32.xlu0 %v12946, 126
  %v13021 = vpop.permute.xlu0 %13020
  %13022 = vrot.lane.b32.xlu0 %v12949, 126
  %v13023 = vpop.permute.xlu0 %13022
  %13024 = vrot.lane.b32.xlu0 %v12951, 126
  %v13025 = vpop.permute.xlu0 %13024
  %13026 = vrot.lane.b32.xlu0 %v12953, 126
  %v13027 = vpop.permute.xlu0 %13026
  %13028 = vrot.lane.b32.xlu0 %v12956, 126
  %v13029 = vpop.permute.xlu0 %13028
  %13030 = vrot.lane.b32.xlu0 %v12959, 126
  %v13031 = vpop.permute.xlu0 %13030
  %13032 = vrot.lane.b32.xlu0 %v12961, 126
  %v13033 = vpop.permute.xlu0 %13032
  %13034 = vrot.lane.b32.xlu0 %v12963, 126
  %v13035 = vpop.permute.xlu0 %13034
  %13036 = vrot.lane.b32.xlu0 %v12966, 126
  %v13037 = vpop.permute.xlu0 %13036
  %13038 = vrot.lane.b32.xlu0 %v12969, 126
  %v13039 = vpop.permute.xlu0 %13038
  %13040 = vrot.lane.b32.xlu0 %v12971, 126
  %v13041 = vpop.permute.xlu0 %13040
  %13042 = vrot.lane.b32.xlu0 %v12973, 126
  %v13043 = vpop.permute.xlu0 %13042
  %13044 = vrot.lane.b32.xlu0 %v12976, 126
  %v13045 = vpop.permute.xlu0 %13044
  %13046 = vrot.lane.b32.xlu0 %v12979, 126
  %v13047 = vpop.permute.xlu0 %13046
  %13048 = vrot.lane.b32.xlu0 %v12981, 126
  %v13049 = vpop.permute.xlu0 %13048
  %13050 = vrot.lane.b32.xlu0 %v12983, 126
  %v13051 = vpop.permute.xlu0 %13050
  %13052 = vrot.lane.b32.xlu0 %v12986, 126
  %v13053 = vpop.permute.xlu0 %13052
  %13054 = vrot.lane.b32.xlu0 %v12989, 126
  %v13055 = vpop.permute.xlu0 %13054
  %13056 = vrot.lane.b32.xlu0 %v12991, 126
  %v13057 = vpop.permute.xlu0 %13056
  %13058 = vrot.lane.b32.xlu0 %v12993, 126
  %v13059 = vpop.permute.xlu0 %13058
  %13060 = vrot.lane.b32.xlu0 %v12996, 126
  %v13061 = vpop.permute.xlu0 %13060
  %13062 = vrot.lane.b32.xlu0 %v12999, 126
  %v13063 = vpop.permute.xlu0 %13062
  %13064 = vrot.lane.b32.xlu0 %v13001, 126
  %v13065 = vpop.permute.xlu0 %13064
  %13066 = vrot.lane.b32.xlu0 %v13003, 126
  %v13067 = vpop.permute.xlu0 %13066
  %v13068 = vsel %vm823, %v13005, %v13007
  %v13069 = vsel %vm823, %v13009, %v13011
  %v13070 = vsel %vm823, %v13013, %v13015
  %v13071 = vsel %vm823, %v13017, %v13019
  %v13072 = vsel %vm823, %v13021, %v13023
  %v13073 = vsel %vm823, %v13025, %v13027
  %v13074 = vsel %vm823, %v13029, %v13031
  %v13075 = vsel %vm823, %v13033, %v13035
  %v13076 = vsel %vm823, %v13037, %v13039
  %v13077 = vsel %vm823, %v13041, %v13043
  %v13078 = vsel %vm823, %v13045, %v13047
  %v13079 = vsel %vm823, %v13049, %v13051
  %v13080 = vsel %vm823, %v13053, %v13055
  %v13081 = vsel %vm823, %v13057, %v13059
  %v13082 = vsel %vm823, %v13061, %v13063
  %v13083 = vsel %vm823, %v13065, %v13067
  %v13116 = vadd.f32 %v12682, %v13068
  %v13117 = vadd.f32 %v12683, %v13007
  %v13118 = vadd.f32 %v12684, %v13069
  %v13119 = vadd.f32 %v12685, %v13011
  %v13120 = vadd.f32 %v12686, %v13070
  %v13121 = vadd.f32 %v12687, %v13015
  %v13122 = vadd.f32 %v12688, %v13071
  %v13123 = vadd.f32 %v12689, %v13019
  %v13124 = vadd.f32 %v12690, %v13072
  %v13125 = vadd.f32 %v12691, %v13023
  %v13126 = vadd.f32 %v12692, %v13073
  %v13127 = vadd.f32 %v12693, %v13027
  %v13128 = vadd.f32 %v12694, %v13074
  %v13129 = vadd.f32 %v12695, %v13031
  %v13130 = vadd.f32 %v12696, %v13075
  %v13131 = vadd.f32 %v12697, %v13035
  %v13132 = vadd.f32 %v12698, %v13076
  %v13133 = vadd.f32 %v12699, %v13039
  %v13134 = vadd.f32 %v12700, %v13077
  %v13135 = vadd.f32 %v12701, %v13043
  %v13136 = vadd.f32 %v12702, %v13078
  %v13137 = vadd.f32 %v12703, %v13047
  %v13138 = vadd.f32 %v12704, %v13079
  %v13139 = vadd.f32 %v12705, %v13051
  %v13140 = vadd.f32 %v12706, %v13080
  %v13141 = vadd.f32 %v12707, %v13055
  %v13142 = vadd.f32 %v12708, %v13081
  %v13143 = vadd.f32 %v12709, %v13059
  %v13144 = vadd.f32 %v12710, %v13082
  %v13145 = vadd.f32 %v12711, %v13063
  %v13146 = vadd.f32 %v12712, %v13083
  %v13147 = vadd.f32 %v12713, %v13067
  %v13148 = vld [vmem:[%s2] sm:$0xff]
  %v13150 = vcombine.high %v13148, %v13148
  %v13152 = vunpack.c.l.s4 1966171168
  %v13153 = vunpack.c.0.s8 %v13152
  %v13154 = vlaneseq
  %v13155 = vshrl.u32 %v13154, 7
  %v13156 = vsub.s32 %v13153, %v13155
  %v13157 = vrot.slane %v13148, %v13156
  %v13159 = vunpack.c.l.s4 1966171168
  %v13160 = vunpack.c.0.s8 %v13159
  %v13161 = vlaneseq
  %v13162 = vshrl.u32 %v13161, 7
  %v13163 = vsub.s32 %v13160, %v13162
  %v13164 = vrot.slane %v13150, %v13163
  %v13165 = vcombine.high %v13157, %v13157
  %v13166 = vcombine.high %v13164, %v13164
  %v13168 = vunpack.c.l.s4 1966171168
  %v13169 = vunpack.c.0.s8 %v13168
  %v13170 = vlaneseq
  %v13171 = vshrl.u32 %v13170, 7
  %v13172 = vsub.s32 %v13169, %v13171
  %v13173 = vrot.slane %v13157, %v13172
  %v13175 = vunpack.c.l.s4 1966171168
  %v13176 = vunpack.c.0.s8 %v13175
  %v13177 = vlaneseq
  %v13178 = vshrl.u32 %v13177, 7
  %v13179 = vsub.s32 %v13176, %v13178
  %v13180 = vrot.slane %v13164, %v13179
  %v13182 = vunpack.c.l.s4 1966171168
  %v13183 = vunpack.c.0.s8 %v13182
  %v13184 = vlaneseq
  %v13185 = vshrl.u32 %v13184, 7
  %v13186 = vsub.s32 %v13183, %v13185
  %v13187 = vrot.slane %v13165, %v13186
  %v13189 = vunpack.c.l.s4 1966171168
  %v13190 = vunpack.c.0.s8 %v13189
  %v13191 = vlaneseq
  %v13192 = vshrl.u32 %v13191, 7
  %v13193 = vsub.s32 %v13190, %v13192
  %v13194 = vrot.slane %v13166, %v13193
  %v13195 = vcombine.high %v13173, %v13173
  %v13196 = vcombine.high %v13180, %v13180
  %v13197 = vcombine.high %v13187, %v13187
  %v13198 = vcombine.high %v13194, %v13194
  %v13199 = vlaneseq
  %v13200 = vshrl.u32 %v13199, 7
  %v13201 = vsub.s32 0, %v13200
  %v13202 = vrot.slane %v13173, %v13201
  %v13203 = vlaneseq
  %v13204 = vshrl.u32 %v13203, 7
  %v13205 = vsub.s32 0, %v13204
  %v13206 = vrot.slane %v13187, %v13205
  %v13207 = vlaneseq
  %v13208 = vshrl.u32 %v13207, 7
  %v13209 = vsub.s32 0, %v13208
  %v13210 = vrot.slane %v13195, %v13209
  %v13211 = vlaneseq
  %v13212 = vshrl.u32 %v13211, 7
  %v13213 = vsub.s32 0, %v13212
  %v13214 = vrot.slane %v13197, %v13213
  %v13215 = vlaneseq
  %v13216 = vshrl.u32 %v13215, 7
  %v13217 = vsub.s32 0, %v13216
  %v13218 = vrot.slane %v13180, %v13217
  %v13219 = vlaneseq
  %v13220 = vshrl.u32 %v13219, 7
  %v13221 = vsub.s32 0, %v13220
  %v13222 = vrot.slane %v13194, %v13221
  %v13223 = vlaneseq
  %v13224 = vshrl.u32 %v13223, 7
  %v13225 = vsub.s32 0, %v13224
  %v13226 = vrot.slane %v13196, %v13225
  %v13227 = vlaneseq
  %v13228 = vshrl.u32 %v13227, 7
  %v13229 = vsub.s32 0, %v13228
  %v13230 = vrot.slane %v13198, %v13229
  %13231 = vset.pattern.permute.xlu0 0
  %13232 = vperm.xlu0 %13231, %v13202
  %v13233 = vpop.permute.xlu0 %13232
  %13235 = vset.pattern.permute.xlu0 0
  %13236 = vperm.xlu0 %13235, %v13206
  %v13237 = vpop.permute.xlu0 %13236
  %13239 = vset.pattern.permute.xlu0 0
  %13240 = vperm.xlu0 %13239, %v13210
  %v13241 = vpop.permute.xlu0 %13240
  %13243 = vset.pattern.permute.xlu0 0
  %13244 = vperm.xlu0 %13243, %v13214
  %v13245 = vpop.permute.xlu0 %13244
  %13247 = vset.pattern.permute.xlu0 0
  %13248 = vperm.xlu0 %13247, %v13218
  %v13249 = vpop.permute.xlu0 %13248
  %13251 = vset.pattern.permute.xlu0 0
  %13252 = vperm.xlu0 %13251, %v13222
  %v13253 = vpop.permute.xlu0 %13252
  %13255 = vset.pattern.permute.xlu0 0
  %13256 = vperm.xlu0 %13255, %v13226
  %v13257 = vpop.permute.xlu0 %13256
  %13259 = vset.pattern.permute.xlu0 0
  %13260 = vperm.xlu0 %13259, %v13230
  %v13261 = vpop.permute.xlu0 %13260
  %v13263 = vadd.f32 %v13116, %v13233
  %v13264 = vadd.f32 %v13117, %v13233
  %v13265 = vadd.f32 %v13118, %v13233
  %v13266 = vadd.f32 %v13119, %v13233
  %v13267 = vadd.f32 %v13120, %v13237
  %v13268 = vadd.f32 %v13121, %v13237
  %v13269 = vadd.f32 %v13122, %v13237
  %v13270 = vadd.f32 %v13123, %v13237
  %v13271 = vadd.f32 %v13124, %v13241
  %v13272 = vadd.f32 %v13125, %v13241
  %v13273 = vadd.f32 %v13126, %v13241
  %v13274 = vadd.f32 %v13127, %v13241
  %v13275 = vadd.f32 %v13128, %v13245
  %v13276 = vadd.f32 %v13129, %v13245
  %v13277 = vadd.f32 %v13130, %v13245
  %v13278 = vadd.f32 %v13131, %v13245
  %v13279 = vadd.f32 %v13132, %v13249
  %v13280 = vadd.f32 %v13133, %v13249
  %v13281 = vadd.f32 %v13134, %v13249
  %v13282 = vadd.f32 %v13135, %v13249
  %v13283 = vadd.f32 %v13136, %v13253
  %v13284 = vadd.f32 %v13137, %v13253
  %v13285 = vadd.f32 %v13138, %v13253
  %v13286 = vadd.f32 %v13139, %v13253
  %v13287 = vadd.f32 %v13140, %v13257
  %v13288 = vadd.f32 %v13141, %v13257
  %v13289 = vadd.f32 %v13142, %v13257
  %v13290 = vadd.f32 %v13143, %v13257
  %v13291 = vadd.f32 %v13144, %v13261
  %v13292 = vadd.f32 %v13145, %v13261
  %v13293 = vadd.f32 %v13146, %v13261
  %v13294 = vadd.f32 %v13147, %v13261
  %v13295 = vmax.f32 %v13263, 0.0
  %v13296 = vmax.f32 %v13264, 0.0
  %v13297 = vmax.f32 %v13265, 0.0
  %v13298 = vmax.f32 %v13266, 0.0
  %v13299 = vmax.f32 %v13267, 0.0
  %v13300 = vmax.f32 %v13268, 0.0
  %v13301 = vmax.f32 %v13269, 0.0
  %v13302 = vmax.f32 %v13270, 0.0
  %v13303 = vmax.f32 %v13271, 0.0
  %v13304 = vmax.f32 %v13272, 0.0
  %v13305 = vmax.f32 %v13273, 0.0
  %v13306 = vmax.f32 %v13274, 0.0
  %v13307 = vmax.f32 %v13275, 0.0
  %v13308 = vmax.f32 %v13276, 0.0
  %v13309 = vmax.f32 %v13277, 0.0
  %v13310 = vmax.f32 %v13278, 0.0
  %v13311 = vmax.f32 %v13279, 0.0
  %v13312 = vmax.f32 %v13280, 0.0
  %v13313 = vmax.f32 %v13281, 0.0
  %v13314 = vmax.f32 %v13282, 0.0
  %v13315 = vmax.f32 %v13283, 0.0
  %v13316 = vmax.f32 %v13284, 0.0
  %v13317 = vmax.f32 %v13285, 0.0
  %v13318 = vmax.f32 %v13286, 0.0
  %v13319 = vmax.f32 %v13287, 0.0
  %v13320 = vmax.f32 %v13288, 0.0
  %v13321 = vmax.f32 %v13289, 0.0
  %v13322 = vmax.f32 %v13290, 0.0
  %v13323 = vmax.f32 %v13291, 0.0
  %v13324 = vmax.f32 %v13292, 0.0
  %v13325 = vmax.f32 %v13293, 0.0
  %v13326 = vmax.f32 %v13294, 0.0
  %v13327 = vadd.f32 %v13295, %v13297
  %v13328 = vrot.slane %v13327, 4
  %v13329 = vadd.f32 %v13327, %v13328
  %v13330 = vrot.slane %v13329, 2
  %v13331 = vadd.f32 %v13329, %v13330
  %v13332 = vrot.slane %v13331, 1
  %v13333 = vadd.f32 %v13331, %v13332
  %vm13334 = vcmask 113664
  %v13335 = vsel %vm13334, %v13296, 0.0
  %v13336 = vsel %vm13334, %v13298, 0.0
  %v13337 = vadd.f32 %v13335, %v13336
  %v13338 = vrot.slane %v13337, 4
  %v13339 = vadd.f32 %v13337, %v13338
  %v13340 = vrot.slane %v13339, 2
  %v13341 = vadd.f32 %v13339, %v13340
  %v13342 = vrot.slane %v13341, 1
  %v13343 = vadd.f32 %v13341, %v13342
  %v13344 = vadd.f32 %v13299, %v13301
  %v13345 = vrot.slane %v13344, 4
  %v13346 = vadd.f32 %v13344, %v13345
  %v13347 = vrot.slane %v13346, 2
  %v13348 = vadd.f32 %v13346, %v13347
  %v13349 = vrot.slane %v13348, 1
  %v13350 = vadd.f32 %v13348, %v13349
  %v13351 = vsel %vm13334, %v13300, 0.0
  %v13352 = vsel %vm13334, %v13302, 0.0
  %v13353 = vadd.f32 %v13351, %v13352
  %v13354 = vrot.slane %v13353, 4
  %v13355 = vadd.f32 %v13353, %v13354
  %v13356 = vrot.slane %v13355, 2
  %v13357 = vadd.f32 %v13355, %v13356
  %v13358 = vrot.slane %v13357, 1
  %v13359 = vadd.f32 %v13357, %v13358
  %v13360 = vadd.f32 %v13303, %v13305
  %v13361 = vrot.slane %v13360, 4
  %v13362 = vadd.f32 %v13360, %v13361
  %v13363 = vrot.slane %v13362, 2
  %v13364 = vadd.f32 %v13362, %v13363
  %v13365 = vrot.slane %v13364, 1
  %v13366 = vadd.f32 %v13364, %v13365
  %v13367 = vsel %vm13334, %v13304, 0.0
  %v13368 = vsel %vm13334, %v13306, 0.0
  %v13369 = vadd.f32 %v13367, %v13368
  %v13370 = vrot.slane %v13369, 4
  %v13371 = vadd.f32 %v13369, %v13370
  %v13372 = vrot.slane %v13371, 2
  %v13373 = vadd.f32 %v13371, %v13372
  %v13374 = vrot.slane %v13373, 1
  %v13375 = vadd.f32 %v13373, %v13374
  %v13376 = vadd.f32 %v13307, %v13309
  %v13377 = vrot.slane %v13376, 4
  %v13378 = vadd.f32 %v13376, %v13377
  %v13379 = vrot.slane %v13378, 2
  %v13380 = vadd.f32 %v13378, %v13379
  %v13381 = vrot.slane %v13380, 1
  %v13382 = vadd.f32 %v13380, %v13381
  %v13383 = vsel %vm13334, %v13308, 0.0
  %v13384 = vsel %vm13334, %v13310, 0.0
  %v13385 = vadd.f32 %v13383, %v13384
  %v13386 = vrot.slane %v13385, 4
  %v13387 = vadd.f32 %v13385, %v13386
  %v13388 = vrot.slane %v13387, 2
  %v13389 = vadd.f32 %v13387, %v13388
  %v13390 = vrot.slane %v13389, 1
  %v13391 = vadd.f32 %v13389, %v13390
  %v13392 = vadd.f32 %v13311, %v13313
  %v13393 = vrot.slane %v13392, 4
  %v13394 = vadd.f32 %v13392, %v13393
  %v13395 = vrot.slane %v13394, 2
  %v13396 = vadd.f32 %v13394, %v13395
  %v13397 = vrot.slane %v13396, 1
  %v13398 = vadd.f32 %v13396, %v13397
  %v13399 = vsel %vm13334, %v13312, 0.0
  %v13400 = vsel %vm13334, %v13314, 0.0
  %v13401 = vadd.f32 %v13399, %v13400
  %v13402 = vrot.slane %v13401, 4
  %v13403 = vadd.f32 %v13401, %v13402
  %v13404 = vrot.slane %v13403, 2
  %v13405 = vadd.f32 %v13403, %v13404
  %v13406 = vrot.slane %v13405, 1
  %v13407 = vadd.f32 %v13405, %v13406
  %v13408 = vadd.f32 %v13315, %v13317
  %v13409 = vrot.slane %v13408, 4
  %v13410 = vadd.f32 %v13408, %v13409
  %v13411 = vrot.slane %v13410, 2
  %v13412 = vadd.f32 %v13410, %v13411
  %v13413 = vrot.slane %v13412, 1
  %v13414 = vadd.f32 %v13412, %v13413
  %v13415 = vsel %vm13334, %v13316, 0.0
  %v13416 = vsel %vm13334, %v13318, 0.0
  %v13417 = vadd.f32 %v13415, %v13416
  %v13418 = vrot.slane %v13417, 4
  %v13419 = vadd.f32 %v13417, %v13418
  %v13420 = vrot.slane %v13419, 2
  %v13421 = vadd.f32 %v13419, %v13420
  %v13422 = vrot.slane %v13421, 1
  %v13423 = vadd.f32 %v13421, %v13422
  %v13424 = vadd.f32 %v13319, %v13321
  %v13425 = vrot.slane %v13424, 4
  %v13426 = vadd.f32 %v13424, %v13425
  %v13427 = vrot.slane %v13426, 2
  %v13428 = vadd.f32 %v13426, %v13427
  %v13429 = vrot.slane %v13428, 1
  %v13430 = vadd.f32 %v13428, %v13429
  %v13431 = vsel %vm13334, %v13320, 0.0
  %v13432 = vsel %vm13334, %v13322, 0.0
  %v13433 = vadd.f32 %v13431, %v13432
  %v13434 = vrot.slane %v13433, 4
  %v13435 = vadd.f32 %v13433, %v13434
  %v13436 = vrot.slane %v13435, 2
  %v13437 = vadd.f32 %v13435, %v13436
  %v13438 = vrot.slane %v13437, 1
  %v13439 = vadd.f32 %v13437, %v13438
  %v13440 = vadd.f32 %v13323, %v13325
  %v13441 = vrot.slane %v13440, 4
  %v13442 = vadd.f32 %v13440, %v13441
  %v13443 = vrot.slane %v13442, 2
  %v13444 = vadd.f32 %v13442, %v13443
  %v13445 = vrot.slane %v13444, 1
  %v13446 = vadd.f32 %v13444, %v13445
  %v13447 = vsel %vm13334, %v13324, 0.0
  %v13448 = vsel %vm13334, %v13326, 0.0
  %v13449 = vadd.f32 %v13447, %v13448
  %v13450 = vrot.slane %v13449, 4
  %v13451 = vadd.f32 %v13449, %v13450
  %v13452 = vrot.slane %v13451, 2
  %v13453 = vadd.f32 %v13451, %v13452
  %v13454 = vrot.slane %v13453, 1
  %v13455 = vadd.f32 %v13453, %v13454
  %vm13464 = vcmask 1041409
  %v13465 = vsel %vm13464, %v13350, %v13333
  %vm13466 = vcmask 1042434
  %v13467 = vsel %vm13466, %v13366, %v13465
  %vm13468 = vcmask 1043459
  %v13469 = vsel %vm13468, %v13382, %v13467
  %vm13470 = vcmask 1044484
  %v13471 = vsel %vm13470, %v13398, %v13469
  %vm13472 = vcmask 1045509
  %v13473 = vsel %vm13472, %v13414, %v13471
  %vm13474 = vcmask 1046534
  %v13475 = vsel %vm13474, %v13430, %v13473
  %vm13476 = vcmask 1047559
  %v13477 = vsel %vm13476, %v13446, %v13475
  %vm13479 = vcmask 130048
  %v13480 = vsel %vm13479, %v13477, 0.0
  %13481 = vadd.xlane.f32.xlu0 %v13480
  %v13482 = vpop.xlane.xlu0 %13481
  %13483 = vrot.lane.b32.xlu0 %v13477, 110
  %v13484 = vpop.permute.xlu0 %13483
  %v13486 = vsel %vm13479, %v13484, 0.0
  %13487 = vadd.xlane.f32.xlu0 %v13486
  %v13488 = vpop.xlane.xlu0 %13487
  %13489 = vrot.lane.b32.xlu0 %v13477, 92
  %v13490 = vpop.permute.xlu0 %13489
  %v13492 = vsel %vm13479, %v13490, 0.0
  %13493 = vadd.xlane.f32.xlu0 %v13492
  %v13494 = vpop.xlane.xlu0 %13493
  %13495 = vrot.lane.b32.xlu0 %v13477, 74
  %v13496 = vpop.permute.xlu0 %13495
  %v13498 = vsel %vm13479, %v13496, 0.0
  %13499 = vadd.xlane.f32.xlu0 %v13498
  %v13500 = vpop.xlane.xlu0 %13499
  %13501 = vrot.lane.b32.xlu0 %v13477, 56
  %v13502 = vpop.permute.xlu0 %13501
  %v13504 = vsel %vm13479, %v13502, 0.0
  %13505 = vadd.xlane.f32.xlu0 %v13504
  %v13506 = vpop.xlane.xlu0 %13505
  %13507 = vrot.lane.b32.xlu0 %v13477, 38
  %v13508 = vpop.permute.xlu0 %13507
  %v13510 = vsel %vm13479, %v13508, 0.0
  %13511 = vadd.xlane.f32.xlu0 %v13510
  %v13512 = vpop.xlane.xlu0 %13511
  %13513 = vrot.lane.b32.xlu0 %v13477, 20
  %v13514 = vpop.permute.xlu0 %13513
  %v13516 = vsel %vm13479, %v13514, 0.0
  %13517 = vadd.xlane.f32.xlu0 %v13516
  %v13518 = vpop.xlane.xlu0 %13517
  %v13527 = vsel %vm13464, %v13359, %v13343
  %v13528 = vsel %vm13466, %v13375, %v13527
  %v13529 = vsel %vm13468, %v13391, %v13528
  %v13530 = vsel %vm13470, %v13407, %v13529
  %v13531 = vsel %vm13472, %v13423, %v13530
  %v13532 = vsel %vm13474, %v13439, %v13531
  %v13533 = vsel %vm13476, %v13455, %v13532
  %13534 = vrot.lane.b32.xlu0 %v13477, 2
  %v13535 = vpop.permute.xlu0 %13534
  %13536 = vrot.lane.b32.xlu0 %v13533, 2
  %v13537 = vpop.permute.xlu0 %13536
  %vm13538 = vcmask 15360
  %v13539 = vsel %vm13538, %v13535, %v13537
  %v13541 = vsel %vm13479, %v13539, 0.0
  %13542 = vadd.xlane.f32.xlu0 %v13541
  %v13543 = vpop.xlane.xlu0 %13542
  %vm13544 = vcmask 7168
  %v13545 = vsel %vm13544, %v13482, %v13488
  %v13546 = vsel %vm13538, %v13545, %v13494
  %vm13547 = vcmask 23552
  %v13548 = vsel %vm13547, %v13546, %v13500
  %vm13549 = vcmask 31744
  %v13550 = vsel %vm13549, %v13548, %v13506
  %vm13551 = vcmask 39936
  %v13552 = vsel %vm13551, %v13550, %v13512
  %vm13553 = vcmask 48128
  %v13554 = vsel %vm13553, %v13552, %v13518
  %vm13555 = vcmask 56320
  %v13556 = vsel %vm13555, %v13554, %v13543
  %v13557 = vmul.f32 %v13556, 0.00390625
  %v13558 = vld [vmem:[%s3] sm:$0xff]
  %v13559 = vld [vmem:[%s4] sm:$0x1]
  %v13561 = vlaneseq
  %v13562 = vshrl.u32 %v13561, 7
  %v13563 = vsub.s32 0, %v13562
  %v13564 = vrot.slane %v13559, %v13563
  %13566 = vxpose.xlu0.b32.start [1/16] %v13557, 128
  %13567 = vxpose.xlu0.b32.cont [2/16] 0.0, 128
  %13568 = vxpose.xlu0.b32.cont [3/16] 0.0, 128
  %13569 = vxpose.xlu0.b32.cont [4/16] 0.0, 128
  %13570 = vxpose.xlu0.b32.cont [5/16] 0.0, 128
  %13571 = vxpose.xlu0.b32.cont [6/16] 0.0, 128
  %13572 = vxpose.xlu0.b32.cont [7/16] 0.0, 128
  %13573 = vxpose.xlu0.b32.cont [8/16] 0.0, 128
  %13574 = vxpose.xlu0.b32.cont [9/16] 0.0, 128
  %13575 = vxpose.xlu0.b32.cont [10/16] 0.0, 128
  %13576 = vxpose.xlu0.b32.cont [11/16] 0.0, 128
  %13577 = vxpose.xlu0.b32.cont [12/16] 0.0, 128
  %13578 = vxpose.xlu0.b32.cont [13/16] 0.0, 128
  %13579 = vxpose.xlu0.b32.cont [14/16] 0.0, 128
  %13580 = vxpose.xlu0.b32.cont [15/16] 0.0, 128
  %13581 = vxpose.xlu0.b32.end [16/16] 0.0, 128
  %v13582 = vpop.trf.xlu0
  %v13583 = vpop.trf.xlu0
  %v13584 = vpop.trf.xlu0
  %v13585 = vpop.trf.xlu0
  %v13586 = vpop.trf.xlu0
  %v13587 = vpop.trf.xlu0
  %v13588 = vpop.trf.xlu0
  %v13589 = vpop.trf.xlu0
  %v13590 = vpop.trf.xlu0
  %v13591 = vpop.trf.xlu0
  %v13592 = vpop.trf.xlu0
  %v13593 = vpop.trf.xlu0
  %v13594 = vpop.trf.xlu0
  %v13595 = vpop.trf.xlu0
  %v13596 = vpop.trf.xlu0
  %v13597 = vpop.trf.xlu0
  %vm13598 = vcmask 64512
  %v13600 = vsel %vm13598, %v13582, 0
  %13602 = vmatprep.subr.mxu0 0.0
  %13603 = vmatpush1.msra.mxu0 0.0
  %13604 = vmatprep.subr.mxu0 0.0
  %13605 = vmatpush1.msra.mxu0 0.0
  %13606 = vmatprep.subr.mxu0 0.0
  %13607 = vmatpush1.msra.mxu0 0.0
  %13608 = vmatprep.subr.mxu0 0.0
  %13609 = vmatpush1.msra.mxu0 0.0
  %13610 = vmatprep.subr.mxu0 0.0
  %13611 = vmatpush1.msra.mxu0 0.0
  %13612 = vmatprep.subr.mxu0 0.0
  %13613 = vmatpush1.msra.mxu0 0.0
  %13614 = vmatprep.subr.mxu0 0.0
  %13615 = vmatpush1.msra.mxu0 0.0
  %13616 = vmatprep.subr.mxu0 0.0
  %13617 = vmatpush1.msra.mxu0 0.0
  %13618 = vmatprep.subr.mxu0 0.0
  %13619 = vmatpush1.msra.mxu0 0.0
  %13620 = vmatprep.subr.mxu0 0.0
  %13621 = vmatpush1.msra.mxu0 0.0
  %13622 = vmatprep.subr.mxu0 0.0
  %13623 = vmatpush1.msra.mxu0 0.0
  %13624 = vmatprep.subr.mxu0 0.0
  %13625 = vmatpush1.msra.mxu0 0.0
  %13626 = vmatprep.subr.mxu0 0.0
  %13627 = vmatpush1.msra.mxu0 0.0
  %13628 = vmatprep.subr.mxu0 0.0
  %13629 = vmatpush1.msra.mxu0 0.0
  %13630 = vmatprep.subr.mxu0 0.0
  %13631 = vmatpush1.msra.mxu0 0.0
  %13632 = vmatprep.subr.mxu0 0.0
  %13633 = vmatpush1.msra.mxu0 %v13558
  %13634 = vmatprep.subr.mxu0 0.0
  %13635 = vmatpush2.msra.mxu0 0.0
  %13636 = vmatprep.subr.mxu0 0.0
  %13637 = vmatpush2.msra.mxu0 0.0
  %13638 = vmatprep.subr.mxu0 0.0
  %13639 = vmatpush2.msra.mxu0 0.0
  %13640 = vmatprep.subr.mxu0 0.0
  %13641 = vmatpush2.msra.mxu0 0.0
  %13642 = vmatprep.subr.mxu0 0.0
  %13643 = vmatpush2.msra.mxu0 0.0
  %13644 = vmatprep.subr.mxu0 0.0
  %13645 = vmatpush2.msra.mxu0 0.0
  %13646 = vmatprep.subr.mxu0 0.0
  %13647 = vmatpush2.msra.mxu0 0.0
  %13648 = vmatprep.subr.mxu0 0.0
  %13649 = vmatpush2.msra.mxu0 0.0
  %13650 = vmatprep.subr.mxu0 0.0
  %13651 = vmatpush2.msra.mxu0 0.0
  %13652 = vmatprep.subr.mxu0 0.0
  %13653 = vmatpush2.msra.mxu0 0.0
  %13654 = vmatprep.subr.mxu0 0.0
  %13655 = vmatpush2.msra.mxu0 0.0
  %13656 = vmatprep.subr.mxu0 0.0
  %13657 = vmatpush2.msra.mxu0 0.0
  %13658 = vmatprep.subr.mxu0 0.0
  %13659 = vmatpush2.msra.mxu0 0.0
  %13660 = vmatprep.subr.mxu0 0.0
  %13661 = vmatpush2.msra.mxu0 0.0
  %13662 = vmatprep.subr.mxu0 0.0
  %13663 = vmatpush2.msra.mxu0 0.0
  %13664 = vmatprep.subr.mxu0 0.0
  %13665 = vmatpush2.msra.mxu0 0.0
  %13666 = vmatprep.mubr.f32.mxu0 0.0
  %13667 = vmatmul.mubr.f32.gmra.mxu0 %v13600
  %v13668 = vpop.f32.mrf.mxu0
  %v13669 = vadd.f32 %v13564, %v13668
  %v13670 = vpop.f32.mrf.mxu0
  %13671 = vdwg.mxu0
  %13672 = vst [vmem:[%s5] sm:$0xff] %v13669
  // Predicated region
  $region22: #{triplet_net_forward.1} parent=0 // pred_check
    _
  $region23: #{triplet_net_forward.1} parent=0 // pred_check_branch
    %13674 = sbr.rel (0) target = $region25
  $region24: #{triplet_net_forward.1} parent=0 // pred_region
    _
  $region25: #{triplet_net_forward.1} parent=0 // pred_fallthru
    _
  // Predicated region
  $region26: #{triplet_net_forward.1} parent=0 // pred_check
    _
  $region27: #{triplet_net_forward.1} parent=0 // pred_check_branch
    %13676 = sbr.rel (0) target = $region29
  $region28: #{triplet_net_forward.1} parent=0 // pred_region
    _
  $region29: #{triplet_net_forward.1} parent=0 // pred_fallthru
    _

</llo_original>
